<compile_context>
chip_gen: v6e
topology: v6e:2x2x1
jax: 0.10.0
libtpu: 0.0.40
codegen_flags: <defaults>
</compile_context>

<pallas_src>
import functools

import jax
import jax.numpy as jnp
from jax.experimental import pallas as pl
from jax.experimental.pallas import tpu as pltpu


# ----------------------------------------------------------------------------
# Pallas kernel: fused 3x3 conv + per-channel affine + optional ReLU/residual
# ----------------------------------------------------------------------------
def _conv3x3_kernel(*refs, act, has_residual):
    if has_residual:
        x_ref, w_ref, scale_ref, shift_ref, res_ref, o_ref = refs
    else:
        x_ref, w_ref, scale_ref, shift_ref, o_ref = refs
        res_ref = None

    bsz, th, wdim, cout = o_ref.shape          # output row tile
    cin = x_ref.shape[-1]
    m = bsz * th * wdim

    # x_ref is the FULL padded activation (resident in VMEM); output row r reads
    # padded rows r .. r+2.  r0 = first output row of this grid step.
    r0 = pl.multiple_of(pl.program_id(0) * th, th)

    acc = jnp.zeros((m, cout), jnp.float32)
    # 3x3 tap loop inside the kernel: 9 shifted windows, one MXU matmul each,
    # f32 accumulation.  No im2col matrix ever touches HBM.
    for di in range(3):
        for dj in range(3):
            xt = x_ref[:, pl.ds(r0 + di, th), pl.ds(dj, wdim), :]   # (B, th, W, Cin) bf16
            acc = acc + jax.lax.dot_general(
                xt.reshape(m, cin), w_ref[di * 3 + dj],
                (((1,), (0,)), ((), ())),
                preferred_element_type=jnp.float32)

    # Epilogue on the f32 accumulator (conv bias / folded BatchNorm are pre-baked
    # into scale & shift by the wrapper), then optional ReLU / residual add.
    y = acc * scale_ref[...] + shift_ref[...]
    if act == "relu":
        y = jnp.maximum(y, 0.0)
    if has_residual:
        y = y + res_ref[...].reshape(m, cout).astype(jnp.float32)
    o_ref[...] = y.reshape(bsz, th, wdim, cout).astype(o_ref.dtype)


def conv3x3_affine_act(x, w, scale, shift, *, act="none", residual=None,
                       out_dtype=jnp.float32, tile_h=None):
    """Fused 3x3 'same' conv:  act(conv(x, w) * scale + shift) (+ residual).

    x:        [B, H, W, Cin]  (any float dtype; matmul runs in bf16, f32 accum)
    w:        [3, 3, Cin, Cout]  (HWIO)
    scale:    [Cout]  per-channel multiplier applied to the f32 accumulator
    shift:    [Cout]  per-channel offset (conv bias / folded BN go here)
    residual: optional [B, H, W, Cout] added after the activation
    """
    B, H, W, C = x.shape
    Cout = w.shape[-1]

    xb = jnp.pad(x.astype(jnp.bfloat16), ((0, 0), (1, 1), (1, 1), (0, 0)))
    wb = w.astype(jnp.bfloat16).reshape(9, C, Cout)
    scale2 = scale.reshape(1, Cout).astype(jnp.float32)
    shift2 = shift.reshape(1, Cout).astype(jnp.float32)

    if tile_h is None:
        # Largest divisor of H whose output tile stays around <= 4 MiB of f32,
        # preferring >= 2 grid steps so both v7x TensorCores get work.
        budget_elems = 1 << 20
        divisors = [d for d in range(H, 0, -1) if H % d == 0]
        fitting = [d for d in divisors if B * d * W * Cout <= budget_elems] or [1]
        multi = [d for d in fitting if H // d >= 2]
        tile_h = multi[0] if multi else fitting[0]
    n_tiles = H // tile_h

    in_specs = [
        pl.BlockSpec((B, H + 2, W + 2, C), lambda i: (0, 0, 0, 0)),   # resident input
        pl.BlockSpec((9, C, Cout), lambda i: (0, 0, 0)),              # resident weights
        pl.BlockSpec((1, Cout), lambda i: (0, 0)),
        pl.BlockSpec((1, Cout), lambda i: (0, 0)),
    ]
    args = [xb, wb, scale2, shift2]
    if residual is not None:
        in_specs.append(pl.BlockSpec((B, tile_h, W, Cout), lambda i: (0, i, 0, 0)))
        args.append(residual)

    out_itemsize = jnp.dtype(out_dtype).itemsize
    bytes_accessed = (xb.size * 2 + wb.size * 2 + B * H * W * Cout * out_itemsize
                      + (residual.size * residual.dtype.itemsize if residual is not None else 0))
    cost = pl.CostEstimate(flops=2 * B * H * W * 9 * C * Cout,
                           transcendentals=0,
                           bytes_accessed=int(bytes_accessed))

    return pl.pallas_call(
        functools.partial(_conv3x3_kernel, act=act, has_residual=residual is not None),
        out_shape=jax.ShapeDtypeStruct((B, H, W, Cout), out_dtype),
        grid=(n_tiles,),
        in_specs=in_specs,
        out_specs=pl.BlockSpec((B, tile_h, W, Cout), lambda i: (0, i, 0, 0)),
        compiler_params=pltpu.CompilerParams(
            dimension_semantics=("parallel",),
            vmem_limit_bytes=32 * 1024 * 1024),
        cost_estimate=cost,
    )(*args)


# ----------------------------------------------------------------------------
# ResidualBlock_BN forward
# ----------------------------------------------------------------------------
def _bn_fold(bn, conv_bias, eps):
    """Eval-mode BN + conv bias -> per-channel (scale, shift) on the raw conv output."""
    scale = bn["gamma"] * jax.lax.rsqrt(bn["var"] + eps)
    shift = (conv_bias - bn["mean"]) * scale + bn["beta"]
    return scale, shift


def residual_block_bn_forward(params, x_nchw, *, eps=1e-5, training=False):
    """x_nchw: [B, C, H, W] (PyTorch layout) -> [B, C, H, W]."""
    x = jnp.transpose(x_nchw, (0, 2, 3, 1)).astype(jnp.float32)   # NHWC

    if training:
        # PyTorch default .train() state: normalize with per-batch statistics
        # (biased variance).  The global reduction lives between the two kernels.
        ones = jnp.ones_like(params["conv1"]["b"])
        y1 = conv3x3_affine_act(x, params["conv1"]["w"], ones, params["conv1"]["b"],
                                act="none", out_dtype=jnp.float32)
        mu1 = jnp.mean(y1, axis=(0, 1, 2))
        var1 = jnp.mean(jnp.square(y1 - mu1), axis=(0, 1, 2))
        h = jax.nn.relu((y1 - mu1) * (params["bn1"]["gamma"] * jax.lax.rsqrt(var1 + eps))
                        + params["bn1"]["beta"])

        y2 = conv3x3_affine_act(h, params["conv2"]["w"], ones, params["conv2"]["b"],
                                act="none", out_dtype=jnp.float32)
        mu2 = jnp.mean(y2, axis=(0, 1, 2))
        var2 = jnp.mean(jnp.square(y2 - mu2), axis=(0, 1, 2))
        bn2 = ((y2 - mu2) * (params["bn2"]["gamma"] * jax.lax.rsqrt(var2 + eps))
               + params["bn2"]["beta"])
        out = x + bn2
    else:
        # Eval mode: BN folds into the conv epilogue; residual add fused into conv2.
        s1, sh1 = _bn_fold(params["bn1"], params["conv1"]["b"], eps)
        h = conv3x3_affine_act(x, params["conv1"]["w"], s1, sh1,
                               act="relu", out_dtype=jnp.bfloat16)
        s2, sh2 = _bn_fold(params["bn2"], params["conv2"]["b"], eps)
        out = conv3x3_affine_act(h, params["conv2"]["w"], s2, sh2,
                                 act="none", residual=x, out_dtype=jnp.float32)

    return jnp.transpose(out, (0, 3, 1, 2))


# ----------------------------------------------------------------------------
# Pure-JAX reference (same bf16 operand / f32 accumulation convention)
# ----------------------------------------------------------------------------
def _conv3x3_ref(x, w, b):
    y = jax.lax.conv_general_dilated(
        x.astype(jnp.bfloat16), w.astype(jnp.bfloat16),
        window_strides=(1, 1), padding=((1, 1), (1, 1)),
        dimension_numbers=("NHWC", "HWIO", "NHWC"),
        preferred_element_type=jnp.float32)
    return y + b


def residual_block_bn_ref(params, x_nchw, *, eps=1e-5, training=False):
    x = jnp.transpose(x_nchw, (0, 2, 3, 1)).astype(jnp.float32)

    def bn(y, p, mu, var):
        return (y - mu) * (p["gamma"] * jax.lax.rsqrt(var + eps)) + p["beta"]

    y1 = _conv3x3_ref(x, params["conv1"]["w"], params["conv1"]["b"])
    if training:
        mu1 = jnp.mean(y1, (0, 1, 2)); var1 = jnp.mean(jnp.square(y1 - mu1), (0, 1, 2))
    else:
        mu1, var1 = params["bn1"]["mean"], params["bn1"]["var"]
    h = jax.nn.relu(bn(y1, params["bn1"], mu1, var1))

    y2 = _conv3x3_ref(h, params["conv2"]["w"], params["conv2"]["b"])
    if training:
        mu2 = jnp.mean(y2, (0, 1, 2)); var2 = jnp.mean(jnp.square(y2 - mu2), (0, 1, 2))
    else:
        mu2, var2 = params["bn2"]["mean"], params["bn2"]["var"]
    out = x + bn(y2, params["bn2"], mu2, var2)
    return jnp.transpose(out, (0, 3, 1, 2))


# ----------------------------------------------------------------------------
# Parameter init (mirrors initialize_weights([...], 0.1) in the PyTorch module;
# weights stored HWIO instead of PyTorch's OIHW).
# ----------------------------------------------------------------------------
def init_params(key, nf=64):
    k1, k2 = jax.random.split(key)

    def conv(k, cin, cout, scale=0.1):
        std = (2.0 / (3 * 3 * cin)) ** 0.5        # kaiming_normal_, a=0, fan_in
        w = jax.random.normal(k, (3, 3, cin, cout), jnp.float32) * std * scale
        return {"w": w, "b": jnp.zeros((cout,), jnp.float32)}

    def bn(c):
        return {"gamma": jnp.ones((c,), jnp.float32), "beta": jnp.zeros((c,), jnp.float32),
                "mean": jnp.zeros((c,), jnp.float32), "var": jnp.ones((c,), jnp.float32)}

    return {"conv1": conv(k1, nf, nf), "bn1": bn(nf),
            "conv2": conv(k2, nf, nf), "bn2": bn(nf)}


# ----------------------------------------------------------------------------
if __name__ == "__main__":
    nf, B, H, W = 64, 2, 16, 16

    key = jax.random.PRNGKey(0)
    kx, kp, kb = jax.random.split(key, 3)
    params = init_params(kp, nf)

    # Perturb BN buffers / conv biases so the folded-affine and bias paths are actually
    # exercised (a freshly-constructed module has all-zero biases and identity running
    # stats, which would hide bugs in those paths).  Semantics are unchanged: both the
    # Pallas path and the reference consume the same parameters.
    kb1, kb2, kb3, kb4 = jax.random.split(kb, 4)
    for name, k in (("bn1", kb1), ("bn2", kb2)):
        km, kv, kg, kbt = jax.random.split(k, 4)
        params[name]["mean"] = 0.1 * jax.random.normal(km, (nf,), jnp.float32)
        params[name]["var"] = 1.0 + 0.2 * jax.random.uniform(kv, (nf,), jnp.float32)
        params[name]["gamma"] = 1.0 + 0.1 * jax.random.normal(kg, (nf,), jnp.float32)
        params[name]["beta"] = 0.05 * jax.random.normal(kbt, (nf,), jnp.float32)
    params["conv1"]["b"] = 0.05 * jax.random.normal(kb3, (nf,), jnp.float32)
    params["conv2"]["b"] = 0.05 * jax.random.normal(kb4, (nf,), jnp.float32)

    x = jax.random.normal(kx, (B, nf, H, W), jnp.float32)

    fwd_eval = jax.jit(functools.partial(residual_block_bn_forward, training=False))
    fwd_train = jax.jit(functools.partial(residual_block_bn_forward, training=True))

    out_eval = jax.block_until_ready(fwd_eval(params, x))
    out_train = jax.block_until_ready(fwd_train(params, x))
    assert out_eval.shape == (B, nf, H, W), out_eval.shape
    assert out_train.shape == (B, nf, H, W), out_train.shape

    ref_eval = residual_block_bn_ref(params, x, training=False)
    ref_train = residual_block_bn_ref(params, x, training=True)
    assert jnp.allclose(out_eval, ref_eval, atol=1e-2, rtol=1e-2), \
        float(jnp.max(jnp.abs(out_eval - ref_eval)))
    assert jnp.allclose(out_train, ref_train, atol=1e-2, rtol=1e-2), \
        float(jnp.max(jnp.abs(out_train - ref_train)))

    print("KERNEL_OK")
</pallas_src>

<mosaic_0001>
module attributes {stable_mosaic.version = 11 : i64} {
  func.func @_conv3x3_kernel(%arg0: i32, %arg1: memref<2x18x18x64xbf16, #tpu.memory_space<vmem>>, %arg2: memref<9x64x64xbf16, #tpu.memory_space<vmem>>, %arg3: memref<1x64xf32, #tpu.memory_space<vmem>>, %arg4: memref<1x64xf32, #tpu.memory_space<vmem>>, %arg5: memref<2x8x16x64xf32, #tpu.memory_space<vmem>>, %arg6: memref<2x8x16x64xf32, #tpu.memory_space<vmem>>) attributes {dimension_semantics = [#tpu.dimension_semantics<parallel>], iteration_bounds = array<i64: 2>, scalar_prefetch = 0 : i64, scratch_operands = 0 : i64, tpu.core_type = #tpu.core_type<tc>, window_params = [{pipeline_mode = #tpu.pipeline_mode<synchronous>, transform_indices = @transform_0, window_bounds = array<i64: 2, 18, 18, 64>}, {pipeline_mode = #tpu.pipeline_mode<synchronous>, transform_indices = @transform_1, window_bounds = array<i64: 9, 64, 64>}, {pipeline_mode = #tpu.pipeline_mode<synchronous>, transform_indices = @transform_2, window_bounds = array<i64: 1, 64>}, {pipeline_mode = #tpu.pipeline_mode<synchronous>, transform_indices = @transform_3, window_bounds = array<i64: 1, 64>}, {transform_indices = @transform_4, window_bounds = array<i64: 2, 8, 16, 64>}, {transform_indices = @transform_5, window_bounds = array<i64: 2, 8, 16, 64>}]} {
    %c8_i32 = arith.constant 8 : i32
    %0 = arith.muli %arg0, %c8_i32 : i32
    %1 = tpu.assume_multiple %0, 8 : i32
    %cst = arith.constant 0.000000e+00 : f32
    %2 = vector.broadcast %cst : f32 to vector<256x64xf32>
    %c0_i32 = arith.constant 0 : i32
    %3 = arith.addi %1, %c0_i32 : i32
    %c0 = arith.constant 0 : index
    %4 = arith.index_cast %3 : i32 to index
    %c0_0 = arith.constant 0 : index
    %c0_1 = arith.constant 0 : index
    %5 = vector.load %arg1[%c0, %4, %c0_0, %c0_1] : memref<2x18x18x64xbf16, #tpu.memory_space<vmem>>, vector<2x8x16x64xbf16>
    %6 = vector.shape_cast %5 : vector<2x8x16x64xbf16> to vector<256x64xbf16>
    %c0_2 = arith.constant 0 : index
    %c0_3 = arith.constant 0 : index
    %c0_4 = arith.constant 0 : index
    %7 = vector.load %arg2[%c0_2, %c0_3, %c0_4] : memref<9x64x64xbf16, #tpu.memory_space<vmem>>, vector<1x64x64xbf16>
    %8 = vector.shape_cast %7 : vector<1x64x64xbf16> to vector<64x64xbf16>
    %cst_5 = arith.constant dense<0.000000e+00> : vector<256x64xf32>
    %9 = tpu.matmul %6, %8, %cst_5 {dimension_numbers = #tpu.dot_dimension_numbers<[1], [0], [0], [1], [0, 0, 1, 1], [], []>} : vector<256x64xbf16>, vector<64x64xbf16>, vector<256x64xf32> -> vector<256x64xf32>
    %10 = arith.addf %2, %9 : vector<256x64xf32>
    %c0_i32_6 = arith.constant 0 : i32
    %11 = arith.addi %1, %c0_i32_6 : i32
    %c0_7 = arith.constant 0 : index
    %12 = arith.index_cast %11 : i32 to index
    %c1 = arith.constant 1 : index
    %c0_8 = arith.constant 0 : index
    %13 = vector.load %arg1[%c0_7, %12, %c1, %c0_8] : memref<2x18x18x64xbf16, #tpu.memory_space<vmem>>, vector<2x8x16x64xbf16>
    %14 = vector.shape_cast %13 : vector<2x8x16x64xbf16> to vector<256x64xbf16>
    %c1_9 = arith.constant 1 : index
    %c0_10 = arith.constant 0 : index
    %c0_11 = arith.constant 0 : index
    %15 = vector.load %arg2[%c1_9, %c0_10, %c0_11] : memref<9x64x64xbf16, #tpu.memory_space<vmem>>, vector<1x64x64xbf16>
    %16 = vector.shape_cast %15 : vector<1x64x64xbf16> to vector<64x64xbf16>
    %cst_12 = arith.constant dense<0.000000e+00> : vector<256x64xf32>
    %17 = tpu.matmul %14, %16, %cst_12 {dimension_numbers = #tpu.dot_dimension_numbers<[1], [0], [0], [1], [0, 0, 1, 1], [], []>} : vector<256x64xbf16>, vector<64x64xbf16>, vector<256x64xf32> -> vector<256x64xf32>
    %18 = arith.addf %10, %17 : vector<256x64xf32>
    %c0_i32_13 = arith.constant 0 : i32
    %19 = arith.addi %1, %c0_i32_13 : i32
    %c0_14 = arith.constant 0 : index
    %20 = arith.index_cast %19 : i32 to index
    %c2 = arith.constant 2 : index
    %c0_15 = arith.constant 0 : index
    %21 = vector.load %arg1[%c0_14, %20, %c2, %c0_15] : memref<2x18x18x64xbf16, #tpu.memory_space<vmem>>, vector<2x8x16x64xbf16>
    %22 = vector.shape_cast %21 : vector<2x8x16x64xbf16> to vector<256x64xbf16>
    %c2_16 = arith.constant 2 : index
    %c0_17 = arith.constant 0 : index
    %c0_18 = arith.constant 0 : index
    %23 = vector.load %arg2[%c2_16, %c0_17, %c0_18] : memref<9x64x64xbf16, #tpu.memory_space<vmem>>, vector<1x64x64xbf16>
    %24 = vector.shape_cast %23 : vector<1x64x64xbf16> to vector<64x64xbf16>
    %cst_19 = arith.constant dense<0.000000e+00> : vector<256x64xf32>
    %25 = tpu.matmul %22, %24, %cst_19 {dimension_numbers = #tpu.dot_dimension_numbers<[1], [0], [0], [1], [0, 0, 1, 1], [], []>} : vector<256x64xbf16>, vector<64x64xbf16>, vector<256x64xf32> -> vector<256x64xf32>
    %26 = arith.addf %18, %25 : vector<256x64xf32>
    %c1_i32 = arith.constant 1 : i32
    %27 = arith.addi %1, %c1_i32 : i32
    %c0_20 = arith.constant 0 : index
    %28 = arith.index_cast %27 : i32 to index
    %c0_21 = arith.constant 0 : index
    %c0_22 = arith.constant 0 : index
    %29 = vector.load %arg1[%c0_20, %28, %c0_21, %c0_22] : memref<2x18x18x64xbf16, #tpu.memory_space<vmem>>, vector<2x8x16x64xbf16>
    %30 = vector.shape_cast %29 : vector<2x8x16x64xbf16> to vector<256x64xbf16>
    %c3 = arith.constant 3 : index
    %c0_23 = arith.constant 0 : index
    %c0_24 = arith.constant 0 : index
    %31 = vector.load %arg2[%c3, %c0_23, %c0_24] : memref<9x64x64xbf16, #tpu.memory_space<vmem>>, vector<1x64x64xbf16>
    %32 = vector.shape_cast %31 : vector<1x64x64xbf16> to vector<64x64xbf16>
    %cst_25 = arith.constant dense<0.000000e+00> : vector<256x64xf32>
    %33 = tpu.matmul %30, %32, %cst_25 {dimension_numbers = #tpu.dot_dimension_numbers<[1], [0], [0], [1], [0, 0, 1, 1], [], []>} : vector<256x64xbf16>, vector<64x64xbf16>, vector<256x64xf32> -> vector<256x64xf32>
    %34 = arith.addf %26, %33 : vector<256x64xf32>
    %c1_i32_26 = arith.constant 1 : i32
    %35 = arith.addi %1, %c1_i32_26 : i32
    %c0_27 = arith.constant 0 : index
    %36 = arith.index_cast %35 : i32 to index
    %c1_28 = arith.constant 1 : index
    %c0_29 = arith.constant 0 : index
    %37 = vector.load %arg1[%c0_27, %36, %c1_28, %c0_29] : memref<2x18x18x64xbf16, #tpu.memory_space<vmem>>, vector<2x8x16x64xbf16>
    %38 = vector.shape_cast %37 : vector<2x8x16x64xbf16> to vector<256x64xbf16>
    %c4 = arith.constant 4 : index
    %c0_30 = arith.constant 0 : index
    %c0_31 = arith.constant 0 : index
    %39 = vector.load %arg2[%c4, %c0_30, %c0_31] : memref<9x64x64xbf16, #tpu.memory_space<vmem>>, vector<1x64x64xbf16>
    %40 = vector.shape_cast %39 : vector<1x64x64xbf16> to vector<64x64xbf16>
    %cst_32 = arith.constant dense<0.000000e+00> : vector<256x64xf32>
    %41 = tpu.matmul %38, %40, %cst_32 {dimension_numbers = #tpu.dot_dimension_numbers<[1], [0], [0], [1], [0, 0, 1, 1], [], []>} : vector<256x64xbf16>, vector<64x64xbf16>, vector<256x64xf32> -> vector<256x64xf32>
    %42 = arith.addf %34, %41 : vector<256x64xf32>
    %c1_i32_33 = arith.constant 1 : i32
    %43 = arith.addi %1, %c1_i32_33 : i32
    %c0_34 = arith.constant 0 : index
    %44 = arith.index_cast %43 : i32 to index
    %c2_35 = arith.constant 2 : index
    %c0_36 = arith.constant 0 : index
    %45 = vector.load %arg1[%c0_34, %44, %c2_35, %c0_36] : memref<2x18x18x64xbf16, #tpu.memory_space<vmem>>, vector<2x8x16x64xbf16>
    %46 = vector.shape_cast %45 : vector<2x8x16x64xbf16> to vector<256x64xbf16>
    %c5 = arith.constant 5 : index
    %c0_37 = arith.constant 0 : index
    %c0_38 = arith.constant 0 : index
    %47 = vector.load %arg2[%c5, %c0_37, %c0_38] : memref<9x64x64xbf16, #tpu.memory_space<vmem>>, vector<1x64x64xbf16>
    %48 = vector.shape_cast %47 : vector<1x64x64xbf16> to vector<64x64xbf16>
    %cst_39 = arith.constant dense<0.000000e+00> : vector<256x64xf32>
    %49 = tpu.matmul %46, %48, %cst_39 {dimension_numbers = #tpu.dot_dimension_numbers<[1], [0], [0], [1], [0, 0, 1, 1], [], []>} : vector<256x64xbf16>, vector<64x64xbf16>, vector<256x64xf32> -> vector<256x64xf32>
    %50 = arith.addf %42, %49 : vector<256x64xf32>
    %c2_i32 = arith.constant 2 : i32
    %51 = arith.addi %1, %c2_i32 : i32
    %c0_40 = arith.constant 0 : index
    %52 = arith.index_cast %51 : i32 to index
    %c0_41 = arith.constant 0 : index
    %c0_42 = arith.constant 0 : index
    %53 = vector.load %arg1[%c0_40, %52, %c0_41, %c0_42] : memref<2x18x18x64xbf16, #tpu.memory_space<vmem>>, vector<2x8x16x64xbf16>
    %54 = vector.shape_cast %53 : vector<2x8x16x64xbf16> to vector<256x64xbf16>
    %c6 = arith.constant 6 : index
    %c0_43 = arith.constant 0 : index
    %c0_44 = arith.constant 0 : index
    %55 = vector.load %arg2[%c6, %c0_43, %c0_44] : memref<9x64x64xbf16, #tpu.memory_space<vmem>>, vector<1x64x64xbf16>
    %56 = vector.shape_cast %55 : vector<1x64x64xbf16> to vector<64x64xbf16>
    %cst_45 = arith.constant dense<0.000000e+00> : vector<256x64xf32>
    %57 = tpu.matmul %54, %56, %cst_45 {dimension_numbers = #tpu.dot_dimension_numbers<[1], [0], [0], [1], [0, 0, 1, 1], [], []>} : vector<256x64xbf16>, vector<64x64xbf16>, vector<256x64xf32> -> vector<256x64xf32>
    %58 = arith.addf %50, %57 : vector<256x64xf32>
    %c2_i32_46 = arith.constant 2 : i32
    %59 = arith.addi %1, %c2_i32_46 : i32
    %c0_47 = arith.constant 0 : index
    %60 = arith.index_cast %59 : i32 to index
    %c1_48 = arith.constant 1 : index
    %c0_49 = arith.constant 0 : index
    %61 = vector.load %arg1[%c0_47, %60, %c1_48, %c0_49] : memref<2x18x18x64xbf16, #tpu.memory_space<vmem>>, vector<2x8x16x64xbf16>
    %62 = vector.shape_cast %61 : vector<2x8x16x64xbf16> to vector<256x64xbf16>
    %c7 = arith.constant 7 : index
    %c0_50 = arith.constant 0 : index
    %c0_51 = arith.constant 0 : index
    %63 = vector.load %arg2[%c7, %c0_50, %c0_51] : memref<9x64x64xbf16, #tpu.memory_space<vmem>>, vector<1x64x64xbf16>
    %64 = vector.shape_cast %63 : vector<1x64x64xbf16> to vector<64x64xbf16>
    %cst_52 = arith.constant dense<0.000000e+00> : vector<256x64xf32>
    %65 = tpu.matmul %62, %64, %cst_52 {dimension_numbers = #tpu.dot_dimension_numbers<[1], [0], [0], [1], [0, 0, 1, 1], [], []>} : vector<256x64xbf16>, vector<64x64xbf16>, vector<256x64xf32> -> vector<256x64xf32>
    %66 = arith.addf %58, %65 : vector<256x64xf32>
    %c2_i32_53 = arith.constant 2 : i32
    %67 = arith.addi %1, %c2_i32_53 : i32
    %c0_54 = arith.constant 0 : index
    %68 = arith.index_cast %67 : i32 to index
    %c2_55 = arith.constant 2 : index
    %c0_56 = arith.constant 0 : index
    %69 = vector.load %arg1[%c0_54, %68, %c2_55, %c0_56] : memref<2x18x18x64xbf16, #tpu.memory_space<vmem>>, vector<2x8x16x64xbf16>
    %70 = vector.shape_cast %69 : vector<2x8x16x64xbf16> to vector<256x64xbf16>
    %c8 = arith.constant 8 : index
    %c0_57 = arith.constant 0 : index
    %c0_58 = arith.constant 0 : index
    %71 = vector.load %arg2[%c8, %c0_57, %c0_58] : memref<9x64x64xbf16, #tpu.memory_space<vmem>>, vector<1x64x64xbf16>
    %72 = vector.shape_cast %71 : vector<1x64x64xbf16> to vector<64x64xbf16>
    %cst_59 = arith.constant dense<0.000000e+00> : vector<256x64xf32>
    %73 = tpu.matmul %70, %72, %cst_59 {dimension_numbers = #tpu.dot_dimension_numbers<[1], [0], [0], [1], [0, 0, 1, 1], [], []>} : vector<256x64xbf16>, vector<64x64xbf16>, vector<256x64xf32> -> vector<256x64xf32>
    %74 = arith.addf %66, %73 : vector<256x64xf32>
    %c0_60 = arith.constant 0 : index
    %c0_61 = arith.constant 0 : index
    %75 = vector.load %arg3[%c0_60, %c0_61] : memref<1x64xf32, #tpu.memory_space<vmem>>, vector<1x64xf32>
    %76 = vector.broadcast %75 : vector<1x64xf32> to vector<256x64xf32>
    %77 = arith.mulf %74, %76 : vector<256x64xf32>
    %c0_62 = arith.constant 0 : index
    %c0_63 = arith.constant 0 : index
    %78 = vector.load %arg4[%c0_62, %c0_63] : memref<1x64xf32, #tpu.memory_space<vmem>>, vector<1x64xf32>
    %79 = vector.broadcast %78 : vector<1x64xf32> to vector<256x64xf32>
    %80 = arith.addf %77, %79 : vector<256x64xf32>
    %c0_64 = arith.constant 0 : index
    %c0_65 = arith.constant 0 : index
    %c0_66 = arith.constant 0 : index
    %c0_67 = arith.constant 0 : index
    %81 = vector.load %arg5[%c0_64, %c0_65, %c0_66, %c0_67] : memref<2x8x16x64xf32, #tpu.memory_space<vmem>>, vector<2x8x16x64xf32>
    %82 = vector.shape_cast %81 : vector<2x8x16x64xf32> to vector<256x64xf32>
    %83 = arith.addf %80, %82 : vector<256x64xf32>
    %84 = vector.shape_cast %83 : vector<256x64xf32> to vector<2x8x16x64xf32>
    %c0_68 = arith.constant 0 : index
    %c0_69 = arith.constant 0 : index
    %c0_70 = arith.constant 0 : index
    %c0_71 = arith.constant 0 : index
    %85 = vector.load %arg6[%c0_68, %c0_69, %c0_70, %c0_71] : memref<2x8x16x64xf32, #tpu.memory_space<vmem>>, vector<2x8x16x64xf32>
    tpu.vector_store %arg6[%c0_68, %c0_69, %c0_70, %c0_71], %84 {strides = array<i32>} : memref<2x8x16x64xf32, #tpu.memory_space<vmem>>, vector<2x8x16x64xf32>,
    return
  }
  func.func @transform_0(%arg0: i32) -> (i32, i32, i32, i32) {
    %c0_i32 = arith.constant 0 : i32
    %c0_i32_0 = arith.constant 0 : i32
    %c0_i32_1 = arith.constant 0 : i32
    %c0_i32_2 = arith.constant 0 : i32
    %c0_i32_3 = arith.constant 0 : i32
    return %c0_i32, %c0_i32_0, %c0_i32_1, %c0_i32_2 : i32, i32, i32, i32
  }
  func.func @transform_1(%arg0: i32) -> (i32, i32, i32) {
    %c0_i32 = arith.constant 0 : i32
    %c0_i32_0 = arith.constant 0 : i32
    %c0_i32_1 = arith.constant 0 : i32
    %c0_i32_2 = arith.constant 0 : i32
    return %c0_i32, %c0_i32_0, %c0_i32_1 : i32, i32, i32
  }
  func.func @transform_2(%arg0: i32) -> (i32, i32) {
    %c0_i32 = arith.constant 0 : i32
    %c0_i32_0 = arith.constant 0 : i32
    %c0_i32_1 = arith.constant 0 : i32
    return %c0_i32, %c0_i32_0 : i32, i32
  }
  func.func @transform_3(%arg0: i32) -> (i32, i32) {
    %c0_i32 = arith.constant 0 : i32
    %c0_i32_0 = arith.constant 0 : i32
    %c0_i32_1 = arith.constant 0 : i32
    return %c0_i32, %c0_i32_0 : i32, i32
  }
  func.func @transform_4(%arg0: i32) -> (i32, i32, i32, i32) {
    %c0_i32 = arith.constant 0 : i32
    %c0_i32_0 = arith.constant 0 : i32
    %c0_i32_1 = arith.constant 0 : i32
    %c0_i32_2 = arith.constant 0 : i32
    return %c0_i32, %arg0, %c0_i32_0, %c0_i32_1 : i32, i32, i32, i32
  }
  func.func @transform_5(%arg0: i32) -> (i32, i32, i32, i32) {
    %c0_i32 = arith.constant 0 : i32
    %c0_i32_0 = arith.constant 0 : i32
    %c0_i32_1 = arith.constant 0 : i32
    %c0_i32_2 = arith.constant 0 : i32
    return %c0_i32, %arg0, %c0_i32_0, %c0_i32_1 : i32, i32, i32, i32
  }
}

module attributes {stable_mosaic.version = 11 : i64} {
  func.func @_conv3x3_kernel(%arg0: i32, %arg1: memref<2x18x18x64xbf16, #tpu.memory_space<vmem>>, %arg2: memref<9x64x64xbf16, #tpu.memory_space<vmem>>, %arg3: memref<1x64xf32, #tpu.memory_space<vmem>>, %arg4: memref<1x64xf32, #tpu.memory_space<vmem>>, %arg5: memref<2x8x16x64xbf16, #tpu.memory_space<vmem>>) attributes {dimension_semantics = [#tpu.dimension_semantics<parallel>], iteration_bounds = array<i64: 2>, scalar_prefetch = 0 : i64, scratch_operands = 0 : i64, tpu.core_type = #tpu.core_type<tc>, window_params = [{pipeline_mode = #tpu.pipeline_mode<synchronous>, transform_indices = @transform_0, window_bounds = array<i64: 2, 18, 18, 64>}, {pipeline_mode = #tpu.pipeline_mode<synchronous>, transform_indices = @transform_1, window_bounds = array<i64: 9, 64, 64>}, {pipeline_mode = #tpu.pipeline_mode<synchronous>, transform_indices = @transform_2, window_bounds = array<i64: 1, 64>}, {pipeline_mode = #tpu.pipeline_mode<synchronous>, transform_indices = @transform_3, window_bounds = array<i64: 1, 64>}, {transform_indices = @transform_4, window_bounds = array<i64: 2, 8, 16, 64>}]} {
    %c8_i32 = arith.constant 8 : i32
    %0 = arith.muli %arg0, %c8_i32 : i32
    %1 = tpu.assume_multiple %0, 8 : i32
    %cst = arith.constant 0.000000e+00 : f32
    %2 = vector.broadcast %cst : f32 to vector<256x64xf32>
    %c0_i32 = arith.constant 0 : i32
    %3 = arith.addi %1, %c0_i32 : i32
    %c0 = arith.constant 0 : index
    %4 = arith.index_cast %3 : i32 to index
    %c0_0 = arith.constant 0 : index
    %c0_1 = arith.constant 0 : index
    %5 = vector.load %arg1[%c0, %4, %c0_0, %c0_1] : memref<2x18x18x64xbf16, #tpu.memory_space<vmem>>, vector<2x8x16x64xbf16>
    %6 = vector.shape_cast %5 : vector<2x8x16x64xbf16> to vector<256x64xbf16>
    %c0_2 = arith.constant 0 : index
    %c0_3 = arith.constant 0 : index
    %c0_4 = arith.constant 0 : index
    %7 = vector.load %arg2[%c0_2, %c0_3, %c0_4] : memref<9x64x64xbf16, #tpu.memory_space<vmem>>, vector<1x64x64xbf16>
    %8 = vector.shape_cast %7 : vector<1x64x64xbf16> to vector<64x64xbf16>
    %cst_5 = arith.constant dense<0.000000e+00> : vector<256x64xf32>
    %9 = tpu.matmul %6, %8, %cst_5 {dimension_numbers = #tpu.dot_dimension_numbers<[1], [0], [0], [1], [0, 0, 1, 1], [], []>} : vector<256x64xbf16>, vector<64x64xbf16>, vector<256x64xf32> -> vector<256x64xf32>
    %10 = arith.addf %2, %9 : vector<256x64xf32>
    %c0_i32_6 = arith.constant 0 : i32
    %11 = arith.addi %1, %c0_i32_6 : i32
    %c0_7 = arith.constant 0 : index
    %12 = arith.index_cast %11 : i32 to index
    %c1 = arith.constant 1 : index
    %c0_8 = arith.constant 0 : index
    %13 = vector.load %arg1[%c0_7, %12, %c1, %c0_8] : memref<2x18x18x64xbf16, #tpu.memory_space<vmem>>, vector<2x8x16x64xbf16>
    %14 = vector.shape_cast %13 : vector<2x8x16x64xbf16> to vector<256x64xbf16>
    %c1_9 = arith.constant 1 : index
    %c0_10 = arith.constant 0 : index
    %c0_11 = arith.constant 0 : index
    %15 = vector.load %arg2[%c1_9, %c0_10, %c0_11] : memref<9x64x64xbf16, #tpu.memory_space<vmem>>, vector<1x64x64xbf16>
    %16 = vector.shape_cast %15 : vector<1x64x64xbf16> to vector<64x64xbf16>
    %cst_12 = arith.constant dense<0.000000e+00> : vector<256x64xf32>
    %17 = tpu.matmul %14, %16, %cst_12 {dimension_numbers = #tpu.dot_dimension_numbers<[1], [0], [0], [1], [0, 0, 1, 1], [], []>} : vector<256x64xbf16>, vector<64x64xbf16>, vector<256x64xf32> -> vector<256x64xf32>
    %18 = arith.addf %10, %17 : vector<256x64xf32>
    %c0_i32_13 = arith.constant 0 : i32
    %19 = arith.addi %1, %c0_i32_13 : i32
    %c0_14 = arith.constant 0 : index
    %20 = arith.index_cast %19 : i32 to index
    %c2 = arith.constant 2 : index
    %c0_15 = arith.constant 0 : index
    %21 = vector.load %arg1[%c0_14, %20, %c2, %c0_15] : memref<2x18x18x64xbf16, #tpu.memory_space<vmem>>, vector<2x8x16x64xbf16>
    %22 = vector.shape_cast %21 : vector<2x8x16x64xbf16> to vector<256x64xbf16>
    %c2_16 = arith.constant 2 : index
    %c0_17 = arith.constant 0 : index
    %c0_18 = arith.constant 0 : index
    %23 = vector.load %arg2[%c2_16, %c0_17, %c0_18] : memref<9x64x64xbf16, #tpu.memory_space<vmem>>, vector<1x64x64xbf16>
    %24 = vector.shape_cast %23 : vector<1x64x64xbf16> to vector<64x64xbf16>
    %cst_19 = arith.constant dense<0.000000e+00> : vector<256x64xf32>
    %25 = tpu.matmul %22, %24, %cst_19 {dimension_numbers = #tpu.dot_dimension_numbers<[1], [0], [0], [1], [0, 0, 1, 1], [], []>} : vector<256x64xbf16>, vector<64x64xbf16>, vector<256x64xf32> -> vector<256x64xf32>
    %26 = arith.addf %18, %25 : vector<256x64xf32>
    %c1_i32 = arith.constant 1 : i32
    %27 = arith.addi %1, %c1_i32 : i32
    %c0_20 = arith.constant 0 : index
    %28 = arith.index_cast %27 : i32 to index
    %c0_21 = arith.constant 0 : index
    %c0_22 = arith.constant 0 : index
    %29 = vector.load %arg1[%c0_20, %28, %c0_21, %c0_22] : memref<2x18x18x64xbf16, #tpu.memory_space<vmem>>, vector<2x8x16x64xbf16>
    %30 = vector.shape_cast %29 : vector<2x8x16x64xbf16> to vector<256x64xbf16>
    %c3 = arith.constant 3 : index
    %c0_23 = arith.constant 0 : index
    %c0_24 = arith.constant 0 : index
    %31 = vector.load %arg2[%c3, %c0_23, %c0_24] : memref<9x64x64xbf16, #tpu.memory_space<vmem>>, vector<1x64x64xbf16>
    %32 = vector.shape_cast %31 : vector<1x64x64xbf16> to vector<64x64xbf16>
    %cst_25 = arith.constant dense<0.000000e+00> : vector<256x64xf32>
    %33 = tpu.matmul %30, %32, %cst_25 {dimension_numbers = #tpu.dot_dimension_numbers<[1], [0], [0], [1], [0, 0, 1, 1], [], []>} : vector<256x64xbf16>, vector<64x64xbf16>, vector<256x64xf32> -> vector<256x64xf32>
    %34 = arith.addf %26, %33 : vector<256x64xf32>
    %c1_i32_26 = arith.constant 1 : i32
    %35 = arith.addi %1, %c1_i32_26 : i32
    %c0_27 = arith.constant 0 : index
    %36 = arith.index_cast %35 : i32 to index
    %c1_28 = arith.constant 1 : index
    %c0_29 = arith.constant 0 : index
    %37 = vector.load %arg1[%c0_27, %36, %c1_28, %c0_29] : memref<2x18x18x64xbf16, #tpu.memory_space<vmem>>, vector<2x8x16x64xbf16>
    %38 = vector.shape_cast %37 : vector<2x8x16x64xbf16> to vector<256x64xbf16>
    %c4 = arith.constant 4 : index
    %c0_30 = arith.constant 0 : index
    %c0_31 = arith.constant 0 : index
    %39 = vector.load %arg2[%c4, %c0_30, %c0_31] : memref<9x64x64xbf16, #tpu.memory_space<vmem>>, vector<1x64x64xbf16>
    %40 = vector.shape_cast %39 : vector<1x64x64xbf16> to vector<64x64xbf16>
    %cst_32 = arith.constant dense<0.000000e+00> : vector<256x64xf32>
    %41 = tpu.matmul %38, %40, %cst_32 {dimension_numbers = #tpu.dot_dimension_numbers<[1], [0], [0], [1], [0, 0, 1, 1], [], []>} : vector<256x64xbf16>, vector<64x64xbf16>, vector<256x64xf32> -> vector<256x64xf32>
    %42 = arith.addf %34, %41 : vector<256x64xf32>
    %c1_i32_33 = arith.constant 1 : i32
    %43 = arith.addi %1, %c1_i32_33 : i32
    %c0_34 = arith.constant 0 : index
    %44 = arith.index_cast %43 : i32 to index
    %c2_35 = arith.constant 2 : index
    %c0_36 = arith.constant 0 : index
    %45 = vector.load %arg1[%c0_34, %44, %c2_35, %c0_36] : memref<2x18x18x64xbf16, #tpu.memory_space<vmem>>, vector<2x8x16x64xbf16>
    %46 = vector.shape_cast %45 : vector<2x8x16x64xbf16> to vector<256x64xbf16>
    %c5 = arith.constant 5 : index
    %c0_37 = arith.constant 0 : index
    %c0_38 = arith.constant 0 : index
    %47 = vector.load %arg2[%c5, %c0_37, %c0_38] : memref<9x64x64xbf16, #tpu.memory_space<vmem>>, vector<1x64x64xbf16>
    %48 = vector.shape_cast %47 : vector<1x64x64xbf16> to vector<64x64xbf16>
    %cst_39 = arith.constant dense<0.000000e+00> : vector<256x64xf32>
    %49 = tpu.matmul %46, %48, %cst_39 {dimension_numbers = #tpu.dot_dimension_numbers<[1], [0], [0], [1], [0, 0, 1, 1], [], []>} : vector<256x64xbf16>, vector<64x64xbf16>, vector<256x64xf32> -> vector<256x64xf32>
    %50 = arith.addf %42, %49 : vector<256x64xf32>
    %c2_i32 = arith.constant 2 : i32
    %51 = arith.addi %1, %c2_i32 : i32
    %c0_40 = arith.constant 0 : index
    %52 = arith.index_cast %51 : i32 to index
    %c0_41 = arith.constant 0 : index
    %c0_42 = arith.constant 0 : index
    %53 = vector.load %arg1[%c0_40, %52, %c0_41, %c0_42] : memref<2x18x18x64xbf16, #tpu.memory_space<vmem>>, vector<2x8x16x64xbf16>
    %54 = vector.shape_cast %53 : vector<2x8x16x64xbf16> to vector<256x64xbf16>
    %c6 = arith.constant 6 : index
    %c0_43 = arith.constant 0 : index
    %c0_44 = arith.constant 0 : index
    %55 = vector.load %arg2[%c6, %c0_43, %c0_44] : memref<9x64x64xbf16, #tpu.memory_space<vmem>>, vector<1x64x64xbf16>
    %56 = vector.shape_cast %55 : vector<1x64x64xbf16> to vector<64x64xbf16>
    %cst_45 = arith.constant dense<0.000000e+00> : vector<256x64xf32>
    %57 = tpu.matmul %54, %56, %cst_45 {dimension_numbers = #tpu.dot_dimension_numbers<[1], [0], [0], [1], [0, 0, 1, 1], [], []>} : vector<256x64xbf16>, vector<64x64xbf16>, vector<256x64xf32> -> vector<256x64xf32>
    %58 = arith.addf %50, %57 : vector<256x64xf32>
    %c2_i32_46 = arith.constant 2 : i32
    %59 = arith.addi %1, %c2_i32_46 : i32
    %c0_47 = arith.constant 0 : index
    %60 = arith.index_cast %59 : i32 to index
    %c1_48 = arith.constant 1 : index
    %c0_49 = arith.constant 0 : index
    %61 = vector.load %arg1[%c0_47, %60, %c1_48, %c0_49] : memref<2x18x18x64xbf16, #tpu.memory_space<vmem>>, vector<2x8x16x64xbf16>
    %62 = vector.shape_cast %61 : vector<2x8x16x64xbf16> to vector<256x64xbf16>
    %c7 = arith.constant 7 : index
    %c0_50 = arith.constant 0 : index
    %c0_51 = arith.constant 0 : index
    %63 = vector.load %arg2[%c7, %c0_50, %c0_51] : memref<9x64x64xbf16, #tpu.memory_space<vmem>>, vector<1x64x64xbf16>
    %64 = vector.shape_cast %63 : vector<1x64x64xbf16> to vector<64x64xbf16>
    %cst_52 = arith.constant dense<0.000000e+00> : vector<256x64xf32>
    %65 = tpu.matmul %62, %64, %cst_52 {dimension_numbers = #tpu.dot_dimension_numbers<[1], [0], [0], [1], [0, 0, 1, 1], [], []>} : vector<256x64xbf16>, vector<64x64xbf16>, vector<256x64xf32> -> vector<256x64xf32>
    %66 = arith.addf %58, %65 : vector<256x64xf32>
    %c2_i32_53 = arith.constant 2 : i32
    %67 = arith.addi %1, %c2_i32_53 : i32
    %c0_54 = arith.constant 0 : index
    %68 = arith.index_cast %67 : i32 to index
    %c2_55 = arith.constant 2 : index
    %c0_56 = arith.constant 0 : index
    %69 = vector.load %arg1[%c0_54, %68, %c2_55, %c0_56] : memref<2x18x18x64xbf16, #tpu.memory_space<vmem>>, vector<2x8x16x64xbf16>
    %70 = vector.shape_cast %69 : vector<2x8x16x64xbf16> to vector<256x64xbf16>
    %c8 = arith.constant 8 : index
    %c0_57 = arith.constant 0 : index
    %c0_58 = arith.constant 0 : index
    %71 = vector.load %arg2[%c8, %c0_57, %c0_58] : memref<9x64x64xbf16, #tpu.memory_space<vmem>>, vector<1x64x64xbf16>
    %72 = vector.shape_cast %71 : vector<1x64x64xbf16> to vector<64x64xbf16>
    %cst_59 = arith.constant dense<0.000000e+00> : vector<256x64xf32>
    %73 = tpu.matmul %70, %72, %cst_59 {dimension_numbers = #tpu.dot_dimension_numbers<[1], [0], [0], [1], [0, 0, 1, 1], [], []>} : vector<256x64xbf16>, vector<64x64xbf16>, vector<256x64xf32> -> vector<256x64xf32>
    %74 = arith.addf %66, %73 : vector<256x64xf32>
    %c0_60 = arith.constant 0 : index
    %c0_61 = arith.constant 0 : index
    %75 = vector.load %arg3[%c0_60, %c0_61] : memref<1x64xf32, #tpu.memory_space<vmem>>, vector<1x64xf32>
    %76 = vector.broadcast %75 : vector<1x64xf32> to vector<256x64xf32>
    %77 = arith.mulf %74, %76 : vector<256x64xf32>
    %c0_62 = arith.constant 0 : index
    %c0_63 = arith.constant 0 : index
    %78 = vector.load %arg4[%c0_62, %c0_63] : memref<1x64xf32, #tpu.memory_space<vmem>>, vector<1x64xf32>
    %79 = vector.broadcast %78 : vector<1x64xf32> to vector<256x64xf32>
    %80 = arith.addf %77, %79 : vector<256x64xf32>
    %cst_64 = arith.constant 0.000000e+00 : f32
    %81 = vector.broadcast %cst_64 : f32 to vector<256x64xf32>
    %82 = arith.maximumf %80, %81 : vector<256x64xf32>
    %83 = vector.shape_cast %82 : vector<256x64xf32> to vector<2x8x16x64xf32>
    %84 = arith.truncf %83 : vector<2x8x16x64xf32> to vector<2x8x16x64xbf16>
    %c0_65 = arith.constant 0 : index
    %c0_66 = arith.constant 0 : index
    %c0_67 = arith.constant 0 : index
    %c0_68 = arith.constant 0 : index
    %85 = vector.load %arg5[%c0_65, %c0_66, %c0_67, %c0_68] : memref<2x8x16x64xbf16, #tpu.memory_space<vmem>>, vector<2x8x16x64xbf16>
    tpu.vector_store %arg5[%c0_65, %c0_66, %c0_67, %c0_68], %84 {strides = array<i32>} : memref<2x8x16x64xbf16, #tpu.memory_space<vmem>>, vector<2x8x16x64xbf16>,
    return
  }
  func.func @transform_0(%arg0: i32) -> (i32, i32, i32, i32) {
    %c0_i32 = arith.constant 0 : i32
    %c0_i32_0 = arith.constant 0 : i32
    %c0_i32_1 = arith.constant 0 : i32
    %c0_i32_2 = arith.constant 0 : i32
    %c0_i32_3 = arith.constant 0 : i32
    return %c0_i32, %c0_i32_0, %c0_i32_1, %c0_i32_2 : i32, i32, i32, i32
  }
  func.func @transform_1(%arg0: i32) -> (i32, i32, i32) {
    %c0_i32 = arith.constant 0 : i32
    %c0_i32_0 = arith.constant 0 : i32
    %c0_i32_1 = arith.constant 0 : i32
    %c0_i32_2 = arith.constant 0 : i32
    return %c0_i32, %c0_i32_0, %c0_i32_1 : i32, i32, i32
  }
  func.func @transform_2(%arg0: i32) -> (i32, i32) {
    %c0_i32 = arith.constant 0 : i32
    %c0_i32_0 = arith.constant 0 : i32
    %c0_i32_1 = arith.constant 0 : i32
    return %c0_i32, %c0_i32_0 : i32, i32
  }
  func.func @transform_3(%arg0: i32) -> (i32, i32) {
    %c0_i32 = arith.constant 0 : i32
    %c0_i32_0 = arith.constant 0 : i32
    %c0_i32_1 = arith.constant 0 : i32
    return %c0_i32, %c0_i32_0 : i32, i32
  }
  func.func @transform_4(%arg0: i32) -> (i32, i32, i32, i32) {
    %c0_i32 = arith.constant 0 : i32
    %c0_i32_0 = arith.constant 0 : i32
    %c0_i32_1 = arith.constant 0 : i32
    %c0_i32_2 = arith.constant 0 : i32
    return %c0_i32, %arg0, %c0_i32_0, %c0_i32_1 : i32, i32, i32, i32
  }
}

</mosaic_0001>

<llo_original>
// kernel: residual_block_bn_forward.3
$region0: #{residual_block_bn_forward.3}
  #allocation0 [shape = 'u32[]', space=smem, size = 0x4, offset = 0x4, fixed_abs, tag = 'smem constant byte address 0x4 - core index']
  #allocation1 [shape = 'u32[144,128]{1,0:T(1,128)}', space=vmem, size = 0x12000, scoped, tag = 'internal scratch']
  #allocation5 [shape = 's32[]', space=sflag, size = 0x4, offset = 0, fixed_abs, tag = 'sflag constant byte address 0x0 - dummy sync flag']
  %s0 = inlined_call_operand.vmem [shape: bf16[2,18,18,64], index: 0, kind: input, shape index: {}]
  %s1 = inlined_call_operand.vmem [shape: bf16[9,64,64], index: 1, kind: input, shape index: {}]
  %s2 = inlined_call_operand.vmem [shape: f32[1,64], index: 2, kind: input, shape index: {}]
  %s3 = inlined_call_operand.vmem [shape: f32[1,64], index: 3, kind: input, shape index: {}]
  %s4 = inlined_call_operand.vmem [shape: f32[2,16,16,64], index: 4, kind: input, shape index: {}]
  %s5 = inlined_call_operand.hbm [shape: f32[2,16,16,64], index: 5, kind: output, shape index: {}]
  %s6 = sld [smem:[#allocation0]]
  $region91: #{residual_block_bn_forward.3} parent=0
    _
  %s8 = ssub.s32 1, %s6
  %s9 = scalar_select 0, %s8, %s6
  $region1: #{residual_block_bn_forward.3} parent=0
    #allocation2 [shape = 'u8[262144]{0}', space=vmem, size = 0x40000, scoped, tag = 'input window, operand 4']
    #allocation3 [shape = 'u8[262144]{0}', space=vmem, size = 0x40000, scoped, tag = 'output window, operand 0']
    #allocation4 [shape = 's32[2]{0}', space=sflag, size = 0x8, scoped, tag = 'scoped memory for residual_block_bn_forward.3']
    %10 = vsyncpa [#allocation4], 0
    %s11 = scalar_lea.sflag [#allocation4], 1
    %12 = vsyncpa %s11, 0
    loop: start=0, step=1, limit=4
    $region2: #{residual_block_bn_forward.3} parent=1 // loop_pre_header
      _
    $region3: #{residual_block_bn_forward.3} parent=1 // loop_header
      %s14 = sphi 0, %s18
      %p15 = scmp.ge.s32.totalorder %s14, 4
      %s22 = sphi 0, %s22
      %s24 = sphi 0, %s22
      %s25 = sphi 0, %s24
      %s39 = sphi 0, %s25
      %s43 = sphi 0, %s43
      %s45 = sphi 0, %s43
      %s46 = sphi 0, %s45
      %s60 = sphi 0, %s46
      %s64 = sphi 0, %s64
      %s66 = sphi 0, %s64
      %s67 = sphi 0, %s66
      %s81 = sphi 0, %s67
      %s85 = sphi 0, %s85
      %s87 = sphi 0, %s85
      %s88 = sphi 0, %s87
      %s102 = sphi 0, %s88
      %s108 = sphi 0, %s110
      %s111 = sphi 0, %s108
      %s112 = sphi 0, %s111
      %s128 = sphi 0, %s112
      %s134 = sphi 0, %s136
      %s137 = sphi 0, %s134
      %s138 = sphi 0, %s137
      %s154 = sphi 0, %s138
    $region4: #{residual_block_bn_forward.3} parent=1 // loop_header_branch
      %17 = sbr.rel (%p15) target = $region8
    $region5: #{residual_block_bn_forward.3} parent=1 // loop_body
      %s19 = ssub.s32 %s14, 1
      %s20 = ssub.s32 %s14, 2
      %s21 = sadd.s32 %s14, 1
      %s23 = sadd.s32 %s22, 1
      %p26 = scmp.eq.s32.totalorder %s14, 1
      %p27 = scmp.ne.s32.totalorder %s22, %s24
      %p28 = scmp.eq.s32.totalorder %s14, 0
      %p29 = por %p27, %p28
      %p30 = scmp.ne.s32.totalorder %s22, %s24
      %p31 = scmp.eq.s32.totalorder %s19, 1
      %p32 = por %p30, %p31
      %p33 = scmp.ne.s32.totalorder %s24, %s25
      %p34 = scmp.eq.s32.totalorder %s19, 0
      %p35 = por %p33, %p34
      %p36 = scmp.ne.s32.totalorder %s24, %s25
      %p37 = scmp.eq.s32.totalorder %s20, 1
      %p38 = por %p36, %p37
      %p40 = scmp.ne.s32.totalorder %s25, %s39
      %p41 = scmp.eq.s32.totalorder %s20, 0
      %p42 = por %p40, %p41
      %s44 = sadd.s32 %s43, 1
      %p47 = scmp.eq.s32.totalorder %s14, 1
      %p48 = scmp.ne.s32.totalorder %s43, %s45
      %p49 = scmp.eq.s32.totalorder %s14, 0
      %p50 = por %p48, %p49
      %p51 = scmp.ne.s32.totalorder %s43, %s45
      %p52 = scmp.eq.s32.totalorder %s19, 1
      %p53 = por %p51, %p52
      %p54 = scmp.ne.s32.totalorder %s45, %s46
      %p55 = scmp.eq.s32.totalorder %s19, 0
      %p56 = por %p54, %p55
      %p57 = scmp.ne.s32.totalorder %s45, %s46
      %p58 = scmp.eq.s32.totalorder %s20, 1
      %p59 = por %p57, %p58
      %p61 = scmp.ne.s32.totalorder %s46, %s60
      %p62 = scmp.eq.s32.totalorder %s20, 0
      %p63 = por %p61, %p62
      %s65 = sadd.s32 %s64, 1
      %p68 = scmp.eq.s32.totalorder %s14, 1
      %p69 = scmp.ne.s32.totalorder %s64, %s66
      %p70 = scmp.eq.s32.totalorder %s14, 0
      %p71 = por %p69, %p70
      %p72 = scmp.ne.s32.totalorder %s64, %s66
      %p73 = scmp.eq.s32.totalorder %s19, 1
      %p74 = por %p72, %p73
      %p75 = scmp.ne.s32.totalorder %s66, %s67
      %p76 = scmp.eq.s32.totalorder %s19, 0
      %p77 = por %p75, %p76
      %p78 = scmp.ne.s32.totalorder %s66, %s67
      %p79 = scmp.eq.s32.totalorder %s20, 1
      %p80 = por %p78, %p79
      %p82 = scmp.ne.s32.totalorder %s67, %s81
      %p83 = scmp.eq.s32.totalorder %s20, 0
      %p84 = por %p82, %p83
      %s86 = sadd.s32 %s85, 1
      %p89 = scmp.eq.s32.totalorder %s14, 1
      %p90 = scmp.ne.s32.totalorder %s85, %s87
      %p91 = scmp.eq.s32.totalorder %s14, 0
      %p92 = por %p90, %p91
      %p93 = scmp.ne.s32.totalorder %s85, %s87
      %p94 = scmp.eq.s32.totalorder %s19, 1
      %p95 = por %p93, %p94
      %p96 = scmp.ne.s32.totalorder %s87, %s88
      %p97 = scmp.eq.s32.totalorder %s19, 0
      %p98 = por %p96, %p97
      %p99 = scmp.ne.s32.totalorder %s87, %s88
      %p100 = scmp.eq.s32.totalorder %s20, 1
      %p101 = por %p99, %p100
      %p103 = scmp.ne.s32.totalorder %s88, %s102
      %p104 = scmp.eq.s32.totalorder %s20, 0
      %p105 = por %p103, %p104
      %s106 = ssub.s32 %s14, %s21
      %p107 = scmp.eq.s32.totalorder %s106, 0
      %s109 = sadd.s32 %s108, 1
      %s110 = scalar_select %p107, %s108, %s109
      %p113 = pneg %p107
      %p114 = scmp.eq.s32.totalorder %s14, 1
      %p115 = por %p113, %p114
      %p116 = scmp.ne.s32.totalorder %s108, %s111
      %p117 = scmp.eq.s32.totalorder %s14, 0
      %p118 = por %p116, %p117
      %p119 = scmp.ne.s32.totalorder %s108, %s111
      %p120 = scmp.eq.s32.totalorder %s19, 1
      %p121 = por %p119, %p120
      %p122 = scmp.ne.s32.totalorder %s111, %s112
      %p123 = scmp.eq.s32.totalorder %s19, 0
      %p124 = por %p122, %p123
      %p125 = scmp.ne.s32.totalorder %s111, %s112
      %p126 = scmp.eq.s32.totalorder %s20, 1
      %p127 = por %p125, %p126
      %p129 = scmp.ne.s32.totalorder %s112, %s128
      %p130 = scmp.eq.s32.totalorder %s20, 0
      %p131 = por %p129, %p130
      %s132 = ssub.s32 %s14, %s21
      %p133 = scmp.eq.s32.totalorder %s132, 0
      %s135 = sadd.s32 %s134, 1
      %s136 = scalar_select %p133, %s134, %s135
      %p139 = pneg %p133
      %p140 = scmp.eq.s32.totalorder %s14, 1
      %p141 = por %p139, %p140
      %p142 = scmp.ne.s32.totalorder %s134, %s137
      %p143 = scmp.eq.s32.totalorder %s14, 0
      %p144 = por %p142, %p143
      %p145 = scmp.ne.s32.totalorder %s134, %s137
      %p146 = scmp.eq.s32.totalorder %s19, 1
      %p147 = por %p145, %p146
      %p148 = scmp.ne.s32.totalorder %s137, %s138
      %p149 = scmp.eq.s32.totalorder %s19, 0
      %p150 = por %p148, %p149
      %p151 = scmp.ne.s32.totalorder %s137, %s138
      %p152 = scmp.eq.s32.totalorder %s20, 1
      %p153 = por %p151, %p152
      %p155 = scmp.ne.s32.totalorder %s138, %s154
      %p156 = scmp.eq.s32.totalorder %s20, 0
      %p157 = por %p155, %p156
      %p158 = scmp.le.s32.totalorder 1, %s14
      %p159 = scmp.lt.s32.totalorder %s14, 3
      %p160 = pnand %p158, %p159
      %p161 = pneg %p160
      // Predicated region
      $region9: #{residual_block_bn_forward.3} parent=5 // pred_check
        _
      $region10: #{residual_block_bn_forward.3} parent=5 // pred_check_branch
        %163 = sbr.rel (%p160) target = $region12
      $region11: #{residual_block_bn_forward.3} parent=5 // pred_region
        %s164 = ssub.s32 %s14, 1
        // Predicated region
        $region13: #{residual_block_bn_forward.3} parent=11 // pred_check
          %p165 = pneg %p35
        $region14: #{residual_block_bn_forward.3} parent=11 // pred_check_branch
          %167 = sbr.rel (%p165) target = $region16
        $region15: #{residual_block_bn_forward.3} parent=11 // pred_region
          _
        $region16: #{residual_block_bn_forward.3} parent=11 // pred_fallthru
          _
        // Predicated region
        $region17: #{residual_block_bn_forward.3} parent=11 // pred_check
          %p168 = pneg %p56
        $region18: #{residual_block_bn_forward.3} parent=11 // pred_check_branch
          %170 = sbr.rel (%p168) target = $region20
        $region19: #{residual_block_bn_forward.3} parent=11 // pred_region
          _
        $region20: #{residual_block_bn_forward.3} parent=11 // pred_fallthru
          _
        // Predicated region
        $region21: #{residual_block_bn_forward.3} parent=11 // pred_check
          %p171 = pneg %p77
        $region22: #{residual_block_bn_forward.3} parent=11 // pred_check_branch
          %173 = sbr.rel (%p171) target = $region24
        $region23: #{residual_block_bn_forward.3} parent=11 // pred_region
          _
        $region24: #{residual_block_bn_forward.3} parent=11 // pred_fallthru
          _
        // Predicated region
        $region25: #{residual_block_bn_forward.3} parent=11 // pred_check
          %p174 = pneg %p98
        $region26: #{residual_block_bn_forward.3} parent=11 // pred_check_branch
          %176 = sbr.rel (%p174) target = $region28
        $region27: #{residual_block_bn_forward.3} parent=11 // pred_region
          _
        $region28: #{residual_block_bn_forward.3} parent=11 // pred_fallthru
          _
      $region12: #{residual_block_bn_forward.3} parent=5 // pred_fallthru
        _
      %p177 = scmp.lt.s32.totalorder %s14, 2
      // Predicated region
      $region29: #{residual_block_bn_forward.3} parent=5 // pred_check
        %p178 = pneg %p177
      $region30: #{residual_block_bn_forward.3} parent=5 // pred_check_branch
        %180 = sbr.rel (%p178) target = $region32
      $region31: #{residual_block_bn_forward.3} parent=5 // pred_region
        // Predicated region
        $region33: #{residual_block_bn_forward.3} parent=31 // pred_check
          %p181 = pneg %p118
        $region34: #{residual_block_bn_forward.3} parent=31 // pred_check_branch
          %183 = sbr.rel (%p181) target = $region36
        $region35: #{residual_block_bn_forward.3} parent=31 // pred_region
          %s184 = sand.u32 %s108, 1
          %s185 = sand.u32 %s108, 1
          %s186 = smul.addr %s185, 256
          %s187 = scalar_lea.vmem [#allocation2], %s186
          %s188 = smul.u32 8, %s14
          %s189 = smul.addr %s188, 2
          %s190 = smul.addr %s189, 8
          %s191 = scalar_lea.vmem %s4, %s190
          // Predicated region
          $region37: #{residual_block_bn_forward.3} parent=35 // pred_check
            _
          $region38: #{residual_block_bn_forward.3} parent=35 // pred_check_branch
            %193 = sbr.rel (0) target = $region40
          $region39: #{residual_block_bn_forward.3} parent=35 // pred_region
            // Predicated region
            $region41: #{residual_block_bn_forward.3} parent=39 // pred_check
              _
            $region42: #{residual_block_bn_forward.3} parent=39 // pred_check_branch
              %195 = sbr.rel (0) target = $region44
            $region43: #{residual_block_bn_forward.3} parent=39 // pred_region
              // Predicated region
              $region56: #{residual_block_bn_forward.3} parent=43 // pred_check
                _
              $region57: #{residual_block_bn_forward.3} parent=43 // pred_check_branch
                %273 = sbr.rel (0) target = $region59
              $region58: #{residual_block_bn_forward.3} parent=43 // pred_region
                loop: start=0, step=1, limit=1
                $region60: #{residual_block_bn_forward.3} parent=58 // loop_pre_header
                  _
                $region61: #{residual_block_bn_forward.3} parent=58 // loop_header
                  %s275 = sphi 0, %s279
                  %p276 = scmp.ge.s32.totalorder %s275, 1
                  %s280 = sphi %s191, %s191
                  %s281 = sphi %s187, %s187
                $region62: #{residual_block_bn_forward.3} parent=58 // loop_header_branch
                  %278 = sbr.rel (%p276) target = $region66
                $region63: #{residual_block_bn_forward.3} parent=58 // loop_body
                  %v282 = vld [vmem:[%s280] sm:$0xff]
                  %283 = vst [vmem:[%s281] sm:$0xff] %v282
                  %v284 = vld [vmem:[%s280 + $0x8] sm:$0xff]
                  %285 = vst [vmem:[%s281 + $0x8] sm:$0xff] %v284
                  %v286 = vld [vmem:[%s280 + $0x10] sm:$0xff]
                  %287 = vst [vmem:[%s281 + $0x10] sm:$0xff] %v286
                  %v288 = vld [vmem:[%s280 + $0x18] sm:$0xff]
                  %289 = vst [vmem:[%s281 + $0x18] sm:$0xff] %v288
                  %v290 = vld [vmem:[%s280 + $0x20] sm:$0xff]
                  %291 = vst [vmem:[%s281 + $0x20] sm:$0xff] %v290
                  %v292 = vld [vmem:[%s280 + $0x28] sm:$0xff]
                  %293 = vst [vmem:[%s281 + $0x28] sm:$0xff] %v292
                  %v294 = vld [vmem:[%s280 + $0x30] sm:$0xff]
                  %295 = vst [vmem:[%s281 + $0x30] sm:$0xff] %v294
                  %v296 = vld [vmem:[%s280 + $0x38] sm:$0xff]
                  %297 = vst [vmem:[%s281 + $0x38] sm:$0xff] %v296
                  %v298 = vld [vmem:[%s280 + $0x40] sm:$0xff]
                  %299 = vst [vmem:[%s281 + $0x40] sm:$0xff] %v298
                  %v300 = vld [vmem:[%s280 + $0x48] sm:$0xff]
                  %301 = vst [vmem:[%s281 + $0x48] sm:$0xff] %v300
                  %v302 = vld [vmem:[%s280 + $0x50] sm:$0xff]
                  %303 = vst [vmem:[%s281 + $0x50] sm:$0xff] %v302
                  %v304 = vld [vmem:[%s280 + $0x58] sm:$0xff]
                  %305 = vst [vmem:[%s281 + $0x58] sm:$0xff] %v304
                  %v306 = vld [vmem:[%s280 + $0x60] sm:$0xff]
                  %307 = vst [vmem:[%s281 + $0x60] sm:$0xff] %v306
                  %v308 = vld [vmem:[%s280 + $0x68] sm:$0xff]
                  %309 = vst [vmem:[%s281 + $0x68] sm:$0xff] %v308
                  %v310 = vld [vmem:[%s280 + $0x70] sm:$0xff]
                  %311 = vst [vmem:[%s281 + $0x70] sm:$0xff] %v310
                  %v312 = vld [vmem:[%s280 + $0x78] sm:$0xff]
                  %313 = vst [vmem:[%s281 + $0x78] sm:$0xff] %v312
                  %v314 = vld [vmem:[%s280 + $0x100] sm:$0xff]
                  %315 = vst [vmem:[%s281 + $0x80] sm:$0xff] %v314
                  %v316 = vld [vmem:[%s280 + $0x108] sm:$0xff]
                  %317 = vst [vmem:[%s281 + $0x88] sm:$0xff] %v316
                  %v318 = vld [vmem:[%s280 + $0x110] sm:$0xff]
                  %319 = vst [vmem:[%s281 + $0x90] sm:$0xff] %v318
                  %v320 = vld [vmem:[%s280 + $0x118] sm:$0xff]
                  %321 = vst [vmem:[%s281 + $0x98] sm:$0xff] %v320
                  %v322 = vld [vmem:[%s280 + $0x120] sm:$0xff]
                  %323 = vst [vmem:[%s281 + $0xa0] sm:$0xff] %v322
                  %v324 = vld [vmem:[%s280 + $0x128] sm:$0xff]
                  %325 = vst [vmem:[%s281 + $0xa8] sm:$0xff] %v324
                  %v326 = vld [vmem:[%s280 + $0x130] sm:$0xff]
                  %327 = vst [vmem:[%s281 + $0xb0] sm:$0xff] %v326
                  %v328 = vld [vmem:[%s280 + $0x138] sm:$0xff]
                  %329 = vst [vmem:[%s281 + $0xb8] sm:$0xff] %v328
                  %v330 = vld [vmem:[%s280 + $0x140] sm:$0xff]
                  %331 = vst [vmem:[%s281 + $0xc0] sm:$0xff] %v330
                  %v332 = vld [vmem:[%s280 + $0x148] sm:$0xff]
                  %333 = vst [vmem:[%s281 + $0xc8] sm:$0xff] %v332
                  %v334 = vld [vmem:[%s280 + $0x150] sm:$0xff]
                  %335 = vst [vmem:[%s281 + $0xd0] sm:$0xff] %v334
                  %v336 = vld [vmem:[%s280 + $0x158] sm:$0xff]
                  %337 = vst [vmem:[%s281 + $0xd8] sm:$0xff] %v336
                  %v338 = vld [vmem:[%s280 + $0x160] sm:$0xff]
                  %339 = vst [vmem:[%s281 + $0xe0] sm:$0xff] %v338
                  %v340 = vld [vmem:[%s280 + $0x168] sm:$0xff]
                  %341 = vst [vmem:[%s281 + $0xe8] sm:$0xff] %v340
                  %v342 = vld [vmem:[%s280 + $0x170] sm:$0xff]
                  %343 = vst [vmem:[%s281 + $0xf0] sm:$0xff] %v342
                  %v344 = vld [vmem:[%s280 + $0x178] sm:$0xff]
                  %345 = vst [vmem:[%s281 + $0xf8] sm:$0xff] %v344
                $region64: #{residual_block_bn_forward.3} parent=58 // loop_footer
                  %s279 = sadd.s32 1, %s275
                $region65: #{residual_block_bn_forward.3} parent=58 // loop_footer_branch
                  %274 = sbr.rel target = $region61
                $region66: #{residual_block_bn_forward.3} parent=58 // loop_exit
                  _
              $region59: #{residual_block_bn_forward.3} parent=43 // pred_fallthru
                _
              // Predicated region
              $region67: #{residual_block_bn_forward.3} parent=43 // pred_check
                _
              $region68: #{residual_block_bn_forward.3} parent=43 // pred_check_branch
                %347 = sbr.rel target = $region70
              $region69: #{residual_block_bn_forward.3} parent=43 // pred_region
                _
              $region70: #{residual_block_bn_forward.3} parent=43 // pred_fallthru
                _
            $region44: #{residual_block_bn_forward.3} parent=39 // pred_fallthru
              _
            // Predicated region
            $region45: #{residual_block_bn_forward.3} parent=39 // pred_check
              _
            $region46: #{residual_block_bn_forward.3} parent=39 // pred_check_branch
              %197 = sbr.rel target = $region48
            $region47: #{residual_block_bn_forward.3} parent=39 // pred_region
              %s199 = ssub.s32 256, 1
              loop: start=0, step=1, limit=1
              $region49: #{residual_block_bn_forward.3} parent=47 // loop_pre_header
                _
              $region50: #{residual_block_bn_forward.3} parent=47 // loop_header
                %s201 = sphi 0, %s205
                %p202 = scmp.ge.s32.totalorder %s201, 1
                %s206 = sphi %s191, %s191
                %s207 = sphi %s187, %s187
              $region51: #{residual_block_bn_forward.3} parent=47 // loop_header_branch
                %204 = sbr.rel (%p202) target = $region55
              $region52: #{residual_block_bn_forward.3} parent=47 // loop_body
                %v208 = vld [vmem:[%s206] sm:%s199]
                %209 = vst [vmem:[%s207] sm:%s199] %v208
                %v210 = vld [vmem:[%s206 + $0x8] sm:%s199]
                %211 = vst [vmem:[%s207 + $0x8] sm:%s199] %v210
                %v212 = vld [vmem:[%s206 + $0x10] sm:%s199]
                %213 = vst [vmem:[%s207 + $0x10] sm:%s199] %v212
                %v214 = vld [vmem:[%s206 + $0x18] sm:%s199]
                %215 = vst [vmem:[%s207 + $0x18] sm:%s199] %v214
                %v216 = vld [vmem:[%s206 + $0x20] sm:%s199]
                %217 = vst [vmem:[%s207 + $0x20] sm:%s199] %v216
                %v218 = vld [vmem:[%s206 + $0x28] sm:%s199]
                %219 = vst [vmem:[%s207 + $0x28] sm:%s199] %v218
                %v220 = vld [vmem:[%s206 + $0x30] sm:%s199]
                %221 = vst [vmem:[%s207 + $0x30] sm:%s199] %v220
                %v222 = vld [vmem:[%s206 + $0x38] sm:%s199]
                %223 = vst [vmem:[%s207 + $0x38] sm:%s199] %v222
                %v224 = vld [vmem:[%s206 + $0x40] sm:%s199]
                %225 = vst [vmem:[%s207 + $0x40] sm:%s199] %v224
                %v226 = vld [vmem:[%s206 + $0x48] sm:%s199]
                %227 = vst [vmem:[%s207 + $0x48] sm:%s199] %v226
                %v228 = vld [vmem:[%s206 + $0x50] sm:%s199]
                %229 = vst [vmem:[%s207 + $0x50] sm:%s199] %v228
                %v230 = vld [vmem:[%s206 + $0x58] sm:%s199]
                %231 = vst [vmem:[%s207 + $0x58] sm:%s199] %v230
                %v232 = vld [vmem:[%s206 + $0x60] sm:%s199]
                %233 = vst [vmem:[%s207 + $0x60] sm:%s199] %v232
                %v234 = vld [vmem:[%s206 + $0x68] sm:%s199]
                %235 = vst [vmem:[%s207 + $0x68] sm:%s199] %v234
                %v236 = vld [vmem:[%s206 + $0x70] sm:%s199]
                %237 = vst [vmem:[%s207 + $0x70] sm:%s199] %v236
                %v238 = vld [vmem:[%s206 + $0x78] sm:%s199]
                %239 = vst [vmem:[%s207 + $0x78] sm:%s199] %v238
                %v240 = vld [vmem:[%s206 + $0x100] sm:%s199]
                %241 = vst [vmem:[%s207 + $0x80] sm:%s199] %v240
                %v242 = vld [vmem:[%s206 + $0x108] sm:%s199]
                %243 = vst [vmem:[%s207 + $0x88] sm:%s199] %v242
                %v244 = vld [vmem:[%s206 + $0x110] sm:%s199]
                %245 = vst [vmem:[%s207 + $0x90] sm:%s199] %v244
                %v246 = vld [vmem:[%s206 + $0x118] sm:%s199]
                %247 = vst [vmem:[%s207 + $0x98] sm:%s199] %v246
                %v248 = vld [vmem:[%s206 + $0x120] sm:%s199]
                %249 = vst [vmem:[%s207 + $0xa0] sm:%s199] %v248
                %v250 = vld [vmem:[%s206 + $0x128] sm:%s199]
                %251 = vst [vmem:[%s207 + $0xa8] sm:%s199] %v250
                %v252 = vld [vmem:[%s206 + $0x130] sm:%s199]
                %253 = vst [vmem:[%s207 + $0xb0] sm:%s199] %v252
                %v254 = vld [vmem:[%s206 + $0x138] sm:%s199]
                %255 = vst [vmem:[%s207 + $0xb8] sm:%s199] %v254
                %v256 = vld [vmem:[%s206 + $0x140] sm:%s199]
                %257 = vst [vmem:[%s207 + $0xc0] sm:%s199] %v256
                %v258 = vld [vmem:[%s206 + $0x148] sm:%s199]
                %259 = vst [vmem:[%s207 + $0xc8] sm:%s199] %v258
                %v260 = vld [vmem:[%s206 + $0x150] sm:%s199]
                %261 = vst [vmem:[%s207 + $0xd0] sm:%s199] %v260
                %v262 = vld [vmem:[%s206 + $0x158] sm:%s199]
                %263 = vst [vmem:[%s207 + $0xd8] sm:%s199] %v262
                %v264 = vld [vmem:[%s206 + $0x160] sm:%s199]
                %265 = vst [vmem:[%s207 + $0xe0] sm:%s199] %v264
                %v266 = vld [vmem:[%s206 + $0x168] sm:%s199]
                %267 = vst [vmem:[%s207 + $0xe8] sm:%s199] %v266
                %v268 = vld [vmem:[%s206 + $0x170] sm:%s199]
                %269 = vst [vmem:[%s207 + $0xf0] sm:%s199] %v268
                %v270 = vld [vmem:[%s206 + $0x178] sm:%s199]
                %271 = vst [vmem:[%s207 + $0xf8] sm:%s199] %v270
              $region53: #{residual_block_bn_forward.3} parent=47 // loop_footer
                %s205 = sadd.s32 1, %s201
              $region54: #{residual_block_bn_forward.3} parent=47 // loop_footer_branch
                %200 = sbr.rel target = $region50
              $region55: #{residual_block_bn_forward.3} parent=47 // loop_exit
                _
            $region48: #{residual_block_bn_forward.3} parent=39 // pred_fallthru
              _
          $region40: #{residual_block_bn_forward.3} parent=35 // pred_fallthru
            _
          %348 = vnop
        $region36: #{residual_block_bn_forward.3} parent=31 // pred_fallthru
          _
      $region32: #{residual_block_bn_forward.3} parent=5 // pred_fallthru
        _
      %p349 = scmp.le.s32.totalorder 1, %s14
      %p350 = scmp.lt.s32.totalorder %s14, 3
      %p351 = pnand %p349, %p350
      %p352 = pneg %p351
      // Predicated region
      $region71: #{residual_block_bn_forward.3} parent=5 // pred_check
        _
      $region72: #{residual_block_bn_forward.3} parent=5 // pred_check_branch
        %354 = sbr.rel (%p351) target = $region74
      $region73: #{residual_block_bn_forward.3} parent=5 // pred_region
        %s355 = ssub.s32 %s14, 1
        %s356 = sand.u32 %s111, 1
        %s357 = sand.u32 %s111, 1
        %s358 = smul.addr %s357, 256
        %s359 = scalar_lea.vmem [#allocation2], %s358
        // Predicated region
        $region75: #{residual_block_bn_forward.3} parent=73 // pred_check
          %p360 = pneg %p124
        $region76: #{residual_block_bn_forward.3} parent=73 // pred_check_branch
          %362 = sbr.rel (%p360) target = $region78
        $region77: #{residual_block_bn_forward.3} parent=73 // pred_region
          _
        $region78: #{residual_block_bn_forward.3} parent=73 // pred_fallthru
          _
        %p363 = pneg %p35
        %p364 = pneg %p32
        %p365 = pneg %p56
        %p366 = pneg %p53
        %p367 = pneg %p77
        %p368 = pneg %p74
        %p369 = pneg %p98
        %p370 = pneg %p95
        %s371 = sand.u32 %s111, 1
        %s372 = sand.u32 %s111, 1
        %s373 = smul.addr %s372, 256
        %s374 = scalar_lea.vmem [#allocation2], %s373
        %p375 = pneg %p124
        %p376 = pneg %p121
        %p377 = pneg %p150
        %p378 = pneg %p147
        %s379 = sand.u32 %s137, 1
        %s380 = scalar_lea.sflag [#allocation4], %s379
        %s381 = sand.u32 %s137, 1
        %s382 = smul.addr %s381, 256
        %s383 = scalar_lea.vmem [#allocation3], %s382
        %s384 = smul.u32 8, %s19
        %s385 = smul.u32 8, %s19
        %s387 = smul.u32 %s19, 8
        %s388 = smul.u32 %s387, 3
        %s389 = smul.addr %s388, 4
        %s390 = scalar_lea.vmem %s0, %s389
        %v391 = vld [vmem:[%s390] sm:$0xf]
        %v392 = vld [vmem:[%s390 + $0x4] sm:$0xf]
        %v393 = vld [vmem:[%s390 + $0xc] sm:$0xf]
        %v394 = vld [vmem:[%s390 + $0x10] sm:$0xf]
        %v395 = vld [vmem:[%s390 + $0x18] sm:$0xf]
        %v396 = vld [vmem:[%s390 + $0x1c] sm:$0xf]
        %v397 = vld [vmem:[%s390 + $0x24] sm:$0xf]
        %v398 = vld [vmem:[%s390 + $0x28] sm:$0xf]
        %v399 = vld [vmem:[%s390 + $0x30] sm:$0xf]
        %v400 = vld [vmem:[%s390 + $0x34] sm:$0xf]
        %v401 = vld [vmem:[%s390 + $0x3c] sm:$0xf]
        %v402 = vld [vmem:[%s390 + $0x40] sm:$0xf]
        %v403 = vld [vmem:[%s390 + $0x48] sm:$0xf]
        %v404 = vld [vmem:[%s390 + $0x4c] sm:$0xf]
        %v405 = vld [vmem:[%s390 + $0x54] sm:$0xf]
        %v406 = vld [vmem:[%s390 + $0x58] sm:$0xf]
        %v407 = vld [vmem:[%s390 + $0xd8] sm:$0xf]
        %v408 = vld [vmem:[%s390 + $0xdc] sm:$0xf]
        %v409 = vld [vmem:[%s390 + $0xe4] sm:$0xf]
        %v410 = vld [vmem:[%s390 + $0xe8] sm:$0xf]
        %v411 = vld [vmem:[%s390 + $0xf0] sm:$0xf]
        %v412 = vld [vmem:[%s390 + $0xf4] sm:$0xf]
        %v413 = vld [vmem:[%s390 + $0xfc] sm:$0xf]
        %v414 = vld [vmem:[%s390 + $0x100] sm:$0xf]
        %v415 = vld [vmem:[%s390 + $0x108] sm:$0xf]
        %v416 = vld [vmem:[%s390 + $0x10c] sm:$0xf]
        %v417 = vld [vmem:[%s390 + $0x114] sm:$0xf]
        %v418 = vld [vmem:[%s390 + $0x118] sm:$0xf]
        %v419 = vld [vmem:[%s390 + $0x120] sm:$0xf]
        %v420 = vld [vmem:[%s390 + $0x124] sm:$0xf]
        %v421 = vld [vmem:[%s390 + $0x12c] sm:$0xf]
        %v422 = vld [vmem:[%s390 + $0x130] sm:$0xf]
        %v423 = vld [vmem:[%s1] sm:$0xf]
        %v424 = vld [vmem:[%s1 + $0x4] sm:$0xf]
        %v425 = vld [vmem:[%s1 + $0x8] sm:$0xf]
        %v426 = vld [vmem:[%s1 + $0xc] sm:$0xf]
        %v427 = vld [vmem:[%s1 + $0x10] sm:$0xf]
        %v428 = vld [vmem:[%s1 + $0x14] sm:$0xf]
        %v429 = vld [vmem:[%s1 + $0x18] sm:$0xf]
        %v430 = vld [vmem:[%s1 + $0x1c] sm:$0xf]
        %v431 = vld [vmem:[%s390 + $0x8] sm:$0x1]
        %v432 = vld [vmem:[%s390 + $0x14] sm:$0x1]
        %v433 = vld [vmem:[%s390 + $0x20] sm:$0x1]
        %v434 = vld [vmem:[%s390 + $0x2c] sm:$0x1]
        %v435 = vld [vmem:[%s390 + $0x38] sm:$0x1]
        %v436 = vld [vmem:[%s390 + $0x44] sm:$0x1]
        %v437 = vld [vmem:[%s390 + $0x50] sm:$0x1]
        %v438 = vld [vmem:[%s390 + $0x5c] sm:$0x1]
        %v439 = vld [vmem:[%s390 + $0xe0] sm:$0x1]
        %v440 = vld [vmem:[%s390 + $0xec] sm:$0x1]
        %v441 = vld [vmem:[%s390 + $0xf8] sm:$0x1]
        %v442 = vld [vmem:[%s390 + $0x104] sm:$0x1]
        %v443 = vld [vmem:[%s390 + $0x110] sm:$0x1]
        %v444 = vld [vmem:[%s390 + $0x11c] sm:$0x1]
        %v445 = vld [vmem:[%s390 + $0x128] sm:$0x1]
        %v446 = vld [vmem:[%s390 + $0x134] sm:$0x1]
        %vm447 = vsmask.f32 3328
        %vm448 = vsmask.f32 7440
        %vm449 = vmor %vm447, %vm448
        %v451 = vshrl.u32 %v391, 16
        %v453 = vrot.slane %v451, 4
        %v454 = vshll.u32 %v391, 16
        %v456 = vrot.slane %v454, 5
        %v457 = vor.u32 %v453, %v456
        %v458 = vrot.slane %v457, 4
        %v460 = vshll.u32 %v392, 16
        %v462 = vrot.slane %v460, 5
        %v463 = vsel %vm449, %v458, %v462
        %v464 = vshrl.u32 %v392, 16
        %v466 = vrot.slane %v464, 4
        %v467 = vor.u32 %v466, %v462
        %v468 = vrot.slane %v467, 4
        %v470 = vshll.u32 %v431, 16
        %v472 = vrot.slane %v470, 5
        %v473 = vsel %vm449, %v468, %v472
        %v475 = vshrl.u32 %v393, 16
        %v477 = vrot.slane %v475, 4
        %v478 = vshll.u32 %v393, 16
        %v480 = vrot.slane %v478, 5
        %v481 = vor.u32 %v477, %v480
        %v482 = vrot.slane %v481, 4
        %v484 = vshll.u32 %v394, 16
        %v486 = vrot.slane %v484, 5
        %v487 = vsel %vm449, %v482, %v486
        %v488 = vshrl.u32 %v394, 16
        %v490 = vrot.slane %v488, 4
        %v491 = vor.u32 %v490, %v486
        %v492 = vrot.slane %v491, 4
        %v494 = vshll.u32 %v432, 16
        %v496 = vrot.slane %v494, 5
        %v497 = vsel %vm449, %v492, %v496
        %v499 = vshrl.u32 %v395, 16
        %v501 = vrot.slane %v499, 4
        %v502 = vshll.u32 %v395, 16
        %v504 = vrot.slane %v502, 5
        %v505 = vor.u32 %v501, %v504
        %v506 = vrot.slane %v505, 4
        %v508 = vshll.u32 %v396, 16
        %v510 = vrot.slane %v508, 5
        %v511 = vsel %vm449, %v506, %v510
        %v512 = vshrl.u32 %v396, 16
        %v514 = vrot.slane %v512, 4
        %v515 = vor.u32 %v514, %v510
        %v516 = vrot.slane %v515, 4
        %v518 = vshll.u32 %v433, 16
        %v520 = vrot.slane %v518, 5
        %v521 = vsel %vm449, %v516, %v520
        %v523 = vshrl.u32 %v397, 16
        %v525 = vrot.slane %v523, 4
        %v526 = vshll.u32 %v397, 16
        %v528 = vrot.slane %v526, 5
        %v529 = vor.u32 %v525, %v528
        %v530 = vrot.slane %v529, 4
        %v532 = vshll.u32 %v398, 16
        %v534 = vrot.slane %v532, 5
        %v535 = vsel %vm449, %v530, %v534
        %v536 = vshrl.u32 %v398, 16
        %v538 = vrot.slane %v536, 4
        %v539 = vor.u32 %v538, %v534
        %v540 = vrot.slane %v539, 4
        %v542 = vshll.u32 %v434, 16
        %v544 = vrot.slane %v542, 5
        %v545 = vsel %vm449, %v540, %v544
        %v547 = vshrl.u32 %v399, 16
        %v549 = vrot.slane %v547, 4
        %v550 = vshll.u32 %v399, 16
        %v552 = vrot.slane %v550, 5
        %v553 = vor.u32 %v549, %v552
        %v554 = vrot.slane %v553, 4
        %v556 = vshll.u32 %v400, 16
        %v558 = vrot.slane %v556, 5
        %v559 = vsel %vm449, %v554, %v558
        %v560 = vshrl.u32 %v400, 16
        %v562 = vrot.slane %v560, 4
        %v563 = vor.u32 %v562, %v558
        %v564 = vrot.slane %v563, 4
        %v566 = vshll.u32 %v435, 16
        %v568 = vrot.slane %v566, 5
        %v569 = vsel %vm449, %v564, %v568
        %v571 = vshrl.u32 %v401, 16
        %v573 = vrot.slane %v571, 4
        %v574 = vshll.u32 %v401, 16
        %v576 = vrot.slane %v574, 5
        %v577 = vor.u32 %v573, %v576
        %v578 = vrot.slane %v577, 4
        %v580 = vshll.u32 %v402, 16
        %v582 = vrot.slane %v580, 5
        %v583 = vsel %vm449, %v578, %v582
        %v584 = vshrl.u32 %v402, 16
        %v586 = vrot.slane %v584, 4
        %v587 = vor.u32 %v586, %v582
        %v588 = vrot.slane %v587, 4
        %v590 = vshll.u32 %v436, 16
        %v592 = vrot.slane %v590, 5
        %v593 = vsel %vm449, %v588, %v592
        %v595 = vshrl.u32 %v403, 16
        %v597 = vrot.slane %v595, 4
        %v598 = vshll.u32 %v403, 16
        %v600 = vrot.slane %v598, 5
        %v601 = vor.u32 %v597, %v600
        %v602 = vrot.slane %v601, 4
        %v604 = vshll.u32 %v404, 16
        %v606 = vrot.slane %v604, 5
        %v607 = vsel %vm449, %v602, %v606
        %v608 = vshrl.u32 %v404, 16
        %v610 = vrot.slane %v608, 4
        %v611 = vor.u32 %v610, %v606
        %v612 = vrot.slane %v611, 4
        %v614 = vshll.u32 %v437, 16
        %v616 = vrot.slane %v614, 5
        %v617 = vsel %vm449, %v612, %v616
        %v619 = vshrl.u32 %v405, 16
        %v621 = vrot.slane %v619, 4
        %v622 = vshll.u32 %v405, 16
        %v624 = vrot.slane %v622, 5
        %v625 = vor.u32 %v621, %v624
        %v626 = vrot.slane %v625, 4
        %v628 = vshll.u32 %v406, 16
        %v630 = vrot.slane %v628, 5
        %v631 = vsel %vm449, %v626, %v630
        %v632 = vshrl.u32 %v406, 16
        %v634 = vrot.slane %v632, 4
        %v635 = vor.u32 %v634, %v630
        %v636 = vrot.slane %v635, 4
        %v638 = vshll.u32 %v438, 16
        %v640 = vrot.slane %v638, 5
        %v641 = vsel %vm449, %v636, %v640
        %v643 = vshrl.u32 %v407, 16
        %v645 = vrot.slane %v643, 4
        %v646 = vshll.u32 %v407, 16
        %v648 = vrot.slane %v646, 5
        %v649 = vor.u32 %v645, %v648
        %v650 = vrot.slane %v649, 4
        %v652 = vshll.u32 %v408, 16
        %v654 = vrot.slane %v652, 5
        %v655 = vsel %vm449, %v650, %v654
        %v656 = vshrl.u32 %v408, 16
        %v658 = vrot.slane %v656, 4
        %v659 = vor.u32 %v658, %v654
        %v660 = vrot.slane %v659, 4
        %v662 = vshll.u32 %v439, 16
        %v664 = vrot.slane %v662, 5
        %v665 = vsel %vm449, %v660, %v664
        %v667 = vshrl.u32 %v409, 16
        %v669 = vrot.slane %v667, 4
        %v670 = vshll.u32 %v409, 16
        %v672 = vrot.slane %v670, 5
        %v673 = vor.u32 %v669, %v672
        %v674 = vrot.slane %v673, 4
        %v676 = vshll.u32 %v410, 16
        %v678 = vrot.slane %v676, 5
        %v679 = vsel %vm449, %v674, %v678
        %v680 = vshrl.u32 %v410, 16
        %v682 = vrot.slane %v680, 4
        %v683 = vor.u32 %v682, %v678
        %v684 = vrot.slane %v683, 4
        %v686 = vshll.u32 %v440, 16
        %v688 = vrot.slane %v686, 5
        %v689 = vsel %vm449, %v684, %v688
        %v691 = vshrl.u32 %v411, 16
        %v693 = vrot.slane %v691, 4
        %v694 = vshll.u32 %v411, 16
        %v696 = vrot.slane %v694, 5
        %v697 = vor.u32 %v693, %v696
        %v698 = vrot.slane %v697, 4
        %v700 = vshll.u32 %v412, 16
        %v702 = vrot.slane %v700, 5
        %v703 = vsel %vm449, %v698, %v702
        %v704 = vshrl.u32 %v412, 16
        %v706 = vrot.slane %v704, 4
        %v707 = vor.u32 %v706, %v702
        %v708 = vrot.slane %v707, 4
        %v710 = vshll.u32 %v441, 16
        %v712 = vrot.slane %v710, 5
        %v713 = vsel %vm449, %v708, %v712
        %v715 = vshrl.u32 %v413, 16
        %v717 = vrot.slane %v715, 4
        %v718 = vshll.u32 %v413, 16
        %v720 = vrot.slane %v718, 5
        %v721 = vor.u32 %v717, %v720
        %v722 = vrot.slane %v721, 4
        %v724 = vshll.u32 %v414, 16
        %v726 = vrot.slane %v724, 5
        %v727 = vsel %vm449, %v722, %v726
        %v728 = vshrl.u32 %v414, 16
        %v730 = vrot.slane %v728, 4
        %v731 = vor.u32 %v730, %v726
        %v732 = vrot.slane %v731, 4
        %v734 = vshll.u32 %v442, 16
        %v736 = vrot.slane %v734, 5
        %v737 = vsel %vm449, %v732, %v736
        %v739 = vshrl.u32 %v415, 16
        %v741 = vrot.slane %v739, 4
        %v742 = vshll.u32 %v415, 16
        %v744 = vrot.slane %v742, 5
        %v745 = vor.u32 %v741, %v744
        %v746 = vrot.slane %v745, 4
        %v748 = vshll.u32 %v416, 16
        %v750 = vrot.slane %v748, 5
        %v751 = vsel %vm449, %v746, %v750
        %v752 = vshrl.u32 %v416, 16
        %v754 = vrot.slane %v752, 4
        %v755 = vor.u32 %v754, %v750
        %v756 = vrot.slane %v755, 4
        %v758 = vshll.u32 %v443, 16
        %v760 = vrot.slane %v758, 5
        %v761 = vsel %vm449, %v756, %v760
        %v763 = vshrl.u32 %v417, 16
        %v765 = vrot.slane %v763, 4
        %v766 = vshll.u32 %v417, 16
        %v768 = vrot.slane %v766, 5
        %v769 = vor.u32 %v765, %v768
        %v770 = vrot.slane %v769, 4
        %v772 = vshll.u32 %v418, 16
        %v774 = vrot.slane %v772, 5
        %v775 = vsel %vm449, %v770, %v774
        %v776 = vshrl.u32 %v418, 16
        %v778 = vrot.slane %v776, 4
        %v779 = vor.u32 %v778, %v774
        %v780 = vrot.slane %v779, 4
        %v782 = vshll.u32 %v444, 16
        %v784 = vrot.slane %v782, 5
        %v785 = vsel %vm449, %v780, %v784
        %v787 = vshrl.u32 %v419, 16
        %v789 = vrot.slane %v787, 4
        %v790 = vshll.u32 %v419, 16
        %v792 = vrot.slane %v790, 5
        %v793 = vor.u32 %v789, %v792
        %v794 = vrot.slane %v793, 4
        %v796 = vshll.u32 %v420, 16
        %v798 = vrot.slane %v796, 5
        %v799 = vsel %vm449, %v794, %v798
        %v800 = vshrl.u32 %v420, 16
        %v802 = vrot.slane %v800, 4
        %v803 = vor.u32 %v802, %v798
        %v804 = vrot.slane %v803, 4
        %v806 = vshll.u32 %v445, 16
        %v808 = vrot.slane %v806, 5
        %v809 = vsel %vm449, %v804, %v808
        %v811 = vshrl.u32 %v421, 16
        %v813 = vrot.slane %v811, 4
        %v814 = vshll.u32 %v421, 16
        %v816 = vrot.slane %v814, 5
        %v817 = vor.u32 %v813, %v816
        %v818 = vrot.slane %v817, 4
        %v820 = vshll.u32 %v422, 16
        %v822 = vrot.slane %v820, 5
        %v823 = vsel %vm449, %v818, %v822
        %v824 = vshrl.u32 %v422, 16
        %v826 = vrot.slane %v824, 4
        %v827 = vor.u32 %v826, %v822
        %v828 = vrot.slane %v827, 4
        %v830 = vshll.u32 %v446, 16
        %v832 = vrot.slane %v830, 5
        %v833 = vsel %vm449, %v828, %v832
        %s834 = scalar_lea.vmem %s1, 32
        %v835 = vld [vmem:[%s834] sm:$0xf]
        %v836 = vld [vmem:[%s834 + $0x4] sm:$0xf]
        %v837 = vld [vmem:[%s834 + $0x8] sm:$0xf]
        %v838 = vld [vmem:[%s834 + $0xc] sm:$0xf]
        %v839 = vld [vmem:[%s834 + $0x10] sm:$0xf]
        %v840 = vld [vmem:[%s834 + $0x14] sm:$0xf]
        %v841 = vld [vmem:[%s834 + $0x18] sm:$0xf]
        %v842 = vld [vmem:[%s834 + $0x1c] sm:$0xf]
        %v843 = vunpack.c.l.b16 %v463
        %v844 = vunpack.c.l.b16 %v473
        %v845 = vunpack.c.l.b16 %v487
        %v846 = vunpack.c.l.b16 %v497
        %v847 = vunpack.c.l.b16 %v511
        %v848 = vunpack.c.l.b16 %v521
        %v849 = vunpack.c.l.b16 %v535
        %v850 = vunpack.c.l.b16 %v545
        %v851 = vunpack.c.l.b16 %v559
        %v852 = vunpack.c.l.b16 %v569
        %v853 = vunpack.c.l.b16 %v583
        %v854 = vunpack.c.l.b16 %v593
        %v855 = vunpack.c.l.b16 %v607
        %v856 = vunpack.c.l.b16 %v617
        %v857 = vunpack.c.l.b16 %v631
        %v858 = vunpack.c.l.b16 %v641
        %v859 = vunpack.c.l.b16 %v655
        %v860 = vunpack.c.l.b16 %v665
        %v861 = vunpack.c.l.b16 %v679
        %v862 = vunpack.c.l.b16 %v689
        %v863 = vunpack.c.l.b16 %v703
        %v864 = vunpack.c.l.b16 %v713
        %v865 = vunpack.c.l.b16 %v727
        %v866 = vunpack.c.l.b16 %v737
        %v867 = vunpack.c.l.b16 %v751
        %v868 = vunpack.c.l.b16 %v761
        %v869 = vunpack.c.l.b16 %v775
        %v870 = vunpack.c.l.b16 %v785
        %v871 = vunpack.c.l.b16 %v799
        %v872 = vunpack.c.l.b16 %v809
        %v873 = vunpack.c.l.b16 %v823
        %v874 = vunpack.c.l.b16 %v833
        %v875 = vpack.c.b16 %v844, %v843
        %v876 = vpack.c.b16 %v846, %v845
        %v877 = vpack.c.b16 %v848, %v847
        %v878 = vpack.c.b16 %v850, %v849
        %v879 = vpack.c.b16 %v852, %v851
        %v880 = vpack.c.b16 %v854, %v853
        %v881 = vpack.c.b16 %v856, %v855
        %v882 = vpack.c.b16 %v858, %v857
        %v883 = vpack.c.b16 %v860, %v859
        %v884 = vpack.c.b16 %v862, %v861
        %v885 = vpack.c.b16 %v864, %v863
        %v886 = vpack.c.b16 %v866, %v865
        %v887 = vpack.c.b16 %v868, %v867
        %v888 = vpack.c.b16 %v870, %v869
        %v889 = vpack.c.b16 %v872, %v871
        %v890 = vpack.c.b16 %v874, %v873
        %v899 = vunpack.c.l.b16 %v835
        %v900 = vunpack.c.l.b16 %v836
        %v901 = vunpack.c.l.b16 %v837
        %v902 = vunpack.c.l.b16 %v838
        %v903 = vunpack.c.l.b16 %v839
        %v904 = vunpack.c.l.b16 %v840
        %v905 = vunpack.c.l.b16 %v841
        %v906 = vunpack.c.l.b16 %v842
        %v907 = vpack.c.b16 %v900, %v899
        %v908 = vpack.c.b16 %v902, %v901
        %v909 = vpack.c.b16 %v904, %v903
        %v910 = vpack.c.b16 %v906, %v905
        %vm915 = vcmask 523264
        %v917 = vsel %vm915, %v875, 0
        %v920 = vsel %vm915, %v876, 0
        %v923 = vsel %vm915, %v877, 0
        %v926 = vsel %vm915, %v878, 0
        %v929 = vsel %vm915, %v879, 0
        %v932 = vsel %vm915, %v880, 0
        %v935 = vsel %vm915, %v881, 0
        %v938 = vsel %vm915, %v882, 0
        %v941 = vsel %vm915, %v883, 0
        %v944 = vsel %vm915, %v884, 0
        %v947 = vsel %vm915, %v885, 0
        %v950 = vsel %vm915, %v886, 0
        %v953 = vsel %vm915, %v887, 0
        %v956 = vsel %vm915, %v888, 0
        %v959 = vsel %vm915, %v889, 0
        %v962 = vsel %vm915, %v890, 0
        %964 = vmatprep.subr.bf16.mxu0 0
        %965 = vmatpush1.bf16.msra.mxu0 0
        %966 = vmatprep.subr.bf16.mxu0 0
        %967 = vmatpush1.bf16.msra.mxu0 0
        %968 = vmatprep.subr.bf16.mxu0 0
        %969 = vmatpush1.bf16.msra.mxu0 0
        %970 = vmatprep.subr.bf16.mxu0 0
        %971 = vmatpush1.bf16.msra.mxu0 0
        %972 = vmatprep.subr.bf16.mxu0 0
        %973 = vmatpush1.bf16.msra.mxu0 %v910
        %974 = vmatprep.subr.bf16.mxu0 0
        %975 = vmatpush1.bf16.msra.mxu0 %v909
        %976 = vmatprep.subr.bf16.mxu0 0
        %977 = vmatpush1.bf16.msra.mxu0 %v908
        %978 = vmatprep.subr.bf16.mxu0 0
        %979 = vmatpush1.bf16.msra.mxu0 %v907
        %980 = vmatprep.subr.bf16.mxu0 0
        %981 = vmatpush2.bf16.msra.mxu0 0
        %982 = vmatprep.subr.bf16.mxu0 0
        %983 = vmatpush2.bf16.msra.mxu0 0
        %984 = vmatprep.subr.bf16.mxu0 0
        %985 = vmatpush2.bf16.msra.mxu0 0
        %986 = vmatprep.subr.bf16.mxu0 0
        %987 = vmatpush2.bf16.msra.mxu0 0
        %988 = vmatprep.subr.bf16.mxu0 0
        %989 = vmatpush2.bf16.msra.mxu0 0
        %990 = vmatprep.subr.bf16.mxu0 0
        %991 = vmatpush2.bf16.msra.mxu0 0
        %992 = vmatprep.subr.bf16.mxu0 0
        %993 = vmatpush2.bf16.msra.mxu0 0
        %994 = vmatprep.subr.bf16.mxu0 0
        %995 = vmatpush2.bf16.msra.mxu0 0
        %996 = vmatprep.mubr.bf16.mxu0 0
        %997 = vmatmul.mubr.bf16.gmra.mxu0 %v917
        %v998 = vpop.f32.mrf.mxu0
        %v999 = vadd.f32 0.0, %v998
        %v1000 = vpop.f32.mrf.mxu0
        %v1001 = vpop.f32.mrf.mxu0
        %v1002 = vadd.f32 0.0, %v1001
        %v1003 = vpop.f32.mrf.mxu0
        %1004 = vmatprep.mubr.bf16.mxu0 0
        %1005 = vmatmul.mubr.bf16.gmra.mxu0 %v920
        %v1006 = vpop.f32.mrf.mxu0
        %v1007 = vadd.f32 0.0, %v1006
        %v1008 = vpop.f32.mrf.mxu0
        %v1009 = vpop.f32.mrf.mxu0
        %v1010 = vadd.f32 0.0, %v1009
        %v1011 = vpop.f32.mrf.mxu0
        %1012 = vmatprep.mubr.bf16.mxu0 0
        %1013 = vmatmul.mubr.bf16.gmra.mxu0 %v923
        %v1014 = vpop.f32.mrf.mxu0
        %v1015 = vadd.f32 0.0, %v1014
        %v1016 = vpop.f32.mrf.mxu0
        %v1017 = vpop.f32.mrf.mxu0
        %v1018 = vadd.f32 0.0, %v1017
        %v1019 = vpop.f32.mrf.mxu0
        %1020 = vmatprep.mubr.bf16.mxu0 0
        %1021 = vmatmul.mubr.bf16.gmra.mxu0 %v926
        %v1022 = vpop.f32.mrf.mxu0
        %v1023 = vadd.f32 0.0, %v1022
        %v1024 = vpop.f32.mrf.mxu0
        %v1025 = vpop.f32.mrf.mxu0
        %v1026 = vadd.f32 0.0, %v1025
        %v1027 = vpop.f32.mrf.mxu0
        %1028 = vmatprep.mubr.bf16.mxu0 0
        %1029 = vmatmul.mubr.bf16.gmra.mxu0 %v929
        %v1030 = vpop.f32.mrf.mxu0
        %v1031 = vadd.f32 0.0, %v1030
        %v1032 = vpop.f32.mrf.mxu0
        %v1033 = vpop.f32.mrf.mxu0
        %v1034 = vadd.f32 0.0, %v1033
        %v1035 = vpop.f32.mrf.mxu0
        %1036 = vmatprep.mubr.bf16.mxu0 0
        %1037 = vmatmul.mubr.bf16.gmra.mxu0 %v932
        %v1038 = vpop.f32.mrf.mxu0
        %v1039 = vadd.f32 0.0, %v1038
        %v1040 = vpop.f32.mrf.mxu0
        %v1041 = vpop.f32.mrf.mxu0
        %v1042 = vadd.f32 0.0, %v1041
        %v1043 = vpop.f32.mrf.mxu0
        %1044 = vmatprep.mubr.bf16.mxu0 0
        %1045 = vmatmul.mubr.bf16.gmra.mxu0 %v935
        %v1046 = vpop.f32.mrf.mxu0
        %v1047 = vadd.f32 0.0, %v1046
        %v1048 = vpop.f32.mrf.mxu0
        %v1049 = vpop.f32.mrf.mxu0
        %v1050 = vadd.f32 0.0, %v1049
        %v1051 = vpop.f32.mrf.mxu0
        %1052 = vmatprep.mubr.bf16.mxu0 0
        %1053 = vmatmul.mubr.bf16.gmra.mxu0 %v938
        %v1054 = vpop.f32.mrf.mxu0
        %v1055 = vadd.f32 0.0, %v1054
        %v1056 = vpop.f32.mrf.mxu0
        %v1057 = vpop.f32.mrf.mxu0
        %v1058 = vadd.f32 0.0, %v1057
        %v1059 = vpop.f32.mrf.mxu0
        %1060 = vmatprep.mubr.bf16.mxu0 0
        %1061 = vmatmul.mubr.bf16.gmra.mxu0 %v941
        %v1062 = vpop.f32.mrf.mxu0
        %v1063 = vadd.f32 0.0, %v1062
        %v1064 = vpop.f32.mrf.mxu0
        %v1065 = vpop.f32.mrf.mxu0
        %v1066 = vadd.f32 0.0, %v1065
        %v1067 = vpop.f32.mrf.mxu0
        %1068 = vmatprep.mubr.bf16.mxu0 0
        %1069 = vmatmul.mubr.bf16.gmra.mxu0 %v944
        %v1070 = vpop.f32.mrf.mxu0
        %v1071 = vadd.f32 0.0, %v1070
        %v1072 = vpop.f32.mrf.mxu0
        %v1073 = vpop.f32.mrf.mxu0
        %v1074 = vadd.f32 0.0, %v1073
        %v1075 = vpop.f32.mrf.mxu0
        %1076 = vmatprep.mubr.bf16.mxu0 0
        %1077 = vmatmul.mubr.bf16.gmra.mxu0 %v947
        %v1078 = vpop.f32.mrf.mxu0
        %v1079 = vadd.f32 0.0, %v1078
        %v1080 = vpop.f32.mrf.mxu0
        %v1081 = vpop.f32.mrf.mxu0
        %v1082 = vadd.f32 0.0, %v1081
        %v1083 = vpop.f32.mrf.mxu0
        %1084 = vmatprep.mubr.bf16.mxu0 0
        %1085 = vmatmul.mubr.bf16.gmra.mxu0 %v950
        %v1086 = vpop.f32.mrf.mxu0
        %v1087 = vadd.f32 0.0, %v1086
        %v1088 = vpop.f32.mrf.mxu0
        %v1089 = vpop.f32.mrf.mxu0
        %v1090 = vadd.f32 0.0, %v1089
        %v1091 = vpop.f32.mrf.mxu0
        %1092 = vmatprep.mubr.bf16.mxu0 0
        %1093 = vmatmul.mubr.bf16.gmra.mxu0 %v953
        %v1094 = vpop.f32.mrf.mxu0
        %v1095 = vadd.f32 0.0, %v1094
        %v1096 = vpop.f32.mrf.mxu0
        %v1097 = vpop.f32.mrf.mxu0
        %v1098 = vadd.f32 0.0, %v1097
        %v1099 = vpop.f32.mrf.mxu0
        %1100 = vmatprep.mubr.bf16.mxu0 0
        %1101 = vmatmul.mubr.bf16.gmra.mxu0 %v956
        %v1102 = vpop.f32.mrf.mxu0
        %v1103 = vadd.f32 0.0, %v1102
        %v1104 = vpop.f32.mrf.mxu0
        %v1105 = vpop.f32.mrf.mxu0
        %v1106 = vadd.f32 0.0, %v1105
        %v1107 = vpop.f32.mrf.mxu0
        %1108 = vmatprep.mubr.bf16.mxu0 0
        %1109 = vmatmul.mubr.bf16.gmra.mxu0 %v959
        %v1110 = vpop.f32.mrf.mxu0
        %v1111 = vadd.f32 0.0, %v1110
        %v1112 = vpop.f32.mrf.mxu0
        %v1113 = vpop.f32.mrf.mxu0
        %v1114 = vadd.f32 0.0, %v1113
        %v1115 = vpop.f32.mrf.mxu0
        %1116 = vmatprep.mubr.bf16.mxu0 0
        %1117 = vmatmul.mubr.bf16.gmra.mxu0 %v962
        %v1118 = vpop.f32.mrf.mxu0
        %v1119 = vadd.f32 0.0, %v1118
        %v1120 = vpop.f32.mrf.mxu0
        %v1121 = vpop.f32.mrf.mxu0
        %v1122 = vadd.f32 0.0, %v1121
        %v1123 = vpop.f32.mrf.mxu0
        %1124 = vdwg.mxu0
        %v1157 = vunpack.c.l.b16 %v391
        %v1158 = vunpack.c.l.b16 %v392
        %v1159 = vunpack.c.l.b16 %v393
        %v1160 = vunpack.c.l.b16 %v394
        %v1161 = vunpack.c.l.b16 %v395
        %v1162 = vunpack.c.l.b16 %v396
        %v1163 = vunpack.c.l.b16 %v397
        %v1164 = vunpack.c.l.b16 %v398
        %v1165 = vunpack.c.l.b16 %v399
        %v1166 = vunpack.c.l.b16 %v400
        %v1167 = vunpack.c.l.b16 %v401
        %v1168 = vunpack.c.l.b16 %v402
        %v1169 = vunpack.c.l.b16 %v403
        %v1170 = vunpack.c.l.b16 %v404
        %v1171 = vunpack.c.l.b16 %v405
        %v1172 = vunpack.c.l.b16 %v406
        %v1173 = vunpack.c.l.b16 %v407
        %v1174 = vunpack.c.l.b16 %v408
        %v1175 = vunpack.c.l.b16 %v409
        %v1176 = vunpack.c.l.b16 %v410
        %v1177 = vunpack.c.l.b16 %v411
        %v1178 = vunpack.c.l.b16 %v412
        %v1179 = vunpack.c.l.b16 %v413
        %v1180 = vunpack.c.l.b16 %v414
        %v1181 = vunpack.c.l.b16 %v415
        %v1182 = vunpack.c.l.b16 %v416
        %v1183 = vunpack.c.l.b16 %v417
        %v1184 = vunpack.c.l.b16 %v418
        %v1185 = vunpack.c.l.b16 %v419
        %v1186 = vunpack.c.l.b16 %v420
        %v1187 = vunpack.c.l.b16 %v421
        %v1188 = vunpack.c.l.b16 %v422
        %v1189 = vpack.c.b16 %v1158, %v1157
        %v1190 = vpack.c.b16 %v1160, %v1159
        %v1191 = vpack.c.b16 %v1162, %v1161
        %v1192 = vpack.c.b16 %v1164, %v1163
        %v1193 = vpack.c.b16 %v1166, %v1165
        %v1194 = vpack.c.b16 %v1168, %v1167
        %v1195 = vpack.c.b16 %v1170, %v1169
        %v1196 = vpack.c.b16 %v1172, %v1171
        %v1197 = vpack.c.b16 %v1174, %v1173
        %v1198 = vpack.c.b16 %v1176, %v1175
        %v1199 = vpack.c.b16 %v1178, %v1177
        %v1200 = vpack.c.b16 %v1180, %v1179
        %v1201 = vpack.c.b16 %v1182, %v1181
        %v1202 = vpack.c.b16 %v1184, %v1183
        %v1203 = vpack.c.b16 %v1186, %v1185
        %v1204 = vpack.c.b16 %v1188, %v1187
        %v1213 = vunpack.c.l.b16 %v423
        %v1214 = vunpack.c.l.b16 %v424
        %v1215 = vunpack.c.l.b16 %v425
        %v1216 = vunpack.c.l.b16 %v426
        %v1217 = vunpack.c.l.b16 %v427
        %v1218 = vunpack.c.l.b16 %v428
        %v1219 = vunpack.c.l.b16 %v429
        %v1220 = vunpack.c.l.b16 %v430
        %v1221 = vpack.c.b16 %v1214, %v1213
        %v1222 = vpack.c.b16 %v1216, %v1215
        %v1223 = vpack.c.b16 %v1218, %v1217
        %v1224 = vpack.c.b16 %v1220, %v1219
        %v1230 = vsel %vm915, %v1189, 0
        %v1233 = vsel %vm915, %v1190, 0
        %v1236 = vsel %vm915, %v1191, 0
        %v1239 = vsel %vm915, %v1192, 0
        %v1242 = vsel %vm915, %v1193, 0
        %v1245 = vsel %vm915, %v1194, 0
        %v1248 = vsel %vm915, %v1195, 0
        %v1251 = vsel %vm915, %v1196, 0
        %v1254 = vsel %vm915, %v1197, 0
        %v1257 = vsel %vm915, %v1198, 0
        %v1260 = vsel %vm915, %v1199, 0
        %v1263 = vsel %vm915, %v1200, 0
        %v1266 = vsel %vm915, %v1201, 0
        %v1269 = vsel %vm915, %v1202, 0
        %v1272 = vsel %vm915, %v1203, 0
        %v1275 = vsel %vm915, %v1204, 0
        %1277 = vmatprep.subr.bf16.mxu0 0
        %1278 = vmatpush1.bf16.msra.mxu0 0
        %1279 = vmatprep.subr.bf16.mxu0 0
        %1280 = vmatpush1.bf16.msra.mxu0 0
        %1281 = vmatprep.subr.bf16.mxu0 0
        %1282 = vmatpush1.bf16.msra.mxu0 0
        %1283 = vmatprep.subr.bf16.mxu0 0
        %1284 = vmatpush1.bf16.msra.mxu0 0
        %1285 = vmatprep.subr.bf16.mxu0 0
        %1286 = vmatpush1.bf16.msra.mxu0 %v1224
        %1287 = vmatprep.subr.bf16.mxu0 0
        %1288 = vmatpush1.bf16.msra.mxu0 %v1223
        %1289 = vmatprep.subr.bf16.mxu0 0
        %1290 = vmatpush1.bf16.msra.mxu0 %v1222
        %1291 = vmatprep.subr.bf16.mxu0 0
        %1292 = vmatpush1.bf16.msra.mxu0 %v1221
        %1293 = vmatprep.subr.bf16.mxu0 0
        %1294 = vmatpush2.bf16.msra.mxu0 0
        %1295 = vmatprep.subr.bf16.mxu0 0
        %1296 = vmatpush2.bf16.msra.mxu0 0
        %1297 = vmatprep.subr.bf16.mxu0 0
        %1298 = vmatpush2.bf16.msra.mxu0 0
        %1299 = vmatprep.subr.bf16.mxu0 0
        %1300 = vmatpush2.bf16.msra.mxu0 0
        %1301 = vmatprep.subr.bf16.mxu0 0
        %1302 = vmatpush2.bf16.msra.mxu0 0
        %1303 = vmatprep.subr.bf16.mxu0 0
        %1304 = vmatpush2.bf16.msra.mxu0 0
        %1305 = vmatprep.subr.bf16.mxu0 0
        %1306 = vmatpush2.bf16.msra.mxu0 0
        %1307 = vmatprep.subr.bf16.mxu0 0
        %1308 = vmatpush2.bf16.msra.mxu0 0
        %1309 = vmatprep.mubr.bf16.mxu0 0
        %1310 = vmatmul.mubr.bf16.gmra.mxu0 %v1230
        %v1311 = vpop.f32.mrf.mxu0
        %v1312 = vadd.f32 %v999, %v1311
        %v1313 = vpop.f32.mrf.mxu0
        %v1314 = vpop.f32.mrf.mxu0
        %v1315 = vadd.f32 %v1002, %v1314
        %v1316 = vpop.f32.mrf.mxu0
        %1317 = vmatprep.mubr.bf16.mxu0 0
        %1318 = vmatmul.mubr.bf16.gmra.mxu0 %v1233
        %v1319 = vpop.f32.mrf.mxu0
        %v1320 = vadd.f32 %v1007, %v1319
        %v1321 = vpop.f32.mrf.mxu0
        %v1322 = vpop.f32.mrf.mxu0
        %v1323 = vadd.f32 %v1010, %v1322
        %v1324 = vpop.f32.mrf.mxu0
        %1325 = vmatprep.mubr.bf16.mxu0 0
        %1326 = vmatmul.mubr.bf16.gmra.mxu0 %v1236
        %v1327 = vpop.f32.mrf.mxu0
        %v1328 = vadd.f32 %v1015, %v1327
        %v1329 = vpop.f32.mrf.mxu0
        %v1330 = vpop.f32.mrf.mxu0
        %v1331 = vadd.f32 %v1018, %v1330
        %v1332 = vpop.f32.mrf.mxu0
        %1333 = vmatprep.mubr.bf16.mxu0 0
        %1334 = vmatmul.mubr.bf16.gmra.mxu0 %v1239
        %v1335 = vpop.f32.mrf.mxu0
        %v1336 = vadd.f32 %v1023, %v1335
        %v1337 = vpop.f32.mrf.mxu0
        %v1338 = vpop.f32.mrf.mxu0
        %v1339 = vadd.f32 %v1026, %v1338
        %v1340 = vpop.f32.mrf.mxu0
        %1341 = vmatprep.mubr.bf16.mxu0 0
        %1342 = vmatmul.mubr.bf16.gmra.mxu0 %v1242
        %v1343 = vpop.f32.mrf.mxu0
        %v1344 = vadd.f32 %v1031, %v1343
        %v1345 = vpop.f32.mrf.mxu0
        %v1346 = vpop.f32.mrf.mxu0
        %v1347 = vadd.f32 %v1034, %v1346
        %v1348 = vpop.f32.mrf.mxu0
        %1349 = vmatprep.mubr.bf16.mxu0 0
        %1350 = vmatmul.mubr.bf16.gmra.mxu0 %v1245
        %v1351 = vpop.f32.mrf.mxu0
        %v1352 = vadd.f32 %v1039, %v1351
        %v1353 = vpop.f32.mrf.mxu0
        %v1354 = vpop.f32.mrf.mxu0
        %v1355 = vadd.f32 %v1042, %v1354
        %v1356 = vpop.f32.mrf.mxu0
        %1357 = vmatprep.mubr.bf16.mxu0 0
        %1358 = vmatmul.mubr.bf16.gmra.mxu0 %v1248
        %v1359 = vpop.f32.mrf.mxu0
        %v1360 = vadd.f32 %v1047, %v1359
        %v1361 = vpop.f32.mrf.mxu0
        %v1362 = vpop.f32.mrf.mxu0
        %v1363 = vadd.f32 %v1050, %v1362
        %v1364 = vpop.f32.mrf.mxu0
        %1365 = vmatprep.mubr.bf16.mxu0 0
        %1366 = vmatmul.mubr.bf16.gmra.mxu0 %v1251
        %v1367 = vpop.f32.mrf.mxu0
        %v1368 = vadd.f32 %v1055, %v1367
        %v1369 = vpop.f32.mrf.mxu0
        %v1370 = vpop.f32.mrf.mxu0
        %v1371 = vadd.f32 %v1058, %v1370
        %v1372 = vpop.f32.mrf.mxu0
        %1373 = vmatprep.mubr.bf16.mxu0 0
        %1374 = vmatmul.mubr.bf16.gmra.mxu0 %v1254
        %v1375 = vpop.f32.mrf.mxu0
        %v1376 = vadd.f32 %v1063, %v1375
        %v1377 = vpop.f32.mrf.mxu0
        %v1378 = vpop.f32.mrf.mxu0
        %v1379 = vadd.f32 %v1066, %v1378
        %v1380 = vpop.f32.mrf.mxu0
        %1381 = vmatprep.mubr.bf16.mxu0 0
        %1382 = vmatmul.mubr.bf16.gmra.mxu0 %v1257
        %v1383 = vpop.f32.mrf.mxu0
        %v1384 = vadd.f32 %v1071, %v1383
        %v1385 = vpop.f32.mrf.mxu0
        %v1386 = vpop.f32.mrf.mxu0
        %v1387 = vadd.f32 %v1074, %v1386
        %v1388 = vpop.f32.mrf.mxu0
        %1389 = vmatprep.mubr.bf16.mxu0 0
        %1390 = vmatmul.mubr.bf16.gmra.mxu0 %v1260
        %v1391 = vpop.f32.mrf.mxu0
        %v1392 = vadd.f32 %v1079, %v1391
        %v1393 = vpop.f32.mrf.mxu0
        %v1394 = vpop.f32.mrf.mxu0
        %v1395 = vadd.f32 %v1082, %v1394
        %v1396 = vpop.f32.mrf.mxu0
        %1397 = vmatprep.mubr.bf16.mxu0 0
        %1398 = vmatmul.mubr.bf16.gmra.mxu0 %v1263
        %v1399 = vpop.f32.mrf.mxu0
        %v1400 = vadd.f32 %v1087, %v1399
        %v1401 = vpop.f32.mrf.mxu0
        %v1402 = vpop.f32.mrf.mxu0
        %v1403 = vadd.f32 %v1090, %v1402
        %v1404 = vpop.f32.mrf.mxu0
        %1405 = vmatprep.mubr.bf16.mxu0 0
        %1406 = vmatmul.mubr.bf16.gmra.mxu0 %v1266
        %v1407 = vpop.f32.mrf.mxu0
        %v1408 = vadd.f32 %v1095, %v1407
        %v1409 = vpop.f32.mrf.mxu0
        %v1410 = vpop.f32.mrf.mxu0
        %v1411 = vadd.f32 %v1098, %v1410
        %v1412 = vpop.f32.mrf.mxu0
        %1413 = vmatprep.mubr.bf16.mxu0 0
        %1414 = vmatmul.mubr.bf16.gmra.mxu0 %v1269
        %v1415 = vpop.f32.mrf.mxu0
        %v1416 = vadd.f32 %v1103, %v1415
        %v1417 = vpop.f32.mrf.mxu0
        %v1418 = vpop.f32.mrf.mxu0
        %v1419 = vadd.f32 %v1106, %v1418
        %v1420 = vpop.f32.mrf.mxu0
        %1421 = vmatprep.mubr.bf16.mxu0 0
        %1422 = vmatmul.mubr.bf16.gmra.mxu0 %v1272
        %v1423 = vpop.f32.mrf.mxu0
        %v1424 = vadd.f32 %v1111, %v1423
        %v1425 = vpop.f32.mrf.mxu0
        %v1426 = vpop.f32.mrf.mxu0
        %v1427 = vadd.f32 %v1114, %v1426
        %v1428 = vpop.f32.mrf.mxu0
        %1429 = vmatprep.mubr.bf16.mxu0 0
        %1430 = vmatmul.mubr.bf16.gmra.mxu0 %v1275
        %v1431 = vpop.f32.mrf.mxu0
        %v1432 = vadd.f32 %v1119, %v1431
        %v1433 = vpop.f32.mrf.mxu0
        %v1434 = vpop.f32.mrf.mxu0
        %v1435 = vadd.f32 %v1122, %v1434
        %v1436 = vpop.f32.mrf.mxu0
        %1437 = vdwg.mxu0
        %v1438 = vld [vmem:[%s390] sm:$0xe]
        %v1439 = vld [vmem:[%s390 + $0xc] sm:$0xe]
        %v1440 = vld [vmem:[%s390 + $0x18] sm:$0xe]
        %v1441 = vld [vmem:[%s390 + $0x24] sm:$0xe]
        %v1442 = vld [vmem:[%s390 + $0x30] sm:$0xe]
        %v1443 = vld [vmem:[%s390 + $0x3c] sm:$0xe]
        %v1444 = vld [vmem:[%s390 + $0x48] sm:$0xe]
        %v1445 = vld [vmem:[%s390 + $0x54] sm:$0xe]
        %v1446 = vld [vmem:[%s390 + $0xd8] sm:$0xe]
        %v1447 = vld [vmem:[%s390 + $0xe4] sm:$0xe]
        %v1448 = vld [vmem:[%s390 + $0xf0] sm:$0xe]
        %v1449 = vld [vmem:[%s390 + $0xfc] sm:$0xe]
        %v1450 = vld [vmem:[%s390 + $0x108] sm:$0xe]
        %v1451 = vld [vmem:[%s390 + $0x114] sm:$0xe]
        %v1452 = vld [vmem:[%s390 + $0x120] sm:$0xe]
        %v1453 = vld [vmem:[%s390 + $0x12c] sm:$0xe]
        %vm1486 = vcmask 1042432
        %vm1487 = vcmask 1046532
        %vm1488 = vmor %vm1486, %vm1487
        %v1489 = vrot.slane %v1438, 5
        %v1490 = vrot.slane %v1489, 4
        %v1491 = vrot.slane %v392, 5
        %v1492 = vsel %vm1488, %v1490, %v1491
        %v1493 = vrot.slane %v1491, 4
        %v1494 = vrot.slane %v431, 5
        %v1495 = vsel %vm1488, %v1493, %v1494
        %v1496 = vrot.slane %v1439, 5
        %v1497 = vrot.slane %v1496, 4
        %v1498 = vrot.slane %v394, 5
        %v1499 = vsel %vm1488, %v1497, %v1498
        %v1500 = vrot.slane %v1498, 4
        %v1501 = vrot.slane %v432, 5
        %v1502 = vsel %vm1488, %v1500, %v1501
        %v1503 = vrot.slane %v1440, 5
        %v1504 = vrot.slane %v1503, 4
        %v1505 = vrot.slane %v396, 5
        %v1506 = vsel %vm1488, %v1504, %v1505
        %v1507 = vrot.slane %v1505, 4
        %v1508 = vrot.slane %v433, 5
        %v1509 = vsel %vm1488, %v1507, %v1508
        %v1510 = vrot.slane %v1441, 5
        %v1511 = vrot.slane %v1510, 4
        %v1512 = vrot.slane %v398, 5
        %v1513 = vsel %vm1488, %v1511, %v1512
        %v1514 = vrot.slane %v1512, 4
        %v1515 = vrot.slane %v434, 5
        %v1516 = vsel %vm1488, %v1514, %v1515
        %v1517 = vrot.slane %v1442, 5
        %v1518 = vrot.slane %v1517, 4
        %v1519 = vrot.slane %v400, 5
        %v1520 = vsel %vm1488, %v1518, %v1519
        %v1521 = vrot.slane %v1519, 4
        %v1522 = vrot.slane %v435, 5
        %v1523 = vsel %vm1488, %v1521, %v1522
        %v1524 = vrot.slane %v1443, 5
        %v1525 = vrot.slane %v1524, 4
        %v1526 = vrot.slane %v402, 5
        %v1527 = vsel %vm1488, %v1525, %v1526
        %v1528 = vrot.slane %v1526, 4
        %v1529 = vrot.slane %v436, 5
        %v1530 = vsel %vm1488, %v1528, %v1529
        %v1531 = vrot.slane %v1444, 5
        %v1532 = vrot.slane %v1531, 4
        %v1533 = vrot.slane %v404, 5
        %v1534 = vsel %vm1488, %v1532, %v1533
        %v1535 = vrot.slane %v1533, 4
        %v1536 = vrot.slane %v437, 5
        %v1537 = vsel %vm1488, %v1535, %v1536
        %v1538 = vrot.slane %v1445, 5
        %v1539 = vrot.slane %v1538, 4
        %v1540 = vrot.slane %v406, 5
        %v1541 = vsel %vm1488, %v1539, %v1540
        %v1542 = vrot.slane %v1540, 4
        %v1543 = vrot.slane %v438, 5
        %v1544 = vsel %vm1488, %v1542, %v1543
        %v1545 = vrot.slane %v1446, 5
        %v1546 = vrot.slane %v1545, 4
        %v1547 = vrot.slane %v408, 5
        %v1548 = vsel %vm1488, %v1546, %v1547
        %v1549 = vrot.slane %v1547, 4
        %v1550 = vrot.slane %v439, 5
        %v1551 = vsel %vm1488, %v1549, %v1550
        %v1552 = vrot.slane %v1447, 5
        %v1553 = vrot.slane %v1552, 4
        %v1554 = vrot.slane %v410, 5
        %v1555 = vsel %vm1488, %v1553, %v1554
        %v1556 = vrot.slane %v1554, 4
        %v1557 = vrot.slane %v440, 5
        %v1558 = vsel %vm1488, %v1556, %v1557
        %v1559 = vrot.slane %v1448, 5
        %v1560 = vrot.slane %v1559, 4
        %v1561 = vrot.slane %v412, 5
        %v1562 = vsel %vm1488, %v1560, %v1561
        %v1563 = vrot.slane %v1561, 4
        %v1564 = vrot.slane %v441, 5
        %v1565 = vsel %vm1488, %v1563, %v1564
        %v1566 = vrot.slane %v1449, 5
        %v1567 = vrot.slane %v1566, 4
        %v1568 = vrot.slane %v414, 5
        %v1569 = vsel %vm1488, %v1567, %v1568
        %v1570 = vrot.slane %v1568, 4
        %v1571 = vrot.slane %v442, 5
        %v1572 = vsel %vm1488, %v1570, %v1571
        %v1573 = vrot.slane %v1450, 5
        %v1574 = vrot.slane %v1573, 4
        %v1575 = vrot.slane %v416, 5
        %v1576 = vsel %vm1488, %v1574, %v1575
        %v1577 = vrot.slane %v1575, 4
        %v1578 = vrot.slane %v443, 5
        %v1579 = vsel %vm1488, %v1577, %v1578
        %v1580 = vrot.slane %v1451, 5
        %v1581 = vrot.slane %v1580, 4
        %v1582 = vrot.slane %v418, 5
        %v1583 = vsel %vm1488, %v1581, %v1582
        %v1584 = vrot.slane %v1582, 4
        %v1585 = vrot.slane %v444, 5
        %v1586 = vsel %vm1488, %v1584, %v1585
        %v1587 = vrot.slane %v1452, 5
        %v1588 = vrot.slane %v1587, 4
        %v1589 = vrot.slane %v420, 5
        %v1590 = vsel %vm1488, %v1588, %v1589
        %v1591 = vrot.slane %v1589, 4
        %v1592 = vrot.slane %v445, 5
        %v1593 = vsel %vm1488, %v1591, %v1592
        %v1594 = vrot.slane %v1453, 5
        %v1595 = vrot.slane %v1594, 4
        %v1596 = vrot.slane %v422, 5
        %v1597 = vsel %vm1488, %v1595, %v1596
        %v1598 = vrot.slane %v1596, 4
        %v1599 = vrot.slane %v446, 5
        %v1600 = vsel %vm1488, %v1598, %v1599
        %s1601 = scalar_lea.vmem %s1, 64
        %v1602 = vld [vmem:[%s1601] sm:$0xf]
        %v1603 = vld [vmem:[%s1601 + $0x4] sm:$0xf]
        %v1604 = vld [vmem:[%s1601 + $0x8] sm:$0xf]
        %v1605 = vld [vmem:[%s1601 + $0xc] sm:$0xf]
        %v1606 = vld [vmem:[%s1601 + $0x10] sm:$0xf]
        %v1607 = vld [vmem:[%s1601 + $0x14] sm:$0xf]
        %v1608 = vld [vmem:[%s1601 + $0x18] sm:$0xf]
        %v1609 = vld [vmem:[%s1601 + $0x1c] sm:$0xf]
        %v1610 = vunpack.c.l.b16 %v1492
        %v1611 = vunpack.c.l.b16 %v1495
        %v1612 = vunpack.c.l.b16 %v1499
        %v1613 = vunpack.c.l.b16 %v1502
        %v1614 = vunpack.c.l.b16 %v1506
        %v1615 = vunpack.c.l.b16 %v1509
        %v1616 = vunpack.c.l.b16 %v1513
        %v1617 = vunpack.c.l.b16 %v1516
        %v1618 = vunpack.c.l.b16 %v1520
        %v1619 = vunpack.c.l.b16 %v1523
        %v1620 = vunpack.c.l.b16 %v1527
        %v1621 = vunpack.c.l.b16 %v1530
        %v1622 = vunpack.c.l.b16 %v1534
        %v1623 = vunpack.c.l.b16 %v1537
        %v1624 = vunpack.c.l.b16 %v1541
        %v1625 = vunpack.c.l.b16 %v1544
        %v1626 = vunpack.c.l.b16 %v1548
        %v1627 = vunpack.c.l.b16 %v1551
        %v1628 = vunpack.c.l.b16 %v1555
        %v1629 = vunpack.c.l.b16 %v1558
        %v1630 = vunpack.c.l.b16 %v1562
        %v1631 = vunpack.c.l.b16 %v1565
        %v1632 = vunpack.c.l.b16 %v1569
        %v1633 = vunpack.c.l.b16 %v1572
        %v1634 = vunpack.c.l.b16 %v1576
        %v1635 = vunpack.c.l.b16 %v1579
        %v1636 = vunpack.c.l.b16 %v1583
        %v1637 = vunpack.c.l.b16 %v1586
        %v1638 = vunpack.c.l.b16 %v1590
        %v1639 = vunpack.c.l.b16 %v1593
        %v1640 = vunpack.c.l.b16 %v1597
        %v1641 = vunpack.c.l.b16 %v1600
        %v1642 = vpack.c.b16 %v1611, %v1610
        %v1643 = vpack.c.b16 %v1613, %v1612
        %v1644 = vpack.c.b16 %v1615, %v1614
        %v1645 = vpack.c.b16 %v1617, %v1616
        %v1646 = vpack.c.b16 %v1619, %v1618
        %v1647 = vpack.c.b16 %v1621, %v1620
        %v1648 = vpack.c.b16 %v1623, %v1622
        %v1649 = vpack.c.b16 %v1625, %v1624
        %v1650 = vpack.c.b16 %v1627, %v1626
        %v1651 = vpack.c.b16 %v1629, %v1628
        %v1652 = vpack.c.b16 %v1631, %v1630
        %v1653 = vpack.c.b16 %v1633, %v1632
        %v1654 = vpack.c.b16 %v1635, %v1634
        %v1655 = vpack.c.b16 %v1637, %v1636
        %v1656 = vpack.c.b16 %v1639, %v1638
        %v1657 = vpack.c.b16 %v1641, %v1640
        %v1666 = vunpack.c.l.b16 %v1602
        %v1667 = vunpack.c.l.b16 %v1603
        %v1668 = vunpack.c.l.b16 %v1604
        %v1669 = vunpack.c.l.b16 %v1605
        %v1670 = vunpack.c.l.b16 %v1606
        %v1671 = vunpack.c.l.b16 %v1607
        %v1672 = vunpack.c.l.b16 %v1608
        %v1673 = vunpack.c.l.b16 %v1609
        %v1674 = vpack.c.b16 %v1667, %v1666
        %v1675 = vpack.c.b16 %v1669, %v1668
        %v1676 = vpack.c.b16 %v1671, %v1670
        %v1677 = vpack.c.b16 %v1673, %v1672
        %v1683 = vsel %vm915, %v1642, 0
        %v1686 = vsel %vm915, %v1643, 0
        %v1689 = vsel %vm915, %v1644, 0
        %v1692 = vsel %vm915, %v1645, 0
        %v1695 = vsel %vm915, %v1646, 0
        %v1698 = vsel %vm915, %v1647, 0
        %v1701 = vsel %vm915, %v1648, 0
        %v1704 = vsel %vm915, %v1649, 0
        %v1707 = vsel %vm915, %v1650, 0
        %v1710 = vsel %vm915, %v1651, 0
        %v1713 = vsel %vm915, %v1652, 0
        %v1716 = vsel %vm915, %v1653, 0
        %v1719 = vsel %vm915, %v1654, 0
        %v1722 = vsel %vm915, %v1655, 0
        %v1725 = vsel %vm915, %v1656, 0
        %v1728 = vsel %vm915, %v1657, 0
        %1730 = vmatprep.subr.bf16.mxu0 0
        %1731 = vmatpush1.bf16.msra.mxu0 0
        %1732 = vmatprep.subr.bf16.mxu0 0
        %1733 = vmatpush1.bf16.msra.mxu0 0
        %1734 = vmatprep.subr.bf16.mxu0 0
        %1735 = vmatpush1.bf16.msra.mxu0 0
        %1736 = vmatprep.subr.bf16.mxu0 0
        %1737 = vmatpush1.bf16.msra.mxu0 0
        %1738 = vmatprep.subr.bf16.mxu0 0
        %1739 = vmatpush1.bf16.msra.mxu0 %v1677
        %1740 = vmatprep.subr.bf16.mxu0 0
        %1741 = vmatpush1.bf16.msra.mxu0 %v1676
        %1742 = vmatprep.subr.bf16.mxu0 0
        %1743 = vmatpush1.bf16.msra.mxu0 %v1675
        %1744 = vmatprep.subr.bf16.mxu0 0
        %1745 = vmatpush1.bf16.msra.mxu0 %v1674
        %1746 = vmatprep.subr.bf16.mxu0 0
        %1747 = vmatpush2.bf16.msra.mxu0 0
        %1748 = vmatprep.subr.bf16.mxu0 0
        %1749 = vmatpush2.bf16.msra.mxu0 0
        %1750 = vmatprep.subr.bf16.mxu0 0
        %1751 = vmatpush2.bf16.msra.mxu0 0
        %1752 = vmatprep.subr.bf16.mxu0 0
        %1753 = vmatpush2.bf16.msra.mxu0 0
        %1754 = vmatprep.subr.bf16.mxu0 0
        %1755 = vmatpush2.bf16.msra.mxu0 0
        %1756 = vmatprep.subr.bf16.mxu0 0
        %1757 = vmatpush2.bf16.msra.mxu0 0
        %1758 = vmatprep.subr.bf16.mxu0 0
        %1759 = vmatpush2.bf16.msra.mxu0 0
        %1760 = vmatprep.subr.bf16.mxu0 0
        %1761 = vmatpush2.bf16.msra.mxu0 0
        %1762 = vmatprep.mubr.bf16.mxu0 0
        %1763 = vmatmul.mubr.bf16.gmra.mxu0 %v1683
        %v1764 = vpop.f32.mrf.mxu0
        %v1765 = vadd.f32 0.0, %v1764
        %v1766 = vpop.f32.mrf.mxu0
        %v1767 = vpop.f32.mrf.mxu0
        %v1768 = vadd.f32 0.0, %v1767
        %v1769 = vpop.f32.mrf.mxu0
        %1770 = vmatprep.mubr.bf16.mxu0 0
        %1771 = vmatmul.mubr.bf16.gmra.mxu0 %v1686
        %v1772 = vpop.f32.mrf.mxu0
        %v1773 = vadd.f32 0.0, %v1772
        %v1774 = vpop.f32.mrf.mxu0
        %v1775 = vpop.f32.mrf.mxu0
        %v1776 = vadd.f32 0.0, %v1775
        %v1777 = vpop.f32.mrf.mxu0
        %1778 = vmatprep.mubr.bf16.mxu0 0
        %1779 = vmatmul.mubr.bf16.gmra.mxu0 %v1689
        %v1780 = vpop.f32.mrf.mxu0
        %v1781 = vadd.f32 0.0, %v1780
        %v1782 = vpop.f32.mrf.mxu0
        %v1783 = vpop.f32.mrf.mxu0
        %v1784 = vadd.f32 0.0, %v1783
        %v1785 = vpop.f32.mrf.mxu0
        %1786 = vmatprep.mubr.bf16.mxu0 0
        %1787 = vmatmul.mubr.bf16.gmra.mxu0 %v1692
        %v1788 = vpop.f32.mrf.mxu0
        %v1789 = vadd.f32 0.0, %v1788
        %v1790 = vpop.f32.mrf.mxu0
        %v1791 = vpop.f32.mrf.mxu0
        %v1792 = vadd.f32 0.0, %v1791
        %v1793 = vpop.f32.mrf.mxu0
        %1794 = vmatprep.mubr.bf16.mxu0 0
        %1795 = vmatmul.mubr.bf16.gmra.mxu0 %v1695
        %v1796 = vpop.f32.mrf.mxu0
        %v1797 = vadd.f32 0.0, %v1796
        %v1798 = vpop.f32.mrf.mxu0
        %v1799 = vpop.f32.mrf.mxu0
        %v1800 = vadd.f32 0.0, %v1799
        %v1801 = vpop.f32.mrf.mxu0
        %1802 = vmatprep.mubr.bf16.mxu0 0
        %1803 = vmatmul.mubr.bf16.gmra.mxu0 %v1698
        %v1804 = vpop.f32.mrf.mxu0
        %v1805 = vadd.f32 0.0, %v1804
        %v1806 = vpop.f32.mrf.mxu0
        %v1807 = vpop.f32.mrf.mxu0
        %v1808 = vadd.f32 0.0, %v1807
        %v1809 = vpop.f32.mrf.mxu0
        %1810 = vmatprep.mubr.bf16.mxu0 0
        %1811 = vmatmul.mubr.bf16.gmra.mxu0 %v1701
        %v1812 = vpop.f32.mrf.mxu0
        %v1813 = vadd.f32 0.0, %v1812
        %v1814 = vpop.f32.mrf.mxu0
        %v1815 = vpop.f32.mrf.mxu0
        %v1816 = vadd.f32 0.0, %v1815
        %v1817 = vpop.f32.mrf.mxu0
        %1818 = vmatprep.mubr.bf16.mxu0 0
        %1819 = vmatmul.mubr.bf16.gmra.mxu0 %v1704
        %v1820 = vpop.f32.mrf.mxu0
        %v1821 = vadd.f32 0.0, %v1820
        %v1822 = vpop.f32.mrf.mxu0
        %v1823 = vpop.f32.mrf.mxu0
        %v1824 = vadd.f32 0.0, %v1823
        %v1825 = vpop.f32.mrf.mxu0
        %1826 = vmatprep.mubr.bf16.mxu0 0
        %1827 = vmatmul.mubr.bf16.gmra.mxu0 %v1707
        %v1828 = vpop.f32.mrf.mxu0
        %v1829 = vadd.f32 0.0, %v1828
        %v1830 = vpop.f32.mrf.mxu0
        %v1831 = vpop.f32.mrf.mxu0
        %v1832 = vadd.f32 0.0, %v1831
        %v1833 = vpop.f32.mrf.mxu0
        %1834 = vmatprep.mubr.bf16.mxu0 0
        %1835 = vmatmul.mubr.bf16.gmra.mxu0 %v1710
        %v1836 = vpop.f32.mrf.mxu0
        %v1837 = vadd.f32 0.0, %v1836
        %v1838 = vpop.f32.mrf.mxu0
        %v1839 = vpop.f32.mrf.mxu0
        %v1840 = vadd.f32 0.0, %v1839
        %v1841 = vpop.f32.mrf.mxu0
        %1842 = vmatprep.mubr.bf16.mxu0 0
        %1843 = vmatmul.mubr.bf16.gmra.mxu0 %v1713
        %v1844 = vpop.f32.mrf.mxu0
        %v1845 = vadd.f32 0.0, %v1844
        %v1846 = vpop.f32.mrf.mxu0
        %v1847 = vpop.f32.mrf.mxu0
        %v1848 = vadd.f32 0.0, %v1847
        %v1849 = vpop.f32.mrf.mxu0
        %1850 = vmatprep.mubr.bf16.mxu0 0
        %1851 = vmatmul.mubr.bf16.gmra.mxu0 %v1716
        %v1852 = vpop.f32.mrf.mxu0
        %v1853 = vadd.f32 0.0, %v1852
        %v1854 = vpop.f32.mrf.mxu0
        %v1855 = vpop.f32.mrf.mxu0
        %v1856 = vadd.f32 0.0, %v1855
        %v1857 = vpop.f32.mrf.mxu0
        %1858 = vmatprep.mubr.bf16.mxu0 0
        %1859 = vmatmul.mubr.bf16.gmra.mxu0 %v1719
        %v1860 = vpop.f32.mrf.mxu0
        %v1861 = vadd.f32 0.0, %v1860
        %v1862 = vpop.f32.mrf.mxu0
        %v1863 = vpop.f32.mrf.mxu0
        %v1864 = vadd.f32 0.0, %v1863
        %v1865 = vpop.f32.mrf.mxu0
        %1866 = vmatprep.mubr.bf16.mxu0 0
        %1867 = vmatmul.mubr.bf16.gmra.mxu0 %v1722
        %v1868 = vpop.f32.mrf.mxu0
        %v1869 = vadd.f32 0.0, %v1868
        %v1870 = vpop.f32.mrf.mxu0
        %v1871 = vpop.f32.mrf.mxu0
        %v1872 = vadd.f32 0.0, %v1871
        %v1873 = vpop.f32.mrf.mxu0
        %1874 = vmatprep.mubr.bf16.mxu0 0
        %1875 = vmatmul.mubr.bf16.gmra.mxu0 %v1725
        %v1876 = vpop.f32.mrf.mxu0
        %v1877 = vadd.f32 0.0, %v1876
        %v1878 = vpop.f32.mrf.mxu0
        %v1879 = vpop.f32.mrf.mxu0
        %v1880 = vadd.f32 0.0, %v1879
        %v1881 = vpop.f32.mrf.mxu0
        %1882 = vmatprep.mubr.bf16.mxu0 0
        %1883 = vmatmul.mubr.bf16.gmra.mxu0 %v1728
        %v1884 = vpop.f32.mrf.mxu0
        %v1885 = vadd.f32 0.0, %v1884
        %v1886 = vpop.f32.mrf.mxu0
        %v1887 = vpop.f32.mrf.mxu0
        %v1888 = vadd.f32 0.0, %v1887
        %v1889 = vpop.f32.mrf.mxu0
        %1890 = vdwg.mxu0
        %v1891 = vadd.f32 %v1312, %v1765
        %v1892 = vadd.f32 %v1315, %v1768
        %v1893 = vadd.f32 %v1320, %v1773
        %v1894 = vadd.f32 %v1323, %v1776
        %v1895 = vadd.f32 %v1328, %v1781
        %v1896 = vadd.f32 %v1331, %v1784
        %v1897 = vadd.f32 %v1336, %v1789
        %v1898 = vadd.f32 %v1339, %v1792
        %v1899 = vadd.f32 %v1344, %v1797
        %v1900 = vadd.f32 %v1347, %v1800
        %v1901 = vadd.f32 %v1352, %v1805
        %v1902 = vadd.f32 %v1355, %v1808
        %v1903 = vadd.f32 %v1360, %v1813
        %v1904 = vadd.f32 %v1363, %v1816
        %v1905 = vadd.f32 %v1368, %v1821
        %v1906 = vadd.f32 %v1371, %v1824
        %v1907 = vadd.f32 %v1376, %v1829
        %v1908 = vadd.f32 %v1379, %v1832
        %v1909 = vadd.f32 %v1384, %v1837
        %v1910 = vadd.f32 %v1387, %v1840
        %v1911 = vadd.f32 %v1392, %v1845
        %v1912 = vadd.f32 %v1395, %v1848
        %v1913 = vadd.f32 %v1400, %v1853
        %v1914 = vadd.f32 %v1403, %v1856
        %v1915 = vadd.f32 %v1408, %v1861
        %v1916 = vadd.f32 %v1411, %v1864
        %v1917 = vadd.f32 %v1416, %v1869
        %v1918 = vadd.f32 %v1419, %v1872
        %v1919 = vadd.f32 %v1424, %v1877
        %v1920 = vadd.f32 %v1427, %v1880
        %v1921 = vadd.f32 %v1432, %v1885
        %v1922 = vadd.f32 %v1435, %v1888
        %s1923 = sadd.s32 %s387, 1
        %s1924 = smul.u32 %s1923, 3
        %s1925 = smul.addr %s1924, 4
        %s1926 = scalar_lea.vmem %s0, %s1925
        %v1927 = vld [vmem:[%s1926] sm:$0xf]
        %v1928 = vld [vmem:[%s1926 + $0x4] sm:$0xf]
        %v1929 = vld [vmem:[%s1926 + $0xc] sm:$0xf]
        %v1930 = vld [vmem:[%s1926 + $0x10] sm:$0xf]
        %v1931 = vld [vmem:[%s1926 + $0x18] sm:$0xf]
        %v1932 = vld [vmem:[%s1926 + $0x1c] sm:$0xf]
        %v1933 = vld [vmem:[%s1926 + $0x24] sm:$0xf]
        %v1934 = vld [vmem:[%s1926 + $0x28] sm:$0xf]
        %v1935 = vld [vmem:[%s1926 + $0x30] sm:$0xf]
        %v1936 = vld [vmem:[%s1926 + $0x34] sm:$0xf]
        %v1937 = vld [vmem:[%s1926 + $0x3c] sm:$0xf]
        %v1938 = vld [vmem:[%s1926 + $0x40] sm:$0xf]
        %v1939 = vld [vmem:[%s1926 + $0x48] sm:$0xf]
        %v1940 = vld [vmem:[%s1926 + $0x4c] sm:$0xf]
        %v1941 = vld [vmem:[%s1926 + $0x54] sm:$0xf]
        %v1942 = vld [vmem:[%s1926 + $0x58] sm:$0xf]
        %v1943 = vld [vmem:[%s1926 + $0xd8] sm:$0xf]
        %v1944 = vld [vmem:[%s1926 + $0xdc] sm:$0xf]
        %v1945 = vld [vmem:[%s1926 + $0xe4] sm:$0xf]
        %v1946 = vld [vmem:[%s1926 + $0xe8] sm:$0xf]
        %v1947 = vld [vmem:[%s1926 + $0xf0] sm:$0xf]
        %v1948 = vld [vmem:[%s1926 + $0xf4] sm:$0xf]
        %v1949 = vld [vmem:[%s1926 + $0xfc] sm:$0xf]
        %v1950 = vld [vmem:[%s1926 + $0x100] sm:$0xf]
        %v1951 = vld [vmem:[%s1926 + $0x108] sm:$0xf]
        %v1952 = vld [vmem:[%s1926 + $0x10c] sm:$0xf]
        %v1953 = vld [vmem:[%s1926 + $0x114] sm:$0xf]
        %v1954 = vld [vmem:[%s1926 + $0x118] sm:$0xf]
        %v1955 = vld [vmem:[%s1926 + $0x120] sm:$0xf]
        %v1956 = vld [vmem:[%s1926 + $0x124] sm:$0xf]
        %v1957 = vld [vmem:[%s1926 + $0x12c] sm:$0xf]
        %v1958 = vld [vmem:[%s1926 + $0x130] sm:$0xf]
        %s1959 = scalar_lea.vmem %s1, 96
        %v1960 = vld [vmem:[%s1959] sm:$0xf]
        %v1961 = vld [vmem:[%s1959 + $0x4] sm:$0xf]
        %v1962 = vld [vmem:[%s1959 + $0x8] sm:$0xf]
        %v1963 = vld [vmem:[%s1959 + $0xc] sm:$0xf]
        %v1964 = vld [vmem:[%s1959 + $0x10] sm:$0xf]
        %v1965 = vld [vmem:[%s1959 + $0x14] sm:$0xf]
        %v1966 = vld [vmem:[%s1959 + $0x18] sm:$0xf]
        %v1967 = vld [vmem:[%s1959 + $0x1c] sm:$0xf]
        %v2000 = vunpack.c.l.b16 %v1927
        %v2001 = vunpack.c.l.b16 %v1928
        %v2002 = vunpack.c.l.b16 %v1929
        %v2003 = vunpack.c.l.b16 %v1930
        %v2004 = vunpack.c.l.b16 %v1931
        %v2005 = vunpack.c.l.b16 %v1932
        %v2006 = vunpack.c.l.b16 %v1933
        %v2007 = vunpack.c.l.b16 %v1934
        %v2008 = vunpack.c.l.b16 %v1935
        %v2009 = vunpack.c.l.b16 %v1936
        %v2010 = vunpack.c.l.b16 %v1937
        %v2011 = vunpack.c.l.b16 %v1938
        %v2012 = vunpack.c.l.b16 %v1939
        %v2013 = vunpack.c.l.b16 %v1940
        %v2014 = vunpack.c.l.b16 %v1941
        %v2015 = vunpack.c.l.b16 %v1942
        %v2016 = vunpack.c.l.b16 %v1943
        %v2017 = vunpack.c.l.b16 %v1944
        %v2018 = vunpack.c.l.b16 %v1945
        %v2019 = vunpack.c.l.b16 %v1946
        %v2020 = vunpack.c.l.b16 %v1947
        %v2021 = vunpack.c.l.b16 %v1948
        %v2022 = vunpack.c.l.b16 %v1949
        %v2023 = vunpack.c.l.b16 %v1950
        %v2024 = vunpack.c.l.b16 %v1951
        %v2025 = vunpack.c.l.b16 %v1952
        %v2026 = vunpack.c.l.b16 %v1953
        %v2027 = vunpack.c.l.b16 %v1954
        %v2028 = vunpack.c.l.b16 %v1955
        %v2029 = vunpack.c.l.b16 %v1956
        %v2030 = vunpack.c.l.b16 %v1957
        %v2031 = vunpack.c.l.b16 %v1958
        %v2032 = vpack.c.b16 %v2001, %v2000
        %v2033 = vpack.c.b16 %v2003, %v2002
        %v2034 = vpack.c.b16 %v2005, %v2004
        %v2035 = vpack.c.b16 %v2007, %v2006
        %v2036 = vpack.c.b16 %v2009, %v2008
        %v2037 = vpack.c.b16 %v2011, %v2010
        %v2038 = vpack.c.b16 %v2013, %v2012
        %v2039 = vpack.c.b16 %v2015, %v2014
        %v2040 = vpack.c.b16 %v2017, %v2016
        %v2041 = vpack.c.b16 %v2019, %v2018
        %v2042 = vpack.c.b16 %v2021, %v2020
        %v2043 = vpack.c.b16 %v2023, %v2022
        %v2044 = vpack.c.b16 %v2025, %v2024
        %v2045 = vpack.c.b16 %v2027, %v2026
        %v2046 = vpack.c.b16 %v2029, %v2028
        %v2047 = vpack.c.b16 %v2031, %v2030
        %v2056 = vunpack.c.l.b16 %v1960
        %v2057 = vunpack.c.l.b16 %v1961
        %v2058 = vunpack.c.l.b16 %v1962
        %v2059 = vunpack.c.l.b16 %v1963
        %v2060 = vunpack.c.l.b16 %v1964
        %v2061 = vunpack.c.l.b16 %v1965
        %v2062 = vunpack.c.l.b16 %v1966
        %v2063 = vunpack.c.l.b16 %v1967
        %v2064 = vpack.c.b16 %v2057, %v2056
        %v2065 = vpack.c.b16 %v2059, %v2058
        %v2066 = vpack.c.b16 %v2061, %v2060
        %v2067 = vpack.c.b16 %v2063, %v2062
        %v2073 = vsel %vm915, %v2032, 0
        %v2076 = vsel %vm915, %v2033, 0
        %v2079 = vsel %vm915, %v2034, 0
        %v2082 = vsel %vm915, %v2035, 0
        %v2085 = vsel %vm915, %v2036, 0
        %v2088 = vsel %vm915, %v2037, 0
        %v2091 = vsel %vm915, %v2038, 0
        %v2094 = vsel %vm915, %v2039, 0
        %v2097 = vsel %vm915, %v2040, 0
        %v2100 = vsel %vm915, %v2041, 0
        %v2103 = vsel %vm915, %v2042, 0
        %v2106 = vsel %vm915, %v2043, 0
        %v2109 = vsel %vm915, %v2044, 0
        %v2112 = vsel %vm915, %v2045, 0
        %v2115 = vsel %vm915, %v2046, 0
        %v2118 = vsel %vm915, %v2047, 0
        %2120 = vmatprep.subr.bf16.mxu0 0
        %2121 = vmatpush1.bf16.msra.mxu0 0
        %2122 = vmatprep.subr.bf16.mxu0 0
        %2123 = vmatpush1.bf16.msra.mxu0 0
        %2124 = vmatprep.subr.bf16.mxu0 0
        %2125 = vmatpush1.bf16.msra.mxu0 0
        %2126 = vmatprep.subr.bf16.mxu0 0
        %2127 = vmatpush1.bf16.msra.mxu0 0
        %2128 = vmatprep.subr.bf16.mxu0 0
        %2129 = vmatpush1.bf16.msra.mxu0 %v2067
        %2130 = vmatprep.subr.bf16.mxu0 0
        %2131 = vmatpush1.bf16.msra.mxu0 %v2066
        %2132 = vmatprep.subr.bf16.mxu0 0
        %2133 = vmatpush1.bf16.msra.mxu0 %v2065
        %2134 = vmatprep.subr.bf16.mxu0 0
        %2135 = vmatpush1.bf16.msra.mxu0 %v2064
        %2136 = vmatprep.subr.bf16.mxu0 0
        %2137 = vmatpush2.bf16.msra.mxu0 0
        %2138 = vmatprep.subr.bf16.mxu0 0
        %2139 = vmatpush2.bf16.msra.mxu0 0
        %2140 = vmatprep.subr.bf16.mxu0 0
        %2141 = vmatpush2.bf16.msra.mxu0 0
        %2142 = vmatprep.subr.bf16.mxu0 0
        %2143 = vmatpush2.bf16.msra.mxu0 0
        %2144 = vmatprep.subr.bf16.mxu0 0
        %2145 = vmatpush2.bf16.msra.mxu0 0
        %2146 = vmatprep.subr.bf16.mxu0 0
        %2147 = vmatpush2.bf16.msra.mxu0 0
        %2148 = vmatprep.subr.bf16.mxu0 0
        %2149 = vmatpush2.bf16.msra.mxu0 0
        %2150 = vmatprep.subr.bf16.mxu0 0
        %2151 = vmatpush2.bf16.msra.mxu0 0
        %2152 = vmatprep.mubr.bf16.mxu0 0
        %2153 = vmatmul.mubr.bf16.gmra.mxu0 %v2073
        %v2154 = vpop.f32.mrf.mxu0
        %v2155 = vadd.f32 0.0, %v2154
        %v2156 = vpop.f32.mrf.mxu0
        %v2157 = vpop.f32.mrf.mxu0
        %v2158 = vadd.f32 0.0, %v2157
        %v2159 = vpop.f32.mrf.mxu0
        %2160 = vmatprep.mubr.bf16.mxu0 0
        %2161 = vmatmul.mubr.bf16.gmra.mxu0 %v2076
        %v2162 = vpop.f32.mrf.mxu0
        %v2163 = vadd.f32 0.0, %v2162
        %v2164 = vpop.f32.mrf.mxu0
        %v2165 = vpop.f32.mrf.mxu0
        %v2166 = vadd.f32 0.0, %v2165
        %v2167 = vpop.f32.mrf.mxu0
        %2168 = vmatprep.mubr.bf16.mxu0 0
        %2169 = vmatmul.mubr.bf16.gmra.mxu0 %v2079
        %v2170 = vpop.f32.mrf.mxu0
        %v2171 = vadd.f32 0.0, %v2170
        %v2172 = vpop.f32.mrf.mxu0
        %v2173 = vpop.f32.mrf.mxu0
        %v2174 = vadd.f32 0.0, %v2173
        %v2175 = vpop.f32.mrf.mxu0
        %2176 = vmatprep.mubr.bf16.mxu0 0
        %2177 = vmatmul.mubr.bf16.gmra.mxu0 %v2082
        %v2178 = vpop.f32.mrf.mxu0
        %v2179 = vadd.f32 0.0, %v2178
        %v2180 = vpop.f32.mrf.mxu0
        %v2181 = vpop.f32.mrf.mxu0
        %v2182 = vadd.f32 0.0, %v2181
        %v2183 = vpop.f32.mrf.mxu0
        %2184 = vmatprep.mubr.bf16.mxu0 0
        %2185 = vmatmul.mubr.bf16.gmra.mxu0 %v2085
        %v2186 = vpop.f32.mrf.mxu0
        %v2187 = vadd.f32 0.0, %v2186
        %v2188 = vpop.f32.mrf.mxu0
        %v2189 = vpop.f32.mrf.mxu0
        %v2190 = vadd.f32 0.0, %v2189
        %v2191 = vpop.f32.mrf.mxu0
        %2192 = vmatprep.mubr.bf16.mxu0 0
        %2193 = vmatmul.mubr.bf16.gmra.mxu0 %v2088
        %v2194 = vpop.f32.mrf.mxu0
        %v2195 = vadd.f32 0.0, %v2194
        %v2196 = vpop.f32.mrf.mxu0
        %v2197 = vpop.f32.mrf.mxu0
        %v2198 = vadd.f32 0.0, %v2197
        %v2199 = vpop.f32.mrf.mxu0
        %2200 = vmatprep.mubr.bf16.mxu0 0
        %2201 = vmatmul.mubr.bf16.gmra.mxu0 %v2091
        %v2202 = vpop.f32.mrf.mxu0
        %v2203 = vadd.f32 0.0, %v2202
        %v2204 = vpop.f32.mrf.mxu0
        %v2205 = vpop.f32.mrf.mxu0
        %v2206 = vadd.f32 0.0, %v2205
        %v2207 = vpop.f32.mrf.mxu0
        %2208 = vmatprep.mubr.bf16.mxu0 0
        %2209 = vmatmul.mubr.bf16.gmra.mxu0 %v2094
        %v2210 = vpop.f32.mrf.mxu0
        %v2211 = vadd.f32 0.0, %v2210
        %v2212 = vpop.f32.mrf.mxu0
        %v2213 = vpop.f32.mrf.mxu0
        %v2214 = vadd.f32 0.0, %v2213
        %v2215 = vpop.f32.mrf.mxu0
        %2216 = vmatprep.mubr.bf16.mxu0 0
        %2217 = vmatmul.mubr.bf16.gmra.mxu0 %v2097
        %v2218 = vpop.f32.mrf.mxu0
        %v2219 = vadd.f32 0.0, %v2218
        %v2220 = vpop.f32.mrf.mxu0
        %v2221 = vpop.f32.mrf.mxu0
        %v2222 = vadd.f32 0.0, %v2221
        %v2223 = vpop.f32.mrf.mxu0
        %2224 = vmatprep.mubr.bf16.mxu0 0
        %2225 = vmatmul.mubr.bf16.gmra.mxu0 %v2100
        %v2226 = vpop.f32.mrf.mxu0
        %v2227 = vadd.f32 0.0, %v2226
        %v2228 = vpop.f32.mrf.mxu0
        %v2229 = vpop.f32.mrf.mxu0
        %v2230 = vadd.f32 0.0, %v2229
        %v2231 = vpop.f32.mrf.mxu0
        %2232 = vmatprep.mubr.bf16.mxu0 0
        %2233 = vmatmul.mubr.bf16.gmra.mxu0 %v2103
        %v2234 = vpop.f32.mrf.mxu0
        %v2235 = vadd.f32 0.0, %v2234
        %v2236 = vpop.f32.mrf.mxu0
        %v2237 = vpop.f32.mrf.mxu0
        %v2238 = vadd.f32 0.0, %v2237
        %v2239 = vpop.f32.mrf.mxu0
        %2240 = vmatprep.mubr.bf16.mxu0 0
        %2241 = vmatmul.mubr.bf16.gmra.mxu0 %v2106
        %v2242 = vpop.f32.mrf.mxu0
        %v2243 = vadd.f32 0.0, %v2242
        %v2244 = vpop.f32.mrf.mxu0
        %v2245 = vpop.f32.mrf.mxu0
        %v2246 = vadd.f32 0.0, %v2245
        %v2247 = vpop.f32.mrf.mxu0
        %2248 = vmatprep.mubr.bf16.mxu0 0
        %2249 = vmatmul.mubr.bf16.gmra.mxu0 %v2109
        %v2250 = vpop.f32.mrf.mxu0
        %v2251 = vadd.f32 0.0, %v2250
        %v2252 = vpop.f32.mrf.mxu0
        %v2253 = vpop.f32.mrf.mxu0
        %v2254 = vadd.f32 0.0, %v2253
        %v2255 = vpop.f32.mrf.mxu0
        %2256 = vmatprep.mubr.bf16.mxu0 0
        %2257 = vmatmul.mubr.bf16.gmra.mxu0 %v2112
        %v2258 = vpop.f32.mrf.mxu0
        %v2259 = vadd.f32 0.0, %v2258
        %v2260 = vpop.f32.mrf.mxu0
        %v2261 = vpop.f32.mrf.mxu0
        %v2262 = vadd.f32 0.0, %v2261
        %v2263 = vpop.f32.mrf.mxu0
        %2264 = vmatprep.mubr.bf16.mxu0 0
        %2265 = vmatmul.mubr.bf16.gmra.mxu0 %v2115
        %v2266 = vpop.f32.mrf.mxu0
        %v2267 = vadd.f32 0.0, %v2266
        %v2268 = vpop.f32.mrf.mxu0
        %v2269 = vpop.f32.mrf.mxu0
        %v2270 = vadd.f32 0.0, %v2269
        %v2271 = vpop.f32.mrf.mxu0
        %2272 = vmatprep.mubr.bf16.mxu0 0
        %2273 = vmatmul.mubr.bf16.gmra.mxu0 %v2118
        %v2274 = vpop.f32.mrf.mxu0
        %v2275 = vadd.f32 0.0, %v2274
        %v2276 = vpop.f32.mrf.mxu0
        %v2277 = vpop.f32.mrf.mxu0
        %v2278 = vadd.f32 0.0, %v2277
        %v2279 = vpop.f32.mrf.mxu0
        %2280 = vdwg.mxu0
        %v2281 = vadd.f32 %v1891, %v2155
        %v2282 = vadd.f32 %v1892, %v2158
        %v2283 = vadd.f32 %v1893, %v2163
        %v2284 = vadd.f32 %v1894, %v2166
        %v2285 = vadd.f32 %v1895, %v2171
        %v2286 = vadd.f32 %v1896, %v2174
        %v2287 = vadd.f32 %v1897, %v2179
        %v2288 = vadd.f32 %v1898, %v2182
        %v2289 = vadd.f32 %v1899, %v2187
        %v2290 = vadd.f32 %v1900, %v2190
        %v2291 = vadd.f32 %v1901, %v2195
        %v2292 = vadd.f32 %v1902, %v2198
        %v2293 = vadd.f32 %v1903, %v2203
        %v2294 = vadd.f32 %v1904, %v2206
        %v2295 = vadd.f32 %v1905, %v2211
        %v2296 = vadd.f32 %v1906, %v2214
        %v2297 = vadd.f32 %v1907, %v2219
        %v2298 = vadd.f32 %v1908, %v2222
        %v2299 = vadd.f32 %v1909, %v2227
        %v2300 = vadd.f32 %v1910, %v2230
        %v2301 = vadd.f32 %v1911, %v2235
        %v2302 = vadd.f32 %v1912, %v2238
        %v2303 = vadd.f32 %v1913, %v2243
        %v2304 = vadd.f32 %v1914, %v2246
        %v2305 = vadd.f32 %v1915, %v2251
        %v2306 = vadd.f32 %v1916, %v2254
        %v2307 = vadd.f32 %v1917, %v2259
        %v2308 = vadd.f32 %v1918, %v2262
        %v2309 = vadd.f32 %v1919, %v2267
        %v2310 = vadd.f32 %v1920, %v2270
        %v2311 = vadd.f32 %v1921, %v2275
        %v2312 = vadd.f32 %v1922, %v2278
        %v2313 = vld [vmem:[%s1926] sm:$0xf]
        %v2314 = vld [vmem:[%s1926 + $0x4] sm:$0xf]
        %v2315 = vld [vmem:[%s1926 + $0x8] sm:$0x1]
        %v2316 = vld [vmem:[%s1926 + $0xc] sm:$0xf]
        %v2317 = vld [vmem:[%s1926 + $0x10] sm:$0xf]
        %v2318 = vld [vmem:[%s1926 + $0x14] sm:$0x1]
        %v2319 = vld [vmem:[%s1926 + $0x18] sm:$0xf]
        %v2320 = vld [vmem:[%s1926 + $0x1c] sm:$0xf]
        %v2321 = vld [vmem:[%s1926 + $0x20] sm:$0x1]
        %v2322 = vld [vmem:[%s1926 + $0x24] sm:$0xf]
        %v2323 = vld [vmem:[%s1926 + $0x28] sm:$0xf]
        %v2324 = vld [vmem:[%s1926 + $0x2c] sm:$0x1]
        %v2325 = vld [vmem:[%s1926 + $0x30] sm:$0xf]
        %v2326 = vld [vmem:[%s1926 + $0x34] sm:$0xf]
        %v2327 = vld [vmem:[%s1926 + $0x38] sm:$0x1]
        %v2328 = vld [vmem:[%s1926 + $0x3c] sm:$0xf]
        %v2329 = vld [vmem:[%s1926 + $0x40] sm:$0xf]
        %v2330 = vld [vmem:[%s1926 + $0x44] sm:$0x1]
        %v2331 = vld [vmem:[%s1926 + $0x48] sm:$0xf]
        %v2332 = vld [vmem:[%s1926 + $0x4c] sm:$0xf]
        %v2333 = vld [vmem:[%s1926 + $0x50] sm:$0x1]
        %v2334 = vld [vmem:[%s1926 + $0x54] sm:$0xf]
        %v2335 = vld [vmem:[%s1926 + $0x58] sm:$0xf]
        %v2336 = vld [vmem:[%s1926 + $0x5c] sm:$0x1]
        %v2337 = vld [vmem:[%s1926 + $0xd8] sm:$0xf]
        %v2338 = vld [vmem:[%s1926 + $0xdc] sm:$0xf]
        %v2339 = vld [vmem:[%s1926 + $0xe0] sm:$0x1]
        %v2340 = vld [vmem:[%s1926 + $0xe4] sm:$0xf]
        %v2341 = vld [vmem:[%s1926 + $0xe8] sm:$0xf]
        %v2342 = vld [vmem:[%s1926 + $0xec] sm:$0x1]
        %v2343 = vld [vmem:[%s1926 + $0xf0] sm:$0xf]
        %v2344 = vld [vmem:[%s1926 + $0xf4] sm:$0xf]
        %v2345 = vld [vmem:[%s1926 + $0xf8] sm:$0x1]
        %v2346 = vld [vmem:[%s1926 + $0xfc] sm:$0xf]
        %v2347 = vld [vmem:[%s1926 + $0x100] sm:$0xf]
        %v2348 = vld [vmem:[%s1926 + $0x104] sm:$0x1]
        %v2349 = vld [vmem:[%s1926 + $0x108] sm:$0xf]
        %v2350 = vld [vmem:[%s1926 + $0x10c] sm:$0xf]
        %v2351 = vld [vmem:[%s1926 + $0x110] sm:$0x1]
        %v2352 = vld [vmem:[%s1926 + $0x114] sm:$0xf]
        %v2353 = vld [vmem:[%s1926 + $0x118] sm:$0xf]
        %v2354 = vld [vmem:[%s1926 + $0x11c] sm:$0x1]
        %v2355 = vld [vmem:[%s1926 + $0x120] sm:$0xf]
        %v2356 = vld [vmem:[%s1926 + $0x124] sm:$0xf]
        %v2357 = vld [vmem:[%s1926 + $0x128] sm:$0x1]
        %v2358 = vld [vmem:[%s1926 + $0x12c] sm:$0xf]
        %v2359 = vld [vmem:[%s1926 + $0x130] sm:$0xf]
        %v2360 = vld [vmem:[%s1926 + $0x134] sm:$0x1]
        %v2362 = vshrl.u32 %v2313, 16
        %v2364 = vrot.slane %v2362, 4
        %v2365 = vshll.u32 %v2313, 16
        %v2367 = vrot.slane %v2365, 5
        %v2368 = vor.u32 %v2364, %v2367
        %v2369 = vrot.slane %v2368, 4
        %v2371 = vshll.u32 %v2314, 16
        %v2373 = vrot.slane %v2371, 5
        %v2374 = vsel %vm449, %v2369, %v2373
        %v2375 = vshrl.u32 %v2314, 16
        %v2377 = vrot.slane %v2375, 4
        %v2378 = vor.u32 %v2377, %v2373
        %v2379 = vrot.slane %v2378, 4
        %v2381 = vshll.u32 %v2315, 16
        %v2383 = vrot.slane %v2381, 5
        %v2384 = vsel %vm449, %v2379, %v2383
        %v2386 = vshrl.u32 %v2316, 16
        %v2388 = vrot.slane %v2386, 4
        %v2389 = vshll.u32 %v2316, 16
        %v2391 = vrot.slane %v2389, 5
        %v2392 = vor.u32 %v2388, %v2391
        %v2393 = vrot.slane %v2392, 4
        %v2395 = vshll.u32 %v2317, 16
        %v2397 = vrot.slane %v2395, 5
        %v2398 = vsel %vm449, %v2393, %v2397
        %v2399 = vshrl.u32 %v2317, 16
        %v2401 = vrot.slane %v2399, 4
        %v2402 = vor.u32 %v2401, %v2397
        %v2403 = vrot.slane %v2402, 4
        %v2405 = vshll.u32 %v2318, 16
        %v2407 = vrot.slane %v2405, 5
        %v2408 = vsel %vm449, %v2403, %v2407
        %v2410 = vshrl.u32 %v2319, 16
        %v2412 = vrot.slane %v2410, 4
        %v2413 = vshll.u32 %v2319, 16
        %v2415 = vrot.slane %v2413, 5
        %v2416 = vor.u32 %v2412, %v2415
        %v2417 = vrot.slane %v2416, 4
        %v2419 = vshll.u32 %v2320, 16
        %v2421 = vrot.slane %v2419, 5
        %v2422 = vsel %vm449, %v2417, %v2421
        %v2423 = vshrl.u32 %v2320, 16
        %v2425 = vrot.slane %v2423, 4
        %v2426 = vor.u32 %v2425, %v2421
        %v2427 = vrot.slane %v2426, 4
        %v2429 = vshll.u32 %v2321, 16
        %v2431 = vrot.slane %v2429, 5
        %v2432 = vsel %vm449, %v2427, %v2431
        %v2434 = vshrl.u32 %v2322, 16
        %v2436 = vrot.slane %v2434, 4
        %v2437 = vshll.u32 %v2322, 16
        %v2439 = vrot.slane %v2437, 5
        %v2440 = vor.u32 %v2436, %v2439
        %v2441 = vrot.slane %v2440, 4
        %v2443 = vshll.u32 %v2323, 16
        %v2445 = vrot.slane %v2443, 5
        %v2446 = vsel %vm449, %v2441, %v2445
        %v2447 = vshrl.u32 %v2323, 16
        %v2449 = vrot.slane %v2447, 4
        %v2450 = vor.u32 %v2449, %v2445
        %v2451 = vrot.slane %v2450, 4
        %v2453 = vshll.u32 %v2324, 16
        %v2455 = vrot.slane %v2453, 5
        %v2456 = vsel %vm449, %v2451, %v2455
        %v2458 = vshrl.u32 %v2325, 16
        %v2460 = vrot.slane %v2458, 4
        %v2461 = vshll.u32 %v2325, 16
        %v2463 = vrot.slane %v2461, 5
        %v2464 = vor.u32 %v2460, %v2463
        %v2465 = vrot.slane %v2464, 4
        %v2467 = vshll.u32 %v2326, 16
        %v2469 = vrot.slane %v2467, 5
        %v2470 = vsel %vm449, %v2465, %v2469
        %v2471 = vshrl.u32 %v2326, 16
        %v2473 = vrot.slane %v2471, 4
        %v2474 = vor.u32 %v2473, %v2469
        %v2475 = vrot.slane %v2474, 4
        %v2477 = vshll.u32 %v2327, 16
        %v2479 = vrot.slane %v2477, 5
        %v2480 = vsel %vm449, %v2475, %v2479
        %v2482 = vshrl.u32 %v2328, 16
        %v2484 = vrot.slane %v2482, 4
        %v2485 = vshll.u32 %v2328, 16
        %v2487 = vrot.slane %v2485, 5
        %v2488 = vor.u32 %v2484, %v2487
        %v2489 = vrot.slane %v2488, 4
        %v2491 = vshll.u32 %v2329, 16
        %v2493 = vrot.slane %v2491, 5
        %v2494 = vsel %vm449, %v2489, %v2493
        %v2495 = vshrl.u32 %v2329, 16
        %v2497 = vrot.slane %v2495, 4
        %v2498 = vor.u32 %v2497, %v2493
        %v2499 = vrot.slane %v2498, 4
        %v2501 = vshll.u32 %v2330, 16
        %v2503 = vrot.slane %v2501, 5
        %v2504 = vsel %vm449, %v2499, %v2503
        %v2506 = vshrl.u32 %v2331, 16
        %v2508 = vrot.slane %v2506, 4
        %v2509 = vshll.u32 %v2331, 16
        %v2511 = vrot.slane %v2509, 5
        %v2512 = vor.u32 %v2508, %v2511
        %v2513 = vrot.slane %v2512, 4
        %v2515 = vshll.u32 %v2332, 16
        %v2517 = vrot.slane %v2515, 5
        %v2518 = vsel %vm449, %v2513, %v2517
        %v2519 = vshrl.u32 %v2332, 16
        %v2521 = vrot.slane %v2519, 4
        %v2522 = vor.u32 %v2521, %v2517
        %v2523 = vrot.slane %v2522, 4
        %v2525 = vshll.u32 %v2333, 16
        %v2527 = vrot.slane %v2525, 5
        %v2528 = vsel %vm449, %v2523, %v2527
        %v2530 = vshrl.u32 %v2334, 16
        %v2532 = vrot.slane %v2530, 4
        %v2533 = vshll.u32 %v2334, 16
        %v2535 = vrot.slane %v2533, 5
        %v2536 = vor.u32 %v2532, %v2535
        %v2537 = vrot.slane %v2536, 4
        %v2539 = vshll.u32 %v2335, 16
        %v2541 = vrot.slane %v2539, 5
        %v2542 = vsel %vm449, %v2537, %v2541
        %v2543 = vshrl.u32 %v2335, 16
        %v2545 = vrot.slane %v2543, 4
        %v2546 = vor.u32 %v2545, %v2541
        %v2547 = vrot.slane %v2546, 4
        %v2549 = vshll.u32 %v2336, 16
        %v2551 = vrot.slane %v2549, 5
        %v2552 = vsel %vm449, %v2547, %v2551
        %v2554 = vshrl.u32 %v2337, 16
        %v2556 = vrot.slane %v2554, 4
        %v2557 = vshll.u32 %v2337, 16
        %v2559 = vrot.slane %v2557, 5
        %v2560 = vor.u32 %v2556, %v2559
        %v2561 = vrot.slane %v2560, 4
        %v2563 = vshll.u32 %v2338, 16
        %v2565 = vrot.slane %v2563, 5
        %v2566 = vsel %vm449, %v2561, %v2565
        %v2567 = vshrl.u32 %v2338, 16
        %v2569 = vrot.slane %v2567, 4
        %v2570 = vor.u32 %v2569, %v2565
        %v2571 = vrot.slane %v2570, 4
        %v2573 = vshll.u32 %v2339, 16
        %v2575 = vrot.slane %v2573, 5
        %v2576 = vsel %vm449, %v2571, %v2575
        %v2578 = vshrl.u32 %v2340, 16
        %v2580 = vrot.slane %v2578, 4
        %v2581 = vshll.u32 %v2340, 16
        %v2583 = vrot.slane %v2581, 5
        %v2584 = vor.u32 %v2580, %v2583
        %v2585 = vrot.slane %v2584, 4
        %v2587 = vshll.u32 %v2341, 16
        %v2589 = vrot.slane %v2587, 5
        %v2590 = vsel %vm449, %v2585, %v2589
        %v2591 = vshrl.u32 %v2341, 16
        %v2593 = vrot.slane %v2591, 4
        %v2594 = vor.u32 %v2593, %v2589
        %v2595 = vrot.slane %v2594, 4
        %v2597 = vshll.u32 %v2342, 16
        %v2599 = vrot.slane %v2597, 5
        %v2600 = vsel %vm449, %v2595, %v2599
        %v2602 = vshrl.u32 %v2343, 16
        %v2604 = vrot.slane %v2602, 4
        %v2605 = vshll.u32 %v2343, 16
        %v2607 = vrot.slane %v2605, 5
        %v2608 = vor.u32 %v2604, %v2607
        %v2609 = vrot.slane %v2608, 4
        %v2611 = vshll.u32 %v2344, 16
        %v2613 = vrot.slane %v2611, 5
        %v2614 = vsel %vm449, %v2609, %v2613
        %v2615 = vshrl.u32 %v2344, 16
        %v2617 = vrot.slane %v2615, 4
        %v2618 = vor.u32 %v2617, %v2613
        %v2619 = vrot.slane %v2618, 4
        %v2621 = vshll.u32 %v2345, 16
        %v2623 = vrot.slane %v2621, 5
        %v2624 = vsel %vm449, %v2619, %v2623
        %v2626 = vshrl.u32 %v2346, 16
        %v2628 = vrot.slane %v2626, 4
        %v2629 = vshll.u32 %v2346, 16
        %v2631 = vrot.slane %v2629, 5
        %v2632 = vor.u32 %v2628, %v2631
        %v2633 = vrot.slane %v2632, 4
        %v2635 = vshll.u32 %v2347, 16
        %v2637 = vrot.slane %v2635, 5
        %v2638 = vsel %vm449, %v2633, %v2637
        %v2639 = vshrl.u32 %v2347, 16
        %v2641 = vrot.slane %v2639, 4
        %v2642 = vor.u32 %v2641, %v2637
        %v2643 = vrot.slane %v2642, 4
        %v2645 = vshll.u32 %v2348, 16
        %v2647 = vrot.slane %v2645, 5
        %v2648 = vsel %vm449, %v2643, %v2647
        %v2650 = vshrl.u32 %v2349, 16
        %v2652 = vrot.slane %v2650, 4
        %v2653 = vshll.u32 %v2349, 16
        %v2655 = vrot.slane %v2653, 5
        %v2656 = vor.u32 %v2652, %v2655
        %v2657 = vrot.slane %v2656, 4
        %v2659 = vshll.u32 %v2350, 16
        %v2661 = vrot.slane %v2659, 5
        %v2662 = vsel %vm449, %v2657, %v2661
        %v2663 = vshrl.u32 %v2350, 16
        %v2665 = vrot.slane %v2663, 4
        %v2666 = vor.u32 %v2665, %v2661
        %v2667 = vrot.slane %v2666, 4
        %v2669 = vshll.u32 %v2351, 16
        %v2671 = vrot.slane %v2669, 5
        %v2672 = vsel %vm449, %v2667, %v2671
        %v2674 = vshrl.u32 %v2352, 16
        %v2676 = vrot.slane %v2674, 4
        %v2677 = vshll.u32 %v2352, 16
        %v2679 = vrot.slane %v2677, 5
        %v2680 = vor.u32 %v2676, %v2679
        %v2681 = vrot.slane %v2680, 4
        %v2683 = vshll.u32 %v2353, 16
        %v2685 = vrot.slane %v2683, 5
        %v2686 = vsel %vm449, %v2681, %v2685
        %v2687 = vshrl.u32 %v2353, 16
        %v2689 = vrot.slane %v2687, 4
        %v2690 = vor.u32 %v2689, %v2685
        %v2691 = vrot.slane %v2690, 4
        %v2693 = vshll.u32 %v2354, 16
        %v2695 = vrot.slane %v2693, 5
        %v2696 = vsel %vm449, %v2691, %v2695
        %v2698 = vshrl.u32 %v2355, 16
        %v2700 = vrot.slane %v2698, 4
        %v2701 = vshll.u32 %v2355, 16
        %v2703 = vrot.slane %v2701, 5
        %v2704 = vor.u32 %v2700, %v2703
        %v2705 = vrot.slane %v2704, 4
        %v2707 = vshll.u32 %v2356, 16
        %v2709 = vrot.slane %v2707, 5
        %v2710 = vsel %vm449, %v2705, %v2709
        %v2711 = vshrl.u32 %v2356, 16
        %v2713 = vrot.slane %v2711, 4
        %v2714 = vor.u32 %v2713, %v2709
        %v2715 = vrot.slane %v2714, 4
        %v2717 = vshll.u32 %v2357, 16
        %v2719 = vrot.slane %v2717, 5
        %v2720 = vsel %vm449, %v2715, %v2719
        %v2722 = vshrl.u32 %v2358, 16
        %v2724 = vrot.slane %v2722, 4
        %v2725 = vshll.u32 %v2358, 16
        %v2727 = vrot.slane %v2725, 5
        %v2728 = vor.u32 %v2724, %v2727
        %v2729 = vrot.slane %v2728, 4
        %v2731 = vshll.u32 %v2359, 16
        %v2733 = vrot.slane %v2731, 5
        %v2734 = vsel %vm449, %v2729, %v2733
        %v2735 = vshrl.u32 %v2359, 16
        %v2737 = vrot.slane %v2735, 4
        %v2738 = vor.u32 %v2737, %v2733
        %v2739 = vrot.slane %v2738, 4
        %v2741 = vshll.u32 %v2360, 16
        %v2743 = vrot.slane %v2741, 5
        %v2744 = vsel %vm449, %v2739, %v2743
        %s2745 = scalar_lea.vmem %s1, 128
        %v2746 = vld [vmem:[%s2745] sm:$0xf]
        %v2747 = vld [vmem:[%s2745 + $0x4] sm:$0xf]
        %v2748 = vld [vmem:[%s2745 + $0x8] sm:$0xf]
        %v2749 = vld [vmem:[%s2745 + $0xc] sm:$0xf]
        %v2750 = vld [vmem:[%s2745 + $0x10] sm:$0xf]
        %v2751 = vld [vmem:[%s2745 + $0x14] sm:$0xf]
        %v2752 = vld [vmem:[%s2745 + $0x18] sm:$0xf]
        %v2753 = vld [vmem:[%s2745 + $0x1c] sm:$0xf]
        %v2754 = vunpack.c.l.b16 %v2374
        %v2755 = vunpack.c.l.b16 %v2384
        %v2756 = vunpack.c.l.b16 %v2398
        %v2757 = vunpack.c.l.b16 %v2408
        %v2758 = vunpack.c.l.b16 %v2422
        %v2759 = vunpack.c.l.b16 %v2432
        %v2760 = vunpack.c.l.b16 %v2446
        %v2761 = vunpack.c.l.b16 %v2456
        %v2762 = vunpack.c.l.b16 %v2470
        %v2763 = vunpack.c.l.b16 %v2480
        %v2764 = vunpack.c.l.b16 %v2494
        %v2765 = vunpack.c.l.b16 %v2504
        %v2766 = vunpack.c.l.b16 %v2518
        %v2767 = vunpack.c.l.b16 %v2528
        %v2768 = vunpack.c.l.b16 %v2542
        %v2769 = vunpack.c.l.b16 %v2552
        %v2770 = vunpack.c.l.b16 %v2566
        %v2771 = vunpack.c.l.b16 %v2576
        %v2772 = vunpack.c.l.b16 %v2590
        %v2773 = vunpack.c.l.b16 %v2600
        %v2774 = vunpack.c.l.b16 %v2614
        %v2775 = vunpack.c.l.b16 %v2624
        %v2776 = vunpack.c.l.b16 %v2638
        %v2777 = vunpack.c.l.b16 %v2648
        %v2778 = vunpack.c.l.b16 %v2662
        %v2779 = vunpack.c.l.b16 %v2672
        %v2780 = vunpack.c.l.b16 %v2686
        %v2781 = vunpack.c.l.b16 %v2696
        %v2782 = vunpack.c.l.b16 %v2710
        %v2783 = vunpack.c.l.b16 %v2720
        %v2784 = vunpack.c.l.b16 %v2734
        %v2785 = vunpack.c.l.b16 %v2744
        %v2786 = vpack.c.b16 %v2755, %v2754
        %v2787 = vpack.c.b16 %v2757, %v2756
        %v2788 = vpack.c.b16 %v2759, %v2758
        %v2789 = vpack.c.b16 %v2761, %v2760
        %v2790 = vpack.c.b16 %v2763, %v2762
        %v2791 = vpack.c.b16 %v2765, %v2764
        %v2792 = vpack.c.b16 %v2767, %v2766
        %v2793 = vpack.c.b16 %v2769, %v2768
        %v2794 = vpack.c.b16 %v2771, %v2770
        %v2795 = vpack.c.b16 %v2773, %v2772
        %v2796 = vpack.c.b16 %v2775, %v2774
        %v2797 = vpack.c.b16 %v2777, %v2776
        %v2798 = vpack.c.b16 %v2779, %v2778
        %v2799 = vpack.c.b16 %v2781, %v2780
        %v2800 = vpack.c.b16 %v2783, %v2782
        %v2801 = vpack.c.b16 %v2785, %v2784
        %v2810 = vunpack.c.l.b16 %v2746
        %v2811 = vunpack.c.l.b16 %v2747
        %v2812 = vunpack.c.l.b16 %v2748
        %v2813 = vunpack.c.l.b16 %v2749
        %v2814 = vunpack.c.l.b16 %v2750
        %v2815 = vunpack.c.l.b16 %v2751
        %v2816 = vunpack.c.l.b16 %v2752
        %v2817 = vunpack.c.l.b16 %v2753
        %v2818 = vpack.c.b16 %v2811, %v2810
        %v2819 = vpack.c.b16 %v2813, %v2812
        %v2820 = vpack.c.b16 %v2815, %v2814
        %v2821 = vpack.c.b16 %v2817, %v2816
        %v2827 = vsel %vm915, %v2786, 0
        %v2830 = vsel %vm915, %v2787, 0
        %v2833 = vsel %vm915, %v2788, 0
        %v2836 = vsel %vm915, %v2789, 0
        %v2839 = vsel %vm915, %v2790, 0
        %v2842 = vsel %vm915, %v2791, 0
        %v2845 = vsel %vm915, %v2792, 0
        %v2848 = vsel %vm915, %v2793, 0
        %v2851 = vsel %vm915, %v2794, 0
        %v2854 = vsel %vm915, %v2795, 0
        %v2857 = vsel %vm915, %v2796, 0
        %v2860 = vsel %vm915, %v2797, 0
        %v2863 = vsel %vm915, %v2798, 0
        %v2866 = vsel %vm915, %v2799, 0
        %v2869 = vsel %vm915, %v2800, 0
        %v2872 = vsel %vm915, %v2801, 0
        %2874 = vmatprep.subr.bf16.mxu0 0
        %2875 = vmatpush1.bf16.msra.mxu0 0
        %2876 = vmatprep.subr.bf16.mxu0 0
        %2877 = vmatpush1.bf16.msra.mxu0 0
        %2878 = vmatprep.subr.bf16.mxu0 0
        %2879 = vmatpush1.bf16.msra.mxu0 0
        %2880 = vmatprep.subr.bf16.mxu0 0
        %2881 = vmatpush1.bf16.msra.mxu0 0
        %2882 = vmatprep.subr.bf16.mxu0 0
        %2883 = vmatpush1.bf16.msra.mxu0 %v2821
        %2884 = vmatprep.subr.bf16.mxu0 0
        %2885 = vmatpush1.bf16.msra.mxu0 %v2820
        %2886 = vmatprep.subr.bf16.mxu0 0
        %2887 = vmatpush1.bf16.msra.mxu0 %v2819
        %2888 = vmatprep.subr.bf16.mxu0 0
        %2889 = vmatpush1.bf16.msra.mxu0 %v2818
        %2890 = vmatprep.subr.bf16.mxu0 0
        %2891 = vmatpush2.bf16.msra.mxu0 0
        %2892 = vmatprep.subr.bf16.mxu0 0
        %2893 = vmatpush2.bf16.msra.mxu0 0
        %2894 = vmatprep.subr.bf16.mxu0 0
        %2895 = vmatpush2.bf16.msra.mxu0 0
        %2896 = vmatprep.subr.bf16.mxu0 0
        %2897 = vmatpush2.bf16.msra.mxu0 0
        %2898 = vmatprep.subr.bf16.mxu0 0
        %2899 = vmatpush2.bf16.msra.mxu0 0
        %2900 = vmatprep.subr.bf16.mxu0 0
        %2901 = vmatpush2.bf16.msra.mxu0 0
        %2902 = vmatprep.subr.bf16.mxu0 0
        %2903 = vmatpush2.bf16.msra.mxu0 0
        %2904 = vmatprep.subr.bf16.mxu0 0
        %2905 = vmatpush2.bf16.msra.mxu0 0
        %2906 = vmatprep.mubr.bf16.mxu0 0
        %2907 = vmatmul.mubr.bf16.gmra.mxu0 %v2827
        %v2908 = vpop.f32.mrf.mxu0
        %v2909 = vadd.f32 0.0, %v2908
        %v2910 = vpop.f32.mrf.mxu0
        %v2911 = vpop.f32.mrf.mxu0
        %v2912 = vadd.f32 0.0, %v2911
        %v2913 = vpop.f32.mrf.mxu0
        %2914 = vmatprep.mubr.bf16.mxu0 0
        %2915 = vmatmul.mubr.bf16.gmra.mxu0 %v2830
        %v2916 = vpop.f32.mrf.mxu0
        %v2917 = vadd.f32 0.0, %v2916
        %v2918 = vpop.f32.mrf.mxu0
        %v2919 = vpop.f32.mrf.mxu0
        %v2920 = vadd.f32 0.0, %v2919
        %v2921 = vpop.f32.mrf.mxu0
        %2922 = vmatprep.mubr.bf16.mxu0 0
        %2923 = vmatmul.mubr.bf16.gmra.mxu0 %v2833
        %v2924 = vpop.f32.mrf.mxu0
        %v2925 = vadd.f32 0.0, %v2924
        %v2926 = vpop.f32.mrf.mxu0
        %v2927 = vpop.f32.mrf.mxu0
        %v2928 = vadd.f32 0.0, %v2927
        %v2929 = vpop.f32.mrf.mxu0
        %2930 = vmatprep.mubr.bf16.mxu0 0
        %2931 = vmatmul.mubr.bf16.gmra.mxu0 %v2836
        %v2932 = vpop.f32.mrf.mxu0
        %v2933 = vadd.f32 0.0, %v2932
        %v2934 = vpop.f32.mrf.mxu0
        %v2935 = vpop.f32.mrf.mxu0
        %v2936 = vadd.f32 0.0, %v2935
        %v2937 = vpop.f32.mrf.mxu0
        %2938 = vmatprep.mubr.bf16.mxu0 0
        %2939 = vmatmul.mubr.bf16.gmra.mxu0 %v2839
        %v2940 = vpop.f32.mrf.mxu0
        %v2941 = vadd.f32 0.0, %v2940
        %v2942 = vpop.f32.mrf.mxu0
        %v2943 = vpop.f32.mrf.mxu0
        %v2944 = vadd.f32 0.0, %v2943
        %v2945 = vpop.f32.mrf.mxu0
        %2946 = vmatprep.mubr.bf16.mxu0 0
        %2947 = vmatmul.mubr.bf16.gmra.mxu0 %v2842
        %v2948 = vpop.f32.mrf.mxu0
        %v2949 = vadd.f32 0.0, %v2948
        %v2950 = vpop.f32.mrf.mxu0
        %v2951 = vpop.f32.mrf.mxu0
        %v2952 = vadd.f32 0.0, %v2951
        %v2953 = vpop.f32.mrf.mxu0
        %2954 = vmatprep.mubr.bf16.mxu0 0
        %2955 = vmatmul.mubr.bf16.gmra.mxu0 %v2845
        %v2956 = vpop.f32.mrf.mxu0
        %v2957 = vadd.f32 0.0, %v2956
        %v2958 = vpop.f32.mrf.mxu0
        %v2959 = vpop.f32.mrf.mxu0
        %v2960 = vadd.f32 0.0, %v2959
        %v2961 = vpop.f32.mrf.mxu0
        %2962 = vmatprep.mubr.bf16.mxu0 0
        %2963 = vmatmul.mubr.bf16.gmra.mxu0 %v2848
        %v2964 = vpop.f32.mrf.mxu0
        %v2965 = vadd.f32 0.0, %v2964
        %v2966 = vpop.f32.mrf.mxu0
        %v2967 = vpop.f32.mrf.mxu0
        %v2968 = vadd.f32 0.0, %v2967
        %v2969 = vpop.f32.mrf.mxu0
        %2970 = vmatprep.mubr.bf16.mxu0 0
        %2971 = vmatmul.mubr.bf16.gmra.mxu0 %v2851
        %v2972 = vpop.f32.mrf.mxu0
        %v2973 = vadd.f32 0.0, %v2972
        %v2974 = vpop.f32.mrf.mxu0
        %v2975 = vpop.f32.mrf.mxu0
        %v2976 = vadd.f32 0.0, %v2975
        %v2977 = vpop.f32.mrf.mxu0
        %2978 = vmatprep.mubr.bf16.mxu0 0
        %2979 = vmatmul.mubr.bf16.gmra.mxu0 %v2854
        %v2980 = vpop.f32.mrf.mxu0
        %v2981 = vadd.f32 0.0, %v2980
        %v2982 = vpop.f32.mrf.mxu0
        %v2983 = vpop.f32.mrf.mxu0
        %v2984 = vadd.f32 0.0, %v2983
        %v2985 = vpop.f32.mrf.mxu0
        %2986 = vmatprep.mubr.bf16.mxu0 0
        %2987 = vmatmul.mubr.bf16.gmra.mxu0 %v2857
        %v2988 = vpop.f32.mrf.mxu0
        %v2989 = vadd.f32 0.0, %v2988
        %v2990 = vpop.f32.mrf.mxu0
        %v2991 = vpop.f32.mrf.mxu0
        %v2992 = vadd.f32 0.0, %v2991
        %v2993 = vpop.f32.mrf.mxu0
        %2994 = vmatprep.mubr.bf16.mxu0 0
        %2995 = vmatmul.mubr.bf16.gmra.mxu0 %v2860
        %v2996 = vpop.f32.mrf.mxu0
        %v2997 = vadd.f32 0.0, %v2996
        %v2998 = vpop.f32.mrf.mxu0
        %v2999 = vpop.f32.mrf.mxu0
        %v3000 = vadd.f32 0.0, %v2999
        %v3001 = vpop.f32.mrf.mxu0
        %3002 = vmatprep.mubr.bf16.mxu0 0
        %3003 = vmatmul.mubr.bf16.gmra.mxu0 %v2863
        %v3004 = vpop.f32.mrf.mxu0
        %v3005 = vadd.f32 0.0, %v3004
        %v3006 = vpop.f32.mrf.mxu0
        %v3007 = vpop.f32.mrf.mxu0
        %v3008 = vadd.f32 0.0, %v3007
        %v3009 = vpop.f32.mrf.mxu0
        %3010 = vmatprep.mubr.bf16.mxu0 0
        %3011 = vmatmul.mubr.bf16.gmra.mxu0 %v2866
        %v3012 = vpop.f32.mrf.mxu0
        %v3013 = vadd.f32 0.0, %v3012
        %v3014 = vpop.f32.mrf.mxu0
        %v3015 = vpop.f32.mrf.mxu0
        %v3016 = vadd.f32 0.0, %v3015
        %v3017 = vpop.f32.mrf.mxu0
        %3018 = vmatprep.mubr.bf16.mxu0 0
        %3019 = vmatmul.mubr.bf16.gmra.mxu0 %v2869
        %v3020 = vpop.f32.mrf.mxu0
        %v3021 = vadd.f32 0.0, %v3020
        %v3022 = vpop.f32.mrf.mxu0
        %v3023 = vpop.f32.mrf.mxu0
        %v3024 = vadd.f32 0.0, %v3023
        %v3025 = vpop.f32.mrf.mxu0
        %3026 = vmatprep.mubr.bf16.mxu0 0
        %3027 = vmatmul.mubr.bf16.gmra.mxu0 %v2872
        %v3028 = vpop.f32.mrf.mxu0
        %v3029 = vadd.f32 0.0, %v3028
        %v3030 = vpop.f32.mrf.mxu0
        %v3031 = vpop.f32.mrf.mxu0
        %v3032 = vadd.f32 0.0, %v3031
        %v3033 = vpop.f32.mrf.mxu0
        %3034 = vdwg.mxu0
        %v3035 = vadd.f32 %v2281, %v2909
        %v3036 = vadd.f32 %v2282, %v2912
        %v3037 = vadd.f32 %v2283, %v2917
        %v3038 = vadd.f32 %v2284, %v2920
        %v3039 = vadd.f32 %v2285, %v2925
        %v3040 = vadd.f32 %v2286, %v2928
        %v3041 = vadd.f32 %v2287, %v2933
        %v3042 = vadd.f32 %v2288, %v2936
        %v3043 = vadd.f32 %v2289, %v2941
        %v3044 = vadd.f32 %v2290, %v2944
        %v3045 = vadd.f32 %v2291, %v2949
        %v3046 = vadd.f32 %v2292, %v2952
        %v3047 = vadd.f32 %v2293, %v2957
        %v3048 = vadd.f32 %v2294, %v2960
        %v3049 = vadd.f32 %v2295, %v2965
        %v3050 = vadd.f32 %v2296, %v2968
        %v3051 = vadd.f32 %v2297, %v2973
        %v3052 = vadd.f32 %v2298, %v2976
        %v3053 = vadd.f32 %v2299, %v2981
        %v3054 = vadd.f32 %v2300, %v2984
        %v3055 = vadd.f32 %v2301, %v2989
        %v3056 = vadd.f32 %v2302, %v2992
        %v3057 = vadd.f32 %v2303, %v2997
        %v3058 = vadd.f32 %v2304, %v3000
        %v3059 = vadd.f32 %v2305, %v3005
        %v3060 = vadd.f32 %v2306, %v3008
        %v3061 = vadd.f32 %v2307, %v3013
        %v3062 = vadd.f32 %v2308, %v3016
        %v3063 = vadd.f32 %v2309, %v3021
        %v3064 = vadd.f32 %v2310, %v3024
        %v3065 = vadd.f32 %v2311, %v3029
        %v3066 = vadd.f32 %v2312, %v3032
        %v3067 = vld [vmem:[%s1926] sm:$0xe]
        %v3068 = vld [vmem:[%s1926 + $0xc] sm:$0xe]
        %v3069 = vld [vmem:[%s1926 + $0x18] sm:$0xe]
        %v3070 = vld [vmem:[%s1926 + $0x24] sm:$0xe]
        %v3071 = vld [vmem:[%s1926 + $0x30] sm:$0xe]
        %v3072 = vld [vmem:[%s1926 + $0x3c] sm:$0xe]
        %v3073 = vld [vmem:[%s1926 + $0x48] sm:$0xe]
        %v3074 = vld [vmem:[%s1926 + $0x54] sm:$0xe]
        %v3075 = vld [vmem:[%s1926 + $0xd8] sm:$0xe]
        %v3076 = vld [vmem:[%s1926 + $0xe4] sm:$0xe]
        %v3077 = vld [vmem:[%s1926 + $0xf0] sm:$0xe]
        %v3078 = vld [vmem:[%s1926 + $0xfc] sm:$0xe]
        %v3079 = vld [vmem:[%s1926 + $0x108] sm:$0xe]
        %v3080 = vld [vmem:[%s1926 + $0x114] sm:$0xe]
        %v3081 = vld [vmem:[%s1926 + $0x120] sm:$0xe]
        %v3082 = vld [vmem:[%s1926 + $0x12c] sm:$0xe]
        %v3131 = vrot.slane %v3067, 5
        %v3132 = vrot.slane %v3131, 4
        %v3133 = vrot.slane %v2314, 5
        %v3134 = vsel %vm1488, %v3132, %v3133
        %v3135 = vrot.slane %v3133, 4
        %v3136 = vrot.slane %v2315, 5
        %v3137 = vsel %vm1488, %v3135, %v3136
        %v3138 = vrot.slane %v3068, 5
        %v3139 = vrot.slane %v3138, 4
        %v3140 = vrot.slane %v2317, 5
        %v3141 = vsel %vm1488, %v3139, %v3140
        %v3142 = vrot.slane %v3140, 4
        %v3143 = vrot.slane %v2318, 5
        %v3144 = vsel %vm1488, %v3142, %v3143
        %v3145 = vrot.slane %v3069, 5
        %v3146 = vrot.slane %v3145, 4
        %v3147 = vrot.slane %v2320, 5
        %v3148 = vsel %vm1488, %v3146, %v3147
        %v3149 = vrot.slane %v3147, 4
        %v3150 = vrot.slane %v2321, 5
        %v3151 = vsel %vm1488, %v3149, %v3150
        %v3152 = vrot.slane %v3070, 5
        %v3153 = vrot.slane %v3152, 4
        %v3154 = vrot.slane %v2323, 5
        %v3155 = vsel %vm1488, %v3153, %v3154
        %v3156 = vrot.slane %v3154, 4
        %v3157 = vrot.slane %v2324, 5
        %v3158 = vsel %vm1488, %v3156, %v3157
        %v3159 = vrot.slane %v3071, 5
        %v3160 = vrot.slane %v3159, 4
        %v3161 = vrot.slane %v2326, 5
        %v3162 = vsel %vm1488, %v3160, %v3161
        %v3163 = vrot.slane %v3161, 4
        %v3164 = vrot.slane %v2327, 5
        %v3165 = vsel %vm1488, %v3163, %v3164
        %v3166 = vrot.slane %v3072, 5
        %v3167 = vrot.slane %v3166, 4
        %v3168 = vrot.slane %v2329, 5
        %v3169 = vsel %vm1488, %v3167, %v3168
        %v3170 = vrot.slane %v3168, 4
        %v3171 = vrot.slane %v2330, 5
        %v3172 = vsel %vm1488, %v3170, %v3171
        %v3173 = vrot.slane %v3073, 5
        %v3174 = vrot.slane %v3173, 4
        %v3175 = vrot.slane %v2332, 5
        %v3176 = vsel %vm1488, %v3174, %v3175
        %v3177 = vrot.slane %v3175, 4
        %v3178 = vrot.slane %v2333, 5
        %v3179 = vsel %vm1488, %v3177, %v3178
        %v3180 = vrot.slane %v3074, 5
        %v3181 = vrot.slane %v3180, 4
        %v3182 = vrot.slane %v2335, 5
        %v3183 = vsel %vm1488, %v3181, %v3182
        %v3184 = vrot.slane %v3182, 4
        %v3185 = vrot.slane %v2336, 5
        %v3186 = vsel %vm1488, %v3184, %v3185
        %v3187 = vrot.slane %v3075, 5
        %v3188 = vrot.slane %v3187, 4
        %v3189 = vrot.slane %v2338, 5
        %v3190 = vsel %vm1488, %v3188, %v3189
        %v3191 = vrot.slane %v3189, 4
        %v3192 = vrot.slane %v2339, 5
        %v3193 = vsel %vm1488, %v3191, %v3192
        %v3194 = vrot.slane %v3076, 5
        %v3195 = vrot.slane %v3194, 4
        %v3196 = vrot.slane %v2341, 5
        %v3197 = vsel %vm1488, %v3195, %v3196
        %v3198 = vrot.slane %v3196, 4
        %v3199 = vrot.slane %v2342, 5
        %v3200 = vsel %vm1488, %v3198, %v3199
        %v3201 = vrot.slane %v3077, 5
        %v3202 = vrot.slane %v3201, 4
        %v3203 = vrot.slane %v2344, 5
        %v3204 = vsel %vm1488, %v3202, %v3203
        %v3205 = vrot.slane %v3203, 4
        %v3206 = vrot.slane %v2345, 5
        %v3207 = vsel %vm1488, %v3205, %v3206
        %v3208 = vrot.slane %v3078, 5
        %v3209 = vrot.slane %v3208, 4
        %v3210 = vrot.slane %v2347, 5
        %v3211 = vsel %vm1488, %v3209, %v3210
        %v3212 = vrot.slane %v3210, 4
        %v3213 = vrot.slane %v2348, 5
        %v3214 = vsel %vm1488, %v3212, %v3213
        %v3215 = vrot.slane %v3079, 5
        %v3216 = vrot.slane %v3215, 4
        %v3217 = vrot.slane %v2350, 5
        %v3218 = vsel %vm1488, %v3216, %v3217
        %v3219 = vrot.slane %v3217, 4
        %v3220 = vrot.slane %v2351, 5
        %v3221 = vsel %vm1488, %v3219, %v3220
        %v3222 = vrot.slane %v3080, 5
        %v3223 = vrot.slane %v3222, 4
        %v3224 = vrot.slane %v2353, 5
        %v3225 = vsel %vm1488, %v3223, %v3224
        %v3226 = vrot.slane %v3224, 4
        %v3227 = vrot.slane %v2354, 5
        %v3228 = vsel %vm1488, %v3226, %v3227
        %v3229 = vrot.slane %v3081, 5
        %v3230 = vrot.slane %v3229, 4
        %v3231 = vrot.slane %v2356, 5
        %v3232 = vsel %vm1488, %v3230, %v3231
        %v3233 = vrot.slane %v3231, 4
        %v3234 = vrot.slane %v2357, 5
        %v3235 = vsel %vm1488, %v3233, %v3234
        %v3236 = vrot.slane %v3082, 5
        %v3237 = vrot.slane %v3236, 4
        %v3238 = vrot.slane %v2359, 5
        %v3239 = vsel %vm1488, %v3237, %v3238
        %v3240 = vrot.slane %v3238, 4
        %v3241 = vrot.slane %v2360, 5
        %v3242 = vsel %vm1488, %v3240, %v3241
        %s3243 = scalar_lea.vmem %s1, 160
        %v3244 = vld [vmem:[%s3243] sm:$0xf]
        %v3245 = vld [vmem:[%s3243 + $0x4] sm:$0xf]
        %v3246 = vld [vmem:[%s3243 + $0x8] sm:$0xf]
        %v3247 = vld [vmem:[%s3243 + $0xc] sm:$0xf]
        %v3248 = vld [vmem:[%s3243 + $0x10] sm:$0xf]
        %v3249 = vld [vmem:[%s3243 + $0x14] sm:$0xf]
        %v3250 = vld [vmem:[%s3243 + $0x18] sm:$0xf]
        %v3251 = vld [vmem:[%s3243 + $0x1c] sm:$0xf]
        %v3252 = vunpack.c.l.b16 %v3134
        %v3253 = vunpack.c.l.b16 %v3137
        %v3254 = vunpack.c.l.b16 %v3141
        %v3255 = vunpack.c.l.b16 %v3144
        %v3256 = vunpack.c.l.b16 %v3148
        %v3257 = vunpack.c.l.b16 %v3151
        %v3258 = vunpack.c.l.b16 %v3155
        %v3259 = vunpack.c.l.b16 %v3158
        %v3260 = vunpack.c.l.b16 %v3162
        %v3261 = vunpack.c.l.b16 %v3165
        %v3262 = vunpack.c.l.b16 %v3169
        %v3263 = vunpack.c.l.b16 %v3172
        %v3264 = vunpack.c.l.b16 %v3176
        %v3265 = vunpack.c.l.b16 %v3179
        %v3266 = vunpack.c.l.b16 %v3183
        %v3267 = vunpack.c.l.b16 %v3186
        %v3268 = vunpack.c.l.b16 %v3190
        %v3269 = vunpack.c.l.b16 %v3193
        %v3270 = vunpack.c.l.b16 %v3197
        %v3271 = vunpack.c.l.b16 %v3200
        %v3272 = vunpack.c.l.b16 %v3204
        %v3273 = vunpack.c.l.b16 %v3207
        %v3274 = vunpack.c.l.b16 %v3211
        %v3275 = vunpack.c.l.b16 %v3214
        %v3276 = vunpack.c.l.b16 %v3218
        %v3277 = vunpack.c.l.b16 %v3221
        %v3278 = vunpack.c.l.b16 %v3225
        %v3279 = vunpack.c.l.b16 %v3228
        %v3280 = vunpack.c.l.b16 %v3232
        %v3281 = vunpack.c.l.b16 %v3235
        %v3282 = vunpack.c.l.b16 %v3239
        %v3283 = vunpack.c.l.b16 %v3242
        %v3284 = vpack.c.b16 %v3253, %v3252
        %v3285 = vpack.c.b16 %v3255, %v3254
        %v3286 = vpack.c.b16 %v3257, %v3256
        %v3287 = vpack.c.b16 %v3259, %v3258
        %v3288 = vpack.c.b16 %v3261, %v3260
        %v3289 = vpack.c.b16 %v3263, %v3262
        %v3290 = vpack.c.b16 %v3265, %v3264
        %v3291 = vpack.c.b16 %v3267, %v3266
        %v3292 = vpack.c.b16 %v3269, %v3268
        %v3293 = vpack.c.b16 %v3271, %v3270
        %v3294 = vpack.c.b16 %v3273, %v3272
        %v3295 = vpack.c.b16 %v3275, %v3274
        %v3296 = vpack.c.b16 %v3277, %v3276
        %v3297 = vpack.c.b16 %v3279, %v3278
        %v3298 = vpack.c.b16 %v3281, %v3280
        %v3299 = vpack.c.b16 %v3283, %v3282
        %v3308 = vunpack.c.l.b16 %v3244
        %v3309 = vunpack.c.l.b16 %v3245
        %v3310 = vunpack.c.l.b16 %v3246
        %v3311 = vunpack.c.l.b16 %v3247
        %v3312 = vunpack.c.l.b16 %v3248
        %v3313 = vunpack.c.l.b16 %v3249
        %v3314 = vunpack.c.l.b16 %v3250
        %v3315 = vunpack.c.l.b16 %v3251
        %v3316 = vpack.c.b16 %v3309, %v3308
        %v3317 = vpack.c.b16 %v3311, %v3310
        %v3318 = vpack.c.b16 %v3313, %v3312
        %v3319 = vpack.c.b16 %v3315, %v3314
        %v3325 = vsel %vm915, %v3284, 0
        %v3328 = vsel %vm915, %v3285, 0
        %v3331 = vsel %vm915, %v3286, 0
        %v3334 = vsel %vm915, %v3287, 0
        %v3337 = vsel %vm915, %v3288, 0
        %v3340 = vsel %vm915, %v3289, 0
        %v3343 = vsel %vm915, %v3290, 0
        %v3346 = vsel %vm915, %v3291, 0
        %v3349 = vsel %vm915, %v3292, 0
        %v3352 = vsel %vm915, %v3293, 0
        %v3355 = vsel %vm915, %v3294, 0
        %v3358 = vsel %vm915, %v3295, 0
        %v3361 = vsel %vm915, %v3296, 0
        %v3364 = vsel %vm915, %v3297, 0
        %v3367 = vsel %vm915, %v3298, 0
        %v3370 = vsel %vm915, %v3299, 0
        %3372 = vmatprep.subr.bf16.mxu0 0
        %3373 = vmatpush1.bf16.msra.mxu0 0
        %3374 = vmatprep.subr.bf16.mxu0 0
        %3375 = vmatpush1.bf16.msra.mxu0 0
        %3376 = vmatprep.subr.bf16.mxu0 0
        %3377 = vmatpush1.bf16.msra.mxu0 0
        %3378 = vmatprep.subr.bf16.mxu0 0
        %3379 = vmatpush1.bf16.msra.mxu0 0
        %3380 = vmatprep.subr.bf16.mxu0 0
        %3381 = vmatpush1.bf16.msra.mxu0 %v3319
        %3382 = vmatprep.subr.bf16.mxu0 0
        %3383 = vmatpush1.bf16.msra.mxu0 %v3318
        %3384 = vmatprep.subr.bf16.mxu0 0
        %3385 = vmatpush1.bf16.msra.mxu0 %v3317
        %3386 = vmatprep.subr.bf16.mxu0 0
        %3387 = vmatpush1.bf16.msra.mxu0 %v3316
        %3388 = vmatprep.subr.bf16.mxu0 0
        %3389 = vmatpush2.bf16.msra.mxu0 0
        %3390 = vmatprep.subr.bf16.mxu0 0
        %3391 = vmatpush2.bf16.msra.mxu0 0
        %3392 = vmatprep.subr.bf16.mxu0 0
        %3393 = vmatpush2.bf16.msra.mxu0 0
        %3394 = vmatprep.subr.bf16.mxu0 0
        %3395 = vmatpush2.bf16.msra.mxu0 0
        %3396 = vmatprep.subr.bf16.mxu0 0
        %3397 = vmatpush2.bf16.msra.mxu0 0
        %3398 = vmatprep.subr.bf16.mxu0 0
        %3399 = vmatpush2.bf16.msra.mxu0 0
        %3400 = vmatprep.subr.bf16.mxu0 0
        %3401 = vmatpush2.bf16.msra.mxu0 0
        %3402 = vmatprep.subr.bf16.mxu0 0
        %3403 = vmatpush2.bf16.msra.mxu0 0
        %3404 = vmatprep.mubr.bf16.mxu0 0
        %3405 = vmatmul.mubr.bf16.gmra.mxu0 %v3325
        %v3406 = vpop.f32.mrf.mxu0
        %v3407 = vadd.f32 0.0, %v3406
        %v3408 = vpop.f32.mrf.mxu0
        %v3409 = vpop.f32.mrf.mxu0
        %v3410 = vadd.f32 0.0, %v3409
        %v3411 = vpop.f32.mrf.mxu0
        %3412 = vmatprep.mubr.bf16.mxu0 0
        %3413 = vmatmul.mubr.bf16.gmra.mxu0 %v3328
        %v3414 = vpop.f32.mrf.mxu0
        %v3415 = vadd.f32 0.0, %v3414
        %v3416 = vpop.f32.mrf.mxu0
        %v3417 = vpop.f32.mrf.mxu0
        %v3418 = vadd.f32 0.0, %v3417
        %v3419 = vpop.f32.mrf.mxu0
        %3420 = vmatprep.mubr.bf16.mxu0 0
        %3421 = vmatmul.mubr.bf16.gmra.mxu0 %v3331
        %v3422 = vpop.f32.mrf.mxu0
        %v3423 = vadd.f32 0.0, %v3422
        %v3424 = vpop.f32.mrf.mxu0
        %v3425 = vpop.f32.mrf.mxu0
        %v3426 = vadd.f32 0.0, %v3425
        %v3427 = vpop.f32.mrf.mxu0
        %3428 = vmatprep.mubr.bf16.mxu0 0
        %3429 = vmatmul.mubr.bf16.gmra.mxu0 %v3334
        %v3430 = vpop.f32.mrf.mxu0
        %v3431 = vadd.f32 0.0, %v3430
        %v3432 = vpop.f32.mrf.mxu0
        %v3433 = vpop.f32.mrf.mxu0
        %v3434 = vadd.f32 0.0, %v3433
        %v3435 = vpop.f32.mrf.mxu0
        %3436 = vmatprep.mubr.bf16.mxu0 0
        %3437 = vmatmul.mubr.bf16.gmra.mxu0 %v3337
        %v3438 = vpop.f32.mrf.mxu0
        %v3439 = vadd.f32 0.0, %v3438
        %v3440 = vpop.f32.mrf.mxu0
        %v3441 = vpop.f32.mrf.mxu0
        %v3442 = vadd.f32 0.0, %v3441
        %v3443 = vpop.f32.mrf.mxu0
        %3444 = vmatprep.mubr.bf16.mxu0 0
        %3445 = vmatmul.mubr.bf16.gmra.mxu0 %v3340
        %v3446 = vpop.f32.mrf.mxu0
        %v3447 = vadd.f32 0.0, %v3446
        %v3448 = vpop.f32.mrf.mxu0
        %v3449 = vpop.f32.mrf.mxu0
        %v3450 = vadd.f32 0.0, %v3449
        %v3451 = vpop.f32.mrf.mxu0
        %3452 = vmatprep.mubr.bf16.mxu0 0
        %3453 = vmatmul.mubr.bf16.gmra.mxu0 %v3343
        %v3454 = vpop.f32.mrf.mxu0
        %v3455 = vadd.f32 0.0, %v3454
        %v3456 = vpop.f32.mrf.mxu0
        %v3457 = vpop.f32.mrf.mxu0
        %v3458 = vadd.f32 0.0, %v3457
        %v3459 = vpop.f32.mrf.mxu0
        %3460 = vmatprep.mubr.bf16.mxu0 0
        %3461 = vmatmul.mubr.bf16.gmra.mxu0 %v3346
        %v3462 = vpop.f32.mrf.mxu0
        %v3463 = vadd.f32 0.0, %v3462
        %v3464 = vpop.f32.mrf.mxu0
        %v3465 = vpop.f32.mrf.mxu0
        %v3466 = vadd.f32 0.0, %v3465
        %v3467 = vpop.f32.mrf.mxu0
        %3468 = vmatprep.mubr.bf16.mxu0 0
        %3469 = vmatmul.mubr.bf16.gmra.mxu0 %v3349
        %v3470 = vpop.f32.mrf.mxu0
        %v3471 = vadd.f32 0.0, %v3470
        %v3472 = vpop.f32.mrf.mxu0
        %v3473 = vpop.f32.mrf.mxu0
        %v3474 = vadd.f32 0.0, %v3473
        %v3475 = vpop.f32.mrf.mxu0
        %3476 = vmatprep.mubr.bf16.mxu0 0
        %3477 = vmatmul.mubr.bf16.gmra.mxu0 %v3352
        %v3478 = vpop.f32.mrf.mxu0
        %v3479 = vadd.f32 0.0, %v3478
        %v3480 = vpop.f32.mrf.mxu0
        %v3481 = vpop.f32.mrf.mxu0
        %v3482 = vadd.f32 0.0, %v3481
        %v3483 = vpop.f32.mrf.mxu0
        %3484 = vmatprep.mubr.bf16.mxu0 0
        %3485 = vmatmul.mubr.bf16.gmra.mxu0 %v3355
        %v3486 = vpop.f32.mrf.mxu0
        %v3487 = vadd.f32 0.0, %v3486
        %v3488 = vpop.f32.mrf.mxu0
        %v3489 = vpop.f32.mrf.mxu0
        %v3490 = vadd.f32 0.0, %v3489
        %v3491 = vpop.f32.mrf.mxu0
        %3492 = vmatprep.mubr.bf16.mxu0 0
        %3493 = vmatmul.mubr.bf16.gmra.mxu0 %v3358
        %v3494 = vpop.f32.mrf.mxu0
        %v3495 = vadd.f32 0.0, %v3494
        %v3496 = vpop.f32.mrf.mxu0
        %v3497 = vpop.f32.mrf.mxu0
        %v3498 = vadd.f32 0.0, %v3497
        %v3499 = vpop.f32.mrf.mxu0
        %3500 = vmatprep.mubr.bf16.mxu0 0
        %3501 = vmatmul.mubr.bf16.gmra.mxu0 %v3361
        %v3502 = vpop.f32.mrf.mxu0
        %v3503 = vadd.f32 0.0, %v3502
        %v3504 = vpop.f32.mrf.mxu0
        %v3505 = vpop.f32.mrf.mxu0
        %v3506 = vadd.f32 0.0, %v3505
        %v3507 = vpop.f32.mrf.mxu0
        %3508 = vmatprep.mubr.bf16.mxu0 0
        %3509 = vmatmul.mubr.bf16.gmra.mxu0 %v3364
        %v3510 = vpop.f32.mrf.mxu0
        %v3511 = vadd.f32 0.0, %v3510
        %v3512 = vpop.f32.mrf.mxu0
        %v3513 = vpop.f32.mrf.mxu0
        %v3514 = vadd.f32 0.0, %v3513
        %v3515 = vpop.f32.mrf.mxu0
        %3516 = vmatprep.mubr.bf16.mxu0 0
        %3517 = vmatmul.mubr.bf16.gmra.mxu0 %v3367
        %v3518 = vpop.f32.mrf.mxu0
        %v3519 = vadd.f32 0.0, %v3518
        %v3520 = vpop.f32.mrf.mxu0
        %v3521 = vpop.f32.mrf.mxu0
        %v3522 = vadd.f32 0.0, %v3521
        %v3523 = vpop.f32.mrf.mxu0
        %3524 = vmatprep.mubr.bf16.mxu0 0
        %3525 = vmatmul.mubr.bf16.gmra.mxu0 %v3370
        %v3526 = vpop.f32.mrf.mxu0
        %v3527 = vadd.f32 0.0, %v3526
        %v3528 = vpop.f32.mrf.mxu0
        %v3529 = vpop.f32.mrf.mxu0
        %v3530 = vadd.f32 0.0, %v3529
        %v3531 = vpop.f32.mrf.mxu0
        %3532 = vdwg.mxu0
        %v3533 = vadd.f32 %v3035, %v3407
        %v3534 = vadd.f32 %v3036, %v3410
        %v3535 = vadd.f32 %v3037, %v3415
        %v3536 = vadd.f32 %v3038, %v3418
        %v3537 = vadd.f32 %v3039, %v3423
        %v3538 = vadd.f32 %v3040, %v3426
        %v3539 = vadd.f32 %v3041, %v3431
        %v3540 = vadd.f32 %v3042, %v3434
        %v3541 = vadd.f32 %v3043, %v3439
        %v3542 = vadd.f32 %v3044, %v3442
        %v3543 = vadd.f32 %v3045, %v3447
        %v3544 = vadd.f32 %v3046, %v3450
        %v3545 = vadd.f32 %v3047, %v3455
        %v3546 = vadd.f32 %v3048, %v3458
        %v3547 = vadd.f32 %v3049, %v3463
        %v3548 = vadd.f32 %v3050, %v3466
        %v3549 = vadd.f32 %v3051, %v3471
        %v3550 = vadd.f32 %v3052, %v3474
        %v3551 = vadd.f32 %v3053, %v3479
        %v3552 = vadd.f32 %v3054, %v3482
        %v3553 = vadd.f32 %v3055, %v3487
        %v3554 = vadd.f32 %v3056, %v3490
        %v3555 = vadd.f32 %v3057, %v3495
        %v3556 = vadd.f32 %v3058, %v3498
        %v3557 = vadd.f32 %v3059, %v3503
        %v3558 = vadd.f32 %v3060, %v3506
        %v3559 = vadd.f32 %v3061, %v3511
        %v3560 = vadd.f32 %v3062, %v3514
        %v3561 = vadd.f32 %v3063, %v3519
        %v3562 = vadd.f32 %v3064, %v3522
        %v3563 = vadd.f32 %v3065, %v3527
        %v3564 = vadd.f32 %v3066, %v3530
        %s3565 = sadd.s32 %s387, 2
        %s3566 = smul.u32 %s3565, 3
        %s3567 = smul.addr %s3566, 4
        %s3568 = scalar_lea.vmem %s0, %s3567
        %v3569 = vld [vmem:[%s3568] sm:$0xf]
        %v3570 = vld [vmem:[%s3568 + $0x4] sm:$0xf]
        %v3571 = vld [vmem:[%s3568 + $0xc] sm:$0xf]
        %v3572 = vld [vmem:[%s3568 + $0x10] sm:$0xf]
        %v3573 = vld [vmem:[%s3568 + $0x18] sm:$0xf]
        %v3574 = vld [vmem:[%s3568 + $0x1c] sm:$0xf]
        %v3575 = vld [vmem:[%s3568 + $0x24] sm:$0xf]
        %v3576 = vld [vmem:[%s3568 + $0x28] sm:$0xf]
        %v3577 = vld [vmem:[%s3568 + $0x30] sm:$0xf]
        %v3578 = vld [vmem:[%s3568 + $0x34] sm:$0xf]
        %v3579 = vld [vmem:[%s3568 + $0x3c] sm:$0xf]
        %v3580 = vld [vmem:[%s3568 + $0x40] sm:$0xf]
        %v3581 = vld [vmem:[%s3568 + $0x48] sm:$0xf]
        %v3582 = vld [vmem:[%s3568 + $0x4c] sm:$0xf]
        %v3583 = vld [vmem:[%s3568 + $0x54] sm:$0xf]
        %v3584 = vld [vmem:[%s3568 + $0x58] sm:$0xf]
        %v3585 = vld [vmem:[%s3568 + $0xd8] sm:$0xf]
        %v3586 = vld [vmem:[%s3568 + $0xdc] sm:$0xf]
        %v3587 = vld [vmem:[%s3568 + $0xe4] sm:$0xf]
        %v3588 = vld [vmem:[%s3568 + $0xe8] sm:$0xf]
        %v3589 = vld [vmem:[%s3568 + $0xf0] sm:$0xf]
        %v3590 = vld [vmem:[%s3568 + $0xf4] sm:$0xf]
        %v3591 = vld [vmem:[%s3568 + $0xfc] sm:$0xf]
        %v3592 = vld [vmem:[%s3568 + $0x100] sm:$0xf]
        %v3593 = vld [vmem:[%s3568 + $0x108] sm:$0xf]
        %v3594 = vld [vmem:[%s3568 + $0x10c] sm:$0xf]
        %v3595 = vld [vmem:[%s3568 + $0x114] sm:$0xf]
        %v3596 = vld [vmem:[%s3568 + $0x118] sm:$0xf]
        %v3597 = vld [vmem:[%s3568 + $0x120] sm:$0xf]
        %v3598 = vld [vmem:[%s3568 + $0x124] sm:$0xf]
        %v3599 = vld [vmem:[%s3568 + $0x12c] sm:$0xf]
        %v3600 = vld [vmem:[%s3568 + $0x130] sm:$0xf]
        %s3601 = scalar_lea.vmem %s1, 192
        %v3602 = vld [vmem:[%s3601] sm:$0xf]
        %v3603 = vld [vmem:[%s3601 + $0x4] sm:$0xf]
        %v3604 = vld [vmem:[%s3601 + $0x8] sm:$0xf]
        %v3605 = vld [vmem:[%s3601 + $0xc] sm:$0xf]
        %v3606 = vld [vmem:[%s3601 + $0x10] sm:$0xf]
        %v3607 = vld [vmem:[%s3601 + $0x14] sm:$0xf]
        %v3608 = vld [vmem:[%s3601 + $0x18] sm:$0xf]
        %v3609 = vld [vmem:[%s3601 + $0x1c] sm:$0xf]
        %v3642 = vunpack.c.l.b16 %v3569
        %v3643 = vunpack.c.l.b16 %v3570
        %v3644 = vunpack.c.l.b16 %v3571
        %v3645 = vunpack.c.l.b16 %v3572
        %v3646 = vunpack.c.l.b16 %v3573
        %v3647 = vunpack.c.l.b16 %v3574
        %v3648 = vunpack.c.l.b16 %v3575
        %v3649 = vunpack.c.l.b16 %v3576
        %v3650 = vunpack.c.l.b16 %v3577
        %v3651 = vunpack.c.l.b16 %v3578
        %v3652 = vunpack.c.l.b16 %v3579
        %v3653 = vunpack.c.l.b16 %v3580
        %v3654 = vunpack.c.l.b16 %v3581
        %v3655 = vunpack.c.l.b16 %v3582
        %v3656 = vunpack.c.l.b16 %v3583
        %v3657 = vunpack.c.l.b16 %v3584
        %v3658 = vunpack.c.l.b16 %v3585
        %v3659 = vunpack.c.l.b16 %v3586
        %v3660 = vunpack.c.l.b16 %v3587
        %v3661 = vunpack.c.l.b16 %v3588
        %v3662 = vunpack.c.l.b16 %v3589
        %v3663 = vunpack.c.l.b16 %v3590
        %v3664 = vunpack.c.l.b16 %v3591
        %v3665 = vunpack.c.l.b16 %v3592
        %v3666 = vunpack.c.l.b16 %v3593
        %v3667 = vunpack.c.l.b16 %v3594
        %v3668 = vunpack.c.l.b16 %v3595
        %v3669 = vunpack.c.l.b16 %v3596
        %v3670 = vunpack.c.l.b16 %v3597
        %v3671 = vunpack.c.l.b16 %v3598
        %v3672 = vunpack.c.l.b16 %v3599
        %v3673 = vunpack.c.l.b16 %v3600
        %v3674 = vpack.c.b16 %v3643, %v3642
        %v3675 = vpack.c.b16 %v3645, %v3644
        %v3676 = vpack.c.b16 %v3647, %v3646
        %v3677 = vpack.c.b16 %v3649, %v3648
        %v3678 = vpack.c.b16 %v3651, %v3650
        %v3679 = vpack.c.b16 %v3653, %v3652
        %v3680 = vpack.c.b16 %v3655, %v3654
        %v3681 = vpack.c.b16 %v3657, %v3656
        %v3682 = vpack.c.b16 %v3659, %v3658
        %v3683 = vpack.c.b16 %v3661, %v3660
        %v3684 = vpack.c.b16 %v3663, %v3662
        %v3685 = vpack.c.b16 %v3665, %v3664
        %v3686 = vpack.c.b16 %v3667, %v3666
        %v3687 = vpack.c.b16 %v3669, %v3668
        %v3688 = vpack.c.b16 %v3671, %v3670
        %v3689 = vpack.c.b16 %v3673, %v3672
        %v3698 = vunpack.c.l.b16 %v3602
        %v3699 = vunpack.c.l.b16 %v3603
        %v3700 = vunpack.c.l.b16 %v3604
        %v3701 = vunpack.c.l.b16 %v3605
        %v3702 = vunpack.c.l.b16 %v3606
        %v3703 = vunpack.c.l.b16 %v3607
        %v3704 = vunpack.c.l.b16 %v3608
        %v3705 = vunpack.c.l.b16 %v3609
        %v3706 = vpack.c.b16 %v3699, %v3698
        %v3707 = vpack.c.b16 %v3701, %v3700
        %v3708 = vpack.c.b16 %v3703, %v3702
        %v3709 = vpack.c.b16 %v3705, %v3704
        %v3715 = vsel %vm915, %v3674, 0
        %v3718 = vsel %vm915, %v3675, 0
        %v3721 = vsel %vm915, %v3676, 0
        %v3724 = vsel %vm915, %v3677, 0
        %v3727 = vsel %vm915, %v3678, 0
        %v3730 = vsel %vm915, %v3679, 0
        %v3733 = vsel %vm915, %v3680, 0
        %v3736 = vsel %vm915, %v3681, 0
        %v3739 = vsel %vm915, %v3682, 0
        %v3742 = vsel %vm915, %v3683, 0
        %v3745 = vsel %vm915, %v3684, 0
        %v3748 = vsel %vm915, %v3685, 0
        %v3751 = vsel %vm915, %v3686, 0
        %v3754 = vsel %vm915, %v3687, 0
        %v3757 = vsel %vm915, %v3688, 0
        %v3760 = vsel %vm915, %v3689, 0
        %3762 = vmatprep.subr.bf16.mxu0 0
        %3763 = vmatpush1.bf16.msra.mxu0 0
        %3764 = vmatprep.subr.bf16.mxu0 0
        %3765 = vmatpush1.bf16.msra.mxu0 0
        %3766 = vmatprep.subr.bf16.mxu0 0
        %3767 = vmatpush1.bf16.msra.mxu0 0
        %3768 = vmatprep.subr.bf16.mxu0 0
        %3769 = vmatpush1.bf16.msra.mxu0 0
        %3770 = vmatprep.subr.bf16.mxu0 0
        %3771 = vmatpush1.bf16.msra.mxu0 %v3709
        %3772 = vmatprep.subr.bf16.mxu0 0
        %3773 = vmatpush1.bf16.msra.mxu0 %v3708
        %3774 = vmatprep.subr.bf16.mxu0 0
        %3775 = vmatpush1.bf16.msra.mxu0 %v3707
        %3776 = vmatprep.subr.bf16.mxu0 0
        %3777 = vmatpush1.bf16.msra.mxu0 %v3706
        %3778 = vmatprep.subr.bf16.mxu0 0
        %3779 = vmatpush2.bf16.msra.mxu0 0
        %3780 = vmatprep.subr.bf16.mxu0 0
        %3781 = vmatpush2.bf16.msra.mxu0 0
        %3782 = vmatprep.subr.bf16.mxu0 0
        %3783 = vmatpush2.bf16.msra.mxu0 0
        %3784 = vmatprep.subr.bf16.mxu0 0
        %3785 = vmatpush2.bf16.msra.mxu0 0
        %3786 = vmatprep.subr.bf16.mxu0 0
        %3787 = vmatpush2.bf16.msra.mxu0 0
        %3788 = vmatprep.subr.bf16.mxu0 0
        %3789 = vmatpush2.bf16.msra.mxu0 0
        %3790 = vmatprep.subr.bf16.mxu0 0
        %3791 = vmatpush2.bf16.msra.mxu0 0
        %3792 = vmatprep.subr.bf16.mxu0 0
        %3793 = vmatpush2.bf16.msra.mxu0 0
        %3794 = vmatprep.mubr.bf16.mxu0 0
        %3795 = vmatmul.mubr.bf16.gmra.mxu0 %v3715
        %v3796 = vpop.f32.mrf.mxu0
        %v3797 = vadd.f32 0.0, %v3796
        %v3798 = vpop.f32.mrf.mxu0
        %v3799 = vpop.f32.mrf.mxu0
        %v3800 = vadd.f32 0.0, %v3799
        %v3801 = vpop.f32.mrf.mxu0
        %3802 = vmatprep.mubr.bf16.mxu0 0
        %3803 = vmatmul.mubr.bf16.gmra.mxu0 %v3718
        %v3804 = vpop.f32.mrf.mxu0
        %v3805 = vadd.f32 0.0, %v3804
        %v3806 = vpop.f32.mrf.mxu0
        %v3807 = vpop.f32.mrf.mxu0
        %v3808 = vadd.f32 0.0, %v3807
        %v3809 = vpop.f32.mrf.mxu0
        %3810 = vmatprep.mubr.bf16.mxu0 0
        %3811 = vmatmul.mubr.bf16.gmra.mxu0 %v3721
        %v3812 = vpop.f32.mrf.mxu0
        %v3813 = vadd.f32 0.0, %v3812
        %v3814 = vpop.f32.mrf.mxu0
        %v3815 = vpop.f32.mrf.mxu0
        %v3816 = vadd.f32 0.0, %v3815
        %v3817 = vpop.f32.mrf.mxu0
        %3818 = vmatprep.mubr.bf16.mxu0 0
        %3819 = vmatmul.mubr.bf16.gmra.mxu0 %v3724
        %v3820 = vpop.f32.mrf.mxu0
        %v3821 = vadd.f32 0.0, %v3820
        %v3822 = vpop.f32.mrf.mxu0
        %v3823 = vpop.f32.mrf.mxu0
        %v3824 = vadd.f32 0.0, %v3823
        %v3825 = vpop.f32.mrf.mxu0
        %3826 = vmatprep.mubr.bf16.mxu0 0
        %3827 = vmatmul.mubr.bf16.gmra.mxu0 %v3727
        %v3828 = vpop.f32.mrf.mxu0
        %v3829 = vadd.f32 0.0, %v3828
        %v3830 = vpop.f32.mrf.mxu0
        %v3831 = vpop.f32.mrf.mxu0
        %v3832 = vadd.f32 0.0, %v3831
        %v3833 = vpop.f32.mrf.mxu0
        %3834 = vmatprep.mubr.bf16.mxu0 0
        %3835 = vmatmul.mubr.bf16.gmra.mxu0 %v3730
        %v3836 = vpop.f32.mrf.mxu0
        %v3837 = vadd.f32 0.0, %v3836
        %v3838 = vpop.f32.mrf.mxu0
        %v3839 = vpop.f32.mrf.mxu0
        %v3840 = vadd.f32 0.0, %v3839
        %v3841 = vpop.f32.mrf.mxu0
        %3842 = vmatprep.mubr.bf16.mxu0 0
        %3843 = vmatmul.mubr.bf16.gmra.mxu0 %v3733
        %v3844 = vpop.f32.mrf.mxu0
        %v3845 = vadd.f32 0.0, %v3844
        %v3846 = vpop.f32.mrf.mxu0
        %v3847 = vpop.f32.mrf.mxu0
        %v3848 = vadd.f32 0.0, %v3847
        %v3849 = vpop.f32.mrf.mxu0
        %3850 = vmatprep.mubr.bf16.mxu0 0
        %3851 = vmatmul.mubr.bf16.gmra.mxu0 %v3736
        %v3852 = vpop.f32.mrf.mxu0
        %v3853 = vadd.f32 0.0, %v3852
        %v3854 = vpop.f32.mrf.mxu0
        %v3855 = vpop.f32.mrf.mxu0
        %v3856 = vadd.f32 0.0, %v3855
        %v3857 = vpop.f32.mrf.mxu0
        %3858 = vmatprep.mubr.bf16.mxu0 0
        %3859 = vmatmul.mubr.bf16.gmra.mxu0 %v3739
        %v3860 = vpop.f32.mrf.mxu0
        %v3861 = vadd.f32 0.0, %v3860
        %v3862 = vpop.f32.mrf.mxu0
        %v3863 = vpop.f32.mrf.mxu0
        %v3864 = vadd.f32 0.0, %v3863
        %v3865 = vpop.f32.mrf.mxu0
        %3866 = vmatprep.mubr.bf16.mxu0 0
        %3867 = vmatmul.mubr.bf16.gmra.mxu0 %v3742
        %v3868 = vpop.f32.mrf.mxu0
        %v3869 = vadd.f32 0.0, %v3868
        %v3870 = vpop.f32.mrf.mxu0
        %v3871 = vpop.f32.mrf.mxu0
        %v3872 = vadd.f32 0.0, %v3871
        %v3873 = vpop.f32.mrf.mxu0
        %3874 = vmatprep.mubr.bf16.mxu0 0
        %3875 = vmatmul.mubr.bf16.gmra.mxu0 %v3745
        %v3876 = vpop.f32.mrf.mxu0
        %v3877 = vadd.f32 0.0, %v3876
        %v3878 = vpop.f32.mrf.mxu0
        %v3879 = vpop.f32.mrf.mxu0
        %v3880 = vadd.f32 0.0, %v3879
        %v3881 = vpop.f32.mrf.mxu0
        %3882 = vmatprep.mubr.bf16.mxu0 0
        %3883 = vmatmul.mubr.bf16.gmra.mxu0 %v3748
        %v3884 = vpop.f32.mrf.mxu0
        %v3885 = vadd.f32 0.0, %v3884
        %v3886 = vpop.f32.mrf.mxu0
        %v3887 = vpop.f32.mrf.mxu0
        %v3888 = vadd.f32 0.0, %v3887
        %v3889 = vpop.f32.mrf.mxu0
        %3890 = vmatprep.mubr.bf16.mxu0 0
        %3891 = vmatmul.mubr.bf16.gmra.mxu0 %v3751
        %v3892 = vpop.f32.mrf.mxu0
        %v3893 = vadd.f32 0.0, %v3892
        %v3894 = vpop.f32.mrf.mxu0
        %v3895 = vpop.f32.mrf.mxu0
        %v3896 = vadd.f32 0.0, %v3895
        %v3897 = vpop.f32.mrf.mxu0
        %3898 = vmatprep.mubr.bf16.mxu0 0
        %3899 = vmatmul.mubr.bf16.gmra.mxu0 %v3754
        %v3900 = vpop.f32.mrf.mxu0
        %v3901 = vadd.f32 0.0, %v3900
        %v3902 = vpop.f32.mrf.mxu0
        %v3903 = vpop.f32.mrf.mxu0
        %v3904 = vadd.f32 0.0, %v3903
        %v3905 = vpop.f32.mrf.mxu0
        %3906 = vmatprep.mubr.bf16.mxu0 0
        %3907 = vmatmul.mubr.bf16.gmra.mxu0 %v3757
        %v3908 = vpop.f32.mrf.mxu0
        %v3909 = vadd.f32 0.0, %v3908
        %v3910 = vpop.f32.mrf.mxu0
        %v3911 = vpop.f32.mrf.mxu0
        %v3912 = vadd.f32 0.0, %v3911
        %v3913 = vpop.f32.mrf.mxu0
        %3914 = vmatprep.mubr.bf16.mxu0 0
        %3915 = vmatmul.mubr.bf16.gmra.mxu0 %v3760
        %v3916 = vpop.f32.mrf.mxu0
        %v3917 = vadd.f32 0.0, %v3916
        %v3918 = vpop.f32.mrf.mxu0
        %v3919 = vpop.f32.mrf.mxu0
        %v3920 = vadd.f32 0.0, %v3919
        %v3921 = vpop.f32.mrf.mxu0
        %3922 = vdwg.mxu0
        %v3923 = vadd.f32 %v3533, %v3797
        %v3924 = vadd.f32 %v3534, %v3800
        %v3925 = vadd.f32 %v3535, %v3805
        %v3926 = vadd.f32 %v3536, %v3808
        %v3927 = vadd.f32 %v3537, %v3813
        %v3928 = vadd.f32 %v3538, %v3816
        %v3929 = vadd.f32 %v3539, %v3821
        %v3930 = vadd.f32 %v3540, %v3824
        %v3931 = vadd.f32 %v3541, %v3829
        %v3932 = vadd.f32 %v3542, %v3832
        %v3933 = vadd.f32 %v3543, %v3837
        %v3934 = vadd.f32 %v3544, %v3840
        %v3935 = vadd.f32 %v3545, %v3845
        %v3936 = vadd.f32 %v3546, %v3848
        %v3937 = vadd.f32 %v3547, %v3853
        %v3938 = vadd.f32 %v3548, %v3856
        %v3939 = vadd.f32 %v3549, %v3861
        %v3940 = vadd.f32 %v3550, %v3864
        %v3941 = vadd.f32 %v3551, %v3869
        %v3942 = vadd.f32 %v3552, %v3872
        %v3943 = vadd.f32 %v3553, %v3877
        %v3944 = vadd.f32 %v3554, %v3880
        %v3945 = vadd.f32 %v3555, %v3885
        %v3946 = vadd.f32 %v3556, %v3888
        %v3947 = vadd.f32 %v3557, %v3893
        %v3948 = vadd.f32 %v3558, %v3896
        %v3949 = vadd.f32 %v3559, %v3901
        %v3950 = vadd.f32 %v3560, %v3904
        %v3951 = vadd.f32 %v3561, %v3909
        %v3952 = vadd.f32 %v3562, %v3912
        %v3953 = vadd.f32 %v3563, %v3917
        %v3954 = vadd.f32 %v3564, %v3920
        %v3955 = vld [vmem:[%s3568] sm:$0xf]
        %v3956 = vld [vmem:[%s3568 + $0x4] sm:$0xf]
        %v3957 = vld [vmem:[%s3568 + $0x8] sm:$0x1]
        %v3958 = vld [vmem:[%s3568 + $0xc] sm:$0xf]
        %v3959 = vld [vmem:[%s3568 + $0x10] sm:$0xf]
        %v3960 = vld [vmem:[%s3568 + $0x14] sm:$0x1]
        %v3961 = vld [vmem:[%s3568 + $0x18] sm:$0xf]
        %v3962 = vld [vmem:[%s3568 + $0x1c] sm:$0xf]
        %v3963 = vld [vmem:[%s3568 + $0x20] sm:$0x1]
        %v3964 = vld [vmem:[%s3568 + $0x24] sm:$0xf]
        %v3965 = vld [vmem:[%s3568 + $0x28] sm:$0xf]
        %v3966 = vld [vmem:[%s3568 + $0x2c] sm:$0x1]
        %v3967 = vld [vmem:[%s3568 + $0x30] sm:$0xf]
        %v3968 = vld [vmem:[%s3568 + $0x34] sm:$0xf]
        %v3969 = vld [vmem:[%s3568 + $0x38] sm:$0x1]
        %v3970 = vld [vmem:[%s3568 + $0x3c] sm:$0xf]
        %v3971 = vld [vmem:[%s3568 + $0x40] sm:$0xf]
        %v3972 = vld [vmem:[%s3568 + $0x44] sm:$0x1]
        %v3973 = vld [vmem:[%s3568 + $0x48] sm:$0xf]
        %v3974 = vld [vmem:[%s3568 + $0x4c] sm:$0xf]
        %v3975 = vld [vmem:[%s3568 + $0x50] sm:$0x1]
        %v3976 = vld [vmem:[%s3568 + $0x54] sm:$0xf]
        %v3977 = vld [vmem:[%s3568 + $0x58] sm:$0xf]
        %v3978 = vld [vmem:[%s3568 + $0x5c] sm:$0x1]
        %v3979 = vld [vmem:[%s3568 + $0xd8] sm:$0xf]
        %v3980 = vld [vmem:[%s3568 + $0xdc] sm:$0xf]
        %v3981 = vld [vmem:[%s3568 + $0xe0] sm:$0x1]
        %v3982 = vld [vmem:[%s3568 + $0xe4] sm:$0xf]
        %v3983 = vld [vmem:[%s3568 + $0xe8] sm:$0xf]
        %v3984 = vld [vmem:[%s3568 + $0xec] sm:$0x1]
        %v3985 = vld [vmem:[%s3568 + $0xf0] sm:$0xf]
        %v3986 = vld [vmem:[%s3568 + $0xf4] sm:$0xf]
        %v3987 = vld [vmem:[%s3568 + $0xf8] sm:$0x1]
        %v3988 = vld [vmem:[%s3568 + $0xfc] sm:$0xf]
        %v3989 = vld [vmem:[%s3568 + $0x100] sm:$0xf]
        %v3990 = vld [vmem:[%s3568 + $0x104] sm:$0x1]
        %v3991 = vld [vmem:[%s3568 + $0x108] sm:$0xf]
        %v3992 = vld [vmem:[%s3568 + $0x10c] sm:$0xf]
        %v3993 = vld [vmem:[%s3568 + $0x110] sm:$0x1]
        %v3994 = vld [vmem:[%s3568 + $0x114] sm:$0xf]
        %v3995 = vld [vmem:[%s3568 + $0x118] sm:$0xf]
        %v3996 = vld [vmem:[%s3568 + $0x11c] sm:$0x1]
        %v3997 = vld [vmem:[%s3568 + $0x120] sm:$0xf]
        %v3998 = vld [vmem:[%s3568 + $0x124] sm:$0xf]
        %v3999 = vld [vmem:[%s3568 + $0x128] sm:$0x1]
        %v4000 = vld [vmem:[%s3568 + $0x12c] sm:$0xf]
        %v4001 = vld [vmem:[%s3568 + $0x130] sm:$0xf]
        %v4002 = vld [vmem:[%s3568 + $0x134] sm:$0x1]
        %v4004 = vshrl.u32 %v3955, 16
        %v4006 = vrot.slane %v4004, 4
        %v4007 = vshll.u32 %v3955, 16
        %v4009 = vrot.slane %v4007, 5
        %v4010 = vor.u32 %v4006, %v4009
        %v4011 = vrot.slane %v4010, 4
        %v4013 = vshll.u32 %v3956, 16
        %v4015 = vrot.slane %v4013, 5
        %v4016 = vsel %vm449, %v4011, %v4015
        %v4017 = vshrl.u32 %v3956, 16
        %v4019 = vrot.slane %v4017, 4
        %v4020 = vor.u32 %v4019, %v4015
        %v4021 = vrot.slane %v4020, 4
        %v4023 = vshll.u32 %v3957, 16
        %v4025 = vrot.slane %v4023, 5
        %v4026 = vsel %vm449, %v4021, %v4025
        %v4028 = vshrl.u32 %v3958, 16
        %v4030 = vrot.slane %v4028, 4
        %v4031 = vshll.u32 %v3958, 16
        %v4033 = vrot.slane %v4031, 5
        %v4034 = vor.u32 %v4030, %v4033
        %v4035 = vrot.slane %v4034, 4
        %v4037 = vshll.u32 %v3959, 16
        %v4039 = vrot.slane %v4037, 5
        %v4040 = vsel %vm449, %v4035, %v4039
        %v4041 = vshrl.u32 %v3959, 16
        %v4043 = vrot.slane %v4041, 4
        %v4044 = vor.u32 %v4043, %v4039
        %v4045 = vrot.slane %v4044, 4
        %v4047 = vshll.u32 %v3960, 16
        %v4049 = vrot.slane %v4047, 5
        %v4050 = vsel %vm449, %v4045, %v4049
        %v4052 = vshrl.u32 %v3961, 16
        %v4054 = vrot.slane %v4052, 4
        %v4055 = vshll.u32 %v3961, 16
        %v4057 = vrot.slane %v4055, 5
        %v4058 = vor.u32 %v4054, %v4057
        %v4059 = vrot.slane %v4058, 4
        %v4061 = vshll.u32 %v3962, 16
        %v4063 = vrot.slane %v4061, 5
        %v4064 = vsel %vm449, %v4059, %v4063
        %v4065 = vshrl.u32 %v3962, 16
        %v4067 = vrot.slane %v4065, 4
        %v4068 = vor.u32 %v4067, %v4063
        %v4069 = vrot.slane %v4068, 4
        %v4071 = vshll.u32 %v3963, 16
        %v4073 = vrot.slane %v4071, 5
        %v4074 = vsel %vm449, %v4069, %v4073
        %v4076 = vshrl.u32 %v3964, 16
        %v4078 = vrot.slane %v4076, 4
        %v4079 = vshll.u32 %v3964, 16
        %v4081 = vrot.slane %v4079, 5
        %v4082 = vor.u32 %v4078, %v4081
        %v4083 = vrot.slane %v4082, 4
        %v4085 = vshll.u32 %v3965, 16
        %v4087 = vrot.slane %v4085, 5
        %v4088 = vsel %vm449, %v4083, %v4087
        %v4089 = vshrl.u32 %v3965, 16
        %v4091 = vrot.slane %v4089, 4
        %v4092 = vor.u32 %v4091, %v4087
        %v4093 = vrot.slane %v4092, 4
        %v4095 = vshll.u32 %v3966, 16
        %v4097 = vrot.slane %v4095, 5
        %v4098 = vsel %vm449, %v4093, %v4097
        %v4100 = vshrl.u32 %v3967, 16
        %v4102 = vrot.slane %v4100, 4
        %v4103 = vshll.u32 %v3967, 16
        %v4105 = vrot.slane %v4103, 5
        %v4106 = vor.u32 %v4102, %v4105
        %v4107 = vrot.slane %v4106, 4
        %v4109 = vshll.u32 %v3968, 16
        %v4111 = vrot.slane %v4109, 5
        %v4112 = vsel %vm449, %v4107, %v4111
        %v4113 = vshrl.u32 %v3968, 16
        %v4115 = vrot.slane %v4113, 4
        %v4116 = vor.u32 %v4115, %v4111
        %v4117 = vrot.slane %v4116, 4
        %v4119 = vshll.u32 %v3969, 16
        %v4121 = vrot.slane %v4119, 5
        %v4122 = vsel %vm449, %v4117, %v4121
        %v4124 = vshrl.u32 %v3970, 16
        %v4126 = vrot.slane %v4124, 4
        %v4127 = vshll.u32 %v3970, 16
        %v4129 = vrot.slane %v4127, 5
        %v4130 = vor.u32 %v4126, %v4129
        %v4131 = vrot.slane %v4130, 4
        %v4133 = vshll.u32 %v3971, 16
        %v4135 = vrot.slane %v4133, 5
        %v4136 = vsel %vm449, %v4131, %v4135
        %v4137 = vshrl.u32 %v3971, 16
        %v4139 = vrot.slane %v4137, 4
        %v4140 = vor.u32 %v4139, %v4135
        %v4141 = vrot.slane %v4140, 4
        %v4143 = vshll.u32 %v3972, 16
        %v4145 = vrot.slane %v4143, 5
        %v4146 = vsel %vm449, %v4141, %v4145
        %v4148 = vshrl.u32 %v3973, 16
        %v4150 = vrot.slane %v4148, 4
        %v4151 = vshll.u32 %v3973, 16
        %v4153 = vrot.slane %v4151, 5
        %v4154 = vor.u32 %v4150, %v4153
        %v4155 = vrot.slane %v4154, 4
        %v4157 = vshll.u32 %v3974, 16
        %v4159 = vrot.slane %v4157, 5
        %v4160 = vsel %vm449, %v4155, %v4159
        %v4161 = vshrl.u32 %v3974, 16
        %v4163 = vrot.slane %v4161, 4
        %v4164 = vor.u32 %v4163, %v4159
        %v4165 = vrot.slane %v4164, 4
        %v4167 = vshll.u32 %v3975, 16
        %v4169 = vrot.slane %v4167, 5
        %v4170 = vsel %vm449, %v4165, %v4169
        %v4172 = vshrl.u32 %v3976, 16
        %v4174 = vrot.slane %v4172, 4
        %v4175 = vshll.u32 %v3976, 16
        %v4177 = vrot.slane %v4175, 5
        %v4178 = vor.u32 %v4174, %v4177
        %v4179 = vrot.slane %v4178, 4
        %v4181 = vshll.u32 %v3977, 16
        %v4183 = vrot.slane %v4181, 5
        %v4184 = vsel %vm449, %v4179, %v4183
        %v4185 = vshrl.u32 %v3977, 16
        %v4187 = vrot.slane %v4185, 4
        %v4188 = vor.u32 %v4187, %v4183
        %v4189 = vrot.slane %v4188, 4
        %v4191 = vshll.u32 %v3978, 16
        %v4193 = vrot.slane %v4191, 5
        %v4194 = vsel %vm449, %v4189, %v4193
        %v4196 = vshrl.u32 %v3979, 16
        %v4198 = vrot.slane %v4196, 4
        %v4199 = vshll.u32 %v3979, 16
        %v4201 = vrot.slane %v4199, 5
        %v4202 = vor.u32 %v4198, %v4201
        %v4203 = vrot.slane %v4202, 4
        %v4205 = vshll.u32 %v3980, 16
        %v4207 = vrot.slane %v4205, 5
        %v4208 = vsel %vm449, %v4203, %v4207
        %v4209 = vshrl.u32 %v3980, 16
        %v4211 = vrot.slane %v4209, 4
        %v4212 = vor.u32 %v4211, %v4207
        %v4213 = vrot.slane %v4212, 4
        %v4215 = vshll.u32 %v3981, 16
        %v4217 = vrot.slane %v4215, 5
        %v4218 = vsel %vm449, %v4213, %v4217
        %v4220 = vshrl.u32 %v3982, 16
        %v4222 = vrot.slane %v4220, 4
        %v4223 = vshll.u32 %v3982, 16
        %v4225 = vrot.slane %v4223, 5
        %v4226 = vor.u32 %v4222, %v4225
        %v4227 = vrot.slane %v4226, 4
        %v4229 = vshll.u32 %v3983, 16
        %v4231 = vrot.slane %v4229, 5
        %v4232 = vsel %vm449, %v4227, %v4231
        %v4233 = vshrl.u32 %v3983, 16
        %v4235 = vrot.slane %v4233, 4
        %v4236 = vor.u32 %v4235, %v4231
        %v4237 = vrot.slane %v4236, 4
        %v4239 = vshll.u32 %v3984, 16
        %v4241 = vrot.slane %v4239, 5
        %v4242 = vsel %vm449, %v4237, %v4241
        %v4244 = vshrl.u32 %v3985, 16
        %v4246 = vrot.slane %v4244, 4
        %v4247 = vshll.u32 %v3985, 16
        %v4249 = vrot.slane %v4247, 5
        %v4250 = vor.u32 %v4246, %v4249
        %v4251 = vrot.slane %v4250, 4
        %v4253 = vshll.u32 %v3986, 16
        %v4255 = vrot.slane %v4253, 5
        %v4256 = vsel %vm449, %v4251, %v4255
        %v4257 = vshrl.u32 %v3986, 16
        %v4259 = vrot.slane %v4257, 4
        %v4260 = vor.u32 %v4259, %v4255
        %v4261 = vrot.slane %v4260, 4
        %v4263 = vshll.u32 %v3987, 16
        %v4265 = vrot.slane %v4263, 5
        %v4266 = vsel %vm449, %v4261, %v4265
        %v4268 = vshrl.u32 %v3988, 16
        %v4270 = vrot.slane %v4268, 4
        %v4271 = vshll.u32 %v3988, 16
        %v4273 = vrot.slane %v4271, 5
        %v4274 = vor.u32 %v4270, %v4273
        %v4275 = vrot.slane %v4274, 4
        %v4277 = vshll.u32 %v3989, 16
        %v4279 = vrot.slane %v4277, 5
        %v4280 = vsel %vm449, %v4275, %v4279
        %v4281 = vshrl.u32 %v3989, 16
        %v4283 = vrot.slane %v4281, 4
        %v4284 = vor.u32 %v4283, %v4279
        %v4285 = vrot.slane %v4284, 4
        %v4287 = vshll.u32 %v3990, 16
        %v4289 = vrot.slane %v4287, 5
        %v4290 = vsel %vm449, %v4285, %v4289
        %v4292 = vshrl.u32 %v3991, 16
        %v4294 = vrot.slane %v4292, 4
        %v4295 = vshll.u32 %v3991, 16
        %v4297 = vrot.slane %v4295, 5
        %v4298 = vor.u32 %v4294, %v4297
        %v4299 = vrot.slane %v4298, 4
        %v4301 = vshll.u32 %v3992, 16
        %v4303 = vrot.slane %v4301, 5
        %v4304 = vsel %vm449, %v4299, %v4303
        %v4305 = vshrl.u32 %v3992, 16
        %v4307 = vrot.slane %v4305, 4
        %v4308 = vor.u32 %v4307, %v4303
        %v4309 = vrot.slane %v4308, 4
        %v4311 = vshll.u32 %v3993, 16
        %v4313 = vrot.slane %v4311, 5
        %v4314 = vsel %vm449, %v4309, %v4313
        %v4316 = vshrl.u32 %v3994, 16
        %v4318 = vrot.slane %v4316, 4
        %v4319 = vshll.u32 %v3994, 16
        %v4321 = vrot.slane %v4319, 5
        %v4322 = vor.u32 %v4318, %v4321
        %v4323 = vrot.slane %v4322, 4
        %v4325 = vshll.u32 %v3995, 16
        %v4327 = vrot.slane %v4325, 5
        %v4328 = vsel %vm449, %v4323, %v4327
        %v4329 = vshrl.u32 %v3995, 16
        %v4331 = vrot.slane %v4329, 4
        %v4332 = vor.u32 %v4331, %v4327
        %v4333 = vrot.slane %v4332, 4
        %v4335 = vshll.u32 %v3996, 16
        %v4337 = vrot.slane %v4335, 5
        %v4338 = vsel %vm449, %v4333, %v4337
        %v4340 = vshrl.u32 %v3997, 16
        %v4342 = vrot.slane %v4340, 4
        %v4343 = vshll.u32 %v3997, 16
        %v4345 = vrot.slane %v4343, 5
        %v4346 = vor.u32 %v4342, %v4345
        %v4347 = vrot.slane %v4346, 4
        %v4349 = vshll.u32 %v3998, 16
        %v4351 = vrot.slane %v4349, 5
        %v4352 = vsel %vm449, %v4347, %v4351
        %v4353 = vshrl.u32 %v3998, 16
        %v4355 = vrot.slane %v4353, 4
        %v4356 = vor.u32 %v4355, %v4351
        %v4357 = vrot.slane %v4356, 4
        %v4359 = vshll.u32 %v3999, 16
        %v4361 = vrot.slane %v4359, 5
        %v4362 = vsel %vm449, %v4357, %v4361
        %v4364 = vshrl.u32 %v4000, 16
        %v4366 = vrot.slane %v4364, 4
        %v4367 = vshll.u32 %v4000, 16
        %v4369 = vrot.slane %v4367, 5
        %v4370 = vor.u32 %v4366, %v4369
        %v4371 = vrot.slane %v4370, 4
        %v4373 = vshll.u32 %v4001, 16
        %v4375 = vrot.slane %v4373, 5
        %v4376 = vsel %vm449, %v4371, %v4375
        %v4377 = vshrl.u32 %v4001, 16
        %v4379 = vrot.slane %v4377, 4
        %v4380 = vor.u32 %v4379, %v4375
        %v4381 = vrot.slane %v4380, 4
        %v4383 = vshll.u32 %v4002, 16
        %v4385 = vrot.slane %v4383, 5
        %v4386 = vsel %vm449, %v4381, %v4385
        %s4387 = scalar_lea.vmem %s1, 224
        %v4388 = vld [vmem:[%s4387] sm:$0xf]
        %v4389 = vld [vmem:[%s4387 + $0x4] sm:$0xf]
        %v4390 = vld [vmem:[%s4387 + $0x8] sm:$0xf]
        %v4391 = vld [vmem:[%s4387 + $0xc] sm:$0xf]
        %v4392 = vld [vmem:[%s4387 + $0x10] sm:$0xf]
        %v4393 = vld [vmem:[%s4387 + $0x14] sm:$0xf]
        %v4394 = vld [vmem:[%s4387 + $0x18] sm:$0xf]
        %v4395 = vld [vmem:[%s4387 + $0x1c] sm:$0xf]
        %v4396 = vunpack.c.l.b16 %v4016
        %v4397 = vunpack.c.l.b16 %v4026
        %v4398 = vunpack.c.l.b16 %v4040
        %v4399 = vunpack.c.l.b16 %v4050
        %v4400 = vunpack.c.l.b16 %v4064
        %v4401 = vunpack.c.l.b16 %v4074
        %v4402 = vunpack.c.l.b16 %v4088
        %v4403 = vunpack.c.l.b16 %v4098
        %v4404 = vunpack.c.l.b16 %v4112
        %v4405 = vunpack.c.l.b16 %v4122
        %v4406 = vunpack.c.l.b16 %v4136
        %v4407 = vunpack.c.l.b16 %v4146
        %v4408 = vunpack.c.l.b16 %v4160
        %v4409 = vunpack.c.l.b16 %v4170
        %v4410 = vunpack.c.l.b16 %v4184
        %v4411 = vunpack.c.l.b16 %v4194
        %v4412 = vunpack.c.l.b16 %v4208
        %v4413 = vunpack.c.l.b16 %v4218
        %v4414 = vunpack.c.l.b16 %v4232
        %v4415 = vunpack.c.l.b16 %v4242
        %v4416 = vunpack.c.l.b16 %v4256
        %v4417 = vunpack.c.l.b16 %v4266
        %v4418 = vunpack.c.l.b16 %v4280
        %v4419 = vunpack.c.l.b16 %v4290
        %v4420 = vunpack.c.l.b16 %v4304
        %v4421 = vunpack.c.l.b16 %v4314
        %v4422 = vunpack.c.l.b16 %v4328
        %v4423 = vunpack.c.l.b16 %v4338
        %v4424 = vunpack.c.l.b16 %v4352
        %v4425 = vunpack.c.l.b16 %v4362
        %v4426 = vunpack.c.l.b16 %v4376
        %v4427 = vunpack.c.l.b16 %v4386
        %v4428 = vpack.c.b16 %v4397, %v4396
        %v4429 = vpack.c.b16 %v4399, %v4398
        %v4430 = vpack.c.b16 %v4401, %v4400
        %v4431 = vpack.c.b16 %v4403, %v4402
        %v4432 = vpack.c.b16 %v4405, %v4404
        %v4433 = vpack.c.b16 %v4407, %v4406
        %v4434 = vpack.c.b16 %v4409, %v4408
        %v4435 = vpack.c.b16 %v4411, %v4410
        %v4436 = vpack.c.b16 %v4413, %v4412
        %v4437 = vpack.c.b16 %v4415, %v4414
        %v4438 = vpack.c.b16 %v4417, %v4416
        %v4439 = vpack.c.b16 %v4419, %v4418
        %v4440 = vpack.c.b16 %v4421, %v4420
        %v4441 = vpack.c.b16 %v4423, %v4422
        %v4442 = vpack.c.b16 %v4425, %v4424
        %v4443 = vpack.c.b16 %v4427, %v4426
        %v4452 = vunpack.c.l.b16 %v4388
        %v4453 = vunpack.c.l.b16 %v4389
        %v4454 = vunpack.c.l.b16 %v4390
        %v4455 = vunpack.c.l.b16 %v4391
        %v4456 = vunpack.c.l.b16 %v4392
        %v4457 = vunpack.c.l.b16 %v4393
        %v4458 = vunpack.c.l.b16 %v4394
        %v4459 = vunpack.c.l.b16 %v4395
        %v4460 = vpack.c.b16 %v4453, %v4452
        %v4461 = vpack.c.b16 %v4455, %v4454
        %v4462 = vpack.c.b16 %v4457, %v4456
        %v4463 = vpack.c.b16 %v4459, %v4458
        %v4469 = vsel %vm915, %v4428, 0
        %v4472 = vsel %vm915, %v4429, 0
        %v4475 = vsel %vm915, %v4430, 0
        %v4478 = vsel %vm915, %v4431, 0
        %v4481 = vsel %vm915, %v4432, 0
        %v4484 = vsel %vm915, %v4433, 0
        %v4487 = vsel %vm915, %v4434, 0
        %v4490 = vsel %vm915, %v4435, 0
        %v4493 = vsel %vm915, %v4436, 0
        %v4496 = vsel %vm915, %v4437, 0
        %v4499 = vsel %vm915, %v4438, 0
        %v4502 = vsel %vm915, %v4439, 0
        %v4505 = vsel %vm915, %v4440, 0
        %v4508 = vsel %vm915, %v4441, 0
        %v4511 = vsel %vm915, %v4442, 0
        %v4514 = vsel %vm915, %v4443, 0
        %4516 = vmatprep.subr.bf16.mxu0 0
        %4517 = vmatpush1.bf16.msra.mxu0 0
        %4518 = vmatprep.subr.bf16.mxu0 0
        %4519 = vmatpush1.bf16.msra.mxu0 0
        %4520 = vmatprep.subr.bf16.mxu0 0
        %4521 = vmatpush1.bf16.msra.mxu0 0
        %4522 = vmatprep.subr.bf16.mxu0 0
        %4523 = vmatpush1.bf16.msra.mxu0 0
        %4524 = vmatprep.subr.bf16.mxu0 0
        %4525 = vmatpush1.bf16.msra.mxu0 %v4463
        %4526 = vmatprep.subr.bf16.mxu0 0
        %4527 = vmatpush1.bf16.msra.mxu0 %v4462
        %4528 = vmatprep.subr.bf16.mxu0 0
        %4529 = vmatpush1.bf16.msra.mxu0 %v4461
        %4530 = vmatprep.subr.bf16.mxu0 0
        %4531 = vmatpush1.bf16.msra.mxu0 %v4460
        %4532 = vmatprep.subr.bf16.mxu0 0
        %4533 = vmatpush2.bf16.msra.mxu0 0
        %4534 = vmatprep.subr.bf16.mxu0 0
        %4535 = vmatpush2.bf16.msra.mxu0 0
        %4536 = vmatprep.subr.bf16.mxu0 0
        %4537 = vmatpush2.bf16.msra.mxu0 0
        %4538 = vmatprep.subr.bf16.mxu0 0
        %4539 = vmatpush2.bf16.msra.mxu0 0
        %4540 = vmatprep.subr.bf16.mxu0 0
        %4541 = vmatpush2.bf16.msra.mxu0 0
        %4542 = vmatprep.subr.bf16.mxu0 0
        %4543 = vmatpush2.bf16.msra.mxu0 0
        %4544 = vmatprep.subr.bf16.mxu0 0
        %4545 = vmatpush2.bf16.msra.mxu0 0
        %4546 = vmatprep.subr.bf16.mxu0 0
        %4547 = vmatpush2.bf16.msra.mxu0 0
        %4548 = vmatprep.mubr.bf16.mxu0 0
        %4549 = vmatmul.mubr.bf16.gmra.mxu0 %v4469
        %v4550 = vpop.f32.mrf.mxu0
        %v4551 = vadd.f32 0.0, %v4550
        %v4552 = vpop.f32.mrf.mxu0
        %v4553 = vpop.f32.mrf.mxu0
        %v4554 = vadd.f32 0.0, %v4553
        %v4555 = vpop.f32.mrf.mxu0
        %4556 = vmatprep.mubr.bf16.mxu0 0
        %4557 = vmatmul.mubr.bf16.gmra.mxu0 %v4472
        %v4558 = vpop.f32.mrf.mxu0
        %v4559 = vadd.f32 0.0, %v4558
        %v4560 = vpop.f32.mrf.mxu0
        %v4561 = vpop.f32.mrf.mxu0
        %v4562 = vadd.f32 0.0, %v4561
        %v4563 = vpop.f32.mrf.mxu0
        %4564 = vmatprep.mubr.bf16.mxu0 0
        %4565 = vmatmul.mubr.bf16.gmra.mxu0 %v4475
        %v4566 = vpop.f32.mrf.mxu0
        %v4567 = vadd.f32 0.0, %v4566
        %v4568 = vpop.f32.mrf.mxu0
        %v4569 = vpop.f32.mrf.mxu0
        %v4570 = vadd.f32 0.0, %v4569
        %v4571 = vpop.f32.mrf.mxu0
        %4572 = vmatprep.mubr.bf16.mxu0 0
        %4573 = vmatmul.mubr.bf16.gmra.mxu0 %v4478
        %v4574 = vpop.f32.mrf.mxu0
        %v4575 = vadd.f32 0.0, %v4574
        %v4576 = vpop.f32.mrf.mxu0
        %v4577 = vpop.f32.mrf.mxu0
        %v4578 = vadd.f32 0.0, %v4577
        %v4579 = vpop.f32.mrf.mxu0
        %4580 = vmatprep.mubr.bf16.mxu0 0
        %4581 = vmatmul.mubr.bf16.gmra.mxu0 %v4481
        %v4582 = vpop.f32.mrf.mxu0
        %v4583 = vadd.f32 0.0, %v4582
        %v4584 = vpop.f32.mrf.mxu0
        %v4585 = vpop.f32.mrf.mxu0
        %v4586 = vadd.f32 0.0, %v4585
        %v4587 = vpop.f32.mrf.mxu0
        %4588 = vmatprep.mubr.bf16.mxu0 0
        %4589 = vmatmul.mubr.bf16.gmra.mxu0 %v4484
        %v4590 = vpop.f32.mrf.mxu0
        %v4591 = vadd.f32 0.0, %v4590
        %v4592 = vpop.f32.mrf.mxu0
        %v4593 = vpop.f32.mrf.mxu0
        %v4594 = vadd.f32 0.0, %v4593
        %v4595 = vpop.f32.mrf.mxu0
        %4596 = vmatprep.mubr.bf16.mxu0 0
        %4597 = vmatmul.mubr.bf16.gmra.mxu0 %v4487
        %v4598 = vpop.f32.mrf.mxu0
        %v4599 = vadd.f32 0.0, %v4598
        %v4600 = vpop.f32.mrf.mxu0
        %v4601 = vpop.f32.mrf.mxu0
        %v4602 = vadd.f32 0.0, %v4601
        %v4603 = vpop.f32.mrf.mxu0
        %4604 = vmatprep.mubr.bf16.mxu0 0
        %4605 = vmatmul.mubr.bf16.gmra.mxu0 %v4490
        %v4606 = vpop.f32.mrf.mxu0
        %v4607 = vadd.f32 0.0, %v4606
        %v4608 = vpop.f32.mrf.mxu0
        %v4609 = vpop.f32.mrf.mxu0
        %v4610 = vadd.f32 0.0, %v4609
        %v4611 = vpop.f32.mrf.mxu0
        %4612 = vmatprep.mubr.bf16.mxu0 0
        %4613 = vmatmul.mubr.bf16.gmra.mxu0 %v4493
        %v4614 = vpop.f32.mrf.mxu0
        %v4615 = vadd.f32 0.0, %v4614
        %v4616 = vpop.f32.mrf.mxu0
        %v4617 = vpop.f32.mrf.mxu0
        %v4618 = vadd.f32 0.0, %v4617
        %v4619 = vpop.f32.mrf.mxu0
        %4620 = vmatprep.mubr.bf16.mxu0 0
        %4621 = vmatmul.mubr.bf16.gmra.mxu0 %v4496
        %v4622 = vpop.f32.mrf.mxu0
        %v4623 = vadd.f32 0.0, %v4622
        %v4624 = vpop.f32.mrf.mxu0
        %v4625 = vpop.f32.mrf.mxu0
        %v4626 = vadd.f32 0.0, %v4625
        %v4627 = vpop.f32.mrf.mxu0
        %4628 = vmatprep.mubr.bf16.mxu0 0
        %4629 = vmatmul.mubr.bf16.gmra.mxu0 %v4499
        %v4630 = vpop.f32.mrf.mxu0
        %v4631 = vadd.f32 0.0, %v4630
        %v4632 = vpop.f32.mrf.mxu0
        %v4633 = vpop.f32.mrf.mxu0
        %v4634 = vadd.f32 0.0, %v4633
        %v4635 = vpop.f32.mrf.mxu0
        %4636 = vmatprep.mubr.bf16.mxu0 0
        %4637 = vmatmul.mubr.bf16.gmra.mxu0 %v4502
        %v4638 = vpop.f32.mrf.mxu0
        %v4639 = vadd.f32 0.0, %v4638
        %v4640 = vpop.f32.mrf.mxu0
        %v4641 = vpop.f32.mrf.mxu0
        %v4642 = vadd.f32 0.0, %v4641
        %v4643 = vpop.f32.mrf.mxu0
        %4644 = vmatprep.mubr.bf16.mxu0 0
        %4645 = vmatmul.mubr.bf16.gmra.mxu0 %v4505
        %v4646 = vpop.f32.mrf.mxu0
        %v4647 = vadd.f32 0.0, %v4646
        %v4648 = vpop.f32.mrf.mxu0
        %v4649 = vpop.f32.mrf.mxu0
        %v4650 = vadd.f32 0.0, %v4649
        %v4651 = vpop.f32.mrf.mxu0
        %4652 = vmatprep.mubr.bf16.mxu0 0
        %4653 = vmatmul.mubr.bf16.gmra.mxu0 %v4508
        %v4654 = vpop.f32.mrf.mxu0
        %v4655 = vadd.f32 0.0, %v4654
        %v4656 = vpop.f32.mrf.mxu0
        %v4657 = vpop.f32.mrf.mxu0
        %v4658 = vadd.f32 0.0, %v4657
        %v4659 = vpop.f32.mrf.mxu0
        %4660 = vmatprep.mubr.bf16.mxu0 0
        %4661 = vmatmul.mubr.bf16.gmra.mxu0 %v4511
        %v4662 = vpop.f32.mrf.mxu0
        %v4663 = vadd.f32 0.0, %v4662
        %v4664 = vpop.f32.mrf.mxu0
        %v4665 = vpop.f32.mrf.mxu0
        %v4666 = vadd.f32 0.0, %v4665
        %v4667 = vpop.f32.mrf.mxu0
        %4668 = vmatprep.mubr.bf16.mxu0 0
        %4669 = vmatmul.mubr.bf16.gmra.mxu0 %v4514
        %v4670 = vpop.f32.mrf.mxu0
        %v4671 = vadd.f32 0.0, %v4670
        %v4672 = vpop.f32.mrf.mxu0
        %v4673 = vpop.f32.mrf.mxu0
        %v4674 = vadd.f32 0.0, %v4673
        %v4675 = vpop.f32.mrf.mxu0
        %4676 = vdwg.mxu0
        %v4677 = vadd.f32 %v3923, %v4551
        %v4678 = vadd.f32 %v3924, %v4554
        %v4679 = vadd.f32 %v3925, %v4559
        %v4680 = vadd.f32 %v3926, %v4562
        %v4681 = vadd.f32 %v3927, %v4567
        %v4682 = vadd.f32 %v3928, %v4570
        %v4683 = vadd.f32 %v3929, %v4575
        %v4684 = vadd.f32 %v3930, %v4578
        %v4685 = vadd.f32 %v3931, %v4583
        %v4686 = vadd.f32 %v3932, %v4586
        %v4687 = vadd.f32 %v3933, %v4591
        %v4688 = vadd.f32 %v3934, %v4594
        %v4689 = vadd.f32 %v3935, %v4599
        %v4690 = vadd.f32 %v3936, %v4602
        %v4691 = vadd.f32 %v3937, %v4607
        %v4692 = vadd.f32 %v3938, %v4610
        %v4693 = vadd.f32 %v3939, %v4615
        %v4694 = vadd.f32 %v3940, %v4618
        %v4695 = vadd.f32 %v3941, %v4623
        %v4696 = vadd.f32 %v3942, %v4626
        %v4697 = vadd.f32 %v3943, %v4631
        %v4698 = vadd.f32 %v3944, %v4634
        %v4699 = vadd.f32 %v3945, %v4639
        %v4700 = vadd.f32 %v3946, %v4642
        %v4701 = vadd.f32 %v3947, %v4647
        %v4702 = vadd.f32 %v3948, %v4650
        %v4703 = vadd.f32 %v3949, %v4655
        %v4704 = vadd.f32 %v3950, %v4658
        %v4705 = vadd.f32 %v3951, %v4663
        %v4706 = vadd.f32 %v3952, %v4666
        %v4707 = vadd.f32 %v3953, %v4671
        %v4708 = vadd.f32 %v3954, %v4674
        %v4709 = vld [vmem:[%s3568] sm:$0xe]
        %v4710 = vld [vmem:[%s3568 + $0xc] sm:$0xe]
        %v4711 = vld [vmem:[%s3568 + $0x18] sm:$0xe]
        %v4712 = vld [vmem:[%s3568 + $0x24] sm:$0xe]
        %v4713 = vld [vmem:[%s3568 + $0x30] sm:$0xe]
        %v4714 = vld [vmem:[%s3568 + $0x3c] sm:$0xe]
        %v4715 = vld [vmem:[%s3568 + $0x48] sm:$0xe]
        %v4716 = vld [vmem:[%s3568 + $0x54] sm:$0xe]
        %v4717 = vld [vmem:[%s3568 + $0xd8] sm:$0xe]
        %v4718 = vld [vmem:[%s3568 + $0xe4] sm:$0xe]
        %v4719 = vld [vmem:[%s3568 + $0xf0] sm:$0xe]
        %v4720 = vld [vmem:[%s3568 + $0xfc] sm:$0xe]
        %v4721 = vld [vmem:[%s3568 + $0x108] sm:$0xe]
        %v4722 = vld [vmem:[%s3568 + $0x114] sm:$0xe]
        %v4723 = vld [vmem:[%s3568 + $0x120] sm:$0xe]
        %v4724 = vld [vmem:[%s3568 + $0x12c] sm:$0xe]
        %v4773 = vrot.slane %v4709, 5
        %v4774 = vrot.slane %v4773, 4
        %v4775 = vrot.slane %v3956, 5
        %v4776 = vsel %vm1488, %v4774, %v4775
        %v4777 = vrot.slane %v4775, 4
        %v4778 = vrot.slane %v3957, 5
        %v4779 = vsel %vm1488, %v4777, %v4778
        %v4780 = vrot.slane %v4710, 5
        %v4781 = vrot.slane %v4780, 4
        %v4782 = vrot.slane %v3959, 5
        %v4783 = vsel %vm1488, %v4781, %v4782
        %v4784 = vrot.slane %v4782, 4
        %v4785 = vrot.slane %v3960, 5
        %v4786 = vsel %vm1488, %v4784, %v4785
        %v4787 = vrot.slane %v4711, 5
        %v4788 = vrot.slane %v4787, 4
        %v4789 = vrot.slane %v3962, 5
        %v4790 = vsel %vm1488, %v4788, %v4789
        %v4791 = vrot.slane %v4789, 4
        %v4792 = vrot.slane %v3963, 5
        %v4793 = vsel %vm1488, %v4791, %v4792
        %v4794 = vrot.slane %v4712, 5
        %v4795 = vrot.slane %v4794, 4
        %v4796 = vrot.slane %v3965, 5
        %v4797 = vsel %vm1488, %v4795, %v4796
        %v4798 = vrot.slane %v4796, 4
        %v4799 = vrot.slane %v3966, 5
        %v4800 = vsel %vm1488, %v4798, %v4799
        %v4801 = vrot.slane %v4713, 5
        %v4802 = vrot.slane %v4801, 4
        %v4803 = vrot.slane %v3968, 5
        %v4804 = vsel %vm1488, %v4802, %v4803
        %v4805 = vrot.slane %v4803, 4
        %v4806 = vrot.slane %v3969, 5
        %v4807 = vsel %vm1488, %v4805, %v4806
        %v4808 = vrot.slane %v4714, 5
        %v4809 = vrot.slane %v4808, 4
        %v4810 = vrot.slane %v3971, 5
        %v4811 = vsel %vm1488, %v4809, %v4810
        %v4812 = vrot.slane %v4810, 4
        %v4813 = vrot.slane %v3972, 5
        %v4814 = vsel %vm1488, %v4812, %v4813
        %v4815 = vrot.slane %v4715, 5
        %v4816 = vrot.slane %v4815, 4
        %v4817 = vrot.slane %v3974, 5
        %v4818 = vsel %vm1488, %v4816, %v4817
        %v4819 = vrot.slane %v4817, 4
        %v4820 = vrot.slane %v3975, 5
        %v4821 = vsel %vm1488, %v4819, %v4820
        %v4822 = vrot.slane %v4716, 5
        %v4823 = vrot.slane %v4822, 4
        %v4824 = vrot.slane %v3977, 5
        %v4825 = vsel %vm1488, %v4823, %v4824
        %v4826 = vrot.slane %v4824, 4
        %v4827 = vrot.slane %v3978, 5
        %v4828 = vsel %vm1488, %v4826, %v4827
        %v4829 = vrot.slane %v4717, 5
        %v4830 = vrot.slane %v4829, 4
        %v4831 = vrot.slane %v3980, 5
        %v4832 = vsel %vm1488, %v4830, %v4831
        %v4833 = vrot.slane %v4831, 4
        %v4834 = vrot.slane %v3981, 5
        %v4835 = vsel %vm1488, %v4833, %v4834
        %v4836 = vrot.slane %v4718, 5
        %v4837 = vrot.slane %v4836, 4
        %v4838 = vrot.slane %v3983, 5
        %v4839 = vsel %vm1488, %v4837, %v4838
        %v4840 = vrot.slane %v4838, 4
        %v4841 = vrot.slane %v3984, 5
        %v4842 = vsel %vm1488, %v4840, %v4841
        %v4843 = vrot.slane %v4719, 5
        %v4844 = vrot.slane %v4843, 4
        %v4845 = vrot.slane %v3986, 5
        %v4846 = vsel %vm1488, %v4844, %v4845
        %v4847 = vrot.slane %v4845, 4
        %v4848 = vrot.slane %v3987, 5
        %v4849 = vsel %vm1488, %v4847, %v4848
        %v4850 = vrot.slane %v4720, 5
        %v4851 = vrot.slane %v4850, 4
        %v4852 = vrot.slane %v3989, 5
        %v4853 = vsel %vm1488, %v4851, %v4852
        %v4854 = vrot.slane %v4852, 4
        %v4855 = vrot.slane %v3990, 5
        %v4856 = vsel %vm1488, %v4854, %v4855
        %v4857 = vrot.slane %v4721, 5
        %v4858 = vrot.slane %v4857, 4
        %v4859 = vrot.slane %v3992, 5
        %v4860 = vsel %vm1488, %v4858, %v4859
        %v4861 = vrot.slane %v4859, 4
        %v4862 = vrot.slane %v3993, 5
        %v4863 = vsel %vm1488, %v4861, %v4862
        %v4864 = vrot.slane %v4722, 5
        %v4865 = vrot.slane %v4864, 4
        %v4866 = vrot.slane %v3995, 5
        %v4867 = vsel %vm1488, %v4865, %v4866
        %v4868 = vrot.slane %v4866, 4
        %v4869 = vrot.slane %v3996, 5
        %v4870 = vsel %vm1488, %v4868, %v4869
        %v4871 = vrot.slane %v4723, 5
        %v4872 = vrot.slane %v4871, 4
        %v4873 = vrot.slane %v3998, 5
        %v4874 = vsel %vm1488, %v4872, %v4873
        %v4875 = vrot.slane %v4873, 4
        %v4876 = vrot.slane %v3999, 5
        %v4877 = vsel %vm1488, %v4875, %v4876
        %v4878 = vrot.slane %v4724, 5
        %v4879 = vrot.slane %v4878, 4
        %v4880 = vrot.slane %v4001, 5
        %v4881 = vsel %vm1488, %v4879, %v4880
        %v4882 = vrot.slane %v4880, 4
        %v4883 = vrot.slane %v4002, 5
        %v4884 = vsel %vm1488, %v4882, %v4883
        %s4885 = scalar_lea.vmem %s1, 256
        %v4886 = vld [vmem:[%s4885] sm:$0xf]
        %v4887 = vld [vmem:[%s4885 + $0x4] sm:$0xf]
        %v4888 = vld [vmem:[%s4885 + $0x8] sm:$0xf]
        %v4889 = vld [vmem:[%s4885 + $0xc] sm:$0xf]
        %v4890 = vld [vmem:[%s4885 + $0x10] sm:$0xf]
        %v4891 = vld [vmem:[%s4885 + $0x14] sm:$0xf]
        %v4892 = vld [vmem:[%s4885 + $0x18] sm:$0xf]
        %v4893 = vld [vmem:[%s4885 + $0x1c] sm:$0xf]
        %v4894 = vunpack.c.l.b16 %v4776
        %v4895 = vunpack.c.l.b16 %v4779
        %v4896 = vunpack.c.l.b16 %v4783
        %v4897 = vunpack.c.l.b16 %v4786
        %v4898 = vunpack.c.l.b16 %v4790
        %v4899 = vunpack.c.l.b16 %v4793
        %v4900 = vunpack.c.l.b16 %v4797
        %v4901 = vunpack.c.l.b16 %v4800
        %v4902 = vunpack.c.l.b16 %v4804
        %v4903 = vunpack.c.l.b16 %v4807
        %v4904 = vunpack.c.l.b16 %v4811
        %v4905 = vunpack.c.l.b16 %v4814
        %v4906 = vunpack.c.l.b16 %v4818
        %v4907 = vunpack.c.l.b16 %v4821
        %v4908 = vunpack.c.l.b16 %v4825
        %v4909 = vunpack.c.l.b16 %v4828
        %v4910 = vunpack.c.l.b16 %v4832
        %v4911 = vunpack.c.l.b16 %v4835
        %v4912 = vunpack.c.l.b16 %v4839
        %v4913 = vunpack.c.l.b16 %v4842
        %v4914 = vunpack.c.l.b16 %v4846
        %v4915 = vunpack.c.l.b16 %v4849
        %v4916 = vunpack.c.l.b16 %v4853
        %v4917 = vunpack.c.l.b16 %v4856
        %v4918 = vunpack.c.l.b16 %v4860
        %v4919 = vunpack.c.l.b16 %v4863
        %v4920 = vunpack.c.l.b16 %v4867
        %v4921 = vunpack.c.l.b16 %v4870
        %v4922 = vunpack.c.l.b16 %v4874
        %v4923 = vunpack.c.l.b16 %v4877
        %v4924 = vunpack.c.l.b16 %v4881
        %v4925 = vunpack.c.l.b16 %v4884
        %v4926 = vpack.c.b16 %v4895, %v4894
        %v4927 = vpack.c.b16 %v4897, %v4896
        %v4928 = vpack.c.b16 %v4899, %v4898
        %v4929 = vpack.c.b16 %v4901, %v4900
        %v4930 = vpack.c.b16 %v4903, %v4902
        %v4931 = vpack.c.b16 %v4905, %v4904
        %v4932 = vpack.c.b16 %v4907, %v4906
        %v4933 = vpack.c.b16 %v4909, %v4908
        %v4934 = vpack.c.b16 %v4911, %v4910
        %v4935 = vpack.c.b16 %v4913, %v4912
        %v4936 = vpack.c.b16 %v4915, %v4914
        %v4937 = vpack.c.b16 %v4917, %v4916
        %v4938 = vpack.c.b16 %v4919, %v4918
        %v4939 = vpack.c.b16 %v4921, %v4920
        %v4940 = vpack.c.b16 %v4923, %v4922
        %v4941 = vpack.c.b16 %v4925, %v4924
        %v4950 = vunpack.c.l.b16 %v4886
        %v4951 = vunpack.c.l.b16 %v4887
        %v4952 = vunpack.c.l.b16 %v4888
        %v4953 = vunpack.c.l.b16 %v4889
        %v4954 = vunpack.c.l.b16 %v4890
        %v4955 = vunpack.c.l.b16 %v4891
        %v4956 = vunpack.c.l.b16 %v4892
        %v4957 = vunpack.c.l.b16 %v4893
        %v4958 = vpack.c.b16 %v4951, %v4950
        %v4959 = vpack.c.b16 %v4953, %v4952
        %v4960 = vpack.c.b16 %v4955, %v4954
        %v4961 = vpack.c.b16 %v4957, %v4956
        %v4967 = vsel %vm915, %v4926, 0
        %v4970 = vsel %vm915, %v4927, 0
        %v4973 = vsel %vm915, %v4928, 0
        %v4976 = vsel %vm915, %v4929, 0
        %v4979 = vsel %vm915, %v4930, 0
        %v4982 = vsel %vm915, %v4931, 0
        %v4985 = vsel %vm915, %v4932, 0
        %v4988 = vsel %vm915, %v4933, 0
        %v4991 = vsel %vm915, %v4934, 0
        %v4994 = vsel %vm915, %v4935, 0
        %v4997 = vsel %vm915, %v4936, 0
        %v5000 = vsel %vm915, %v4937, 0
        %v5003 = vsel %vm915, %v4938, 0
        %v5006 = vsel %vm915, %v4939, 0
        %v5009 = vsel %vm915, %v4940, 0
        %v5012 = vsel %vm915, %v4941, 0
        %5014 = vmatprep.subr.bf16.mxu0 0
        %5015 = vmatpush1.bf16.msra.mxu0 0
        %5016 = vmatprep.subr.bf16.mxu0 0
        %5017 = vmatpush1.bf16.msra.mxu0 0
        %5018 = vmatprep.subr.bf16.mxu0 0
        %5019 = vmatpush1.bf16.msra.mxu0 0
        %5020 = vmatprep.subr.bf16.mxu0 0
        %5021 = vmatpush1.bf16.msra.mxu0 0
        %5022 = vmatprep.subr.bf16.mxu0 0
        %5023 = vmatpush1.bf16.msra.mxu0 %v4961
        %5024 = vmatprep.subr.bf16.mxu0 0
        %5025 = vmatpush1.bf16.msra.mxu0 %v4960
        %5026 = vmatprep.subr.bf16.mxu0 0
        %5027 = vmatpush1.bf16.msra.mxu0 %v4959
        %5028 = vmatprep.subr.bf16.mxu0 0
        %5029 = vmatpush1.bf16.msra.mxu0 %v4958
        %5030 = vmatprep.subr.bf16.mxu0 0
        %5031 = vmatpush2.bf16.msra.mxu0 0
        %5032 = vmatprep.subr.bf16.mxu0 0
        %5033 = vmatpush2.bf16.msra.mxu0 0
        %5034 = vmatprep.subr.bf16.mxu0 0
        %5035 = vmatpush2.bf16.msra.mxu0 0
        %5036 = vmatprep.subr.bf16.mxu0 0
        %5037 = vmatpush2.bf16.msra.mxu0 0
        %5038 = vmatprep.subr.bf16.mxu0 0
        %5039 = vmatpush2.bf16.msra.mxu0 0
        %5040 = vmatprep.subr.bf16.mxu0 0
        %5041 = vmatpush2.bf16.msra.mxu0 0
        %5042 = vmatprep.subr.bf16.mxu0 0
        %5043 = vmatpush2.bf16.msra.mxu0 0
        %5044 = vmatprep.subr.bf16.mxu0 0
        %5045 = vmatpush2.bf16.msra.mxu0 0
        %5046 = vmatprep.mubr.bf16.mxu0 0
        %5047 = vmatmul.mubr.bf16.gmra.mxu0 %v4967
        %v5048 = vpop.f32.mrf.mxu0
        %v5049 = vadd.f32 0.0, %v5048
        %v5050 = vpop.f32.mrf.mxu0
        %v5051 = vpop.f32.mrf.mxu0
        %v5052 = vadd.f32 0.0, %v5051
        %v5053 = vpop.f32.mrf.mxu0
        %5054 = vmatprep.mubr.bf16.mxu0 0
        %5055 = vmatmul.mubr.bf16.gmra.mxu0 %v4970
        %v5056 = vpop.f32.mrf.mxu0
        %v5057 = vadd.f32 0.0, %v5056
        %v5058 = vpop.f32.mrf.mxu0
        %v5059 = vpop.f32.mrf.mxu0
        %v5060 = vadd.f32 0.0, %v5059
        %v5061 = vpop.f32.mrf.mxu0
        %5062 = vmatprep.mubr.bf16.mxu0 0
        %5063 = vmatmul.mubr.bf16.gmra.mxu0 %v4973
        %v5064 = vpop.f32.mrf.mxu0
        %v5065 = vadd.f32 0.0, %v5064
        %v5066 = vpop.f32.mrf.mxu0
        %v5067 = vpop.f32.mrf.mxu0
        %v5068 = vadd.f32 0.0, %v5067
        %v5069 = vpop.f32.mrf.mxu0
        %5070 = vmatprep.mubr.bf16.mxu0 0
        %5071 = vmatmul.mubr.bf16.gmra.mxu0 %v4976
        %v5072 = vpop.f32.mrf.mxu0
        %v5073 = vadd.f32 0.0, %v5072
        %v5074 = vpop.f32.mrf.mxu0
        %v5075 = vpop.f32.mrf.mxu0
        %v5076 = vadd.f32 0.0, %v5075
        %v5077 = vpop.f32.mrf.mxu0
        %5078 = vmatprep.mubr.bf16.mxu0 0
        %5079 = vmatmul.mubr.bf16.gmra.mxu0 %v4979
        %v5080 = vpop.f32.mrf.mxu0
        %v5081 = vadd.f32 0.0, %v5080
        %v5082 = vpop.f32.mrf.mxu0
        %v5083 = vpop.f32.mrf.mxu0
        %v5084 = vadd.f32 0.0, %v5083
        %v5085 = vpop.f32.mrf.mxu0
        %5086 = vmatprep.mubr.bf16.mxu0 0
        %5087 = vmatmul.mubr.bf16.gmra.mxu0 %v4982
        %v5088 = vpop.f32.mrf.mxu0
        %v5089 = vadd.f32 0.0, %v5088
        %v5090 = vpop.f32.mrf.mxu0
        %v5091 = vpop.f32.mrf.mxu0
        %v5092 = vadd.f32 0.0, %v5091
        %v5093 = vpop.f32.mrf.mxu0
        %5094 = vmatprep.mubr.bf16.mxu0 0
        %5095 = vmatmul.mubr.bf16.gmra.mxu0 %v4985
        %v5096 = vpop.f32.mrf.mxu0
        %v5097 = vadd.f32 0.0, %v5096
        %v5098 = vpop.f32.mrf.mxu0
        %v5099 = vpop.f32.mrf.mxu0
        %v5100 = vadd.f32 0.0, %v5099
        %v5101 = vpop.f32.mrf.mxu0
        %5102 = vmatprep.mubr.bf16.mxu0 0
        %5103 = vmatmul.mubr.bf16.gmra.mxu0 %v4988
        %v5104 = vpop.f32.mrf.mxu0
        %v5105 = vadd.f32 0.0, %v5104
        %v5106 = vpop.f32.mrf.mxu0
        %v5107 = vpop.f32.mrf.mxu0
        %v5108 = vadd.f32 0.0, %v5107
        %v5109 = vpop.f32.mrf.mxu0
        %5110 = vmatprep.mubr.bf16.mxu0 0
        %5111 = vmatmul.mubr.bf16.gmra.mxu0 %v4991
        %v5112 = vpop.f32.mrf.mxu0
        %v5113 = vadd.f32 0.0, %v5112
        %v5114 = vpop.f32.mrf.mxu0
        %v5115 = vpop.f32.mrf.mxu0
        %v5116 = vadd.f32 0.0, %v5115
        %v5117 = vpop.f32.mrf.mxu0
        %5118 = vmatprep.mubr.bf16.mxu0 0
        %5119 = vmatmul.mubr.bf16.gmra.mxu0 %v4994
        %v5120 = vpop.f32.mrf.mxu0
        %v5121 = vadd.f32 0.0, %v5120
        %v5122 = vpop.f32.mrf.mxu0
        %v5123 = vpop.f32.mrf.mxu0
        %v5124 = vadd.f32 0.0, %v5123
        %v5125 = vpop.f32.mrf.mxu0
        %5126 = vmatprep.mubr.bf16.mxu0 0
        %5127 = vmatmul.mubr.bf16.gmra.mxu0 %v4997
        %v5128 = vpop.f32.mrf.mxu0
        %v5129 = vadd.f32 0.0, %v5128
        %v5130 = vpop.f32.mrf.mxu0
        %v5131 = vpop.f32.mrf.mxu0
        %v5132 = vadd.f32 0.0, %v5131
        %v5133 = vpop.f32.mrf.mxu0
        %5134 = vmatprep.mubr.bf16.mxu0 0
        %5135 = vmatmul.mubr.bf16.gmra.mxu0 %v5000
        %v5136 = vpop.f32.mrf.mxu0
        %v5137 = vadd.f32 0.0, %v5136
        %v5138 = vpop.f32.mrf.mxu0
        %v5139 = vpop.f32.mrf.mxu0
        %v5140 = vadd.f32 0.0, %v5139
        %v5141 = vpop.f32.mrf.mxu0
        %5142 = vmatprep.mubr.bf16.mxu0 0
        %5143 = vmatmul.mubr.bf16.gmra.mxu0 %v5003
        %v5144 = vpop.f32.mrf.mxu0
        %v5145 = vadd.f32 0.0, %v5144
        %v5146 = vpop.f32.mrf.mxu0
        %v5147 = vpop.f32.mrf.mxu0
        %v5148 = vadd.f32 0.0, %v5147
        %v5149 = vpop.f32.mrf.mxu0
        %5150 = vmatprep.mubr.bf16.mxu0 0
        %5151 = vmatmul.mubr.bf16.gmra.mxu0 %v5006
        %v5152 = vpop.f32.mrf.mxu0
        %v5153 = vadd.f32 0.0, %v5152
        %v5154 = vpop.f32.mrf.mxu0
        %v5155 = vpop.f32.mrf.mxu0
        %v5156 = vadd.f32 0.0, %v5155
        %v5157 = vpop.f32.mrf.mxu0
        %5158 = vmatprep.mubr.bf16.mxu0 0
        %5159 = vmatmul.mubr.bf16.gmra.mxu0 %v5009
        %v5160 = vpop.f32.mrf.mxu0
        %v5161 = vadd.f32 0.0, %v5160
        %v5162 = vpop.f32.mrf.mxu0
        %v5163 = vpop.f32.mrf.mxu0
        %v5164 = vadd.f32 0.0, %v5163
        %v5165 = vpop.f32.mrf.mxu0
        %5166 = vmatprep.mubr.bf16.mxu0 0
        %5167 = vmatmul.mubr.bf16.gmra.mxu0 %v5012
        %v5168 = vpop.f32.mrf.mxu0
        %v5169 = vadd.f32 0.0, %v5168
        %v5170 = vpop.f32.mrf.mxu0
        %v5171 = vpop.f32.mrf.mxu0
        %v5172 = vadd.f32 0.0, %v5171
        %v5173 = vpop.f32.mrf.mxu0
        %5174 = vdwg.mxu0
        %v5175 = vadd.f32 %v4677, %v5049
        %v5176 = vadd.f32 %v4678, %v5052
        %v5177 = vadd.f32 %v4679, %v5057
        %v5178 = vadd.f32 %v4680, %v5060
        %v5179 = vadd.f32 %v4681, %v5065
        %v5180 = vadd.f32 %v4682, %v5068
        %v5181 = vadd.f32 %v4683, %v5073
        %v5182 = vadd.f32 %v4684, %v5076
        %v5183 = vadd.f32 %v4685, %v5081
        %v5184 = vadd.f32 %v4686, %v5084
        %v5185 = vadd.f32 %v4687, %v5089
        %v5186 = vadd.f32 %v4688, %v5092
        %v5187 = vadd.f32 %v4689, %v5097
        %v5188 = vadd.f32 %v4690, %v5100
        %v5189 = vadd.f32 %v4691, %v5105
        %v5190 = vadd.f32 %v4692, %v5108
        %v5191 = vadd.f32 %v4693, %v5113
        %v5192 = vadd.f32 %v4694, %v5116
        %v5193 = vadd.f32 %v4695, %v5121
        %v5194 = vadd.f32 %v4696, %v5124
        %v5195 = vadd.f32 %v4697, %v5129
        %v5196 = vadd.f32 %v4698, %v5132
        %v5197 = vadd.f32 %v4699, %v5137
        %v5198 = vadd.f32 %v4700, %v5140
        %v5199 = vadd.f32 %v4701, %v5145
        %v5200 = vadd.f32 %v4702, %v5148
        %v5201 = vadd.f32 %v4703, %v5153
        %v5202 = vadd.f32 %v4704, %v5156
        %v5203 = vadd.f32 %v4705, %v5161
        %v5204 = vadd.f32 %v4706, %v5164
        %v5205 = vadd.f32 %v4707, %v5169
        %v5206 = vadd.f32 %v4708, %v5172
        %v5207 = vld [vmem:[%s2] sm:$0x1]
        %v5209 = vlaneseq
        %v5210 = vshrl.u32 %v5209, 7
        %v5211 = vsub.s32 0, %v5210
        %v5212 = vrot.slane %v5207, %v5211
        %v5214 = vmul.f32 %v5175, %v5212
        %v5215 = vmul.f32 %v5176, %v5212
        %v5216 = vmul.f32 %v5177, %v5212
        %v5217 = vmul.f32 %v5178, %v5212
        %v5218 = vmul.f32 %v5179, %v5212
        %v5219 = vmul.f32 %v5180, %v5212
        %v5220 = vmul.f32 %v5181, %v5212
        %v5221 = vmul.f32 %v5182, %v5212
        %v5222 = vmul.f32 %v5183, %v5212
        %v5223 = vmul.f32 %v5184, %v5212
        %v5224 = vmul.f32 %v5185, %v5212
        %v5225 = vmul.f32 %v5186, %v5212
        %v5226 = vmul.f32 %v5187, %v5212
        %v5227 = vmul.f32 %v5188, %v5212
        %v5228 = vmul.f32 %v5189, %v5212
        %v5229 = vmul.f32 %v5190, %v5212
        %v5230 = vmul.f32 %v5191, %v5212
        %v5231 = vmul.f32 %v5192, %v5212
        %v5232 = vmul.f32 %v5193, %v5212
        %v5233 = vmul.f32 %v5194, %v5212
        %v5234 = vmul.f32 %v5195, %v5212
        %v5235 = vmul.f32 %v5196, %v5212
        %v5236 = vmul.f32 %v5197, %v5212
        %v5237 = vmul.f32 %v5198, %v5212
        %v5238 = vmul.f32 %v5199, %v5212
        %v5239 = vmul.f32 %v5200, %v5212
        %v5240 = vmul.f32 %v5201, %v5212
        %v5241 = vmul.f32 %v5202, %v5212
        %v5242 = vmul.f32 %v5203, %v5212
        %v5243 = vmul.f32 %v5204, %v5212
        %v5244 = vmul.f32 %v5205, %v5212
        %v5245 = vmul.f32 %v5206, %v5212
        %v5246 = vld [vmem:[%s3] sm:$0x1]
        %v5248 = vlaneseq
        %v5249 = vshrl.u32 %v5248, 7
        %v5250 = vsub.s32 0, %v5249
        %v5251 = vrot.slane %v5246, %v5250
        %v5253 = vadd.f32 %v5214, %v5251
        %v5254 = vadd.f32 %v5215, %v5251
        %v5255 = vadd.f32 %v5216, %v5251
        %v5256 = vadd.f32 %v5217, %v5251
        %v5257 = vadd.f32 %v5218, %v5251
        %v5258 = vadd.f32 %v5219, %v5251
        %v5259 = vadd.f32 %v5220, %v5251
        %v5260 = vadd.f32 %v5221, %v5251
        %v5261 = vadd.f32 %v5222, %v5251
        %v5262 = vadd.f32 %v5223, %v5251
        %v5263 = vadd.f32 %v5224, %v5251
        %v5264 = vadd.f32 %v5225, %v5251
        %v5265 = vadd.f32 %v5226, %v5251
        %v5266 = vadd.f32 %v5227, %v5251
        %v5267 = vadd.f32 %v5228, %v5251
        %v5268 = vadd.f32 %v5229, %v5251
        %v5269 = vadd.f32 %v5230, %v5251
        %v5270 = vadd.f32 %v5231, %v5251
        %v5271 = vadd.f32 %v5232, %v5251
        %v5272 = vadd.f32 %v5233, %v5251
        %v5273 = vadd.f32 %v5234, %v5251
        %v5274 = vadd.f32 %v5235, %v5251
        %v5275 = vadd.f32 %v5236, %v5251
        %v5276 = vadd.f32 %v5237, %v5251
        %v5277 = vadd.f32 %v5238, %v5251
        %v5278 = vadd.f32 %v5239, %v5251
        %v5279 = vadd.f32 %v5240, %v5251
        %v5280 = vadd.f32 %v5241, %v5251
        %v5281 = vadd.f32 %v5242, %v5251
        %v5282 = vadd.f32 %v5243, %v5251
        %v5283 = vadd.f32 %v5244, %v5251
        %v5284 = vadd.f32 %v5245, %v5251
        %v5285 = vld [vmem:[%s359] sm:$0xff]
        %v5286 = vld [vmem:[%s359 + $0x8] sm:$0xff]
        %v5287 = vld [vmem:[%s359 + $0x10] sm:$0xff]
        %v5288 = vld [vmem:[%s359 + $0x18] sm:$0xff]
        %v5289 = vld [vmem:[%s359 + $0x20] sm:$0xff]
        %v5290 = vld [vmem:[%s359 + $0x28] sm:$0xff]
        %v5291 = vld [vmem:[%s359 + $0x30] sm:$0xff]
        %v5292 = vld [vmem:[%s359 + $0x38] sm:$0xff]
        %v5293 = vld [vmem:[%s359 + $0x40] sm:$0xff]
        %v5294 = vld [vmem:[%s359 + $0x48] sm:$0xff]
        %v5295 = vld [vmem:[%s359 + $0x50] sm:$0xff]
        %v5296 = vld [vmem:[%s359 + $0x58] sm:$0xff]
        %v5297 = vld [vmem:[%s359 + $0x60] sm:$0xff]
        %v5298 = vld [vmem:[%s359 + $0x68] sm:$0xff]
        %v5299 = vld [vmem:[%s359 + $0x70] sm:$0xff]
        %v5300 = vld [vmem:[%s359 + $0x78] sm:$0xff]
        %v5301 = vld [vmem:[%s359 + $0x80] sm:$0xff]
        %v5302 = vld [vmem:[%s359 + $0x88] sm:$0xff]
        %v5303 = vld [vmem:[%s359 + $0x90] sm:$0xff]
        %v5304 = vld [vmem:[%s359 + $0x98] sm:$0xff]
        %v5305 = vld [vmem:[%s359 + $0xa0] sm:$0xff]
        %v5306 = vld [vmem:[%s359 + $0xa8] sm:$0xff]
        %v5307 = vld [vmem:[%s359 + $0xb0] sm:$0xff]
        %v5308 = vld [vmem:[%s359 + $0xb8] sm:$0xff]
        %v5309 = vld [vmem:[%s359 + $0xc0] sm:$0xff]
        %v5310 = vld [vmem:[%s359 + $0xc8] sm:$0xff]
        %v5311 = vld [vmem:[%s359 + $0xd0] sm:$0xff]
        %v5312 = vld [vmem:[%s359 + $0xd8] sm:$0xff]
        %v5313 = vld [vmem:[%s359 + $0xe0] sm:$0xff]
        %v5314 = vld [vmem:[%s359 + $0xe8] sm:$0xff]
        %v5315 = vld [vmem:[%s359 + $0xf0] sm:$0xff]
        %v5316 = vld [vmem:[%s359 + $0xf8] sm:$0xff]
        %v5317 = vadd.f32 %v5253, %v5285
        %v5318 = vadd.f32 %v5254, %v5286
        %v5319 = vadd.f32 %v5255, %v5287
        %v5320 = vadd.f32 %v5256, %v5288
        %v5321 = vadd.f32 %v5257, %v5289
        %v5322 = vadd.f32 %v5258, %v5290
        %v5323 = vadd.f32 %v5259, %v5291
        %v5324 = vadd.f32 %v5260, %v5292
        %v5325 = vadd.f32 %v5261, %v5293
        %v5326 = vadd.f32 %v5262, %v5294
        %v5327 = vadd.f32 %v5263, %v5295
        %v5328 = vadd.f32 %v5264, %v5296
        %v5329 = vadd.f32 %v5265, %v5297
        %v5330 = vadd.f32 %v5266, %v5298
        %v5331 = vadd.f32 %v5267, %v5299
        %v5332 = vadd.f32 %v5268, %v5300
        %v5333 = vadd.f32 %v5269, %v5301
        %v5334 = vadd.f32 %v5270, %v5302
        %v5335 = vadd.f32 %v5271, %v5303
        %v5336 = vadd.f32 %v5272, %v5304
        %v5337 = vadd.f32 %v5273, %v5305
        %v5338 = vadd.f32 %v5274, %v5306
        %v5339 = vadd.f32 %v5275, %v5307
        %v5340 = vadd.f32 %v5276, %v5308
        %v5341 = vadd.f32 %v5277, %v5309
        %v5342 = vadd.f32 %v5278, %v5310
        %v5343 = vadd.f32 %v5279, %v5311
        %v5344 = vadd.f32 %v5280, %v5312
        %v5345 = vadd.f32 %v5281, %v5313
        %v5346 = vadd.f32 %v5282, %v5314
        %v5347 = vadd.f32 %v5283, %v5315
        %v5348 = vadd.f32 %v5284, %v5316
        %5349 = vst.msk [vmem:[%s383] sm:$0xff] %vm915, %v5317
        %5350 = vst.msk [vmem:[%s383 + $0x8] sm:$0xff] %vm915, %v5318
        %5351 = vst.msk [vmem:[%s383 + $0x10] sm:$0xff] %vm915, %v5319
        %5352 = vst.msk [vmem:[%s383 + $0x18] sm:$0xff] %vm915, %v5320
        %5353 = vst.msk [vmem:[%s383 + $0x20] sm:$0xff] %vm915, %v5321
        %5354 = vst.msk [vmem:[%s383 + $0x28] sm:$0xff] %vm915, %v5322
        %5355 = vst.msk [vmem:[%s383 + $0x30] sm:$0xff] %vm915, %v5323
        %5356 = vst.msk [vmem:[%s383 + $0x38] sm:$0xff] %vm915, %v5324
        %5357 = vst.msk [vmem:[%s383 + $0x40] sm:$0xff] %vm915, %v5325
        %5358 = vst.msk [vmem:[%s383 + $0x48] sm:$0xff] %vm915, %v5326
        %5359 = vst.msk [vmem:[%s383 + $0x50] sm:$0xff] %vm915, %v5327
        %5360 = vst.msk [vmem:[%s383 + $0x58] sm:$0xff] %vm915, %v5328
        %5361 = vst.msk [vmem:[%s383 + $0x60] sm:$0xff] %vm915, %v5329
        %5362 = vst.msk [vmem:[%s383 + $0x68] sm:$0xff] %vm915, %v5330
        %5363 = vst.msk [vmem:[%s383 + $0x70] sm:$0xff] %vm915, %v5331
        %5364 = vst.msk [vmem:[%s383 + $0x78] sm:$0xff] %vm915, %v5332
        %5365 = vst.msk [vmem:[%s383 + $0x80] sm:$0xff] %vm915, %v5333
        %5366 = vst.msk [vmem:[%s383 + $0x88] sm:$0xff] %vm915, %v5334
        %5367 = vst.msk [vmem:[%s383 + $0x90] sm:$0xff] %vm915, %v5335
        %5368 = vst.msk [vmem:[%s383 + $0x98] sm:$0xff] %vm915, %v5336
        %5369 = vst.msk [vmem:[%s383 + $0xa0] sm:$0xff] %vm915, %v5337
        %5370 = vst.msk [vmem:[%s383 + $0xa8] sm:$0xff] %vm915, %v5338
        %5371 = vst.msk [vmem:[%s383 + $0xb0] sm:$0xff] %vm915, %v5339
        %5372 = vst.msk [vmem:[%s383 + $0xb8] sm:$0xff] %vm915, %v5340
        %5373 = vst.msk [vmem:[%s383 + $0xc0] sm:$0xff] %vm915, %v5341
        %5374 = vst.msk [vmem:[%s383 + $0xc8] sm:$0xff] %vm915, %v5342
        %5375 = vst.msk [vmem:[%s383 + $0xd0] sm:$0xff] %vm915, %v5343
        %5376 = vst.msk [vmem:[%s383 + $0xd8] sm:$0xff] %vm915, %v5344
        %5377 = vst.msk [vmem:[%s383 + $0xe0] sm:$0xff] %vm915, %v5345
        %5378 = vst.msk [vmem:[%s383 + $0xe8] sm:$0xff] %vm915, %v5346
        %5379 = vst.msk [vmem:[%s383 + $0xf0] sm:$0xff] %vm915, %v5347
        %5380 = vst.msk [vmem:[%s383 + $0xf8] sm:$0xff] %vm915, %v5348
        %s5381 = sand.u32 %s137, 1
        %s5382 = scalar_lea.sflag [#allocation4], %s5381
        %s5383 = sand.u32 %s137, 1
        %s5384 = smul.addr %s5383, 256
        %s5385 = scalar_lea.vmem [#allocation3], %s5384
        // Predicated region
        $region79: #{residual_block_bn_forward.3} parent=73 // pred_check
          %p5386 = pneg %p147
        $region80: #{residual_block_bn_forward.3} parent=73 // pred_check_branch
          %5388 = sbr.rel (%p5386) target = $region82
        $region81: #{residual_block_bn_forward.3} parent=73 // pred_region
          #allocation6 [shape = 'u32[6]{0}', space=smem, size = 0x18, scoped, tag = 'DMA stride descriptor']
          %s5389 = smul.u32 8, %s19
          %s5391 = ssub.s32 4096, 4096
          %5392 = vsyncadd %s5382, %s5391
          %s5393 = smul.addr %s5389, 2
          %s5394 = smul.addr %s5393, 128
          %s5395 = scalar_lea.hbm %s5, %s5394
          %s5397 = sshll.u32 1, 14
          %s5398 = sxor.u32 4294967295, %s5397
          %s5401 = sshll.u32 7, 18
          %s5402 = sxor.u32 4294967295, %s5401
          %s5403 = sand.u32 0, %s5402
          %s5405 = sor.u32 %s5403, 0
          %s5406 = sshll.u32 %s5385, 4
          %s5407 = int_to_ptr.vmem [resolvable:$true] %s5406
          %5413 = sst [smem:[#allocation6]] 2048
          %s5414 = scalar_lea.smem [#allocation6], 1
          %5415 = sst [smem:[%s5414]] 4096
          %s5416 = scalar_lea.smem [#allocation6], 2
          %5417 = sst [smem:[%s5416]] 16
          %s5418 = scalar_lea.smem [#allocation6], 3
          %5419 = sst [smem:[%s5418]] 128
          %s5420 = scalar_lea.smem [#allocation6], 4
          %5421 = sst [smem:[%s5420]] 128
          %s5422 = scalar_lea.smem [#allocation6], 5
          %5423 = sst [smem:[%s5422]] 8
          %5425 = dma.general %s5407, 4096, %s5395, %s5382, 131072, [#allocation6], %s5405, 0
        $region82: #{residual_block_bn_forward.3} parent=73 // pred_fallthru
          _
      $region74: #{residual_block_bn_forward.3} parent=5 // pred_fallthru
        _
      %p5426 = scmp.le.s32.totalorder 2, %s14
      // Predicated region
      $region83: #{residual_block_bn_forward.3} parent=5 // pred_check
        %p5427 = pneg %p5426
      $region84: #{residual_block_bn_forward.3} parent=5 // pred_check_branch
        %5429 = sbr.rel (%p5427) target = $region86
      $region85: #{residual_block_bn_forward.3} parent=5 // pred_region
        %s5430 = ssub.s32 %s14, 2
        // Predicated region
        $region87: #{residual_block_bn_forward.3} parent=85 // pred_check
          %p5431 = pneg %p153
        $region88: #{residual_block_bn_forward.3} parent=85 // pred_check_branch
          %5433 = sbr.rel (%p5431) target = $region90
        $region89: #{residual_block_bn_forward.3} parent=85 // pred_region
          %s5434 = sand.u32 %s138, 1
          %s5435 = scalar_lea.sflag [#allocation4], %s5434
          %s5436 = sand.u32 %s138, 1
          %s5437 = smul.addr %s5436, 256
          %s5438 = scalar_lea.vmem [#allocation3], %s5437
          %5439 = dma.done %s5435, 4096
        $region90: #{residual_block_bn_forward.3} parent=85 // pred_fallthru
          _
      $region86: #{residual_block_bn_forward.3} parent=5 // pred_fallthru
        _
    $region6: #{residual_block_bn_forward.3} parent=1 // loop_footer
      %s18 = sadd.s32 1, %s14
    $region7: #{residual_block_bn_forward.3} parent=1 // loop_footer_branch
      %13 = sbr.rel target = $region3
    $region8: #{residual_block_bn_forward.3} parent=1 // loop_exit
      _
    %5440 = vsyncpa [#allocation4], 1
    %s5441 = scalar_lea.sflag [#allocation4], 1
    %5442 = vsyncpa %s5441, 1

// kernel: residual_block_bn_forward.2
$region0: #{residual_block_bn_forward.2}
  #allocation0 [shape = 'u32[]', space=smem, size = 0x4, offset = 0x4, fixed_abs, tag = 'smem constant byte address 0x4 - core index']
  #allocation1 [shape = 'u32[144,128]{1,0:T(1,128)}', space=vmem, size = 0x12000, scoped, tag = 'internal scratch']
  %s0 = inlined_call_operand.vmem [shape: bf16[2,18,18,64], index: 0, kind: input, shape index: {}]
  %s1 = inlined_call_operand.vmem [shape: bf16[9,64,64], index: 1, kind: input, shape index: {}]
  %s2 = inlined_call_operand.vmem [shape: f32[1,64], index: 2, kind: input, shape index: {}]
  %s3 = inlined_call_operand.vmem [shape: f32[1,64], index: 3, kind: input, shape index: {}]
  %s4 = inlined_call_operand.vmem [shape: bf16[2,16,16,64], index: 4, kind: output, shape index: {}]
  %s5 = sld [smem:[#allocation0]]
  $region86: #{residual_block_bn_forward.2} parent=0
    _
  %s7 = ssub.s32 1, %s5
  %s8 = scalar_select 0, %s7, %s5
  $region1: #{residual_block_bn_forward.2} parent=0
    #allocation2 [shape = 'u8[131072]{0}', space=vmem, size = 0x20000, scoped, tag = 'output window, operand 0']
    loop: start=0, step=1, limit=4
    $region2: #{residual_block_bn_forward.2} parent=1 // loop_pre_header
      _
    $region3: #{residual_block_bn_forward.2} parent=1 // loop_header
      %s10 = sphi 0, %s14
      %p11 = scmp.ge.s32.totalorder %s10, 4
      %s18 = sphi 0, %s18
      %s20 = sphi 0, %s18
      %s21 = sphi 0, %s20
      %s35 = sphi 0, %s21
      %s39 = sphi 0, %s39
      %s41 = sphi 0, %s39
      %s42 = sphi 0, %s41
      %s56 = sphi 0, %s42
      %s60 = sphi 0, %s60
      %s62 = sphi 0, %s60
      %s63 = sphi 0, %s62
      %s77 = sphi 0, %s63
      %s81 = sphi 0, %s81
      %s83 = sphi 0, %s81
      %s84 = sphi 0, %s83
      %s98 = sphi 0, %s84
      %s104 = sphi 0, %s106
      %s107 = sphi 0, %s104
      %s108 = sphi 0, %s107
      %s124 = sphi 0, %s108
    $region4: #{residual_block_bn_forward.2} parent=1 // loop_header_branch
      %13 = sbr.rel (%p11) target = $region8
    $region5: #{residual_block_bn_forward.2} parent=1 // loop_body
      %s15 = ssub.s32 %s10, 1
      %s16 = ssub.s32 %s10, 2
      %s17 = sadd.s32 %s10, 1
      %s19 = sadd.s32 %s18, 1
      %p22 = scmp.eq.s32.totalorder %s10, 1
      %p23 = scmp.ne.s32.totalorder %s18, %s20
      %p24 = scmp.eq.s32.totalorder %s10, 0
      %p25 = por %p23, %p24
      %p26 = scmp.ne.s32.totalorder %s18, %s20
      %p27 = scmp.eq.s32.totalorder %s15, 1
      %p28 = por %p26, %p27
      %p29 = scmp.ne.s32.totalorder %s20, %s21
      %p30 = scmp.eq.s32.totalorder %s15, 0
      %p31 = por %p29, %p30
      %p32 = scmp.ne.s32.totalorder %s20, %s21
      %p33 = scmp.eq.s32.totalorder %s16, 1
      %p34 = por %p32, %p33
      %p36 = scmp.ne.s32.totalorder %s21, %s35
      %p37 = scmp.eq.s32.totalorder %s16, 0
      %p38 = por %p36, %p37
      %s40 = sadd.s32 %s39, 1
      %p43 = scmp.eq.s32.totalorder %s10, 1
      %p44 = scmp.ne.s32.totalorder %s39, %s41
      %p45 = scmp.eq.s32.totalorder %s10, 0
      %p46 = por %p44, %p45
      %p47 = scmp.ne.s32.totalorder %s39, %s41
      %p48 = scmp.eq.s32.totalorder %s15, 1
      %p49 = por %p47, %p48
      %p50 = scmp.ne.s32.totalorder %s41, %s42
      %p51 = scmp.eq.s32.totalorder %s15, 0
      %p52 = por %p50, %p51
      %p53 = scmp.ne.s32.totalorder %s41, %s42
      %p54 = scmp.eq.s32.totalorder %s16, 1
      %p55 = por %p53, %p54
      %p57 = scmp.ne.s32.totalorder %s42, %s56
      %p58 = scmp.eq.s32.totalorder %s16, 0
      %p59 = por %p57, %p58
      %s61 = sadd.s32 %s60, 1
      %p64 = scmp.eq.s32.totalorder %s10, 1
      %p65 = scmp.ne.s32.totalorder %s60, %s62
      %p66 = scmp.eq.s32.totalorder %s10, 0
      %p67 = por %p65, %p66
      %p68 = scmp.ne.s32.totalorder %s60, %s62
      %p69 = scmp.eq.s32.totalorder %s15, 1
      %p70 = por %p68, %p69
      %p71 = scmp.ne.s32.totalorder %s62, %s63
      %p72 = scmp.eq.s32.totalorder %s15, 0
      %p73 = por %p71, %p72
      %p74 = scmp.ne.s32.totalorder %s62, %s63
      %p75 = scmp.eq.s32.totalorder %s16, 1
      %p76 = por %p74, %p75
      %p78 = scmp.ne.s32.totalorder %s63, %s77
      %p79 = scmp.eq.s32.totalorder %s16, 0
      %p80 = por %p78, %p79
      %s82 = sadd.s32 %s81, 1
      %p85 = scmp.eq.s32.totalorder %s10, 1
      %p86 = scmp.ne.s32.totalorder %s81, %s83
      %p87 = scmp.eq.s32.totalorder %s10, 0
      %p88 = por %p86, %p87
      %p89 = scmp.ne.s32.totalorder %s81, %s83
      %p90 = scmp.eq.s32.totalorder %s15, 1
      %p91 = por %p89, %p90
      %p92 = scmp.ne.s32.totalorder %s83, %s84
      %p93 = scmp.eq.s32.totalorder %s15, 0
      %p94 = por %p92, %p93
      %p95 = scmp.ne.s32.totalorder %s83, %s84
      %p96 = scmp.eq.s32.totalorder %s16, 1
      %p97 = por %p95, %p96
      %p99 = scmp.ne.s32.totalorder %s84, %s98
      %p100 = scmp.eq.s32.totalorder %s16, 0
      %p101 = por %p99, %p100
      %s102 = ssub.s32 %s10, %s17
      %p103 = scmp.eq.s32.totalorder %s102, 0
      %s105 = sadd.s32 %s104, 1
      %s106 = scalar_select %p103, %s104, %s105
      %p109 = pneg %p103
      %p110 = scmp.eq.s32.totalorder %s10, 1
      %p111 = por %p109, %p110
      %p112 = scmp.ne.s32.totalorder %s104, %s107
      %p113 = scmp.eq.s32.totalorder %s10, 0
      %p114 = por %p112, %p113
      %p115 = scmp.ne.s32.totalorder %s104, %s107
      %p116 = scmp.eq.s32.totalorder %s15, 1
      %p117 = por %p115, %p116
      %p118 = scmp.ne.s32.totalorder %s107, %s108
      %p119 = scmp.eq.s32.totalorder %s15, 0
      %p120 = por %p118, %p119
      %p121 = scmp.ne.s32.totalorder %s107, %s108
      %p122 = scmp.eq.s32.totalorder %s16, 1
      %p123 = por %p121, %p122
      %p125 = scmp.ne.s32.totalorder %s108, %s124
      %p126 = scmp.eq.s32.totalorder %s16, 0
      %p127 = por %p125, %p126
      %p128 = scmp.le.s32.totalorder 1, %s10
      %p129 = scmp.lt.s32.totalorder %s10, 3
      %p130 = pnand %p128, %p129
      %p131 = pneg %p130
      // Predicated region
      $region9: #{residual_block_bn_forward.2} parent=5 // pred_check
        _
      $region10: #{residual_block_bn_forward.2} parent=5 // pred_check_branch
        %133 = sbr.rel (%p130) target = $region12
      $region11: #{residual_block_bn_forward.2} parent=5 // pred_region
        %s134 = ssub.s32 %s10, 1
        // Predicated region
        $region13: #{residual_block_bn_forward.2} parent=11 // pred_check
          %p135 = pneg %p31
        $region14: #{residual_block_bn_forward.2} parent=11 // pred_check_branch
          %137 = sbr.rel (%p135) target = $region16
        $region15: #{residual_block_bn_forward.2} parent=11 // pred_region
          _
        $region16: #{residual_block_bn_forward.2} parent=11 // pred_fallthru
          _
        // Predicated region
        $region17: #{residual_block_bn_forward.2} parent=11 // pred_check
          %p138 = pneg %p52
        $region18: #{residual_block_bn_forward.2} parent=11 // pred_check_branch
          %140 = sbr.rel (%p138) target = $region20
        $region19: #{residual_block_bn_forward.2} parent=11 // pred_region
          _
        $region20: #{residual_block_bn_forward.2} parent=11 // pred_fallthru
          _
        // Predicated region
        $region21: #{residual_block_bn_forward.2} parent=11 // pred_check
          %p141 = pneg %p73
        $region22: #{residual_block_bn_forward.2} parent=11 // pred_check_branch
          %143 = sbr.rel (%p141) target = $region24
        $region23: #{residual_block_bn_forward.2} parent=11 // pred_region
          _
        $region24: #{residual_block_bn_forward.2} parent=11 // pred_fallthru
          _
        // Predicated region
        $region25: #{residual_block_bn_forward.2} parent=11 // pred_check
          %p144 = pneg %p94
        $region26: #{residual_block_bn_forward.2} parent=11 // pred_check_branch
          %146 = sbr.rel (%p144) target = $region28
        $region27: #{residual_block_bn_forward.2} parent=11 // pred_region
          _
        $region28: #{residual_block_bn_forward.2} parent=11 // pred_fallthru
          _
      $region12: #{residual_block_bn_forward.2} parent=5 // pred_fallthru
        _
      %p147 = scmp.lt.s32.totalorder %s10, 2
      // Predicated region
      $region29: #{residual_block_bn_forward.2} parent=5 // pred_check
        %p148 = pneg %p147
      $region30: #{residual_block_bn_forward.2} parent=5 // pred_check_branch
        %150 = sbr.rel (%p148) target = $region32
      $region31: #{residual_block_bn_forward.2} parent=5 // pred_region
        _
      $region32: #{residual_block_bn_forward.2} parent=5 // pred_fallthru
        _
      %p151 = scmp.le.s32.totalorder 1, %s10
      %p152 = scmp.lt.s32.totalorder %s10, 3
      %p153 = pnand %p151, %p152
      %p154 = pneg %p153
      // Predicated region
      $region33: #{residual_block_bn_forward.2} parent=5 // pred_check
        _
      $region34: #{residual_block_bn_forward.2} parent=5 // pred_check_branch
        %156 = sbr.rel (%p153) target = $region36
      $region35: #{residual_block_bn_forward.2} parent=5 // pred_region
        %s157 = ssub.s32 %s10, 1
        %p158 = pneg %p31
        %p159 = pneg %p28
        %p160 = pneg %p52
        %p161 = pneg %p49
        %p162 = pneg %p73
        %p163 = pneg %p70
        %p164 = pneg %p94
        %p165 = pneg %p91
        %p166 = pneg %p120
        %p167 = pneg %p117
        %s168 = sand.u32 %s107, 1
        %s169 = sand.u32 %s107, 1
        %s170 = smul.addr %s169, 128
        %s171 = scalar_lea.vmem [#allocation2], %s170
        %s172 = smul.u32 8, %s15
        %s174 = smul.u32 %s15, 8
        %s175 = smul.u32 %s174, 3
        %s176 = smul.addr %s175, 4
        %s177 = scalar_lea.vmem %s0, %s176
        %v178 = vld [vmem:[%s177] sm:$0xf]
        %v179 = vld [vmem:[%s177 + $0x4] sm:$0xf]
        %v180 = vld [vmem:[%s177 + $0xc] sm:$0xf]
        %v181 = vld [vmem:[%s177 + $0x10] sm:$0xf]
        %v182 = vld [vmem:[%s177 + $0x18] sm:$0xf]
        %v183 = vld [vmem:[%s177 + $0x1c] sm:$0xf]
        %v184 = vld [vmem:[%s177 + $0x24] sm:$0xf]
        %v185 = vld [vmem:[%s177 + $0x28] sm:$0xf]
        %v186 = vld [vmem:[%s177 + $0x30] sm:$0xf]
        %v187 = vld [vmem:[%s177 + $0x34] sm:$0xf]
        %v188 = vld [vmem:[%s177 + $0x3c] sm:$0xf]
        %v189 = vld [vmem:[%s177 + $0x40] sm:$0xf]
        %v190 = vld [vmem:[%s177 + $0x48] sm:$0xf]
        %v191 = vld [vmem:[%s177 + $0x4c] sm:$0xf]
        %v192 = vld [vmem:[%s177 + $0x54] sm:$0xf]
        %v193 = vld [vmem:[%s177 + $0x58] sm:$0xf]
        %v194 = vld [vmem:[%s177 + $0xd8] sm:$0xf]
        %v195 = vld [vmem:[%s177 + $0xdc] sm:$0xf]
        %v196 = vld [vmem:[%s177 + $0xe4] sm:$0xf]
        %v197 = vld [vmem:[%s177 + $0xe8] sm:$0xf]
        %v198 = vld [vmem:[%s177 + $0xf0] sm:$0xf]
        %v199 = vld [vmem:[%s177 + $0xf4] sm:$0xf]
        %v200 = vld [vmem:[%s177 + $0xfc] sm:$0xf]
        %v201 = vld [vmem:[%s177 + $0x100] sm:$0xf]
        %v202 = vld [vmem:[%s177 + $0x108] sm:$0xf]
        %v203 = vld [vmem:[%s177 + $0x10c] sm:$0xf]
        %v204 = vld [vmem:[%s177 + $0x114] sm:$0xf]
        %v205 = vld [vmem:[%s177 + $0x118] sm:$0xf]
        %v206 = vld [vmem:[%s177 + $0x120] sm:$0xf]
        %v207 = vld [vmem:[%s177 + $0x124] sm:$0xf]
        %v208 = vld [vmem:[%s177 + $0x12c] sm:$0xf]
        %v209 = vld [vmem:[%s177 + $0x130] sm:$0xf]
        %v210 = vld [vmem:[%s1] sm:$0xf]
        %v211 = vld [vmem:[%s1 + $0x4] sm:$0xf]
        %v212 = vld [vmem:[%s1 + $0x8] sm:$0xf]
        %v213 = vld [vmem:[%s1 + $0xc] sm:$0xf]
        %v214 = vld [vmem:[%s1 + $0x10] sm:$0xf]
        %v215 = vld [vmem:[%s1 + $0x14] sm:$0xf]
        %v216 = vld [vmem:[%s1 + $0x18] sm:$0xf]
        %v217 = vld [vmem:[%s1 + $0x1c] sm:$0xf]
        %v218 = vld [vmem:[%s177 + $0x8] sm:$0x1]
        %v219 = vld [vmem:[%s177 + $0x14] sm:$0x1]
        %v220 = vld [vmem:[%s177 + $0x20] sm:$0x1]
        %v221 = vld [vmem:[%s177 + $0x2c] sm:$0x1]
        %v222 = vld [vmem:[%s177 + $0x38] sm:$0x1]
        %v223 = vld [vmem:[%s177 + $0x44] sm:$0x1]
        %v224 = vld [vmem:[%s177 + $0x50] sm:$0x1]
        %v225 = vld [vmem:[%s177 + $0x5c] sm:$0x1]
        %v226 = vld [vmem:[%s177 + $0xe0] sm:$0x1]
        %v227 = vld [vmem:[%s177 + $0xec] sm:$0x1]
        %v228 = vld [vmem:[%s177 + $0xf8] sm:$0x1]
        %v229 = vld [vmem:[%s177 + $0x104] sm:$0x1]
        %v230 = vld [vmem:[%s177 + $0x110] sm:$0x1]
        %v231 = vld [vmem:[%s177 + $0x11c] sm:$0x1]
        %v232 = vld [vmem:[%s177 + $0x128] sm:$0x1]
        %v233 = vld [vmem:[%s177 + $0x134] sm:$0x1]
        %vm234 = vsmask.f32 3328
        %vm235 = vsmask.f32 7440
        %vm236 = vmor %vm234, %vm235
        %v238 = vshrl.u32 %v178, 16
        %v240 = vrot.slane %v238, 4
        %v241 = vshll.u32 %v178, 16
        %v243 = vrot.slane %v241, 5
        %v244 = vor.u32 %v240, %v243
        %v245 = vrot.slane %v244, 4
        %v247 = vshll.u32 %v179, 16
        %v249 = vrot.slane %v247, 5
        %v250 = vsel %vm236, %v245, %v249
        %v251 = vshrl.u32 %v179, 16
        %v253 = vrot.slane %v251, 4
        %v254 = vor.u32 %v253, %v249
        %v255 = vrot.slane %v254, 4
        %v257 = vshll.u32 %v218, 16
        %v259 = vrot.slane %v257, 5
        %v260 = vsel %vm236, %v255, %v259
        %v262 = vshrl.u32 %v180, 16
        %v264 = vrot.slane %v262, 4
        %v265 = vshll.u32 %v180, 16
        %v267 = vrot.slane %v265, 5
        %v268 = vor.u32 %v264, %v267
        %v269 = vrot.slane %v268, 4
        %v271 = vshll.u32 %v181, 16
        %v273 = vrot.slane %v271, 5
        %v274 = vsel %vm236, %v269, %v273
        %v275 = vshrl.u32 %v181, 16
        %v277 = vrot.slane %v275, 4
        %v278 = vor.u32 %v277, %v273
        %v279 = vrot.slane %v278, 4
        %v281 = vshll.u32 %v219, 16
        %v283 = vrot.slane %v281, 5
        %v284 = vsel %vm236, %v279, %v283
        %v286 = vshrl.u32 %v182, 16
        %v288 = vrot.slane %v286, 4
        %v289 = vshll.u32 %v182, 16
        %v291 = vrot.slane %v289, 5
        %v292 = vor.u32 %v288, %v291
        %v293 = vrot.slane %v292, 4
        %v295 = vshll.u32 %v183, 16
        %v297 = vrot.slane %v295, 5
        %v298 = vsel %vm236, %v293, %v297
        %v299 = vshrl.u32 %v183, 16
        %v301 = vrot.slane %v299, 4
        %v302 = vor.u32 %v301, %v297
        %v303 = vrot.slane %v302, 4
        %v305 = vshll.u32 %v220, 16
        %v307 = vrot.slane %v305, 5
        %v308 = vsel %vm236, %v303, %v307
        %v310 = vshrl.u32 %v184, 16
        %v312 = vrot.slane %v310, 4
        %v313 = vshll.u32 %v184, 16
        %v315 = vrot.slane %v313, 5
        %v316 = vor.u32 %v312, %v315
        %v317 = vrot.slane %v316, 4
        %v319 = vshll.u32 %v185, 16
        %v321 = vrot.slane %v319, 5
        %v322 = vsel %vm236, %v317, %v321
        %v323 = vshrl.u32 %v185, 16
        %v325 = vrot.slane %v323, 4
        %v326 = vor.u32 %v325, %v321
        %v327 = vrot.slane %v326, 4
        %v329 = vshll.u32 %v221, 16
        %v331 = vrot.slane %v329, 5
        %v332 = vsel %vm236, %v327, %v331
        %v334 = vshrl.u32 %v186, 16
        %v336 = vrot.slane %v334, 4
        %v337 = vshll.u32 %v186, 16
        %v339 = vrot.slane %v337, 5
        %v340 = vor.u32 %v336, %v339
        %v341 = vrot.slane %v340, 4
        %v343 = vshll.u32 %v187, 16
        %v345 = vrot.slane %v343, 5
        %v346 = vsel %vm236, %v341, %v345
        %v347 = vshrl.u32 %v187, 16
        %v349 = vrot.slane %v347, 4
        %v350 = vor.u32 %v349, %v345
        %v351 = vrot.slane %v350, 4
        %v353 = vshll.u32 %v222, 16
        %v355 = vrot.slane %v353, 5
        %v356 = vsel %vm236, %v351, %v355
        %v358 = vshrl.u32 %v188, 16
        %v360 = vrot.slane %v358, 4
        %v361 = vshll.u32 %v188, 16
        %v363 = vrot.slane %v361, 5
        %v364 = vor.u32 %v360, %v363
        %v365 = vrot.slane %v364, 4
        %v367 = vshll.u32 %v189, 16
        %v369 = vrot.slane %v367, 5
        %v370 = vsel %vm236, %v365, %v369
        %v371 = vshrl.u32 %v189, 16
        %v373 = vrot.slane %v371, 4
        %v374 = vor.u32 %v373, %v369
        %v375 = vrot.slane %v374, 4
        %v377 = vshll.u32 %v223, 16
        %v379 = vrot.slane %v377, 5
        %v380 = vsel %vm236, %v375, %v379
        %v382 = vshrl.u32 %v190, 16
        %v384 = vrot.slane %v382, 4
        %v385 = vshll.u32 %v190, 16
        %v387 = vrot.slane %v385, 5
        %v388 = vor.u32 %v384, %v387
        %v389 = vrot.slane %v388, 4
        %v391 = vshll.u32 %v191, 16
        %v393 = vrot.slane %v391, 5
        %v394 = vsel %vm236, %v389, %v393
        %v395 = vshrl.u32 %v191, 16
        %v397 = vrot.slane %v395, 4
        %v398 = vor.u32 %v397, %v393
        %v399 = vrot.slane %v398, 4
        %v401 = vshll.u32 %v224, 16
        %v403 = vrot.slane %v401, 5
        %v404 = vsel %vm236, %v399, %v403
        %v406 = vshrl.u32 %v192, 16
        %v408 = vrot.slane %v406, 4
        %v409 = vshll.u32 %v192, 16
        %v411 = vrot.slane %v409, 5
        %v412 = vor.u32 %v408, %v411
        %v413 = vrot.slane %v412, 4
        %v415 = vshll.u32 %v193, 16
        %v417 = vrot.slane %v415, 5
        %v418 = vsel %vm236, %v413, %v417
        %v419 = vshrl.u32 %v193, 16
        %v421 = vrot.slane %v419, 4
        %v422 = vor.u32 %v421, %v417
        %v423 = vrot.slane %v422, 4
        %v425 = vshll.u32 %v225, 16
        %v427 = vrot.slane %v425, 5
        %v428 = vsel %vm236, %v423, %v427
        %v430 = vshrl.u32 %v194, 16
        %v432 = vrot.slane %v430, 4
        %v433 = vshll.u32 %v194, 16
        %v435 = vrot.slane %v433, 5
        %v436 = vor.u32 %v432, %v435
        %v437 = vrot.slane %v436, 4
        %v439 = vshll.u32 %v195, 16
        %v441 = vrot.slane %v439, 5
        %v442 = vsel %vm236, %v437, %v441
        %v443 = vshrl.u32 %v195, 16
        %v445 = vrot.slane %v443, 4
        %v446 = vor.u32 %v445, %v441
        %v447 = vrot.slane %v446, 4
        %v449 = vshll.u32 %v226, 16
        %v451 = vrot.slane %v449, 5
        %v452 = vsel %vm236, %v447, %v451
        %v454 = vshrl.u32 %v196, 16
        %v456 = vrot.slane %v454, 4
        %v457 = vshll.u32 %v196, 16
        %v459 = vrot.slane %v457, 5
        %v460 = vor.u32 %v456, %v459
        %v461 = vrot.slane %v460, 4
        %v463 = vshll.u32 %v197, 16
        %v465 = vrot.slane %v463, 5
        %v466 = vsel %vm236, %v461, %v465
        %v467 = vshrl.u32 %v197, 16
        %v469 = vrot.slane %v467, 4
        %v470 = vor.u32 %v469, %v465
        %v471 = vrot.slane %v470, 4
        %v473 = vshll.u32 %v227, 16
        %v475 = vrot.slane %v473, 5
        %v476 = vsel %vm236, %v471, %v475
        %v478 = vshrl.u32 %v198, 16
        %v480 = vrot.slane %v478, 4
        %v481 = vshll.u32 %v198, 16
        %v483 = vrot.slane %v481, 5
        %v484 = vor.u32 %v480, %v483
        %v485 = vrot.slane %v484, 4
        %v487 = vshll.u32 %v199, 16
        %v489 = vrot.slane %v487, 5
        %v490 = vsel %vm236, %v485, %v489
        %v491 = vshrl.u32 %v199, 16
        %v493 = vrot.slane %v491, 4
        %v494 = vor.u32 %v493, %v489
        %v495 = vrot.slane %v494, 4
        %v497 = vshll.u32 %v228, 16
        %v499 = vrot.slane %v497, 5
        %v500 = vsel %vm236, %v495, %v499
        %v502 = vshrl.u32 %v200, 16
        %v504 = vrot.slane %v502, 4
        %v505 = vshll.u32 %v200, 16
        %v507 = vrot.slane %v505, 5
        %v508 = vor.u32 %v504, %v507
        %v509 = vrot.slane %v508, 4
        %v511 = vshll.u32 %v201, 16
        %v513 = vrot.slane %v511, 5
        %v514 = vsel %vm236, %v509, %v513
        %v515 = vshrl.u32 %v201, 16
        %v517 = vrot.slane %v515, 4
        %v518 = vor.u32 %v517, %v513
        %v519 = vrot.slane %v518, 4
        %v521 = vshll.u32 %v229, 16
        %v523 = vrot.slane %v521, 5
        %v524 = vsel %vm236, %v519, %v523
        %v526 = vshrl.u32 %v202, 16
        %v528 = vrot.slane %v526, 4
        %v529 = vshll.u32 %v202, 16
        %v531 = vrot.slane %v529, 5
        %v532 = vor.u32 %v528, %v531
        %v533 = vrot.slane %v532, 4
        %v535 = vshll.u32 %v203, 16
        %v537 = vrot.slane %v535, 5
        %v538 = vsel %vm236, %v533, %v537
        %v539 = vshrl.u32 %v203, 16
        %v541 = vrot.slane %v539, 4
        %v542 = vor.u32 %v541, %v537
        %v543 = vrot.slane %v542, 4
        %v545 = vshll.u32 %v230, 16
        %v547 = vrot.slane %v545, 5
        %v548 = vsel %vm236, %v543, %v547
        %v550 = vshrl.u32 %v204, 16
        %v552 = vrot.slane %v550, 4
        %v553 = vshll.u32 %v204, 16
        %v555 = vrot.slane %v553, 5
        %v556 = vor.u32 %v552, %v555
        %v557 = vrot.slane %v556, 4
        %v559 = vshll.u32 %v205, 16
        %v561 = vrot.slane %v559, 5
        %v562 = vsel %vm236, %v557, %v561
        %v563 = vshrl.u32 %v205, 16
        %v565 = vrot.slane %v563, 4
        %v566 = vor.u32 %v565, %v561
        %v567 = vrot.slane %v566, 4
        %v569 = vshll.u32 %v231, 16
        %v571 = vrot.slane %v569, 5
        %v572 = vsel %vm236, %v567, %v571
        %v574 = vshrl.u32 %v206, 16
        %v576 = vrot.slane %v574, 4
        %v577 = vshll.u32 %v206, 16
        %v579 = vrot.slane %v577, 5
        %v580 = vor.u32 %v576, %v579
        %v581 = vrot.slane %v580, 4
        %v583 = vshll.u32 %v207, 16
        %v585 = vrot.slane %v583, 5
        %v586 = vsel %vm236, %v581, %v585
        %v587 = vshrl.u32 %v207, 16
        %v589 = vrot.slane %v587, 4
        %v590 = vor.u32 %v589, %v585
        %v591 = vrot.slane %v590, 4
        %v593 = vshll.u32 %v232, 16
        %v595 = vrot.slane %v593, 5
        %v596 = vsel %vm236, %v591, %v595
        %v598 = vshrl.u32 %v208, 16
        %v600 = vrot.slane %v598, 4
        %v601 = vshll.u32 %v208, 16
        %v603 = vrot.slane %v601, 5
        %v604 = vor.u32 %v600, %v603
        %v605 = vrot.slane %v604, 4
        %v607 = vshll.u32 %v209, 16
        %v609 = vrot.slane %v607, 5
        %v610 = vsel %vm236, %v605, %v609
        %v611 = vshrl.u32 %v209, 16
        %v613 = vrot.slane %v611, 4
        %v614 = vor.u32 %v613, %v609
        %v615 = vrot.slane %v614, 4
        %v617 = vshll.u32 %v233, 16
        %v619 = vrot.slane %v617, 5
        %v620 = vsel %vm236, %v615, %v619
        %s621 = scalar_lea.vmem %s1, 32
        %v622 = vld [vmem:[%s621] sm:$0xf]
        %v623 = vld [vmem:[%s621 + $0x4] sm:$0xf]
        %v624 = vld [vmem:[%s621 + $0x8] sm:$0xf]
        %v625 = vld [vmem:[%s621 + $0xc] sm:$0xf]
        %v626 = vld [vmem:[%s621 + $0x10] sm:$0xf]
        %v627 = vld [vmem:[%s621 + $0x14] sm:$0xf]
        %v628 = vld [vmem:[%s621 + $0x18] sm:$0xf]
        %v629 = vld [vmem:[%s621 + $0x1c] sm:$0xf]
        %v630 = vunpack.c.l.b16 %v250
        %v631 = vunpack.c.l.b16 %v260
        %v632 = vunpack.c.l.b16 %v274
        %v633 = vunpack.c.l.b16 %v284
        %v634 = vunpack.c.l.b16 %v298
        %v635 = vunpack.c.l.b16 %v308
        %v636 = vunpack.c.l.b16 %v322
        %v637 = vunpack.c.l.b16 %v332
        %v638 = vunpack.c.l.b16 %v346
        %v639 = vunpack.c.l.b16 %v356
        %v640 = vunpack.c.l.b16 %v370
        %v641 = vunpack.c.l.b16 %v380
        %v642 = vunpack.c.l.b16 %v394
        %v643 = vunpack.c.l.b16 %v404
        %v644 = vunpack.c.l.b16 %v418
        %v645 = vunpack.c.l.b16 %v428
        %v646 = vunpack.c.l.b16 %v442
        %v647 = vunpack.c.l.b16 %v452
        %v648 = vunpack.c.l.b16 %v466
        %v649 = vunpack.c.l.b16 %v476
        %v650 = vunpack.c.l.b16 %v490
        %v651 = vunpack.c.l.b16 %v500
        %v652 = vunpack.c.l.b16 %v514
        %v653 = vunpack.c.l.b16 %v524
        %v654 = vunpack.c.l.b16 %v538
        %v655 = vunpack.c.l.b16 %v548
        %v656 = vunpack.c.l.b16 %v562
        %v657 = vunpack.c.l.b16 %v572
        %v658 = vunpack.c.l.b16 %v586
        %v659 = vunpack.c.l.b16 %v596
        %v660 = vunpack.c.l.b16 %v610
        %v661 = vunpack.c.l.b16 %v620
        %v662 = vpack.c.b16 %v631, %v630
        %v663 = vpack.c.b16 %v633, %v632
        %v664 = vpack.c.b16 %v635, %v634
        %v665 = vpack.c.b16 %v637, %v636
        %v666 = vpack.c.b16 %v639, %v638
        %v667 = vpack.c.b16 %v641, %v640
        %v668 = vpack.c.b16 %v643, %v642
        %v669 = vpack.c.b16 %v645, %v644
        %v670 = vpack.c.b16 %v647, %v646
        %v671 = vpack.c.b16 %v649, %v648
        %v672 = vpack.c.b16 %v651, %v650
        %v673 = vpack.c.b16 %v653, %v652
        %v674 = vpack.c.b16 %v655, %v654
        %v675 = vpack.c.b16 %v657, %v656
        %v676 = vpack.c.b16 %v659, %v658
        %v677 = vpack.c.b16 %v661, %v660
        %v686 = vunpack.c.l.b16 %v622
        %v687 = vunpack.c.l.b16 %v623
        %v688 = vunpack.c.l.b16 %v624
        %v689 = vunpack.c.l.b16 %v625
        %v690 = vunpack.c.l.b16 %v626
        %v691 = vunpack.c.l.b16 %v627
        %v692 = vunpack.c.l.b16 %v628
        %v693 = vunpack.c.l.b16 %v629
        %v694 = vpack.c.b16 %v687, %v686
        %v695 = vpack.c.b16 %v689, %v688
        %v696 = vpack.c.b16 %v691, %v690
        %v697 = vpack.c.b16 %v693, %v692
        %vm702 = vcmask 523264
        %v704 = vsel %vm702, %v662, 0
        %v707 = vsel %vm702, %v663, 0
        %v710 = vsel %vm702, %v664, 0
        %v713 = vsel %vm702, %v665, 0
        %v716 = vsel %vm702, %v666, 0
        %v719 = vsel %vm702, %v667, 0
        %v722 = vsel %vm702, %v668, 0
        %v725 = vsel %vm702, %v669, 0
        %v728 = vsel %vm702, %v670, 0
        %v731 = vsel %vm702, %v671, 0
        %v734 = vsel %vm702, %v672, 0
        %v737 = vsel %vm702, %v673, 0
        %v740 = vsel %vm702, %v674, 0
        %v743 = vsel %vm702, %v675, 0
        %v746 = vsel %vm702, %v676, 0
        %v749 = vsel %vm702, %v677, 0
        %751 = vmatprep.subr.bf16.mxu0 0
        %752 = vmatpush1.bf16.msra.mxu0 0
        %753 = vmatprep.subr.bf16.mxu0 0
        %754 = vmatpush1.bf16.msra.mxu0 0
        %755 = vmatprep.subr.bf16.mxu0 0
        %756 = vmatpush1.bf16.msra.mxu0 0
        %757 = vmatprep.subr.bf16.mxu0 0
        %758 = vmatpush1.bf16.msra.mxu0 0
        %759 = vmatprep.subr.bf16.mxu0 0
        %760 = vmatpush1.bf16.msra.mxu0 %v697
        %761 = vmatprep.subr.bf16.mxu0 0
        %762 = vmatpush1.bf16.msra.mxu0 %v696
        %763 = vmatprep.subr.bf16.mxu0 0
        %764 = vmatpush1.bf16.msra.mxu0 %v695
        %765 = vmatprep.subr.bf16.mxu0 0
        %766 = vmatpush1.bf16.msra.mxu0 %v694
        %767 = vmatprep.subr.bf16.mxu0 0
        %768 = vmatpush2.bf16.msra.mxu0 0
        %769 = vmatprep.subr.bf16.mxu0 0
        %770 = vmatpush2.bf16.msra.mxu0 0
        %771 = vmatprep.subr.bf16.mxu0 0
        %772 = vmatpush2.bf16.msra.mxu0 0
        %773 = vmatprep.subr.bf16.mxu0 0
        %774 = vmatpush2.bf16.msra.mxu0 0
        %775 = vmatprep.subr.bf16.mxu0 0
        %776 = vmatpush2.bf16.msra.mxu0 0
        %777 = vmatprep.subr.bf16.mxu0 0
        %778 = vmatpush2.bf16.msra.mxu0 0
        %779 = vmatprep.subr.bf16.mxu0 0
        %780 = vmatpush2.bf16.msra.mxu0 0
        %781 = vmatprep.subr.bf16.mxu0 0
        %782 = vmatpush2.bf16.msra.mxu0 0
        %783 = vmatprep.mubr.bf16.mxu0 0
        %784 = vmatmul.mubr.bf16.gmra.mxu0 %v704
        %v785 = vpop.f32.mrf.mxu0
        %v786 = vadd.f32 0.0, %v785
        %v787 = vpop.f32.mrf.mxu0
        %v788 = vpop.f32.mrf.mxu0
        %v789 = vadd.f32 0.0, %v788
        %v790 = vpop.f32.mrf.mxu0
        %791 = vmatprep.mubr.bf16.mxu0 0
        %792 = vmatmul.mubr.bf16.gmra.mxu0 %v707
        %v793 = vpop.f32.mrf.mxu0
        %v794 = vadd.f32 0.0, %v793
        %v795 = vpop.f32.mrf.mxu0
        %v796 = vpop.f32.mrf.mxu0
        %v797 = vadd.f32 0.0, %v796
        %v798 = vpop.f32.mrf.mxu0
        %799 = vmatprep.mubr.bf16.mxu0 0
        %800 = vmatmul.mubr.bf16.gmra.mxu0 %v710
        %v801 = vpop.f32.mrf.mxu0
        %v802 = vadd.f32 0.0, %v801
        %v803 = vpop.f32.mrf.mxu0
        %v804 = vpop.f32.mrf.mxu0
        %v805 = vadd.f32 0.0, %v804
        %v806 = vpop.f32.mrf.mxu0
        %807 = vmatprep.mubr.bf16.mxu0 0
        %808 = vmatmul.mubr.bf16.gmra.mxu0 %v713
        %v809 = vpop.f32.mrf.mxu0
        %v810 = vadd.f32 0.0, %v809
        %v811 = vpop.f32.mrf.mxu0
        %v812 = vpop.f32.mrf.mxu0
        %v813 = vadd.f32 0.0, %v812
        %v814 = vpop.f32.mrf.mxu0
        %815 = vmatprep.mubr.bf16.mxu0 0
        %816 = vmatmul.mubr.bf16.gmra.mxu0 %v716
        %v817 = vpop.f32.mrf.mxu0
        %v818 = vadd.f32 0.0, %v817
        %v819 = vpop.f32.mrf.mxu0
        %v820 = vpop.f32.mrf.mxu0
        %v821 = vadd.f32 0.0, %v820
        %v822 = vpop.f32.mrf.mxu0
        %823 = vmatprep.mubr.bf16.mxu0 0
        %824 = vmatmul.mubr.bf16.gmra.mxu0 %v719
        %v825 = vpop.f32.mrf.mxu0
        %v826 = vadd.f32 0.0, %v825
        %v827 = vpop.f32.mrf.mxu0
        %v828 = vpop.f32.mrf.mxu0
        %v829 = vadd.f32 0.0, %v828
        %v830 = vpop.f32.mrf.mxu0
        %831 = vmatprep.mubr.bf16.mxu0 0
        %832 = vmatmul.mubr.bf16.gmra.mxu0 %v722
        %v833 = vpop.f32.mrf.mxu0
        %v834 = vadd.f32 0.0, %v833
        %v835 = vpop.f32.mrf.mxu0
        %v836 = vpop.f32.mrf.mxu0
        %v837 = vadd.f32 0.0, %v836
        %v838 = vpop.f32.mrf.mxu0
        %839 = vmatprep.mubr.bf16.mxu0 0
        %840 = vmatmul.mubr.bf16.gmra.mxu0 %v725
        %v841 = vpop.f32.mrf.mxu0
        %v842 = vadd.f32 0.0, %v841
        %v843 = vpop.f32.mrf.mxu0
        %v844 = vpop.f32.mrf.mxu0
        %v845 = vadd.f32 0.0, %v844
        %v846 = vpop.f32.mrf.mxu0
        %847 = vmatprep.mubr.bf16.mxu0 0
        %848 = vmatmul.mubr.bf16.gmra.mxu0 %v728
        %v849 = vpop.f32.mrf.mxu0
        %v850 = vadd.f32 0.0, %v849
        %v851 = vpop.f32.mrf.mxu0
        %v852 = vpop.f32.mrf.mxu0
        %v853 = vadd.f32 0.0, %v852
        %v854 = vpop.f32.mrf.mxu0
        %855 = vmatprep.mubr.bf16.mxu0 0
        %856 = vmatmul.mubr.bf16.gmra.mxu0 %v731
        %v857 = vpop.f32.mrf.mxu0
        %v858 = vadd.f32 0.0, %v857
        %v859 = vpop.f32.mrf.mxu0
        %v860 = vpop.f32.mrf.mxu0
        %v861 = vadd.f32 0.0, %v860
        %v862 = vpop.f32.mrf.mxu0
        %863 = vmatprep.mubr.bf16.mxu0 0
        %864 = vmatmul.mubr.bf16.gmra.mxu0 %v734
        %v865 = vpop.f32.mrf.mxu0
        %v866 = vadd.f32 0.0, %v865
        %v867 = vpop.f32.mrf.mxu0
        %v868 = vpop.f32.mrf.mxu0
        %v869 = vadd.f32 0.0, %v868
        %v870 = vpop.f32.mrf.mxu0
        %871 = vmatprep.mubr.bf16.mxu0 0
        %872 = vmatmul.mubr.bf16.gmra.mxu0 %v737
        %v873 = vpop.f32.mrf.mxu0
        %v874 = vadd.f32 0.0, %v873
        %v875 = vpop.f32.mrf.mxu0
        %v876 = vpop.f32.mrf.mxu0
        %v877 = vadd.f32 0.0, %v876
        %v878 = vpop.f32.mrf.mxu0
        %879 = vmatprep.mubr.bf16.mxu0 0
        %880 = vmatmul.mubr.bf16.gmra.mxu0 %v740
        %v881 = vpop.f32.mrf.mxu0
        %v882 = vadd.f32 0.0, %v881
        %v883 = vpop.f32.mrf.mxu0
        %v884 = vpop.f32.mrf.mxu0
        %v885 = vadd.f32 0.0, %v884
        %v886 = vpop.f32.mrf.mxu0
        %887 = vmatprep.mubr.bf16.mxu0 0
        %888 = vmatmul.mubr.bf16.gmra.mxu0 %v743
        %v889 = vpop.f32.mrf.mxu0
        %v890 = vadd.f32 0.0, %v889
        %v891 = vpop.f32.mrf.mxu0
        %v892 = vpop.f32.mrf.mxu0
        %v893 = vadd.f32 0.0, %v892
        %v894 = vpop.f32.mrf.mxu0
        %895 = vmatprep.mubr.bf16.mxu0 0
        %896 = vmatmul.mubr.bf16.gmra.mxu0 %v746
        %v897 = vpop.f32.mrf.mxu0
        %v898 = vadd.f32 0.0, %v897
        %v899 = vpop.f32.mrf.mxu0
        %v900 = vpop.f32.mrf.mxu0
        %v901 = vadd.f32 0.0, %v900
        %v902 = vpop.f32.mrf.mxu0
        %903 = vmatprep.mubr.bf16.mxu0 0
        %904 = vmatmul.mubr.bf16.gmra.mxu0 %v749
        %v905 = vpop.f32.mrf.mxu0
        %v906 = vadd.f32 0.0, %v905
        %v907 = vpop.f32.mrf.mxu0
        %v908 = vpop.f32.mrf.mxu0
        %v909 = vadd.f32 0.0, %v908
        %v910 = vpop.f32.mrf.mxu0
        %911 = vdwg.mxu0
        %v944 = vunpack.c.l.b16 %v178
        %v945 = vunpack.c.l.b16 %v179
        %v946 = vunpack.c.l.b16 %v180
        %v947 = vunpack.c.l.b16 %v181
        %v948 = vunpack.c.l.b16 %v182
        %v949 = vunpack.c.l.b16 %v183
        %v950 = vunpack.c.l.b16 %v184
        %v951 = vunpack.c.l.b16 %v185
        %v952 = vunpack.c.l.b16 %v186
        %v953 = vunpack.c.l.b16 %v187
        %v954 = vunpack.c.l.b16 %v188
        %v955 = vunpack.c.l.b16 %v189
        %v956 = vunpack.c.l.b16 %v190
        %v957 = vunpack.c.l.b16 %v191
        %v958 = vunpack.c.l.b16 %v192
        %v959 = vunpack.c.l.b16 %v193
        %v960 = vunpack.c.l.b16 %v194
        %v961 = vunpack.c.l.b16 %v195
        %v962 = vunpack.c.l.b16 %v196
        %v963 = vunpack.c.l.b16 %v197
        %v964 = vunpack.c.l.b16 %v198
        %v965 = vunpack.c.l.b16 %v199
        %v966 = vunpack.c.l.b16 %v200
        %v967 = vunpack.c.l.b16 %v201
        %v968 = vunpack.c.l.b16 %v202
        %v969 = vunpack.c.l.b16 %v203
        %v970 = vunpack.c.l.b16 %v204
        %v971 = vunpack.c.l.b16 %v205
        %v972 = vunpack.c.l.b16 %v206
        %v973 = vunpack.c.l.b16 %v207
        %v974 = vunpack.c.l.b16 %v208
        %v975 = vunpack.c.l.b16 %v209
        %v976 = vpack.c.b16 %v945, %v944
        %v977 = vpack.c.b16 %v947, %v946
        %v978 = vpack.c.b16 %v949, %v948
        %v979 = vpack.c.b16 %v951, %v950
        %v980 = vpack.c.b16 %v953, %v952
        %v981 = vpack.c.b16 %v955, %v954
        %v982 = vpack.c.b16 %v957, %v956
        %v983 = vpack.c.b16 %v959, %v958
        %v984 = vpack.c.b16 %v961, %v960
        %v985 = vpack.c.b16 %v963, %v962
        %v986 = vpack.c.b16 %v965, %v964
        %v987 = vpack.c.b16 %v967, %v966
        %v988 = vpack.c.b16 %v969, %v968
        %v989 = vpack.c.b16 %v971, %v970
        %v990 = vpack.c.b16 %v973, %v972
        %v991 = vpack.c.b16 %v975, %v974
        %v1000 = vunpack.c.l.b16 %v210
        %v1001 = vunpack.c.l.b16 %v211
        %v1002 = vunpack.c.l.b16 %v212
        %v1003 = vunpack.c.l.b16 %v213
        %v1004 = vunpack.c.l.b16 %v214
        %v1005 = vunpack.c.l.b16 %v215
        %v1006 = vunpack.c.l.b16 %v216
        %v1007 = vunpack.c.l.b16 %v217
        %v1008 = vpack.c.b16 %v1001, %v1000
        %v1009 = vpack.c.b16 %v1003, %v1002
        %v1010 = vpack.c.b16 %v1005, %v1004
        %v1011 = vpack.c.b16 %v1007, %v1006
        %v1017 = vsel %vm702, %v976, 0
        %v1020 = vsel %vm702, %v977, 0
        %v1023 = vsel %vm702, %v978, 0
        %v1026 = vsel %vm702, %v979, 0
        %v1029 = vsel %vm702, %v980, 0
        %v1032 = vsel %vm702, %v981, 0
        %v1035 = vsel %vm702, %v982, 0
        %v1038 = vsel %vm702, %v983, 0
        %v1041 = vsel %vm702, %v984, 0
        %v1044 = vsel %vm702, %v985, 0
        %v1047 = vsel %vm702, %v986, 0
        %v1050 = vsel %vm702, %v987, 0
        %v1053 = vsel %vm702, %v988, 0
        %v1056 = vsel %vm702, %v989, 0
        %v1059 = vsel %vm702, %v990, 0
        %v1062 = vsel %vm702, %v991, 0
        %1064 = vmatprep.subr.bf16.mxu0 0
        %1065 = vmatpush1.bf16.msra.mxu0 0
        %1066 = vmatprep.subr.bf16.mxu0 0
        %1067 = vmatpush1.bf16.msra.mxu0 0
        %1068 = vmatprep.subr.bf16.mxu0 0
        %1069 = vmatpush1.bf16.msra.mxu0 0
        %1070 = vmatprep.subr.bf16.mxu0 0
        %1071 = vmatpush1.bf16.msra.mxu0 0
        %1072 = vmatprep.subr.bf16.mxu0 0
        %1073 = vmatpush1.bf16.msra.mxu0 %v1011
        %1074 = vmatprep.subr.bf16.mxu0 0
        %1075 = vmatpush1.bf16.msra.mxu0 %v1010
        %1076 = vmatprep.subr.bf16.mxu0 0
        %1077 = vmatpush1.bf16.msra.mxu0 %v1009
        %1078 = vmatprep.subr.bf16.mxu0 0
        %1079 = vmatpush1.bf16.msra.mxu0 %v1008
        %1080 = vmatprep.subr.bf16.mxu0 0
        %1081 = vmatpush2.bf16.msra.mxu0 0
        %1082 = vmatprep.subr.bf16.mxu0 0
        %1083 = vmatpush2.bf16.msra.mxu0 0
        %1084 = vmatprep.subr.bf16.mxu0 0
        %1085 = vmatpush2.bf16.msra.mxu0 0
        %1086 = vmatprep.subr.bf16.mxu0 0
        %1087 = vmatpush2.bf16.msra.mxu0 0
        %1088 = vmatprep.subr.bf16.mxu0 0
        %1089 = vmatpush2.bf16.msra.mxu0 0
        %1090 = vmatprep.subr.bf16.mxu0 0
        %1091 = vmatpush2.bf16.msra.mxu0 0
        %1092 = vmatprep.subr.bf16.mxu0 0
        %1093 = vmatpush2.bf16.msra.mxu0 0
        %1094 = vmatprep.subr.bf16.mxu0 0
        %1095 = vmatpush2.bf16.msra.mxu0 0
        %1096 = vmatprep.mubr.bf16.mxu0 0
        %1097 = vmatmul.mubr.bf16.gmra.mxu0 %v1017
        %v1098 = vpop.f32.mrf.mxu0
        %v1099 = vadd.f32 %v786, %v1098
        %v1100 = vpop.f32.mrf.mxu0
        %v1101 = vpop.f32.mrf.mxu0
        %v1102 = vadd.f32 %v789, %v1101
        %v1103 = vpop.f32.mrf.mxu0
        %1104 = vmatprep.mubr.bf16.mxu0 0
        %1105 = vmatmul.mubr.bf16.gmra.mxu0 %v1020
        %v1106 = vpop.f32.mrf.mxu0
        %v1107 = vadd.f32 %v794, %v1106
        %v1108 = vpop.f32.mrf.mxu0
        %v1109 = vpop.f32.mrf.mxu0
        %v1110 = vadd.f32 %v797, %v1109
        %v1111 = vpop.f32.mrf.mxu0
        %1112 = vmatprep.mubr.bf16.mxu0 0
        %1113 = vmatmul.mubr.bf16.gmra.mxu0 %v1023
        %v1114 = vpop.f32.mrf.mxu0
        %v1115 = vadd.f32 %v802, %v1114
        %v1116 = vpop.f32.mrf.mxu0
        %v1117 = vpop.f32.mrf.mxu0
        %v1118 = vadd.f32 %v805, %v1117
        %v1119 = vpop.f32.mrf.mxu0
        %1120 = vmatprep.mubr.bf16.mxu0 0
        %1121 = vmatmul.mubr.bf16.gmra.mxu0 %v1026
        %v1122 = vpop.f32.mrf.mxu0
        %v1123 = vadd.f32 %v810, %v1122
        %v1124 = vpop.f32.mrf.mxu0
        %v1125 = vpop.f32.mrf.mxu0
        %v1126 = vadd.f32 %v813, %v1125
        %v1127 = vpop.f32.mrf.mxu0
        %1128 = vmatprep.mubr.bf16.mxu0 0
        %1129 = vmatmul.mubr.bf16.gmra.mxu0 %v1029
        %v1130 = vpop.f32.mrf.mxu0
        %v1131 = vadd.f32 %v818, %v1130
        %v1132 = vpop.f32.mrf.mxu0
        %v1133 = vpop.f32.mrf.mxu0
        %v1134 = vadd.f32 %v821, %v1133
        %v1135 = vpop.f32.mrf.mxu0
        %1136 = vmatprep.mubr.bf16.mxu0 0
        %1137 = vmatmul.mubr.bf16.gmra.mxu0 %v1032
        %v1138 = vpop.f32.mrf.mxu0
        %v1139 = vadd.f32 %v826, %v1138
        %v1140 = vpop.f32.mrf.mxu0
        %v1141 = vpop.f32.mrf.mxu0
        %v1142 = vadd.f32 %v829, %v1141
        %v1143 = vpop.f32.mrf.mxu0
        %1144 = vmatprep.mubr.bf16.mxu0 0
        %1145 = vmatmul.mubr.bf16.gmra.mxu0 %v1035
        %v1146 = vpop.f32.mrf.mxu0
        %v1147 = vadd.f32 %v834, %v1146
        %v1148 = vpop.f32.mrf.mxu0
        %v1149 = vpop.f32.mrf.mxu0
        %v1150 = vadd.f32 %v837, %v1149
        %v1151 = vpop.f32.mrf.mxu0
        %1152 = vmatprep.mubr.bf16.mxu0 0
        %1153 = vmatmul.mubr.bf16.gmra.mxu0 %v1038
        %v1154 = vpop.f32.mrf.mxu0
        %v1155 = vadd.f32 %v842, %v1154
        %v1156 = vpop.f32.mrf.mxu0
        %v1157 = vpop.f32.mrf.mxu0
        %v1158 = vadd.f32 %v845, %v1157
        %v1159 = vpop.f32.mrf.mxu0
        %1160 = vmatprep.mubr.bf16.mxu0 0
        %1161 = vmatmul.mubr.bf16.gmra.mxu0 %v1041
        %v1162 = vpop.f32.mrf.mxu0
        %v1163 = vadd.f32 %v850, %v1162
        %v1164 = vpop.f32.mrf.mxu0
        %v1165 = vpop.f32.mrf.mxu0
        %v1166 = vadd.f32 %v853, %v1165
        %v1167 = vpop.f32.mrf.mxu0
        %1168 = vmatprep.mubr.bf16.mxu0 0
        %1169 = vmatmul.mubr.bf16.gmra.mxu0 %v1044
        %v1170 = vpop.f32.mrf.mxu0
        %v1171 = vadd.f32 %v858, %v1170
        %v1172 = vpop.f32.mrf.mxu0
        %v1173 = vpop.f32.mrf.mxu0
        %v1174 = vadd.f32 %v861, %v1173
        %v1175 = vpop.f32.mrf.mxu0
        %1176 = vmatprep.mubr.bf16.mxu0 0
        %1177 = vmatmul.mubr.bf16.gmra.mxu0 %v1047
        %v1178 = vpop.f32.mrf.mxu0
        %v1179 = vadd.f32 %v866, %v1178
        %v1180 = vpop.f32.mrf.mxu0
        %v1181 = vpop.f32.mrf.mxu0
        %v1182 = vadd.f32 %v869, %v1181
        %v1183 = vpop.f32.mrf.mxu0
        %1184 = vmatprep.mubr.bf16.mxu0 0
        %1185 = vmatmul.mubr.bf16.gmra.mxu0 %v1050
        %v1186 = vpop.f32.mrf.mxu0
        %v1187 = vadd.f32 %v874, %v1186
        %v1188 = vpop.f32.mrf.mxu0
        %v1189 = vpop.f32.mrf.mxu0
        %v1190 = vadd.f32 %v877, %v1189
        %v1191 = vpop.f32.mrf.mxu0
        %1192 = vmatprep.mubr.bf16.mxu0 0
        %1193 = vmatmul.mubr.bf16.gmra.mxu0 %v1053
        %v1194 = vpop.f32.mrf.mxu0
        %v1195 = vadd.f32 %v882, %v1194
        %v1196 = vpop.f32.mrf.mxu0
        %v1197 = vpop.f32.mrf.mxu0
        %v1198 = vadd.f32 %v885, %v1197
        %v1199 = vpop.f32.mrf.mxu0
        %1200 = vmatprep.mubr.bf16.mxu0 0
        %1201 = vmatmul.mubr.bf16.gmra.mxu0 %v1056
        %v1202 = vpop.f32.mrf.mxu0
        %v1203 = vadd.f32 %v890, %v1202
        %v1204 = vpop.f32.mrf.mxu0
        %v1205 = vpop.f32.mrf.mxu0
        %v1206 = vadd.f32 %v893, %v1205
        %v1207 = vpop.f32.mrf.mxu0
        %1208 = vmatprep.mubr.bf16.mxu0 0
        %1209 = vmatmul.mubr.bf16.gmra.mxu0 %v1059
        %v1210 = vpop.f32.mrf.mxu0
        %v1211 = vadd.f32 %v898, %v1210
        %v1212 = vpop.f32.mrf.mxu0
        %v1213 = vpop.f32.mrf.mxu0
        %v1214 = vadd.f32 %v901, %v1213
        %v1215 = vpop.f32.mrf.mxu0
        %1216 = vmatprep.mubr.bf16.mxu0 0
        %1217 = vmatmul.mubr.bf16.gmra.mxu0 %v1062
        %v1218 = vpop.f32.mrf.mxu0
        %v1219 = vadd.f32 %v906, %v1218
        %v1220 = vpop.f32.mrf.mxu0
        %v1221 = vpop.f32.mrf.mxu0
        %v1222 = vadd.f32 %v909, %v1221
        %v1223 = vpop.f32.mrf.mxu0
        %1224 = vdwg.mxu0
        %v1225 = vld [vmem:[%s177] sm:$0xe]
        %v1226 = vld [vmem:[%s177 + $0xc] sm:$0xe]
        %v1227 = vld [vmem:[%s177 + $0x18] sm:$0xe]
        %v1228 = vld [vmem:[%s177 + $0x24] sm:$0xe]
        %v1229 = vld [vmem:[%s177 + $0x30] sm:$0xe]
        %v1230 = vld [vmem:[%s177 + $0x3c] sm:$0xe]
        %v1231 = vld [vmem:[%s177 + $0x48] sm:$0xe]
        %v1232 = vld [vmem:[%s177 + $0x54] sm:$0xe]
        %v1233 = vld [vmem:[%s177 + $0xd8] sm:$0xe]
        %v1234 = vld [vmem:[%s177 + $0xe4] sm:$0xe]
        %v1235 = vld [vmem:[%s177 + $0xf0] sm:$0xe]
        %v1236 = vld [vmem:[%s177 + $0xfc] sm:$0xe]
        %v1237 = vld [vmem:[%s177 + $0x108] sm:$0xe]
        %v1238 = vld [vmem:[%s177 + $0x114] sm:$0xe]
        %v1239 = vld [vmem:[%s177 + $0x120] sm:$0xe]
        %v1240 = vld [vmem:[%s177 + $0x12c] sm:$0xe]
        %vm1273 = vcmask 1042432
        %vm1274 = vcmask 1046532
        %vm1275 = vmor %vm1273, %vm1274
        %v1276 = vrot.slane %v1225, 5
        %v1277 = vrot.slane %v1276, 4
        %v1278 = vrot.slane %v179, 5
        %v1279 = vsel %vm1275, %v1277, %v1278
        %v1280 = vrot.slane %v1278, 4
        %v1281 = vrot.slane %v218, 5
        %v1282 = vsel %vm1275, %v1280, %v1281
        %v1283 = vrot.slane %v1226, 5
        %v1284 = vrot.slane %v1283, 4
        %v1285 = vrot.slane %v181, 5
        %v1286 = vsel %vm1275, %v1284, %v1285
        %v1287 = vrot.slane %v1285, 4
        %v1288 = vrot.slane %v219, 5
        %v1289 = vsel %vm1275, %v1287, %v1288
        %v1290 = vrot.slane %v1227, 5
        %v1291 = vrot.slane %v1290, 4
        %v1292 = vrot.slane %v183, 5
        %v1293 = vsel %vm1275, %v1291, %v1292
        %v1294 = vrot.slane %v1292, 4
        %v1295 = vrot.slane %v220, 5
        %v1296 = vsel %vm1275, %v1294, %v1295
        %v1297 = vrot.slane %v1228, 5
        %v1298 = vrot.slane %v1297, 4
        %v1299 = vrot.slane %v185, 5
        %v1300 = vsel %vm1275, %v1298, %v1299
        %v1301 = vrot.slane %v1299, 4
        %v1302 = vrot.slane %v221, 5
        %v1303 = vsel %vm1275, %v1301, %v1302
        %v1304 = vrot.slane %v1229, 5
        %v1305 = vrot.slane %v1304, 4
        %v1306 = vrot.slane %v187, 5
        %v1307 = vsel %vm1275, %v1305, %v1306
        %v1308 = vrot.slane %v1306, 4
        %v1309 = vrot.slane %v222, 5
        %v1310 = vsel %vm1275, %v1308, %v1309
        %v1311 = vrot.slane %v1230, 5
        %v1312 = vrot.slane %v1311, 4
        %v1313 = vrot.slane %v189, 5
        %v1314 = vsel %vm1275, %v1312, %v1313
        %v1315 = vrot.slane %v1313, 4
        %v1316 = vrot.slane %v223, 5
        %v1317 = vsel %vm1275, %v1315, %v1316
        %v1318 = vrot.slane %v1231, 5
        %v1319 = vrot.slane %v1318, 4
        %v1320 = vrot.slane %v191, 5
        %v1321 = vsel %vm1275, %v1319, %v1320
        %v1322 = vrot.slane %v1320, 4
        %v1323 = vrot.slane %v224, 5
        %v1324 = vsel %vm1275, %v1322, %v1323
        %v1325 = vrot.slane %v1232, 5
        %v1326 = vrot.slane %v1325, 4
        %v1327 = vrot.slane %v193, 5
        %v1328 = vsel %vm1275, %v1326, %v1327
        %v1329 = vrot.slane %v1327, 4
        %v1330 = vrot.slane %v225, 5
        %v1331 = vsel %vm1275, %v1329, %v1330
        %v1332 = vrot.slane %v1233, 5
        %v1333 = vrot.slane %v1332, 4
        %v1334 = vrot.slane %v195, 5
        %v1335 = vsel %vm1275, %v1333, %v1334
        %v1336 = vrot.slane %v1334, 4
        %v1337 = vrot.slane %v226, 5
        %v1338 = vsel %vm1275, %v1336, %v1337
        %v1339 = vrot.slane %v1234, 5
        %v1340 = vrot.slane %v1339, 4
        %v1341 = vrot.slane %v197, 5
        %v1342 = vsel %vm1275, %v1340, %v1341
        %v1343 = vrot.slane %v1341, 4
        %v1344 = vrot.slane %v227, 5
        %v1345 = vsel %vm1275, %v1343, %v1344
        %v1346 = vrot.slane %v1235, 5
        %v1347 = vrot.slane %v1346, 4
        %v1348 = vrot.slane %v199, 5
        %v1349 = vsel %vm1275, %v1347, %v1348
        %v1350 = vrot.slane %v1348, 4
        %v1351 = vrot.slane %v228, 5
        %v1352 = vsel %vm1275, %v1350, %v1351
        %v1353 = vrot.slane %v1236, 5
        %v1354 = vrot.slane %v1353, 4
        %v1355 = vrot.slane %v201, 5
        %v1356 = vsel %vm1275, %v1354, %v1355
        %v1357 = vrot.slane %v1355, 4
        %v1358 = vrot.slane %v229, 5
        %v1359 = vsel %vm1275, %v1357, %v1358
        %v1360 = vrot.slane %v1237, 5
        %v1361 = vrot.slane %v1360, 4
        %v1362 = vrot.slane %v203, 5
        %v1363 = vsel %vm1275, %v1361, %v1362
        %v1364 = vrot.slane %v1362, 4
        %v1365 = vrot.slane %v230, 5
        %v1366 = vsel %vm1275, %v1364, %v1365
        %v1367 = vrot.slane %v1238, 5
        %v1368 = vrot.slane %v1367, 4
        %v1369 = vrot.slane %v205, 5
        %v1370 = vsel %vm1275, %v1368, %v1369
        %v1371 = vrot.slane %v1369, 4
        %v1372 = vrot.slane %v231, 5
        %v1373 = vsel %vm1275, %v1371, %v1372
        %v1374 = vrot.slane %v1239, 5
        %v1375 = vrot.slane %v1374, 4
        %v1376 = vrot.slane %v207, 5
        %v1377 = vsel %vm1275, %v1375, %v1376
        %v1378 = vrot.slane %v1376, 4
        %v1379 = vrot.slane %v232, 5
        %v1380 = vsel %vm1275, %v1378, %v1379
        %v1381 = vrot.slane %v1240, 5
        %v1382 = vrot.slane %v1381, 4
        %v1383 = vrot.slane %v209, 5
        %v1384 = vsel %vm1275, %v1382, %v1383
        %v1385 = vrot.slane %v1383, 4
        %v1386 = vrot.slane %v233, 5
        %v1387 = vsel %vm1275, %v1385, %v1386
        %s1388 = scalar_lea.vmem %s1, 64
        %v1389 = vld [vmem:[%s1388] sm:$0xf]
        %v1390 = vld [vmem:[%s1388 + $0x4] sm:$0xf]
        %v1391 = vld [vmem:[%s1388 + $0x8] sm:$0xf]
        %v1392 = vld [vmem:[%s1388 + $0xc] sm:$0xf]
        %v1393 = vld [vmem:[%s1388 + $0x10] sm:$0xf]
        %v1394 = vld [vmem:[%s1388 + $0x14] sm:$0xf]
        %v1395 = vld [vmem:[%s1388 + $0x18] sm:$0xf]
        %v1396 = vld [vmem:[%s1388 + $0x1c] sm:$0xf]
        %v1397 = vunpack.c.l.b16 %v1279
        %v1398 = vunpack.c.l.b16 %v1282
        %v1399 = vunpack.c.l.b16 %v1286
        %v1400 = vunpack.c.l.b16 %v1289
        %v1401 = vunpack.c.l.b16 %v1293
        %v1402 = vunpack.c.l.b16 %v1296
        %v1403 = vunpack.c.l.b16 %v1300
        %v1404 = vunpack.c.l.b16 %v1303
        %v1405 = vunpack.c.l.b16 %v1307
        %v1406 = vunpack.c.l.b16 %v1310
        %v1407 = vunpack.c.l.b16 %v1314
        %v1408 = vunpack.c.l.b16 %v1317
        %v1409 = vunpack.c.l.b16 %v1321
        %v1410 = vunpack.c.l.b16 %v1324
        %v1411 = vunpack.c.l.b16 %v1328
        %v1412 = vunpack.c.l.b16 %v1331
        %v1413 = vunpack.c.l.b16 %v1335
        %v1414 = vunpack.c.l.b16 %v1338
        %v1415 = vunpack.c.l.b16 %v1342
        %v1416 = vunpack.c.l.b16 %v1345
        %v1417 = vunpack.c.l.b16 %v1349
        %v1418 = vunpack.c.l.b16 %v1352
        %v1419 = vunpack.c.l.b16 %v1356
        %v1420 = vunpack.c.l.b16 %v1359
        %v1421 = vunpack.c.l.b16 %v1363
        %v1422 = vunpack.c.l.b16 %v1366
        %v1423 = vunpack.c.l.b16 %v1370
        %v1424 = vunpack.c.l.b16 %v1373
        %v1425 = vunpack.c.l.b16 %v1377
        %v1426 = vunpack.c.l.b16 %v1380
        %v1427 = vunpack.c.l.b16 %v1384
        %v1428 = vunpack.c.l.b16 %v1387
        %v1429 = vpack.c.b16 %v1398, %v1397
        %v1430 = vpack.c.b16 %v1400, %v1399
        %v1431 = vpack.c.b16 %v1402, %v1401
        %v1432 = vpack.c.b16 %v1404, %v1403
        %v1433 = vpack.c.b16 %v1406, %v1405
        %v1434 = vpack.c.b16 %v1408, %v1407
        %v1435 = vpack.c.b16 %v1410, %v1409
        %v1436 = vpack.c.b16 %v1412, %v1411
        %v1437 = vpack.c.b16 %v1414, %v1413
        %v1438 = vpack.c.b16 %v1416, %v1415
        %v1439 = vpack.c.b16 %v1418, %v1417
        %v1440 = vpack.c.b16 %v1420, %v1419
        %v1441 = vpack.c.b16 %v1422, %v1421
        %v1442 = vpack.c.b16 %v1424, %v1423
        %v1443 = vpack.c.b16 %v1426, %v1425
        %v1444 = vpack.c.b16 %v1428, %v1427
        %v1453 = vunpack.c.l.b16 %v1389
        %v1454 = vunpack.c.l.b16 %v1390
        %v1455 = vunpack.c.l.b16 %v1391
        %v1456 = vunpack.c.l.b16 %v1392
        %v1457 = vunpack.c.l.b16 %v1393
        %v1458 = vunpack.c.l.b16 %v1394
        %v1459 = vunpack.c.l.b16 %v1395
        %v1460 = vunpack.c.l.b16 %v1396
        %v1461 = vpack.c.b16 %v1454, %v1453
        %v1462 = vpack.c.b16 %v1456, %v1455
        %v1463 = vpack.c.b16 %v1458, %v1457
        %v1464 = vpack.c.b16 %v1460, %v1459
        %v1470 = vsel %vm702, %v1429, 0
        %v1473 = vsel %vm702, %v1430, 0
        %v1476 = vsel %vm702, %v1431, 0
        %v1479 = vsel %vm702, %v1432, 0
        %v1482 = vsel %vm702, %v1433, 0
        %v1485 = vsel %vm702, %v1434, 0
        %v1488 = vsel %vm702, %v1435, 0
        %v1491 = vsel %vm702, %v1436, 0
        %v1494 = vsel %vm702, %v1437, 0
        %v1497 = vsel %vm702, %v1438, 0
        %v1500 = vsel %vm702, %v1439, 0
        %v1503 = vsel %vm702, %v1440, 0
        %v1506 = vsel %vm702, %v1441, 0
        %v1509 = vsel %vm702, %v1442, 0
        %v1512 = vsel %vm702, %v1443, 0
        %v1515 = vsel %vm702, %v1444, 0
        %1517 = vmatprep.subr.bf16.mxu0 0
        %1518 = vmatpush1.bf16.msra.mxu0 0
        %1519 = vmatprep.subr.bf16.mxu0 0
        %1520 = vmatpush1.bf16.msra.mxu0 0
        %1521 = vmatprep.subr.bf16.mxu0 0
        %1522 = vmatpush1.bf16.msra.mxu0 0
        %1523 = vmatprep.subr.bf16.mxu0 0
        %1524 = vmatpush1.bf16.msra.mxu0 0
        %1525 = vmatprep.subr.bf16.mxu0 0
        %1526 = vmatpush1.bf16.msra.mxu0 %v1464
        %1527 = vmatprep.subr.bf16.mxu0 0
        %1528 = vmatpush1.bf16.msra.mxu0 %v1463
        %1529 = vmatprep.subr.bf16.mxu0 0
        %1530 = vmatpush1.bf16.msra.mxu0 %v1462
        %1531 = vmatprep.subr.bf16.mxu0 0
        %1532 = vmatpush1.bf16.msra.mxu0 %v1461
        %1533 = vmatprep.subr.bf16.mxu0 0
        %1534 = vmatpush2.bf16.msra.mxu0 0
        %1535 = vmatprep.subr.bf16.mxu0 0
        %1536 = vmatpush2.bf16.msra.mxu0 0
        %1537 = vmatprep.subr.bf16.mxu0 0
        %1538 = vmatpush2.bf16.msra.mxu0 0
        %1539 = vmatprep.subr.bf16.mxu0 0
        %1540 = vmatpush2.bf16.msra.mxu0 0
        %1541 = vmatprep.subr.bf16.mxu0 0
        %1542 = vmatpush2.bf16.msra.mxu0 0
        %1543 = vmatprep.subr.bf16.mxu0 0
        %1544 = vmatpush2.bf16.msra.mxu0 0
        %1545 = vmatprep.subr.bf16.mxu0 0
        %1546 = vmatpush2.bf16.msra.mxu0 0
        %1547 = vmatprep.subr.bf16.mxu0 0
        %1548 = vmatpush2.bf16.msra.mxu0 0
        %1549 = vmatprep.mubr.bf16.mxu0 0
        %1550 = vmatmul.mubr.bf16.gmra.mxu0 %v1470
        %v1551 = vpop.f32.mrf.mxu0
        %v1552 = vadd.f32 0.0, %v1551
        %v1553 = vpop.f32.mrf.mxu0
        %v1554 = vpop.f32.mrf.mxu0
        %v1555 = vadd.f32 0.0, %v1554
        %v1556 = vpop.f32.mrf.mxu0
        %1557 = vmatprep.mubr.bf16.mxu0 0
        %1558 = vmatmul.mubr.bf16.gmra.mxu0 %v1473
        %v1559 = vpop.f32.mrf.mxu0
        %v1560 = vadd.f32 0.0, %v1559
        %v1561 = vpop.f32.mrf.mxu0
        %v1562 = vpop.f32.mrf.mxu0
        %v1563 = vadd.f32 0.0, %v1562
        %v1564 = vpop.f32.mrf.mxu0
        %1565 = vmatprep.mubr.bf16.mxu0 0
        %1566 = vmatmul.mubr.bf16.gmra.mxu0 %v1476
        %v1567 = vpop.f32.mrf.mxu0
        %v1568 = vadd.f32 0.0, %v1567
        %v1569 = vpop.f32.mrf.mxu0
        %v1570 = vpop.f32.mrf.mxu0
        %v1571 = vadd.f32 0.0, %v1570
        %v1572 = vpop.f32.mrf.mxu0
        %1573 = vmatprep.mubr.bf16.mxu0 0
        %1574 = vmatmul.mubr.bf16.gmra.mxu0 %v1479
        %v1575 = vpop.f32.mrf.mxu0
        %v1576 = vadd.f32 0.0, %v1575
        %v1577 = vpop.f32.mrf.mxu0
        %v1578 = vpop.f32.mrf.mxu0
        %v1579 = vadd.f32 0.0, %v1578
        %v1580 = vpop.f32.mrf.mxu0
        %1581 = vmatprep.mubr.bf16.mxu0 0
        %1582 = vmatmul.mubr.bf16.gmra.mxu0 %v1482
        %v1583 = vpop.f32.mrf.mxu0
        %v1584 = vadd.f32 0.0, %v1583
        %v1585 = vpop.f32.mrf.mxu0
        %v1586 = vpop.f32.mrf.mxu0
        %v1587 = vadd.f32 0.0, %v1586
        %v1588 = vpop.f32.mrf.mxu0
        %1589 = vmatprep.mubr.bf16.mxu0 0
        %1590 = vmatmul.mubr.bf16.gmra.mxu0 %v1485
        %v1591 = vpop.f32.mrf.mxu0
        %v1592 = vadd.f32 0.0, %v1591
        %v1593 = vpop.f32.mrf.mxu0
        %v1594 = vpop.f32.mrf.mxu0
        %v1595 = vadd.f32 0.0, %v1594
        %v1596 = vpop.f32.mrf.mxu0
        %1597 = vmatprep.mubr.bf16.mxu0 0
        %1598 = vmatmul.mubr.bf16.gmra.mxu0 %v1488
        %v1599 = vpop.f32.mrf.mxu0
        %v1600 = vadd.f32 0.0, %v1599
        %v1601 = vpop.f32.mrf.mxu0
        %v1602 = vpop.f32.mrf.mxu0
        %v1603 = vadd.f32 0.0, %v1602
        %v1604 = vpop.f32.mrf.mxu0
        %1605 = vmatprep.mubr.bf16.mxu0 0
        %1606 = vmatmul.mubr.bf16.gmra.mxu0 %v1491
        %v1607 = vpop.f32.mrf.mxu0
        %v1608 = vadd.f32 0.0, %v1607
        %v1609 = vpop.f32.mrf.mxu0
        %v1610 = vpop.f32.mrf.mxu0
        %v1611 = vadd.f32 0.0, %v1610
        %v1612 = vpop.f32.mrf.mxu0
        %1613 = vmatprep.mubr.bf16.mxu0 0
        %1614 = vmatmul.mubr.bf16.gmra.mxu0 %v1494
        %v1615 = vpop.f32.mrf.mxu0
        %v1616 = vadd.f32 0.0, %v1615
        %v1617 = vpop.f32.mrf.mxu0
        %v1618 = vpop.f32.mrf.mxu0
        %v1619 = vadd.f32 0.0, %v1618
        %v1620 = vpop.f32.mrf.mxu0
        %1621 = vmatprep.mubr.bf16.mxu0 0
        %1622 = vmatmul.mubr.bf16.gmra.mxu0 %v1497
        %v1623 = vpop.f32.mrf.mxu0
        %v1624 = vadd.f32 0.0, %v1623
        %v1625 = vpop.f32.mrf.mxu0
        %v1626 = vpop.f32.mrf.mxu0
        %v1627 = vadd.f32 0.0, %v1626
        %v1628 = vpop.f32.mrf.mxu0
        %1629 = vmatprep.mubr.bf16.mxu0 0
        %1630 = vmatmul.mubr.bf16.gmra.mxu0 %v1500
        %v1631 = vpop.f32.mrf.mxu0
        %v1632 = vadd.f32 0.0, %v1631
        %v1633 = vpop.f32.mrf.mxu0
        %v1634 = vpop.f32.mrf.mxu0
        %v1635 = vadd.f32 0.0, %v1634
        %v1636 = vpop.f32.mrf.mxu0
        %1637 = vmatprep.mubr.bf16.mxu0 0
        %1638 = vmatmul.mubr.bf16.gmra.mxu0 %v1503
        %v1639 = vpop.f32.mrf.mxu0
        %v1640 = vadd.f32 0.0, %v1639
        %v1641 = vpop.f32.mrf.mxu0
        %v1642 = vpop.f32.mrf.mxu0
        %v1643 = vadd.f32 0.0, %v1642
        %v1644 = vpop.f32.mrf.mxu0
        %1645 = vmatprep.mubr.bf16.mxu0 0
        %1646 = vmatmul.mubr.bf16.gmra.mxu0 %v1506
        %v1647 = vpop.f32.mrf.mxu0
        %v1648 = vadd.f32 0.0, %v1647
        %v1649 = vpop.f32.mrf.mxu0
        %v1650 = vpop.f32.mrf.mxu0
        %v1651 = vadd.f32 0.0, %v1650
        %v1652 = vpop.f32.mrf.mxu0
        %1653 = vmatprep.mubr.bf16.mxu0 0
        %1654 = vmatmul.mubr.bf16.gmra.mxu0 %v1509
        %v1655 = vpop.f32.mrf.mxu0
        %v1656 = vadd.f32 0.0, %v1655
        %v1657 = vpop.f32.mrf.mxu0
        %v1658 = vpop.f32.mrf.mxu0
        %v1659 = vadd.f32 0.0, %v1658
        %v1660 = vpop.f32.mrf.mxu0
        %1661 = vmatprep.mubr.bf16.mxu0 0
        %1662 = vmatmul.mubr.bf16.gmra.mxu0 %v1512
        %v1663 = vpop.f32.mrf.mxu0
        %v1664 = vadd.f32 0.0, %v1663
        %v1665 = vpop.f32.mrf.mxu0
        %v1666 = vpop.f32.mrf.mxu0
        %v1667 = vadd.f32 0.0, %v1666
        %v1668 = vpop.f32.mrf.mxu0
        %1669 = vmatprep.mubr.bf16.mxu0 0
        %1670 = vmatmul.mubr.bf16.gmra.mxu0 %v1515
        %v1671 = vpop.f32.mrf.mxu0
        %v1672 = vadd.f32 0.0, %v1671
        %v1673 = vpop.f32.mrf.mxu0
        %v1674 = vpop.f32.mrf.mxu0
        %v1675 = vadd.f32 0.0, %v1674
        %v1676 = vpop.f32.mrf.mxu0
        %1677 = vdwg.mxu0
        %v1678 = vadd.f32 %v1099, %v1552
        %v1679 = vadd.f32 %v1102, %v1555
        %v1680 = vadd.f32 %v1107, %v1560
        %v1681 = vadd.f32 %v1110, %v1563
        %v1682 = vadd.f32 %v1115, %v1568
        %v1683 = vadd.f32 %v1118, %v1571
        %v1684 = vadd.f32 %v1123, %v1576
        %v1685 = vadd.f32 %v1126, %v1579
        %v1686 = vadd.f32 %v1131, %v1584
        %v1687 = vadd.f32 %v1134, %v1587
        %v1688 = vadd.f32 %v1139, %v1592
        %v1689 = vadd.f32 %v1142, %v1595
        %v1690 = vadd.f32 %v1147, %v1600
        %v1691 = vadd.f32 %v1150, %v1603
        %v1692 = vadd.f32 %v1155, %v1608
        %v1693 = vadd.f32 %v1158, %v1611
        %v1694 = vadd.f32 %v1163, %v1616
        %v1695 = vadd.f32 %v1166, %v1619
        %v1696 = vadd.f32 %v1171, %v1624
        %v1697 = vadd.f32 %v1174, %v1627
        %v1698 = vadd.f32 %v1179, %v1632
        %v1699 = vadd.f32 %v1182, %v1635
        %v1700 = vadd.f32 %v1187, %v1640
        %v1701 = vadd.f32 %v1190, %v1643
        %v1702 = vadd.f32 %v1195, %v1648
        %v1703 = vadd.f32 %v1198, %v1651
        %v1704 = vadd.f32 %v1203, %v1656
        %v1705 = vadd.f32 %v1206, %v1659
        %v1706 = vadd.f32 %v1211, %v1664
        %v1707 = vadd.f32 %v1214, %v1667
        %v1708 = vadd.f32 %v1219, %v1672
        %v1709 = vadd.f32 %v1222, %v1675
        %s1710 = sadd.s32 %s174, 1
        %s1711 = smul.u32 %s1710, 3
        %s1712 = smul.addr %s1711, 4
        %s1713 = scalar_lea.vmem %s0, %s1712
        %v1714 = vld [vmem:[%s1713] sm:$0xf]
        %v1715 = vld [vmem:[%s1713 + $0x4] sm:$0xf]
        %v1716 = vld [vmem:[%s1713 + $0xc] sm:$0xf]
        %v1717 = vld [vmem:[%s1713 + $0x10] sm:$0xf]
        %v1718 = vld [vmem:[%s1713 + $0x18] sm:$0xf]
        %v1719 = vld [vmem:[%s1713 + $0x1c] sm:$0xf]
        %v1720 = vld [vmem:[%s1713 + $0x24] sm:$0xf]
        %v1721 = vld [vmem:[%s1713 + $0x28] sm:$0xf]
        %v1722 = vld [vmem:[%s1713 + $0x30] sm:$0xf]
        %v1723 = vld [vmem:[%s1713 + $0x34] sm:$0xf]
        %v1724 = vld [vmem:[%s1713 + $0x3c] sm:$0xf]
        %v1725 = vld [vmem:[%s1713 + $0x40] sm:$0xf]
        %v1726 = vld [vmem:[%s1713 + $0x48] sm:$0xf]
        %v1727 = vld [vmem:[%s1713 + $0x4c] sm:$0xf]
        %v1728 = vld [vmem:[%s1713 + $0x54] sm:$0xf]
        %v1729 = vld [vmem:[%s1713 + $0x58] sm:$0xf]
        %v1730 = vld [vmem:[%s1713 + $0xd8] sm:$0xf]
        %v1731 = vld [vmem:[%s1713 + $0xdc] sm:$0xf]
        %v1732 = vld [vmem:[%s1713 + $0xe4] sm:$0xf]
        %v1733 = vld [vmem:[%s1713 + $0xe8] sm:$0xf]
        %v1734 = vld [vmem:[%s1713 + $0xf0] sm:$0xf]
        %v1735 = vld [vmem:[%s1713 + $0xf4] sm:$0xf]
        %v1736 = vld [vmem:[%s1713 + $0xfc] sm:$0xf]
        %v1737 = vld [vmem:[%s1713 + $0x100] sm:$0xf]
        %v1738 = vld [vmem:[%s1713 + $0x108] sm:$0xf]
        %v1739 = vld [vmem:[%s1713 + $0x10c] sm:$0xf]
        %v1740 = vld [vmem:[%s1713 + $0x114] sm:$0xf]
        %v1741 = vld [vmem:[%s1713 + $0x118] sm:$0xf]
        %v1742 = vld [vmem:[%s1713 + $0x120] sm:$0xf]
        %v1743 = vld [vmem:[%s1713 + $0x124] sm:$0xf]
        %v1744 = vld [vmem:[%s1713 + $0x12c] sm:$0xf]
        %v1745 = vld [vmem:[%s1713 + $0x130] sm:$0xf]
        %s1746 = scalar_lea.vmem %s1, 96
        %v1747 = vld [vmem:[%s1746] sm:$0xf]
        %v1748 = vld [vmem:[%s1746 + $0x4] sm:$0xf]
        %v1749 = vld [vmem:[%s1746 + $0x8] sm:$0xf]
        %v1750 = vld [vmem:[%s1746 + $0xc] sm:$0xf]
        %v1751 = vld [vmem:[%s1746 + $0x10] sm:$0xf]
        %v1752 = vld [vmem:[%s1746 + $0x14] sm:$0xf]
        %v1753 = vld [vmem:[%s1746 + $0x18] sm:$0xf]
        %v1754 = vld [vmem:[%s1746 + $0x1c] sm:$0xf]
        %v1787 = vunpack.c.l.b16 %v1714
        %v1788 = vunpack.c.l.b16 %v1715
        %v1789 = vunpack.c.l.b16 %v1716
        %v1790 = vunpack.c.l.b16 %v1717
        %v1791 = vunpack.c.l.b16 %v1718
        %v1792 = vunpack.c.l.b16 %v1719
        %v1793 = vunpack.c.l.b16 %v1720
        %v1794 = vunpack.c.l.b16 %v1721
        %v1795 = vunpack.c.l.b16 %v1722
        %v1796 = vunpack.c.l.b16 %v1723
        %v1797 = vunpack.c.l.b16 %v1724
        %v1798 = vunpack.c.l.b16 %v1725
        %v1799 = vunpack.c.l.b16 %v1726
        %v1800 = vunpack.c.l.b16 %v1727
        %v1801 = vunpack.c.l.b16 %v1728
        %v1802 = vunpack.c.l.b16 %v1729
        %v1803 = vunpack.c.l.b16 %v1730
        %v1804 = vunpack.c.l.b16 %v1731
        %v1805 = vunpack.c.l.b16 %v1732
        %v1806 = vunpack.c.l.b16 %v1733
        %v1807 = vunpack.c.l.b16 %v1734
        %v1808 = vunpack.c.l.b16 %v1735
        %v1809 = vunpack.c.l.b16 %v1736
        %v1810 = vunpack.c.l.b16 %v1737
        %v1811 = vunpack.c.l.b16 %v1738
        %v1812 = vunpack.c.l.b16 %v1739
        %v1813 = vunpack.c.l.b16 %v1740
        %v1814 = vunpack.c.l.b16 %v1741
        %v1815 = vunpack.c.l.b16 %v1742
        %v1816 = vunpack.c.l.b16 %v1743
        %v1817 = vunpack.c.l.b16 %v1744
        %v1818 = vunpack.c.l.b16 %v1745
        %v1819 = vpack.c.b16 %v1788, %v1787
        %v1820 = vpack.c.b16 %v1790, %v1789
        %v1821 = vpack.c.b16 %v1792, %v1791
        %v1822 = vpack.c.b16 %v1794, %v1793
        %v1823 = vpack.c.b16 %v1796, %v1795
        %v1824 = vpack.c.b16 %v1798, %v1797
        %v1825 = vpack.c.b16 %v1800, %v1799
        %v1826 = vpack.c.b16 %v1802, %v1801
        %v1827 = vpack.c.b16 %v1804, %v1803
        %v1828 = vpack.c.b16 %v1806, %v1805
        %v1829 = vpack.c.b16 %v1808, %v1807
        %v1830 = vpack.c.b16 %v1810, %v1809
        %v1831 = vpack.c.b16 %v1812, %v1811
        %v1832 = vpack.c.b16 %v1814, %v1813
        %v1833 = vpack.c.b16 %v1816, %v1815
        %v1834 = vpack.c.b16 %v1818, %v1817
        %v1843 = vunpack.c.l.b16 %v1747
        %v1844 = vunpack.c.l.b16 %v1748
        %v1845 = vunpack.c.l.b16 %v1749
        %v1846 = vunpack.c.l.b16 %v1750
        %v1847 = vunpack.c.l.b16 %v1751
        %v1848 = vunpack.c.l.b16 %v1752
        %v1849 = vunpack.c.l.b16 %v1753
        %v1850 = vunpack.c.l.b16 %v1754
        %v1851 = vpack.c.b16 %v1844, %v1843
        %v1852 = vpack.c.b16 %v1846, %v1845
        %v1853 = vpack.c.b16 %v1848, %v1847
        %v1854 = vpack.c.b16 %v1850, %v1849
        %v1860 = vsel %vm702, %v1819, 0
        %v1863 = vsel %vm702, %v1820, 0
        %v1866 = vsel %vm702, %v1821, 0
        %v1869 = vsel %vm702, %v1822, 0
        %v1872 = vsel %vm702, %v1823, 0
        %v1875 = vsel %vm702, %v1824, 0
        %v1878 = vsel %vm702, %v1825, 0
        %v1881 = vsel %vm702, %v1826, 0
        %v1884 = vsel %vm702, %v1827, 0
        %v1887 = vsel %vm702, %v1828, 0
        %v1890 = vsel %vm702, %v1829, 0
        %v1893 = vsel %vm702, %v1830, 0
        %v1896 = vsel %vm702, %v1831, 0
        %v1899 = vsel %vm702, %v1832, 0
        %v1902 = vsel %vm702, %v1833, 0
        %v1905 = vsel %vm702, %v1834, 0
        %1907 = vmatprep.subr.bf16.mxu0 0
        %1908 = vmatpush1.bf16.msra.mxu0 0
        %1909 = vmatprep.subr.bf16.mxu0 0
        %1910 = vmatpush1.bf16.msra.mxu0 0
        %1911 = vmatprep.subr.bf16.mxu0 0
        %1912 = vmatpush1.bf16.msra.mxu0 0
        %1913 = vmatprep.subr.bf16.mxu0 0
        %1914 = vmatpush1.bf16.msra.mxu0 0
        %1915 = vmatprep.subr.bf16.mxu0 0
        %1916 = vmatpush1.bf16.msra.mxu0 %v1854
        %1917 = vmatprep.subr.bf16.mxu0 0
        %1918 = vmatpush1.bf16.msra.mxu0 %v1853
        %1919 = vmatprep.subr.bf16.mxu0 0
        %1920 = vmatpush1.bf16.msra.mxu0 %v1852
        %1921 = vmatprep.subr.bf16.mxu0 0
        %1922 = vmatpush1.bf16.msra.mxu0 %v1851
        %1923 = vmatprep.subr.bf16.mxu0 0
        %1924 = vmatpush2.bf16.msra.mxu0 0
        %1925 = vmatprep.subr.bf16.mxu0 0
        %1926 = vmatpush2.bf16.msra.mxu0 0
        %1927 = vmatprep.subr.bf16.mxu0 0
        %1928 = vmatpush2.bf16.msra.mxu0 0
        %1929 = vmatprep.subr.bf16.mxu0 0
        %1930 = vmatpush2.bf16.msra.mxu0 0
        %1931 = vmatprep.subr.bf16.mxu0 0
        %1932 = vmatpush2.bf16.msra.mxu0 0
        %1933 = vmatprep.subr.bf16.mxu0 0
        %1934 = vmatpush2.bf16.msra.mxu0 0
        %1935 = vmatprep.subr.bf16.mxu0 0
        %1936 = vmatpush2.bf16.msra.mxu0 0
        %1937 = vmatprep.subr.bf16.mxu0 0
        %1938 = vmatpush2.bf16.msra.mxu0 0
        %1939 = vmatprep.mubr.bf16.mxu0 0
        %1940 = vmatmul.mubr.bf16.gmra.mxu0 %v1860
        %v1941 = vpop.f32.mrf.mxu0
        %v1942 = vadd.f32 0.0, %v1941
        %v1943 = vpop.f32.mrf.mxu0
        %v1944 = vpop.f32.mrf.mxu0
        %v1945 = vadd.f32 0.0, %v1944
        %v1946 = vpop.f32.mrf.mxu0
        %1947 = vmatprep.mubr.bf16.mxu0 0
        %1948 = vmatmul.mubr.bf16.gmra.mxu0 %v1863
        %v1949 = vpop.f32.mrf.mxu0
        %v1950 = vadd.f32 0.0, %v1949
        %v1951 = vpop.f32.mrf.mxu0
        %v1952 = vpop.f32.mrf.mxu0
        %v1953 = vadd.f32 0.0, %v1952
        %v1954 = vpop.f32.mrf.mxu0
        %1955 = vmatprep.mubr.bf16.mxu0 0
        %1956 = vmatmul.mubr.bf16.gmra.mxu0 %v1866
        %v1957 = vpop.f32.mrf.mxu0
        %v1958 = vadd.f32 0.0, %v1957
        %v1959 = vpop.f32.mrf.mxu0
        %v1960 = vpop.f32.mrf.mxu0
        %v1961 = vadd.f32 0.0, %v1960
        %v1962 = vpop.f32.mrf.mxu0
        %1963 = vmatprep.mubr.bf16.mxu0 0
        %1964 = vmatmul.mubr.bf16.gmra.mxu0 %v1869
        %v1965 = vpop.f32.mrf.mxu0
        %v1966 = vadd.f32 0.0, %v1965
        %v1967 = vpop.f32.mrf.mxu0
        %v1968 = vpop.f32.mrf.mxu0
        %v1969 = vadd.f32 0.0, %v1968
        %v1970 = vpop.f32.mrf.mxu0
        %1971 = vmatprep.mubr.bf16.mxu0 0
        %1972 = vmatmul.mubr.bf16.gmra.mxu0 %v1872
        %v1973 = vpop.f32.mrf.mxu0
        %v1974 = vadd.f32 0.0, %v1973
        %v1975 = vpop.f32.mrf.mxu0
        %v1976 = vpop.f32.mrf.mxu0
        %v1977 = vadd.f32 0.0, %v1976
        %v1978 = vpop.f32.mrf.mxu0
        %1979 = vmatprep.mubr.bf16.mxu0 0
        %1980 = vmatmul.mubr.bf16.gmra.mxu0 %v1875
        %v1981 = vpop.f32.mrf.mxu0
        %v1982 = vadd.f32 0.0, %v1981
        %v1983 = vpop.f32.mrf.mxu0
        %v1984 = vpop.f32.mrf.mxu0
        %v1985 = vadd.f32 0.0, %v1984
        %v1986 = vpop.f32.mrf.mxu0
        %1987 = vmatprep.mubr.bf16.mxu0 0
        %1988 = vmatmul.mubr.bf16.gmra.mxu0 %v1878
        %v1989 = vpop.f32.mrf.mxu0
        %v1990 = vadd.f32 0.0, %v1989
        %v1991 = vpop.f32.mrf.mxu0
        %v1992 = vpop.f32.mrf.mxu0
        %v1993 = vadd.f32 0.0, %v1992
        %v1994 = vpop.f32.mrf.mxu0
        %1995 = vmatprep.mubr.bf16.mxu0 0
        %1996 = vmatmul.mubr.bf16.gmra.mxu0 %v1881
        %v1997 = vpop.f32.mrf.mxu0
        %v1998 = vadd.f32 0.0, %v1997
        %v1999 = vpop.f32.mrf.mxu0
        %v2000 = vpop.f32.mrf.mxu0
        %v2001 = vadd.f32 0.0, %v2000
        %v2002 = vpop.f32.mrf.mxu0
        %2003 = vmatprep.mubr.bf16.mxu0 0
        %2004 = vmatmul.mubr.bf16.gmra.mxu0 %v1884
        %v2005 = vpop.f32.mrf.mxu0
        %v2006 = vadd.f32 0.0, %v2005
        %v2007 = vpop.f32.mrf.mxu0
        %v2008 = vpop.f32.mrf.mxu0
        %v2009 = vadd.f32 0.0, %v2008
        %v2010 = vpop.f32.mrf.mxu0
        %2011 = vmatprep.mubr.bf16.mxu0 0
        %2012 = vmatmul.mubr.bf16.gmra.mxu0 %v1887
        %v2013 = vpop.f32.mrf.mxu0
        %v2014 = vadd.f32 0.0, %v2013
        %v2015 = vpop.f32.mrf.mxu0
        %v2016 = vpop.f32.mrf.mxu0
        %v2017 = vadd.f32 0.0, %v2016
        %v2018 = vpop.f32.mrf.mxu0
        %2019 = vmatprep.mubr.bf16.mxu0 0
        %2020 = vmatmul.mubr.bf16.gmra.mxu0 %v1890
        %v2021 = vpop.f32.mrf.mxu0
        %v2022 = vadd.f32 0.0, %v2021
        %v2023 = vpop.f32.mrf.mxu0
        %v2024 = vpop.f32.mrf.mxu0
        %v2025 = vadd.f32 0.0, %v2024
        %v2026 = vpop.f32.mrf.mxu0
        %2027 = vmatprep.mubr.bf16.mxu0 0
        %2028 = vmatmul.mubr.bf16.gmra.mxu0 %v1893
        %v2029 = vpop.f32.mrf.mxu0
        %v2030 = vadd.f32 0.0, %v2029
        %v2031 = vpop.f32.mrf.mxu0
        %v2032 = vpop.f32.mrf.mxu0
        %v2033 = vadd.f32 0.0, %v2032
        %v2034 = vpop.f32.mrf.mxu0
        %2035 = vmatprep.mubr.bf16.mxu0 0
        %2036 = vmatmul.mubr.bf16.gmra.mxu0 %v1896
        %v2037 = vpop.f32.mrf.mxu0
        %v2038 = vadd.f32 0.0, %v2037
        %v2039 = vpop.f32.mrf.mxu0
        %v2040 = vpop.f32.mrf.mxu0
        %v2041 = vadd.f32 0.0, %v2040
        %v2042 = vpop.f32.mrf.mxu0
        %2043 = vmatprep.mubr.bf16.mxu0 0
        %2044 = vmatmul.mubr.bf16.gmra.mxu0 %v1899
        %v2045 = vpop.f32.mrf.mxu0
        %v2046 = vadd.f32 0.0, %v2045
        %v2047 = vpop.f32.mrf.mxu0
        %v2048 = vpop.f32.mrf.mxu0
        %v2049 = vadd.f32 0.0, %v2048
        %v2050 = vpop.f32.mrf.mxu0
        %2051 = vmatprep.mubr.bf16.mxu0 0
        %2052 = vmatmul.mubr.bf16.gmra.mxu0 %v1902
        %v2053 = vpop.f32.mrf.mxu0
        %v2054 = vadd.f32 0.0, %v2053
        %v2055 = vpop.f32.mrf.mxu0
        %v2056 = vpop.f32.mrf.mxu0
        %v2057 = vadd.f32 0.0, %v2056
        %v2058 = vpop.f32.mrf.mxu0
        %2059 = vmatprep.mubr.bf16.mxu0 0
        %2060 = vmatmul.mubr.bf16.gmra.mxu0 %v1905
        %v2061 = vpop.f32.mrf.mxu0
        %v2062 = vadd.f32 0.0, %v2061
        %v2063 = vpop.f32.mrf.mxu0
        %v2064 = vpop.f32.mrf.mxu0
        %v2065 = vadd.f32 0.0, %v2064
        %v2066 = vpop.f32.mrf.mxu0
        %2067 = vdwg.mxu0
        %v2068 = vadd.f32 %v1678, %v1942
        %v2069 = vadd.f32 %v1679, %v1945
        %v2070 = vadd.f32 %v1680, %v1950
        %v2071 = vadd.f32 %v1681, %v1953
        %v2072 = vadd.f32 %v1682, %v1958
        %v2073 = vadd.f32 %v1683, %v1961
        %v2074 = vadd.f32 %v1684, %v1966
        %v2075 = vadd.f32 %v1685, %v1969
        %v2076 = vadd.f32 %v1686, %v1974
        %v2077 = vadd.f32 %v1687, %v1977
        %v2078 = vadd.f32 %v1688, %v1982
        %v2079 = vadd.f32 %v1689, %v1985
        %v2080 = vadd.f32 %v1690, %v1990
        %v2081 = vadd.f32 %v1691, %v1993
        %v2082 = vadd.f32 %v1692, %v1998
        %v2083 = vadd.f32 %v1693, %v2001
        %v2084 = vadd.f32 %v1694, %v2006
        %v2085 = vadd.f32 %v1695, %v2009
        %v2086 = vadd.f32 %v1696, %v2014
        %v2087 = vadd.f32 %v1697, %v2017
        %v2088 = vadd.f32 %v1698, %v2022
        %v2089 = vadd.f32 %v1699, %v2025
        %v2090 = vadd.f32 %v1700, %v2030
        %v2091 = vadd.f32 %v1701, %v2033
        %v2092 = vadd.f32 %v1702, %v2038
        %v2093 = vadd.f32 %v1703, %v2041
        %v2094 = vadd.f32 %v1704, %v2046
        %v2095 = vadd.f32 %v1705, %v2049
        %v2096 = vadd.f32 %v1706, %v2054
        %v2097 = vadd.f32 %v1707, %v2057
        %v2098 = vadd.f32 %v1708, %v2062
        %v2099 = vadd.f32 %v1709, %v2065
        %v2100 = vld [vmem:[%s1713] sm:$0xf]
        %v2101 = vld [vmem:[%s1713 + $0x4] sm:$0xf]
        %v2102 = vld [vmem:[%s1713 + $0x8] sm:$0x1]
        %v2103 = vld [vmem:[%s1713 + $0xc] sm:$0xf]
        %v2104 = vld [vmem:[%s1713 + $0x10] sm:$0xf]
        %v2105 = vld [vmem:[%s1713 + $0x14] sm:$0x1]
        %v2106 = vld [vmem:[%s1713 + $0x18] sm:$0xf]
        %v2107 = vld [vmem:[%s1713 + $0x1c] sm:$0xf]
        %v2108 = vld [vmem:[%s1713 + $0x20] sm:$0x1]
        %v2109 = vld [vmem:[%s1713 + $0x24] sm:$0xf]
        %v2110 = vld [vmem:[%s1713 + $0x28] sm:$0xf]
        %v2111 = vld [vmem:[%s1713 + $0x2c] sm:$0x1]
        %v2112 = vld [vmem:[%s1713 + $0x30] sm:$0xf]
        %v2113 = vld [vmem:[%s1713 + $0x34] sm:$0xf]
        %v2114 = vld [vmem:[%s1713 + $0x38] sm:$0x1]
        %v2115 = vld [vmem:[%s1713 + $0x3c] sm:$0xf]
        %v2116 = vld [vmem:[%s1713 + $0x40] sm:$0xf]
        %v2117 = vld [vmem:[%s1713 + $0x44] sm:$0x1]
        %v2118 = vld [vmem:[%s1713 + $0x48] sm:$0xf]
        %v2119 = vld [vmem:[%s1713 + $0x4c] sm:$0xf]
        %v2120 = vld [vmem:[%s1713 + $0x50] sm:$0x1]
        %v2121 = vld [vmem:[%s1713 + $0x54] sm:$0xf]
        %v2122 = vld [vmem:[%s1713 + $0x58] sm:$0xf]
        %v2123 = vld [vmem:[%s1713 + $0x5c] sm:$0x1]
        %v2124 = vld [vmem:[%s1713 + $0xd8] sm:$0xf]
        %v2125 = vld [vmem:[%s1713 + $0xdc] sm:$0xf]
        %v2126 = vld [vmem:[%s1713 + $0xe0] sm:$0x1]
        %v2127 = vld [vmem:[%s1713 + $0xe4] sm:$0xf]
        %v2128 = vld [vmem:[%s1713 + $0xe8] sm:$0xf]
        %v2129 = vld [vmem:[%s1713 + $0xec] sm:$0x1]
        %v2130 = vld [vmem:[%s1713 + $0xf0] sm:$0xf]
        %v2131 = vld [vmem:[%s1713 + $0xf4] sm:$0xf]
        %v2132 = vld [vmem:[%s1713 + $0xf8] sm:$0x1]
        %v2133 = vld [vmem:[%s1713 + $0xfc] sm:$0xf]
        %v2134 = vld [vmem:[%s1713 + $0x100] sm:$0xf]
        %v2135 = vld [vmem:[%s1713 + $0x104] sm:$0x1]
        %v2136 = vld [vmem:[%s1713 + $0x108] sm:$0xf]
        %v2137 = vld [vmem:[%s1713 + $0x10c] sm:$0xf]
        %v2138 = vld [vmem:[%s1713 + $0x110] sm:$0x1]
        %v2139 = vld [vmem:[%s1713 + $0x114] sm:$0xf]
        %v2140 = vld [vmem:[%s1713 + $0x118] sm:$0xf]
        %v2141 = vld [vmem:[%s1713 + $0x11c] sm:$0x1]
        %v2142 = vld [vmem:[%s1713 + $0x120] sm:$0xf]
        %v2143 = vld [vmem:[%s1713 + $0x124] sm:$0xf]
        %v2144 = vld [vmem:[%s1713 + $0x128] sm:$0x1]
        %v2145 = vld [vmem:[%s1713 + $0x12c] sm:$0xf]
        %v2146 = vld [vmem:[%s1713 + $0x130] sm:$0xf]
        %v2147 = vld [vmem:[%s1713 + $0x134] sm:$0x1]
        %v2149 = vshrl.u32 %v2100, 16
        %v2151 = vrot.slane %v2149, 4
        %v2152 = vshll.u32 %v2100, 16
        %v2154 = vrot.slane %v2152, 5
        %v2155 = vor.u32 %v2151, %v2154
        %v2156 = vrot.slane %v2155, 4
        %v2158 = vshll.u32 %v2101, 16
        %v2160 = vrot.slane %v2158, 5
        %v2161 = vsel %vm236, %v2156, %v2160
        %v2162 = vshrl.u32 %v2101, 16
        %v2164 = vrot.slane %v2162, 4
        %v2165 = vor.u32 %v2164, %v2160
        %v2166 = vrot.slane %v2165, 4
        %v2168 = vshll.u32 %v2102, 16
        %v2170 = vrot.slane %v2168, 5
        %v2171 = vsel %vm236, %v2166, %v2170
        %v2173 = vshrl.u32 %v2103, 16
        %v2175 = vrot.slane %v2173, 4
        %v2176 = vshll.u32 %v2103, 16
        %v2178 = vrot.slane %v2176, 5
        %v2179 = vor.u32 %v2175, %v2178
        %v2180 = vrot.slane %v2179, 4
        %v2182 = vshll.u32 %v2104, 16
        %v2184 = vrot.slane %v2182, 5
        %v2185 = vsel %vm236, %v2180, %v2184
        %v2186 = vshrl.u32 %v2104, 16
        %v2188 = vrot.slane %v2186, 4
        %v2189 = vor.u32 %v2188, %v2184
        %v2190 = vrot.slane %v2189, 4
        %v2192 = vshll.u32 %v2105, 16
        %v2194 = vrot.slane %v2192, 5
        %v2195 = vsel %vm236, %v2190, %v2194
        %v2197 = vshrl.u32 %v2106, 16
        %v2199 = vrot.slane %v2197, 4
        %v2200 = vshll.u32 %v2106, 16
        %v2202 = vrot.slane %v2200, 5
        %v2203 = vor.u32 %v2199, %v2202
        %v2204 = vrot.slane %v2203, 4
        %v2206 = vshll.u32 %v2107, 16
        %v2208 = vrot.slane %v2206, 5
        %v2209 = vsel %vm236, %v2204, %v2208
        %v2210 = vshrl.u32 %v2107, 16
        %v2212 = vrot.slane %v2210, 4
        %v2213 = vor.u32 %v2212, %v2208
        %v2214 = vrot.slane %v2213, 4
        %v2216 = vshll.u32 %v2108, 16
        %v2218 = vrot.slane %v2216, 5
        %v2219 = vsel %vm236, %v2214, %v2218
        %v2221 = vshrl.u32 %v2109, 16
        %v2223 = vrot.slane %v2221, 4
        %v2224 = vshll.u32 %v2109, 16
        %v2226 = vrot.slane %v2224, 5
        %v2227 = vor.u32 %v2223, %v2226
        %v2228 = vrot.slane %v2227, 4
        %v2230 = vshll.u32 %v2110, 16
        %v2232 = vrot.slane %v2230, 5
        %v2233 = vsel %vm236, %v2228, %v2232
        %v2234 = vshrl.u32 %v2110, 16
        %v2236 = vrot.slane %v2234, 4
        %v2237 = vor.u32 %v2236, %v2232
        %v2238 = vrot.slane %v2237, 4
        %v2240 = vshll.u32 %v2111, 16
        %v2242 = vrot.slane %v2240, 5
        %v2243 = vsel %vm236, %v2238, %v2242
        %v2245 = vshrl.u32 %v2112, 16
        %v2247 = vrot.slane %v2245, 4
        %v2248 = vshll.u32 %v2112, 16
        %v2250 = vrot.slane %v2248, 5
        %v2251 = vor.u32 %v2247, %v2250
        %v2252 = vrot.slane %v2251, 4
        %v2254 = vshll.u32 %v2113, 16
        %v2256 = vrot.slane %v2254, 5
        %v2257 = vsel %vm236, %v2252, %v2256
        %v2258 = vshrl.u32 %v2113, 16
        %v2260 = vrot.slane %v2258, 4
        %v2261 = vor.u32 %v2260, %v2256
        %v2262 = vrot.slane %v2261, 4
        %v2264 = vshll.u32 %v2114, 16
        %v2266 = vrot.slane %v2264, 5
        %v2267 = vsel %vm236, %v2262, %v2266
        %v2269 = vshrl.u32 %v2115, 16
        %v2271 = vrot.slane %v2269, 4
        %v2272 = vshll.u32 %v2115, 16
        %v2274 = vrot.slane %v2272, 5
        %v2275 = vor.u32 %v2271, %v2274
        %v2276 = vrot.slane %v2275, 4
        %v2278 = vshll.u32 %v2116, 16
        %v2280 = vrot.slane %v2278, 5
        %v2281 = vsel %vm236, %v2276, %v2280
        %v2282 = vshrl.u32 %v2116, 16
        %v2284 = vrot.slane %v2282, 4
        %v2285 = vor.u32 %v2284, %v2280
        %v2286 = vrot.slane %v2285, 4
        %v2288 = vshll.u32 %v2117, 16
        %v2290 = vrot.slane %v2288, 5
        %v2291 = vsel %vm236, %v2286, %v2290
        %v2293 = vshrl.u32 %v2118, 16
        %v2295 = vrot.slane %v2293, 4
        %v2296 = vshll.u32 %v2118, 16
        %v2298 = vrot.slane %v2296, 5
        %v2299 = vor.u32 %v2295, %v2298
        %v2300 = vrot.slane %v2299, 4
        %v2302 = vshll.u32 %v2119, 16
        %v2304 = vrot.slane %v2302, 5
        %v2305 = vsel %vm236, %v2300, %v2304
        %v2306 = vshrl.u32 %v2119, 16
        %v2308 = vrot.slane %v2306, 4
        %v2309 = vor.u32 %v2308, %v2304
        %v2310 = vrot.slane %v2309, 4
        %v2312 = vshll.u32 %v2120, 16
        %v2314 = vrot.slane %v2312, 5
        %v2315 = vsel %vm236, %v2310, %v2314
        %v2317 = vshrl.u32 %v2121, 16
        %v2319 = vrot.slane %v2317, 4
        %v2320 = vshll.u32 %v2121, 16
        %v2322 = vrot.slane %v2320, 5
        %v2323 = vor.u32 %v2319, %v2322
        %v2324 = vrot.slane %v2323, 4
        %v2326 = vshll.u32 %v2122, 16
        %v2328 = vrot.slane %v2326, 5
        %v2329 = vsel %vm236, %v2324, %v2328
        %v2330 = vshrl.u32 %v2122, 16
        %v2332 = vrot.slane %v2330, 4
        %v2333 = vor.u32 %v2332, %v2328
        %v2334 = vrot.slane %v2333, 4
        %v2336 = vshll.u32 %v2123, 16
        %v2338 = vrot.slane %v2336, 5
        %v2339 = vsel %vm236, %v2334, %v2338
        %v2341 = vshrl.u32 %v2124, 16
        %v2343 = vrot.slane %v2341, 4
        %v2344 = vshll.u32 %v2124, 16
        %v2346 = vrot.slane %v2344, 5
        %v2347 = vor.u32 %v2343, %v2346
        %v2348 = vrot.slane %v2347, 4
        %v2350 = vshll.u32 %v2125, 16
        %v2352 = vrot.slane %v2350, 5
        %v2353 = vsel %vm236, %v2348, %v2352
        %v2354 = vshrl.u32 %v2125, 16
        %v2356 = vrot.slane %v2354, 4
        %v2357 = vor.u32 %v2356, %v2352
        %v2358 = vrot.slane %v2357, 4
        %v2360 = vshll.u32 %v2126, 16
        %v2362 = vrot.slane %v2360, 5
        %v2363 = vsel %vm236, %v2358, %v2362
        %v2365 = vshrl.u32 %v2127, 16
        %v2367 = vrot.slane %v2365, 4
        %v2368 = vshll.u32 %v2127, 16
        %v2370 = vrot.slane %v2368, 5
        %v2371 = vor.u32 %v2367, %v2370
        %v2372 = vrot.slane %v2371, 4
        %v2374 = vshll.u32 %v2128, 16
        %v2376 = vrot.slane %v2374, 5
        %v2377 = vsel %vm236, %v2372, %v2376
        %v2378 = vshrl.u32 %v2128, 16
        %v2380 = vrot.slane %v2378, 4
        %v2381 = vor.u32 %v2380, %v2376
        %v2382 = vrot.slane %v2381, 4
        %v2384 = vshll.u32 %v2129, 16
        %v2386 = vrot.slane %v2384, 5
        %v2387 = vsel %vm236, %v2382, %v2386
        %v2389 = vshrl.u32 %v2130, 16
        %v2391 = vrot.slane %v2389, 4
        %v2392 = vshll.u32 %v2130, 16
        %v2394 = vrot.slane %v2392, 5
        %v2395 = vor.u32 %v2391, %v2394
        %v2396 = vrot.slane %v2395, 4
        %v2398 = vshll.u32 %v2131, 16
        %v2400 = vrot.slane %v2398, 5
        %v2401 = vsel %vm236, %v2396, %v2400
        %v2402 = vshrl.u32 %v2131, 16
        %v2404 = vrot.slane %v2402, 4
        %v2405 = vor.u32 %v2404, %v2400
        %v2406 = vrot.slane %v2405, 4
        %v2408 = vshll.u32 %v2132, 16
        %v2410 = vrot.slane %v2408, 5
        %v2411 = vsel %vm236, %v2406, %v2410
        %v2413 = vshrl.u32 %v2133, 16
        %v2415 = vrot.slane %v2413, 4
        %v2416 = vshll.u32 %v2133, 16
        %v2418 = vrot.slane %v2416, 5
        %v2419 = vor.u32 %v2415, %v2418
        %v2420 = vrot.slane %v2419, 4
        %v2422 = vshll.u32 %v2134, 16
        %v2424 = vrot.slane %v2422, 5
        %v2425 = vsel %vm236, %v2420, %v2424
        %v2426 = vshrl.u32 %v2134, 16
        %v2428 = vrot.slane %v2426, 4
        %v2429 = vor.u32 %v2428, %v2424
        %v2430 = vrot.slane %v2429, 4
        %v2432 = vshll.u32 %v2135, 16
        %v2434 = vrot.slane %v2432, 5
        %v2435 = vsel %vm236, %v2430, %v2434
        %v2437 = vshrl.u32 %v2136, 16
        %v2439 = vrot.slane %v2437, 4
        %v2440 = vshll.u32 %v2136, 16
        %v2442 = vrot.slane %v2440, 5
        %v2443 = vor.u32 %v2439, %v2442
        %v2444 = vrot.slane %v2443, 4
        %v2446 = vshll.u32 %v2137, 16
        %v2448 = vrot.slane %v2446, 5
        %v2449 = vsel %vm236, %v2444, %v2448
        %v2450 = vshrl.u32 %v2137, 16
        %v2452 = vrot.slane %v2450, 4
        %v2453 = vor.u32 %v2452, %v2448
        %v2454 = vrot.slane %v2453, 4
        %v2456 = vshll.u32 %v2138, 16
        %v2458 = vrot.slane %v2456, 5
        %v2459 = vsel %vm236, %v2454, %v2458
        %v2461 = vshrl.u32 %v2139, 16
        %v2463 = vrot.slane %v2461, 4
        %v2464 = vshll.u32 %v2139, 16
        %v2466 = vrot.slane %v2464, 5
        %v2467 = vor.u32 %v2463, %v2466
        %v2468 = vrot.slane %v2467, 4
        %v2470 = vshll.u32 %v2140, 16
        %v2472 = vrot.slane %v2470, 5
        %v2473 = vsel %vm236, %v2468, %v2472
        %v2474 = vshrl.u32 %v2140, 16
        %v2476 = vrot.slane %v2474, 4
        %v2477 = vor.u32 %v2476, %v2472
        %v2478 = vrot.slane %v2477, 4
        %v2480 = vshll.u32 %v2141, 16
        %v2482 = vrot.slane %v2480, 5
        %v2483 = vsel %vm236, %v2478, %v2482
        %v2485 = vshrl.u32 %v2142, 16
        %v2487 = vrot.slane %v2485, 4
        %v2488 = vshll.u32 %v2142, 16
        %v2490 = vrot.slane %v2488, 5
        %v2491 = vor.u32 %v2487, %v2490
        %v2492 = vrot.slane %v2491, 4
        %v2494 = vshll.u32 %v2143, 16
        %v2496 = vrot.slane %v2494, 5
        %v2497 = vsel %vm236, %v2492, %v2496
        %v2498 = vshrl.u32 %v2143, 16
        %v2500 = vrot.slane %v2498, 4
        %v2501 = vor.u32 %v2500, %v2496
        %v2502 = vrot.slane %v2501, 4
        %v2504 = vshll.u32 %v2144, 16
        %v2506 = vrot.slane %v2504, 5
        %v2507 = vsel %vm236, %v2502, %v2506
        %v2509 = vshrl.u32 %v2145, 16
        %v2511 = vrot.slane %v2509, 4
        %v2512 = vshll.u32 %v2145, 16
        %v2514 = vrot.slane %v2512, 5
        %v2515 = vor.u32 %v2511, %v2514
        %v2516 = vrot.slane %v2515, 4
        %v2518 = vshll.u32 %v2146, 16
        %v2520 = vrot.slane %v2518, 5
        %v2521 = vsel %vm236, %v2516, %v2520
        %v2522 = vshrl.u32 %v2146, 16
        %v2524 = vrot.slane %v2522, 4
        %v2525 = vor.u32 %v2524, %v2520
        %v2526 = vrot.slane %v2525, 4
        %v2528 = vshll.u32 %v2147, 16
        %v2530 = vrot.slane %v2528, 5
        %v2531 = vsel %vm236, %v2526, %v2530
        %s2532 = scalar_lea.vmem %s1, 128
        %v2533 = vld [vmem:[%s2532] sm:$0xf]
        %v2534 = vld [vmem:[%s2532 + $0x4] sm:$0xf]
        %v2535 = vld [vmem:[%s2532 + $0x8] sm:$0xf]
        %v2536 = vld [vmem:[%s2532 + $0xc] sm:$0xf]
        %v2537 = vld [vmem:[%s2532 + $0x10] sm:$0xf]
        %v2538 = vld [vmem:[%s2532 + $0x14] sm:$0xf]
        %v2539 = vld [vmem:[%s2532 + $0x18] sm:$0xf]
        %v2540 = vld [vmem:[%s2532 + $0x1c] sm:$0xf]
        %v2541 = vunpack.c.l.b16 %v2161
        %v2542 = vunpack.c.l.b16 %v2171
        %v2543 = vunpack.c.l.b16 %v2185
        %v2544 = vunpack.c.l.b16 %v2195
        %v2545 = vunpack.c.l.b16 %v2209
        %v2546 = vunpack.c.l.b16 %v2219
        %v2547 = vunpack.c.l.b16 %v2233
        %v2548 = vunpack.c.l.b16 %v2243
        %v2549 = vunpack.c.l.b16 %v2257
        %v2550 = vunpack.c.l.b16 %v2267
        %v2551 = vunpack.c.l.b16 %v2281
        %v2552 = vunpack.c.l.b16 %v2291
        %v2553 = vunpack.c.l.b16 %v2305
        %v2554 = vunpack.c.l.b16 %v2315
        %v2555 = vunpack.c.l.b16 %v2329
        %v2556 = vunpack.c.l.b16 %v2339
        %v2557 = vunpack.c.l.b16 %v2353
        %v2558 = vunpack.c.l.b16 %v2363
        %v2559 = vunpack.c.l.b16 %v2377
        %v2560 = vunpack.c.l.b16 %v2387
        %v2561 = vunpack.c.l.b16 %v2401
        %v2562 = vunpack.c.l.b16 %v2411
        %v2563 = vunpack.c.l.b16 %v2425
        %v2564 = vunpack.c.l.b16 %v2435
        %v2565 = vunpack.c.l.b16 %v2449
        %v2566 = vunpack.c.l.b16 %v2459
        %v2567 = vunpack.c.l.b16 %v2473
        %v2568 = vunpack.c.l.b16 %v2483
        %v2569 = vunpack.c.l.b16 %v2497
        %v2570 = vunpack.c.l.b16 %v2507
        %v2571 = vunpack.c.l.b16 %v2521
        %v2572 = vunpack.c.l.b16 %v2531
        %v2573 = vpack.c.b16 %v2542, %v2541
        %v2574 = vpack.c.b16 %v2544, %v2543
        %v2575 = vpack.c.b16 %v2546, %v2545
        %v2576 = vpack.c.b16 %v2548, %v2547
        %v2577 = vpack.c.b16 %v2550, %v2549
        %v2578 = vpack.c.b16 %v2552, %v2551
        %v2579 = vpack.c.b16 %v2554, %v2553
        %v2580 = vpack.c.b16 %v2556, %v2555
        %v2581 = vpack.c.b16 %v2558, %v2557
        %v2582 = vpack.c.b16 %v2560, %v2559
        %v2583 = vpack.c.b16 %v2562, %v2561
        %v2584 = vpack.c.b16 %v2564, %v2563
        %v2585 = vpack.c.b16 %v2566, %v2565
        %v2586 = vpack.c.b16 %v2568, %v2567
        %v2587 = vpack.c.b16 %v2570, %v2569
        %v2588 = vpack.c.b16 %v2572, %v2571
        %v2597 = vunpack.c.l.b16 %v2533
        %v2598 = vunpack.c.l.b16 %v2534
        %v2599 = vunpack.c.l.b16 %v2535
        %v2600 = vunpack.c.l.b16 %v2536
        %v2601 = vunpack.c.l.b16 %v2537
        %v2602 = vunpack.c.l.b16 %v2538
        %v2603 = vunpack.c.l.b16 %v2539
        %v2604 = vunpack.c.l.b16 %v2540
        %v2605 = vpack.c.b16 %v2598, %v2597
        %v2606 = vpack.c.b16 %v2600, %v2599
        %v2607 = vpack.c.b16 %v2602, %v2601
        %v2608 = vpack.c.b16 %v2604, %v2603
        %v2614 = vsel %vm702, %v2573, 0
        %v2617 = vsel %vm702, %v2574, 0
        %v2620 = vsel %vm702, %v2575, 0
        %v2623 = vsel %vm702, %v2576, 0
        %v2626 = vsel %vm702, %v2577, 0
        %v2629 = vsel %vm702, %v2578, 0
        %v2632 = vsel %vm702, %v2579, 0
        %v2635 = vsel %vm702, %v2580, 0
        %v2638 = vsel %vm702, %v2581, 0
        %v2641 = vsel %vm702, %v2582, 0
        %v2644 = vsel %vm702, %v2583, 0
        %v2647 = vsel %vm702, %v2584, 0
        %v2650 = vsel %vm702, %v2585, 0
        %v2653 = vsel %vm702, %v2586, 0
        %v2656 = vsel %vm702, %v2587, 0
        %v2659 = vsel %vm702, %v2588, 0
        %2661 = vmatprep.subr.bf16.mxu0 0
        %2662 = vmatpush1.bf16.msra.mxu0 0
        %2663 = vmatprep.subr.bf16.mxu0 0
        %2664 = vmatpush1.bf16.msra.mxu0 0
        %2665 = vmatprep.subr.bf16.mxu0 0
        %2666 = vmatpush1.bf16.msra.mxu0 0
        %2667 = vmatprep.subr.bf16.mxu0 0
        %2668 = vmatpush1.bf16.msra.mxu0 0
        %2669 = vmatprep.subr.bf16.mxu0 0
        %2670 = vmatpush1.bf16.msra.mxu0 %v2608
        %2671 = vmatprep.subr.bf16.mxu0 0
        %2672 = vmatpush1.bf16.msra.mxu0 %v2607
        %2673 = vmatprep.subr.bf16.mxu0 0
        %2674 = vmatpush1.bf16.msra.mxu0 %v2606
        %2675 = vmatprep.subr.bf16.mxu0 0
        %2676 = vmatpush1.bf16.msra.mxu0 %v2605
        %2677 = vmatprep.subr.bf16.mxu0 0
        %2678 = vmatpush2.bf16.msra.mxu0 0
        %2679 = vmatprep.subr.bf16.mxu0 0
        %2680 = vmatpush2.bf16.msra.mxu0 0
        %2681 = vmatprep.subr.bf16.mxu0 0
        %2682 = vmatpush2.bf16.msra.mxu0 0
        %2683 = vmatprep.subr.bf16.mxu0 0
        %2684 = vmatpush2.bf16.msra.mxu0 0
        %2685 = vmatprep.subr.bf16.mxu0 0
        %2686 = vmatpush2.bf16.msra.mxu0 0
        %2687 = vmatprep.subr.bf16.mxu0 0
        %2688 = vmatpush2.bf16.msra.mxu0 0
        %2689 = vmatprep.subr.bf16.mxu0 0
        %2690 = vmatpush2.bf16.msra.mxu0 0
        %2691 = vmatprep.subr.bf16.mxu0 0
        %2692 = vmatpush2.bf16.msra.mxu0 0
        %2693 = vmatprep.mubr.bf16.mxu0 0
        %2694 = vmatmul.mubr.bf16.gmra.mxu0 %v2614
        %v2695 = vpop.f32.mrf.mxu0
        %v2696 = vadd.f32 0.0, %v2695
        %v2697 = vpop.f32.mrf.mxu0
        %v2698 = vpop.f32.mrf.mxu0
        %v2699 = vadd.f32 0.0, %v2698
        %v2700 = vpop.f32.mrf.mxu0
        %2701 = vmatprep.mubr.bf16.mxu0 0
        %2702 = vmatmul.mubr.bf16.gmra.mxu0 %v2617
        %v2703 = vpop.f32.mrf.mxu0
        %v2704 = vadd.f32 0.0, %v2703
        %v2705 = vpop.f32.mrf.mxu0
        %v2706 = vpop.f32.mrf.mxu0
        %v2707 = vadd.f32 0.0, %v2706
        %v2708 = vpop.f32.mrf.mxu0
        %2709 = vmatprep.mubr.bf16.mxu0 0
        %2710 = vmatmul.mubr.bf16.gmra.mxu0 %v2620
        %v2711 = vpop.f32.mrf.mxu0
        %v2712 = vadd.f32 0.0, %v2711
        %v2713 = vpop.f32.mrf.mxu0
        %v2714 = vpop.f32.mrf.mxu0
        %v2715 = vadd.f32 0.0, %v2714
        %v2716 = vpop.f32.mrf.mxu0
        %2717 = vmatprep.mubr.bf16.mxu0 0
        %2718 = vmatmul.mubr.bf16.gmra.mxu0 %v2623
        %v2719 = vpop.f32.mrf.mxu0
        %v2720 = vadd.f32 0.0, %v2719
        %v2721 = vpop.f32.mrf.mxu0
        %v2722 = vpop.f32.mrf.mxu0
        %v2723 = vadd.f32 0.0, %v2722
        %v2724 = vpop.f32.mrf.mxu0
        %2725 = vmatprep.mubr.bf16.mxu0 0
        %2726 = vmatmul.mubr.bf16.gmra.mxu0 %v2626
        %v2727 = vpop.f32.mrf.mxu0
        %v2728 = vadd.f32 0.0, %v2727
        %v2729 = vpop.f32.mrf.mxu0
        %v2730 = vpop.f32.mrf.mxu0
        %v2731 = vadd.f32 0.0, %v2730
        %v2732 = vpop.f32.mrf.mxu0
        %2733 = vmatprep.mubr.bf16.mxu0 0
        %2734 = vmatmul.mubr.bf16.gmra.mxu0 %v2629
        %v2735 = vpop.f32.mrf.mxu0
        %v2736 = vadd.f32 0.0, %v2735
        %v2737 = vpop.f32.mrf.mxu0
        %v2738 = vpop.f32.mrf.mxu0
        %v2739 = vadd.f32 0.0, %v2738
        %v2740 = vpop.f32.mrf.mxu0
        %2741 = vmatprep.mubr.bf16.mxu0 0
        %2742 = vmatmul.mubr.bf16.gmra.mxu0 %v2632
        %v2743 = vpop.f32.mrf.mxu0
        %v2744 = vadd.f32 0.0, %v2743
        %v2745 = vpop.f32.mrf.mxu0
        %v2746 = vpop.f32.mrf.mxu0
        %v2747 = vadd.f32 0.0, %v2746
        %v2748 = vpop.f32.mrf.mxu0
        %2749 = vmatprep.mubr.bf16.mxu0 0
        %2750 = vmatmul.mubr.bf16.gmra.mxu0 %v2635
        %v2751 = vpop.f32.mrf.mxu0
        %v2752 = vadd.f32 0.0, %v2751
        %v2753 = vpop.f32.mrf.mxu0
        %v2754 = vpop.f32.mrf.mxu0
        %v2755 = vadd.f32 0.0, %v2754
        %v2756 = vpop.f32.mrf.mxu0
        %2757 = vmatprep.mubr.bf16.mxu0 0
        %2758 = vmatmul.mubr.bf16.gmra.mxu0 %v2638
        %v2759 = vpop.f32.mrf.mxu0
        %v2760 = vadd.f32 0.0, %v2759
        %v2761 = vpop.f32.mrf.mxu0
        %v2762 = vpop.f32.mrf.mxu0
        %v2763 = vadd.f32 0.0, %v2762
        %v2764 = vpop.f32.mrf.mxu0
        %2765 = vmatprep.mubr.bf16.mxu0 0
        %2766 = vmatmul.mubr.bf16.gmra.mxu0 %v2641
        %v2767 = vpop.f32.mrf.mxu0
        %v2768 = vadd.f32 0.0, %v2767
        %v2769 = vpop.f32.mrf.mxu0
        %v2770 = vpop.f32.mrf.mxu0
        %v2771 = vadd.f32 0.0, %v2770
        %v2772 = vpop.f32.mrf.mxu0
        %2773 = vmatprep.mubr.bf16.mxu0 0
        %2774 = vmatmul.mubr.bf16.gmra.mxu0 %v2644
        %v2775 = vpop.f32.mrf.mxu0
        %v2776 = vadd.f32 0.0, %v2775
        %v2777 = vpop.f32.mrf.mxu0
        %v2778 = vpop.f32.mrf.mxu0
        %v2779 = vadd.f32 0.0, %v2778
        %v2780 = vpop.f32.mrf.mxu0
        %2781 = vmatprep.mubr.bf16.mxu0 0
        %2782 = vmatmul.mubr.bf16.gmra.mxu0 %v2647
        %v2783 = vpop.f32.mrf.mxu0
        %v2784 = vadd.f32 0.0, %v2783
        %v2785 = vpop.f32.mrf.mxu0
        %v2786 = vpop.f32.mrf.mxu0
        %v2787 = vadd.f32 0.0, %v2786
        %v2788 = vpop.f32.mrf.mxu0
        %2789 = vmatprep.mubr.bf16.mxu0 0
        %2790 = vmatmul.mubr.bf16.gmra.mxu0 %v2650
        %v2791 = vpop.f32.mrf.mxu0
        %v2792 = vadd.f32 0.0, %v2791
        %v2793 = vpop.f32.mrf.mxu0
        %v2794 = vpop.f32.mrf.mxu0
        %v2795 = vadd.f32 0.0, %v2794
        %v2796 = vpop.f32.mrf.mxu0
        %2797 = vmatprep.mubr.bf16.mxu0 0
        %2798 = vmatmul.mubr.bf16.gmra.mxu0 %v2653
        %v2799 = vpop.f32.mrf.mxu0
        %v2800 = vadd.f32 0.0, %v2799
        %v2801 = vpop.f32.mrf.mxu0
        %v2802 = vpop.f32.mrf.mxu0
        %v2803 = vadd.f32 0.0, %v2802
        %v2804 = vpop.f32.mrf.mxu0
        %2805 = vmatprep.mubr.bf16.mxu0 0
        %2806 = vmatmul.mubr.bf16.gmra.mxu0 %v2656
        %v2807 = vpop.f32.mrf.mxu0
        %v2808 = vadd.f32 0.0, %v2807
        %v2809 = vpop.f32.mrf.mxu0
        %v2810 = vpop.f32.mrf.mxu0
        %v2811 = vadd.f32 0.0, %v2810
        %v2812 = vpop.f32.mrf.mxu0
        %2813 = vmatprep.mubr.bf16.mxu0 0
        %2814 = vmatmul.mubr.bf16.gmra.mxu0 %v2659
        %v2815 = vpop.f32.mrf.mxu0
        %v2816 = vadd.f32 0.0, %v2815
        %v2817 = vpop.f32.mrf.mxu0
        %v2818 = vpop.f32.mrf.mxu0
        %v2819 = vadd.f32 0.0, %v2818
        %v2820 = vpop.f32.mrf.mxu0
        %2821 = vdwg.mxu0
        %v2822 = vadd.f32 %v2068, %v2696
        %v2823 = vadd.f32 %v2069, %v2699
        %v2824 = vadd.f32 %v2070, %v2704
        %v2825 = vadd.f32 %v2071, %v2707
        %v2826 = vadd.f32 %v2072, %v2712
        %v2827 = vadd.f32 %v2073, %v2715
        %v2828 = vadd.f32 %v2074, %v2720
        %v2829 = vadd.f32 %v2075, %v2723
        %v2830 = vadd.f32 %v2076, %v2728
        %v2831 = vadd.f32 %v2077, %v2731
        %v2832 = vadd.f32 %v2078, %v2736
        %v2833 = vadd.f32 %v2079, %v2739
        %v2834 = vadd.f32 %v2080, %v2744
        %v2835 = vadd.f32 %v2081, %v2747
        %v2836 = vadd.f32 %v2082, %v2752
        %v2837 = vadd.f32 %v2083, %v2755
        %v2838 = vadd.f32 %v2084, %v2760
        %v2839 = vadd.f32 %v2085, %v2763
        %v2840 = vadd.f32 %v2086, %v2768
        %v2841 = vadd.f32 %v2087, %v2771
        %v2842 = vadd.f32 %v2088, %v2776
        %v2843 = vadd.f32 %v2089, %v2779
        %v2844 = vadd.f32 %v2090, %v2784
        %v2845 = vadd.f32 %v2091, %v2787
        %v2846 = vadd.f32 %v2092, %v2792
        %v2847 = vadd.f32 %v2093, %v2795
        %v2848 = vadd.f32 %v2094, %v2800
        %v2849 = vadd.f32 %v2095, %v2803
        %v2850 = vadd.f32 %v2096, %v2808
        %v2851 = vadd.f32 %v2097, %v2811
        %v2852 = vadd.f32 %v2098, %v2816
        %v2853 = vadd.f32 %v2099, %v2819
        %v2854 = vld [vmem:[%s1713] sm:$0xe]
        %v2855 = vld [vmem:[%s1713 + $0xc] sm:$0xe]
        %v2856 = vld [vmem:[%s1713 + $0x18] sm:$0xe]
        %v2857 = vld [vmem:[%s1713 + $0x24] sm:$0xe]
        %v2858 = vld [vmem:[%s1713 + $0x30] sm:$0xe]
        %v2859 = vld [vmem:[%s1713 + $0x3c] sm:$0xe]
        %v2860 = vld [vmem:[%s1713 + $0x48] sm:$0xe]
        %v2861 = vld [vmem:[%s1713 + $0x54] sm:$0xe]
        %v2862 = vld [vmem:[%s1713 + $0xd8] sm:$0xe]
        %v2863 = vld [vmem:[%s1713 + $0xe4] sm:$0xe]
        %v2864 = vld [vmem:[%s1713 + $0xf0] sm:$0xe]
        %v2865 = vld [vmem:[%s1713 + $0xfc] sm:$0xe]
        %v2866 = vld [vmem:[%s1713 + $0x108] sm:$0xe]
        %v2867 = vld [vmem:[%s1713 + $0x114] sm:$0xe]
        %v2868 = vld [vmem:[%s1713 + $0x120] sm:$0xe]
        %v2869 = vld [vmem:[%s1713 + $0x12c] sm:$0xe]
        %v2918 = vrot.slane %v2854, 5
        %v2919 = vrot.slane %v2918, 4
        %v2920 = vrot.slane %v2101, 5
        %v2921 = vsel %vm1275, %v2919, %v2920
        %v2922 = vrot.slane %v2920, 4
        %v2923 = vrot.slane %v2102, 5
        %v2924 = vsel %vm1275, %v2922, %v2923
        %v2925 = vrot.slane %v2855, 5
        %v2926 = vrot.slane %v2925, 4
        %v2927 = vrot.slane %v2104, 5
        %v2928 = vsel %vm1275, %v2926, %v2927
        %v2929 = vrot.slane %v2927, 4
        %v2930 = vrot.slane %v2105, 5
        %v2931 = vsel %vm1275, %v2929, %v2930
        %v2932 = vrot.slane %v2856, 5
        %v2933 = vrot.slane %v2932, 4
        %v2934 = vrot.slane %v2107, 5
        %v2935 = vsel %vm1275, %v2933, %v2934
        %v2936 = vrot.slane %v2934, 4
        %v2937 = vrot.slane %v2108, 5
        %v2938 = vsel %vm1275, %v2936, %v2937
        %v2939 = vrot.slane %v2857, 5
        %v2940 = vrot.slane %v2939, 4
        %v2941 = vrot.slane %v2110, 5
        %v2942 = vsel %vm1275, %v2940, %v2941
        %v2943 = vrot.slane %v2941, 4
        %v2944 = vrot.slane %v2111, 5
        %v2945 = vsel %vm1275, %v2943, %v2944
        %v2946 = vrot.slane %v2858, 5
        %v2947 = vrot.slane %v2946, 4
        %v2948 = vrot.slane %v2113, 5
        %v2949 = vsel %vm1275, %v2947, %v2948
        %v2950 = vrot.slane %v2948, 4
        %v2951 = vrot.slane %v2114, 5
        %v2952 = vsel %vm1275, %v2950, %v2951
        %v2953 = vrot.slane %v2859, 5
        %v2954 = vrot.slane %v2953, 4
        %v2955 = vrot.slane %v2116, 5
        %v2956 = vsel %vm1275, %v2954, %v2955
        %v2957 = vrot.slane %v2955, 4
        %v2958 = vrot.slane %v2117, 5
        %v2959 = vsel %vm1275, %v2957, %v2958
        %v2960 = vrot.slane %v2860, 5
        %v2961 = vrot.slane %v2960, 4
        %v2962 = vrot.slane %v2119, 5
        %v2963 = vsel %vm1275, %v2961, %v2962
        %v2964 = vrot.slane %v2962, 4
        %v2965 = vrot.slane %v2120, 5
        %v2966 = vsel %vm1275, %v2964, %v2965
        %v2967 = vrot.slane %v2861, 5
        %v2968 = vrot.slane %v2967, 4
        %v2969 = vrot.slane %v2122, 5
        %v2970 = vsel %vm1275, %v2968, %v2969
        %v2971 = vrot.slane %v2969, 4
        %v2972 = vrot.slane %v2123, 5
        %v2973 = vsel %vm1275, %v2971, %v2972
        %v2974 = vrot.slane %v2862, 5
        %v2975 = vrot.slane %v2974, 4
        %v2976 = vrot.slane %v2125, 5
        %v2977 = vsel %vm1275, %v2975, %v2976
        %v2978 = vrot.slane %v2976, 4
        %v2979 = vrot.slane %v2126, 5
        %v2980 = vsel %vm1275, %v2978, %v2979
        %v2981 = vrot.slane %v2863, 5
        %v2982 = vrot.slane %v2981, 4
        %v2983 = vrot.slane %v2128, 5
        %v2984 = vsel %vm1275, %v2982, %v2983
        %v2985 = vrot.slane %v2983, 4
        %v2986 = vrot.slane %v2129, 5
        %v2987 = vsel %vm1275, %v2985, %v2986
        %v2988 = vrot.slane %v2864, 5
        %v2989 = vrot.slane %v2988, 4
        %v2990 = vrot.slane %v2131, 5
        %v2991 = vsel %vm1275, %v2989, %v2990
        %v2992 = vrot.slane %v2990, 4
        %v2993 = vrot.slane %v2132, 5
        %v2994 = vsel %vm1275, %v2992, %v2993
        %v2995 = vrot.slane %v2865, 5
        %v2996 = vrot.slane %v2995, 4
        %v2997 = vrot.slane %v2134, 5
        %v2998 = vsel %vm1275, %v2996, %v2997
        %v2999 = vrot.slane %v2997, 4
        %v3000 = vrot.slane %v2135, 5
        %v3001 = vsel %vm1275, %v2999, %v3000
        %v3002 = vrot.slane %v2866, 5
        %v3003 = vrot.slane %v3002, 4
        %v3004 = vrot.slane %v2137, 5
        %v3005 = vsel %vm1275, %v3003, %v3004
        %v3006 = vrot.slane %v3004, 4
        %v3007 = vrot.slane %v2138, 5
        %v3008 = vsel %vm1275, %v3006, %v3007
        %v3009 = vrot.slane %v2867, 5
        %v3010 = vrot.slane %v3009, 4
        %v3011 = vrot.slane %v2140, 5
        %v3012 = vsel %vm1275, %v3010, %v3011
        %v3013 = vrot.slane %v3011, 4
        %v3014 = vrot.slane %v2141, 5
        %v3015 = vsel %vm1275, %v3013, %v3014
        %v3016 = vrot.slane %v2868, 5
        %v3017 = vrot.slane %v3016, 4
        %v3018 = vrot.slane %v2143, 5
        %v3019 = vsel %vm1275, %v3017, %v3018
        %v3020 = vrot.slane %v3018, 4
        %v3021 = vrot.slane %v2144, 5
        %v3022 = vsel %vm1275, %v3020, %v3021
        %v3023 = vrot.slane %v2869, 5
        %v3024 = vrot.slane %v3023, 4
        %v3025 = vrot.slane %v2146, 5
        %v3026 = vsel %vm1275, %v3024, %v3025
        %v3027 = vrot.slane %v3025, 4
        %v3028 = vrot.slane %v2147, 5
        %v3029 = vsel %vm1275, %v3027, %v3028
        %s3030 = scalar_lea.vmem %s1, 160
        %v3031 = vld [vmem:[%s3030] sm:$0xf]
        %v3032 = vld [vmem:[%s3030 + $0x4] sm:$0xf]
        %v3033 = vld [vmem:[%s3030 + $0x8] sm:$0xf]
        %v3034 = vld [vmem:[%s3030 + $0xc] sm:$0xf]
        %v3035 = vld [vmem:[%s3030 + $0x10] sm:$0xf]
        %v3036 = vld [vmem:[%s3030 + $0x14] sm:$0xf]
        %v3037 = vld [vmem:[%s3030 + $0x18] sm:$0xf]
        %v3038 = vld [vmem:[%s3030 + $0x1c] sm:$0xf]
        %v3039 = vunpack.c.l.b16 %v2921
        %v3040 = vunpack.c.l.b16 %v2924
        %v3041 = vunpack.c.l.b16 %v2928
        %v3042 = vunpack.c.l.b16 %v2931
        %v3043 = vunpack.c.l.b16 %v2935
        %v3044 = vunpack.c.l.b16 %v2938
        %v3045 = vunpack.c.l.b16 %v2942
        %v3046 = vunpack.c.l.b16 %v2945
        %v3047 = vunpack.c.l.b16 %v2949
        %v3048 = vunpack.c.l.b16 %v2952
        %v3049 = vunpack.c.l.b16 %v2956
        %v3050 = vunpack.c.l.b16 %v2959
        %v3051 = vunpack.c.l.b16 %v2963
        %v3052 = vunpack.c.l.b16 %v2966
        %v3053 = vunpack.c.l.b16 %v2970
        %v3054 = vunpack.c.l.b16 %v2973
        %v3055 = vunpack.c.l.b16 %v2977
        %v3056 = vunpack.c.l.b16 %v2980
        %v3057 = vunpack.c.l.b16 %v2984
        %v3058 = vunpack.c.l.b16 %v2987
        %v3059 = vunpack.c.l.b16 %v2991
        %v3060 = vunpack.c.l.b16 %v2994
        %v3061 = vunpack.c.l.b16 %v2998
        %v3062 = vunpack.c.l.b16 %v3001
        %v3063 = vunpack.c.l.b16 %v3005
        %v3064 = vunpack.c.l.b16 %v3008
        %v3065 = vunpack.c.l.b16 %v3012
        %v3066 = vunpack.c.l.b16 %v3015
        %v3067 = vunpack.c.l.b16 %v3019
        %v3068 = vunpack.c.l.b16 %v3022
        %v3069 = vunpack.c.l.b16 %v3026
        %v3070 = vunpack.c.l.b16 %v3029
        %v3071 = vpack.c.b16 %v3040, %v3039
        %v3072 = vpack.c.b16 %v3042, %v3041
        %v3073 = vpack.c.b16 %v3044, %v3043
        %v3074 = vpack.c.b16 %v3046, %v3045
        %v3075 = vpack.c.b16 %v3048, %v3047
        %v3076 = vpack.c.b16 %v3050, %v3049
        %v3077 = vpack.c.b16 %v3052, %v3051
        %v3078 = vpack.c.b16 %v3054, %v3053
        %v3079 = vpack.c.b16 %v3056, %v3055
        %v3080 = vpack.c.b16 %v3058, %v3057
        %v3081 = vpack.c.b16 %v3060, %v3059
        %v3082 = vpack.c.b16 %v3062, %v3061
        %v3083 = vpack.c.b16 %v3064, %v3063
        %v3084 = vpack.c.b16 %v3066, %v3065
        %v3085 = vpack.c.b16 %v3068, %v3067
        %v3086 = vpack.c.b16 %v3070, %v3069
        %v3095 = vunpack.c.l.b16 %v3031
        %v3096 = vunpack.c.l.b16 %v3032
        %v3097 = vunpack.c.l.b16 %v3033
        %v3098 = vunpack.c.l.b16 %v3034
        %v3099 = vunpack.c.l.b16 %v3035
        %v3100 = vunpack.c.l.b16 %v3036
        %v3101 = vunpack.c.l.b16 %v3037
        %v3102 = vunpack.c.l.b16 %v3038
        %v3103 = vpack.c.b16 %v3096, %v3095
        %v3104 = vpack.c.b16 %v3098, %v3097
        %v3105 = vpack.c.b16 %v3100, %v3099
        %v3106 = vpack.c.b16 %v3102, %v3101
        %v3112 = vsel %vm702, %v3071, 0
        %v3115 = vsel %vm702, %v3072, 0
        %v3118 = vsel %vm702, %v3073, 0
        %v3121 = vsel %vm702, %v3074, 0
        %v3124 = vsel %vm702, %v3075, 0
        %v3127 = vsel %vm702, %v3076, 0
        %v3130 = vsel %vm702, %v3077, 0
        %v3133 = vsel %vm702, %v3078, 0
        %v3136 = vsel %vm702, %v3079, 0
        %v3139 = vsel %vm702, %v3080, 0
        %v3142 = vsel %vm702, %v3081, 0
        %v3145 = vsel %vm702, %v3082, 0
        %v3148 = vsel %vm702, %v3083, 0
        %v3151 = vsel %vm702, %v3084, 0
        %v3154 = vsel %vm702, %v3085, 0
        %v3157 = vsel %vm702, %v3086, 0
        %3159 = vmatprep.subr.bf16.mxu0 0
        %3160 = vmatpush1.bf16.msra.mxu0 0
        %3161 = vmatprep.subr.bf16.mxu0 0
        %3162 = vmatpush1.bf16.msra.mxu0 0
        %3163 = vmatprep.subr.bf16.mxu0 0
        %3164 = vmatpush1.bf16.msra.mxu0 0
        %3165 = vmatprep.subr.bf16.mxu0 0
        %3166 = vmatpush1.bf16.msra.mxu0 0
        %3167 = vmatprep.subr.bf16.mxu0 0
        %3168 = vmatpush1.bf16.msra.mxu0 %v3106
        %3169 = vmatprep.subr.bf16.mxu0 0
        %3170 = vmatpush1.bf16.msra.mxu0 %v3105
        %3171 = vmatprep.subr.bf16.mxu0 0
        %3172 = vmatpush1.bf16.msra.mxu0 %v3104
        %3173 = vmatprep.subr.bf16.mxu0 0
        %3174 = vmatpush1.bf16.msra.mxu0 %v3103
        %3175 = vmatprep.subr.bf16.mxu0 0
        %3176 = vmatpush2.bf16.msra.mxu0 0
        %3177 = vmatprep.subr.bf16.mxu0 0
        %3178 = vmatpush2.bf16.msra.mxu0 0
        %3179 = vmatprep.subr.bf16.mxu0 0
        %3180 = vmatpush2.bf16.msra.mxu0 0
        %3181 = vmatprep.subr.bf16.mxu0 0
        %3182 = vmatpush2.bf16.msra.mxu0 0
        %3183 = vmatprep.subr.bf16.mxu0 0
        %3184 = vmatpush2.bf16.msra.mxu0 0
        %3185 = vmatprep.subr.bf16.mxu0 0
        %3186 = vmatpush2.bf16.msra.mxu0 0
        %3187 = vmatprep.subr.bf16.mxu0 0
        %3188 = vmatpush2.bf16.msra.mxu0 0
        %3189 = vmatprep.subr.bf16.mxu0 0
        %3190 = vmatpush2.bf16.msra.mxu0 0
        %3191 = vmatprep.mubr.bf16.mxu0 0
        %3192 = vmatmul.mubr.bf16.gmra.mxu0 %v3112
        %v3193 = vpop.f32.mrf.mxu0
        %v3194 = vadd.f32 0.0, %v3193
        %v3195 = vpop.f32.mrf.mxu0
        %v3196 = vpop.f32.mrf.mxu0
        %v3197 = vadd.f32 0.0, %v3196
        %v3198 = vpop.f32.mrf.mxu0
        %3199 = vmatprep.mubr.bf16.mxu0 0
        %3200 = vmatmul.mubr.bf16.gmra.mxu0 %v3115
        %v3201 = vpop.f32.mrf.mxu0
        %v3202 = vadd.f32 0.0, %v3201
        %v3203 = vpop.f32.mrf.mxu0
        %v3204 = vpop.f32.mrf.mxu0
        %v3205 = vadd.f32 0.0, %v3204
        %v3206 = vpop.f32.mrf.mxu0
        %3207 = vmatprep.mubr.bf16.mxu0 0
        %3208 = vmatmul.mubr.bf16.gmra.mxu0 %v3118
        %v3209 = vpop.f32.mrf.mxu0
        %v3210 = vadd.f32 0.0, %v3209
        %v3211 = vpop.f32.mrf.mxu0
        %v3212 = vpop.f32.mrf.mxu0
        %v3213 = vadd.f32 0.0, %v3212
        %v3214 = vpop.f32.mrf.mxu0
        %3215 = vmatprep.mubr.bf16.mxu0 0
        %3216 = vmatmul.mubr.bf16.gmra.mxu0 %v3121
        %v3217 = vpop.f32.mrf.mxu0
        %v3218 = vadd.f32 0.0, %v3217
        %v3219 = vpop.f32.mrf.mxu0
        %v3220 = vpop.f32.mrf.mxu0
        %v3221 = vadd.f32 0.0, %v3220
        %v3222 = vpop.f32.mrf.mxu0
        %3223 = vmatprep.mubr.bf16.mxu0 0
        %3224 = vmatmul.mubr.bf16.gmra.mxu0 %v3124
        %v3225 = vpop.f32.mrf.mxu0
        %v3226 = vadd.f32 0.0, %v3225
        %v3227 = vpop.f32.mrf.mxu0
        %v3228 = vpop.f32.mrf.mxu0
        %v3229 = vadd.f32 0.0, %v3228
        %v3230 = vpop.f32.mrf.mxu0
        %3231 = vmatprep.mubr.bf16.mxu0 0
        %3232 = vmatmul.mubr.bf16.gmra.mxu0 %v3127
        %v3233 = vpop.f32.mrf.mxu0
        %v3234 = vadd.f32 0.0, %v3233
        %v3235 = vpop.f32.mrf.mxu0
        %v3236 = vpop.f32.mrf.mxu0
        %v3237 = vadd.f32 0.0, %v3236
        %v3238 = vpop.f32.mrf.mxu0
        %3239 = vmatprep.mubr.bf16.mxu0 0
        %3240 = vmatmul.mubr.bf16.gmra.mxu0 %v3130
        %v3241 = vpop.f32.mrf.mxu0
        %v3242 = vadd.f32 0.0, %v3241
        %v3243 = vpop.f32.mrf.mxu0
        %v3244 = vpop.f32.mrf.mxu0
        %v3245 = vadd.f32 0.0, %v3244
        %v3246 = vpop.f32.mrf.mxu0
        %3247 = vmatprep.mubr.bf16.mxu0 0
        %3248 = vmatmul.mubr.bf16.gmra.mxu0 %v3133
        %v3249 = vpop.f32.mrf.mxu0
        %v3250 = vadd.f32 0.0, %v3249
        %v3251 = vpop.f32.mrf.mxu0
        %v3252 = vpop.f32.mrf.mxu0
        %v3253 = vadd.f32 0.0, %v3252
        %v3254 = vpop.f32.mrf.mxu0
        %3255 = vmatprep.mubr.bf16.mxu0 0
        %3256 = vmatmul.mubr.bf16.gmra.mxu0 %v3136
        %v3257 = vpop.f32.mrf.mxu0
        %v3258 = vadd.f32 0.0, %v3257
        %v3259 = vpop.f32.mrf.mxu0
        %v3260 = vpop.f32.mrf.mxu0
        %v3261 = vadd.f32 0.0, %v3260
        %v3262 = vpop.f32.mrf.mxu0
        %3263 = vmatprep.mubr.bf16.mxu0 0
        %3264 = vmatmul.mubr.bf16.gmra.mxu0 %v3139
        %v3265 = vpop.f32.mrf.mxu0
        %v3266 = vadd.f32 0.0, %v3265
        %v3267 = vpop.f32.mrf.mxu0
        %v3268 = vpop.f32.mrf.mxu0
        %v3269 = vadd.f32 0.0, %v3268
        %v3270 = vpop.f32.mrf.mxu0
        %3271 = vmatprep.mubr.bf16.mxu0 0
        %3272 = vmatmul.mubr.bf16.gmra.mxu0 %v3142
        %v3273 = vpop.f32.mrf.mxu0
        %v3274 = vadd.f32 0.0, %v3273
        %v3275 = vpop.f32.mrf.mxu0
        %v3276 = vpop.f32.mrf.mxu0
        %v3277 = vadd.f32 0.0, %v3276
        %v3278 = vpop.f32.mrf.mxu0
        %3279 = vmatprep.mubr.bf16.mxu0 0
        %3280 = vmatmul.mubr.bf16.gmra.mxu0 %v3145
        %v3281 = vpop.f32.mrf.mxu0
        %v3282 = vadd.f32 0.0, %v3281
        %v3283 = vpop.f32.mrf.mxu0
        %v3284 = vpop.f32.mrf.mxu0
        %v3285 = vadd.f32 0.0, %v3284
        %v3286 = vpop.f32.mrf.mxu0
        %3287 = vmatprep.mubr.bf16.mxu0 0
        %3288 = vmatmul.mubr.bf16.gmra.mxu0 %v3148
        %v3289 = vpop.f32.mrf.mxu0
        %v3290 = vadd.f32 0.0, %v3289
        %v3291 = vpop.f32.mrf.mxu0
        %v3292 = vpop.f32.mrf.mxu0
        %v3293 = vadd.f32 0.0, %v3292
        %v3294 = vpop.f32.mrf.mxu0
        %3295 = vmatprep.mubr.bf16.mxu0 0
        %3296 = vmatmul.mubr.bf16.gmra.mxu0 %v3151
        %v3297 = vpop.f32.mrf.mxu0
        %v3298 = vadd.f32 0.0, %v3297
        %v3299 = vpop.f32.mrf.mxu0
        %v3300 = vpop.f32.mrf.mxu0
        %v3301 = vadd.f32 0.0, %v3300
        %v3302 = vpop.f32.mrf.mxu0
        %3303 = vmatprep.mubr.bf16.mxu0 0
        %3304 = vmatmul.mubr.bf16.gmra.mxu0 %v3154
        %v3305 = vpop.f32.mrf.mxu0
        %v3306 = vadd.f32 0.0, %v3305
        %v3307 = vpop.f32.mrf.mxu0
        %v3308 = vpop.f32.mrf.mxu0
        %v3309 = vadd.f32 0.0, %v3308
        %v3310 = vpop.f32.mrf.mxu0
        %3311 = vmatprep.mubr.bf16.mxu0 0
        %3312 = vmatmul.mubr.bf16.gmra.mxu0 %v3157
        %v3313 = vpop.f32.mrf.mxu0
        %v3314 = vadd.f32 0.0, %v3313
        %v3315 = vpop.f32.mrf.mxu0
        %v3316 = vpop.f32.mrf.mxu0
        %v3317 = vadd.f32 0.0, %v3316
        %v3318 = vpop.f32.mrf.mxu0
        %3319 = vdwg.mxu0
        %v3320 = vadd.f32 %v2822, %v3194
        %v3321 = vadd.f32 %v2823, %v3197
        %v3322 = vadd.f32 %v2824, %v3202
        %v3323 = vadd.f32 %v2825, %v3205
        %v3324 = vadd.f32 %v2826, %v3210
        %v3325 = vadd.f32 %v2827, %v3213
        %v3326 = vadd.f32 %v2828, %v3218
        %v3327 = vadd.f32 %v2829, %v3221
        %v3328 = vadd.f32 %v2830, %v3226
        %v3329 = vadd.f32 %v2831, %v3229
        %v3330 = vadd.f32 %v2832, %v3234
        %v3331 = vadd.f32 %v2833, %v3237
        %v3332 = vadd.f32 %v2834, %v3242
        %v3333 = vadd.f32 %v2835, %v3245
        %v3334 = vadd.f32 %v2836, %v3250
        %v3335 = vadd.f32 %v2837, %v3253
        %v3336 = vadd.f32 %v2838, %v3258
        %v3337 = vadd.f32 %v2839, %v3261
        %v3338 = vadd.f32 %v2840, %v3266
        %v3339 = vadd.f32 %v2841, %v3269
        %v3340 = vadd.f32 %v2842, %v3274
        %v3341 = vadd.f32 %v2843, %v3277
        %v3342 = vadd.f32 %v2844, %v3282
        %v3343 = vadd.f32 %v2845, %v3285
        %v3344 = vadd.f32 %v2846, %v3290
        %v3345 = vadd.f32 %v2847, %v3293
        %v3346 = vadd.f32 %v2848, %v3298
        %v3347 = vadd.f32 %v2849, %v3301
        %v3348 = vadd.f32 %v2850, %v3306
        %v3349 = vadd.f32 %v2851, %v3309
        %v3350 = vadd.f32 %v2852, %v3314
        %v3351 = vadd.f32 %v2853, %v3317
        %s3352 = sadd.s32 %s174, 2
        %s3353 = smul.u32 %s3352, 3
        %s3354 = smul.addr %s3353, 4
        %s3355 = scalar_lea.vmem %s0, %s3354
        %v3356 = vld [vmem:[%s3355] sm:$0xf]
        %v3357 = vld [vmem:[%s3355 + $0x4] sm:$0xf]
        %v3358 = vld [vmem:[%s3355 + $0xc] sm:$0xf]
        %v3359 = vld [vmem:[%s3355 + $0x10] sm:$0xf]
        %v3360 = vld [vmem:[%s3355 + $0x18] sm:$0xf]
        %v3361 = vld [vmem:[%s3355 + $0x1c] sm:$0xf]
        %v3362 = vld [vmem:[%s3355 + $0x24] sm:$0xf]
        %v3363 = vld [vmem:[%s3355 + $0x28] sm:$0xf]
        %v3364 = vld [vmem:[%s3355 + $0x30] sm:$0xf]
        %v3365 = vld [vmem:[%s3355 + $0x34] sm:$0xf]
        %v3366 = vld [vmem:[%s3355 + $0x3c] sm:$0xf]
        %v3367 = vld [vmem:[%s3355 + $0x40] sm:$0xf]
        %v3368 = vld [vmem:[%s3355 + $0x48] sm:$0xf]
        %v3369 = vld [vmem:[%s3355 + $0x4c] sm:$0xf]
        %v3370 = vld [vmem:[%s3355 + $0x54] sm:$0xf]
        %v3371 = vld [vmem:[%s3355 + $0x58] sm:$0xf]
        %v3372 = vld [vmem:[%s3355 + $0xd8] sm:$0xf]
        %v3373 = vld [vmem:[%s3355 + $0xdc] sm:$0xf]
        %v3374 = vld [vmem:[%s3355 + $0xe4] sm:$0xf]
        %v3375 = vld [vmem:[%s3355 + $0xe8] sm:$0xf]
        %v3376 = vld [vmem:[%s3355 + $0xf0] sm:$0xf]
        %v3377 = vld [vmem:[%s3355 + $0xf4] sm:$0xf]
        %v3378 = vld [vmem:[%s3355 + $0xfc] sm:$0xf]
        %v3379 = vld [vmem:[%s3355 + $0x100] sm:$0xf]
        %v3380 = vld [vmem:[%s3355 + $0x108] sm:$0xf]
        %v3381 = vld [vmem:[%s3355 + $0x10c] sm:$0xf]
        %v3382 = vld [vmem:[%s3355 + $0x114] sm:$0xf]
        %v3383 = vld [vmem:[%s3355 + $0x118] sm:$0xf]
        %v3384 = vld [vmem:[%s3355 + $0x120] sm:$0xf]
        %v3385 = vld [vmem:[%s3355 + $0x124] sm:$0xf]
        %v3386 = vld [vmem:[%s3355 + $0x12c] sm:$0xf]
        %v3387 = vld [vmem:[%s3355 + $0x130] sm:$0xf]
        %s3388 = scalar_lea.vmem %s1, 192
        %v3389 = vld [vmem:[%s3388] sm:$0xf]
        %v3390 = vld [vmem:[%s3388 + $0x4] sm:$0xf]
        %v3391 = vld [vmem:[%s3388 + $0x8] sm:$0xf]
        %v3392 = vld [vmem:[%s3388 + $0xc] sm:$0xf]
        %v3393 = vld [vmem:[%s3388 + $0x10] sm:$0xf]
        %v3394 = vld [vmem:[%s3388 + $0x14] sm:$0xf]
        %v3395 = vld [vmem:[%s3388 + $0x18] sm:$0xf]
        %v3396 = vld [vmem:[%s3388 + $0x1c] sm:$0xf]
        %v3429 = vunpack.c.l.b16 %v3356
        %v3430 = vunpack.c.l.b16 %v3357
        %v3431 = vunpack.c.l.b16 %v3358
        %v3432 = vunpack.c.l.b16 %v3359
        %v3433 = vunpack.c.l.b16 %v3360
        %v3434 = vunpack.c.l.b16 %v3361
        %v3435 = vunpack.c.l.b16 %v3362
        %v3436 = vunpack.c.l.b16 %v3363
        %v3437 = vunpack.c.l.b16 %v3364
        %v3438 = vunpack.c.l.b16 %v3365
        %v3439 = vunpack.c.l.b16 %v3366
        %v3440 = vunpack.c.l.b16 %v3367
        %v3441 = vunpack.c.l.b16 %v3368
        %v3442 = vunpack.c.l.b16 %v3369
        %v3443 = vunpack.c.l.b16 %v3370
        %v3444 = vunpack.c.l.b16 %v3371
        %v3445 = vunpack.c.l.b16 %v3372
        %v3446 = vunpack.c.l.b16 %v3373
        %v3447 = vunpack.c.l.b16 %v3374
        %v3448 = vunpack.c.l.b16 %v3375
        %v3449 = vunpack.c.l.b16 %v3376
        %v3450 = vunpack.c.l.b16 %v3377
        %v3451 = vunpack.c.l.b16 %v3378
        %v3452 = vunpack.c.l.b16 %v3379
        %v3453 = vunpack.c.l.b16 %v3380
        %v3454 = vunpack.c.l.b16 %v3381
        %v3455 = vunpack.c.l.b16 %v3382
        %v3456 = vunpack.c.l.b16 %v3383
        %v3457 = vunpack.c.l.b16 %v3384
        %v3458 = vunpack.c.l.b16 %v3385
        %v3459 = vunpack.c.l.b16 %v3386
        %v3460 = vunpack.c.l.b16 %v3387
        %v3461 = vpack.c.b16 %v3430, %v3429
        %v3462 = vpack.c.b16 %v3432, %v3431
        %v3463 = vpack.c.b16 %v3434, %v3433
        %v3464 = vpack.c.b16 %v3436, %v3435
        %v3465 = vpack.c.b16 %v3438, %v3437
        %v3466 = vpack.c.b16 %v3440, %v3439
        %v3467 = vpack.c.b16 %v3442, %v3441
        %v3468 = vpack.c.b16 %v3444, %v3443
        %v3469 = vpack.c.b16 %v3446, %v3445
        %v3470 = vpack.c.b16 %v3448, %v3447
        %v3471 = vpack.c.b16 %v3450, %v3449
        %v3472 = vpack.c.b16 %v3452, %v3451
        %v3473 = vpack.c.b16 %v3454, %v3453
        %v3474 = vpack.c.b16 %v3456, %v3455
        %v3475 = vpack.c.b16 %v3458, %v3457
        %v3476 = vpack.c.b16 %v3460, %v3459
        %v3485 = vunpack.c.l.b16 %v3389
        %v3486 = vunpack.c.l.b16 %v3390
        %v3487 = vunpack.c.l.b16 %v3391
        %v3488 = vunpack.c.l.b16 %v3392
        %v3489 = vunpack.c.l.b16 %v3393
        %v3490 = vunpack.c.l.b16 %v3394
        %v3491 = vunpack.c.l.b16 %v3395
        %v3492 = vunpack.c.l.b16 %v3396
        %v3493 = vpack.c.b16 %v3486, %v3485
        %v3494 = vpack.c.b16 %v3488, %v3487
        %v3495 = vpack.c.b16 %v3490, %v3489
        %v3496 = vpack.c.b16 %v3492, %v3491
        %v3502 = vsel %vm702, %v3461, 0
        %v3505 = vsel %vm702, %v3462, 0
        %v3508 = vsel %vm702, %v3463, 0
        %v3511 = vsel %vm702, %v3464, 0
        %v3514 = vsel %vm702, %v3465, 0
        %v3517 = vsel %vm702, %v3466, 0
        %v3520 = vsel %vm702, %v3467, 0
        %v3523 = vsel %vm702, %v3468, 0
        %v3526 = vsel %vm702, %v3469, 0
        %v3529 = vsel %vm702, %v3470, 0
        %v3532 = vsel %vm702, %v3471, 0
        %v3535 = vsel %vm702, %v3472, 0
        %v3538 = vsel %vm702, %v3473, 0
        %v3541 = vsel %vm702, %v3474, 0
        %v3544 = vsel %vm702, %v3475, 0
        %v3547 = vsel %vm702, %v3476, 0
        %3549 = vmatprep.subr.bf16.mxu0 0
        %3550 = vmatpush1.bf16.msra.mxu0 0
        %3551 = vmatprep.subr.bf16.mxu0 0
        %3552 = vmatpush1.bf16.msra.mxu0 0
        %3553 = vmatprep.subr.bf16.mxu0 0
        %3554 = vmatpush1.bf16.msra.mxu0 0
        %3555 = vmatprep.subr.bf16.mxu0 0
        %3556 = vmatpush1.bf16.msra.mxu0 0
        %3557 = vmatprep.subr.bf16.mxu0 0
        %3558 = vmatpush1.bf16.msra.mxu0 %v3496
        %3559 = vmatprep.subr.bf16.mxu0 0
        %3560 = vmatpush1.bf16.msra.mxu0 %v3495
        %3561 = vmatprep.subr.bf16.mxu0 0
        %3562 = vmatpush1.bf16.msra.mxu0 %v3494
        %3563 = vmatprep.subr.bf16.mxu0 0
        %3564 = vmatpush1.bf16.msra.mxu0 %v3493
        %3565 = vmatprep.subr.bf16.mxu0 0
        %3566 = vmatpush2.bf16.msra.mxu0 0
        %3567 = vmatprep.subr.bf16.mxu0 0
        %3568 = vmatpush2.bf16.msra.mxu0 0
        %3569 = vmatprep.subr.bf16.mxu0 0
        %3570 = vmatpush2.bf16.msra.mxu0 0
        %3571 = vmatprep.subr.bf16.mxu0 0
        %3572 = vmatpush2.bf16.msra.mxu0 0
        %3573 = vmatprep.subr.bf16.mxu0 0
        %3574 = vmatpush2.bf16.msra.mxu0 0
        %3575 = vmatprep.subr.bf16.mxu0 0
        %3576 = vmatpush2.bf16.msra.mxu0 0
        %3577 = vmatprep.subr.bf16.mxu0 0
        %3578 = vmatpush2.bf16.msra.mxu0 0
        %3579 = vmatprep.subr.bf16.mxu0 0
        %3580 = vmatpush2.bf16.msra.mxu0 0
        %3581 = vmatprep.mubr.bf16.mxu0 0
        %3582 = vmatmul.mubr.bf16.gmra.mxu0 %v3502
        %v3583 = vpop.f32.mrf.mxu0
        %v3584 = vadd.f32 0.0, %v3583
        %v3585 = vpop.f32.mrf.mxu0
        %v3586 = vpop.f32.mrf.mxu0
        %v3587 = vadd.f32 0.0, %v3586
        %v3588 = vpop.f32.mrf.mxu0
        %3589 = vmatprep.mubr.bf16.mxu0 0
        %3590 = vmatmul.mubr.bf16.gmra.mxu0 %v3505
        %v3591 = vpop.f32.mrf.mxu0
        %v3592 = vadd.f32 0.0, %v3591
        %v3593 = vpop.f32.mrf.mxu0
        %v3594 = vpop.f32.mrf.mxu0
        %v3595 = vadd.f32 0.0, %v3594
        %v3596 = vpop.f32.mrf.mxu0
        %3597 = vmatprep.mubr.bf16.mxu0 0
        %3598 = vmatmul.mubr.bf16.gmra.mxu0 %v3508
        %v3599 = vpop.f32.mrf.mxu0
        %v3600 = vadd.f32 0.0, %v3599
        %v3601 = vpop.f32.mrf.mxu0
        %v3602 = vpop.f32.mrf.mxu0
        %v3603 = vadd.f32 0.0, %v3602
        %v3604 = vpop.f32.mrf.mxu0
        %3605 = vmatprep.mubr.bf16.mxu0 0
        %3606 = vmatmul.mubr.bf16.gmra.mxu0 %v3511
        %v3607 = vpop.f32.mrf.mxu0
        %v3608 = vadd.f32 0.0, %v3607
        %v3609 = vpop.f32.mrf.mxu0
        %v3610 = vpop.f32.mrf.mxu0
        %v3611 = vadd.f32 0.0, %v3610
        %v3612 = vpop.f32.mrf.mxu0
        %3613 = vmatprep.mubr.bf16.mxu0 0
        %3614 = vmatmul.mubr.bf16.gmra.mxu0 %v3514
        %v3615 = vpop.f32.mrf.mxu0
        %v3616 = vadd.f32 0.0, %v3615
        %v3617 = vpop.f32.mrf.mxu0
        %v3618 = vpop.f32.mrf.mxu0
        %v3619 = vadd.f32 0.0, %v3618
        %v3620 = vpop.f32.mrf.mxu0
        %3621 = vmatprep.mubr.bf16.mxu0 0
        %3622 = vmatmul.mubr.bf16.gmra.mxu0 %v3517
        %v3623 = vpop.f32.mrf.mxu0
        %v3624 = vadd.f32 0.0, %v3623
        %v3625 = vpop.f32.mrf.mxu0
        %v3626 = vpop.f32.mrf.mxu0
        %v3627 = vadd.f32 0.0, %v3626
        %v3628 = vpop.f32.mrf.mxu0
        %3629 = vmatprep.mubr.bf16.mxu0 0
        %3630 = vmatmul.mubr.bf16.gmra.mxu0 %v3520
        %v3631 = vpop.f32.mrf.mxu0
        %v3632 = vadd.f32 0.0, %v3631
        %v3633 = vpop.f32.mrf.mxu0
        %v3634 = vpop.f32.mrf.mxu0
        %v3635 = vadd.f32 0.0, %v3634
        %v3636 = vpop.f32.mrf.mxu0
        %3637 = vmatprep.mubr.bf16.mxu0 0
        %3638 = vmatmul.mubr.bf16.gmra.mxu0 %v3523
        %v3639 = vpop.f32.mrf.mxu0
        %v3640 = vadd.f32 0.0, %v3639
        %v3641 = vpop.f32.mrf.mxu0
        %v3642 = vpop.f32.mrf.mxu0
        %v3643 = vadd.f32 0.0, %v3642
        %v3644 = vpop.f32.mrf.mxu0
        %3645 = vmatprep.mubr.bf16.mxu0 0
        %3646 = vmatmul.mubr.bf16.gmra.mxu0 %v3526
        %v3647 = vpop.f32.mrf.mxu0
        %v3648 = vadd.f32 0.0, %v3647
        %v3649 = vpop.f32.mrf.mxu0
        %v3650 = vpop.f32.mrf.mxu0
        %v3651 = vadd.f32 0.0, %v3650
        %v3652 = vpop.f32.mrf.mxu0
        %3653 = vmatprep.mubr.bf16.mxu0 0
        %3654 = vmatmul.mubr.bf16.gmra.mxu0 %v3529
        %v3655 = vpop.f32.mrf.mxu0
        %v3656 = vadd.f32 0.0, %v3655
        %v3657 = vpop.f32.mrf.mxu0
        %v3658 = vpop.f32.mrf.mxu0
        %v3659 = vadd.f32 0.0, %v3658
        %v3660 = vpop.f32.mrf.mxu0
        %3661 = vmatprep.mubr.bf16.mxu0 0
        %3662 = vmatmul.mubr.bf16.gmra.mxu0 %v3532
        %v3663 = vpop.f32.mrf.mxu0
        %v3664 = vadd.f32 0.0, %v3663
        %v3665 = vpop.f32.mrf.mxu0
        %v3666 = vpop.f32.mrf.mxu0
        %v3667 = vadd.f32 0.0, %v3666
        %v3668 = vpop.f32.mrf.mxu0
        %3669 = vmatprep.mubr.bf16.mxu0 0
        %3670 = vmatmul.mubr.bf16.gmra.mxu0 %v3535
        %v3671 = vpop.f32.mrf.mxu0
        %v3672 = vadd.f32 0.0, %v3671
        %v3673 = vpop.f32.mrf.mxu0
        %v3674 = vpop.f32.mrf.mxu0
        %v3675 = vadd.f32 0.0, %v3674
        %v3676 = vpop.f32.mrf.mxu0
        %3677 = vmatprep.mubr.bf16.mxu0 0
        %3678 = vmatmul.mubr.bf16.gmra.mxu0 %v3538
        %v3679 = vpop.f32.mrf.mxu0
        %v3680 = vadd.f32 0.0, %v3679
        %v3681 = vpop.f32.mrf.mxu0
        %v3682 = vpop.f32.mrf.mxu0
        %v3683 = vadd.f32 0.0, %v3682
        %v3684 = vpop.f32.mrf.mxu0
        %3685 = vmatprep.mubr.bf16.mxu0 0
        %3686 = vmatmul.mubr.bf16.gmra.mxu0 %v3541
        %v3687 = vpop.f32.mrf.mxu0
        %v3688 = vadd.f32 0.0, %v3687
        %v3689 = vpop.f32.mrf.mxu0
        %v3690 = vpop.f32.mrf.mxu0
        %v3691 = vadd.f32 0.0, %v3690
        %v3692 = vpop.f32.mrf.mxu0
        %3693 = vmatprep.mubr.bf16.mxu0 0
        %3694 = vmatmul.mubr.bf16.gmra.mxu0 %v3544
        %v3695 = vpop.f32.mrf.mxu0
        %v3696 = vadd.f32 0.0, %v3695
        %v3697 = vpop.f32.mrf.mxu0
        %v3698 = vpop.f32.mrf.mxu0
        %v3699 = vadd.f32 0.0, %v3698
        %v3700 = vpop.f32.mrf.mxu0
        %3701 = vmatprep.mubr.bf16.mxu0 0
        %3702 = vmatmul.mubr.bf16.gmra.mxu0 %v3547
        %v3703 = vpop.f32.mrf.mxu0
        %v3704 = vadd.f32 0.0, %v3703
        %v3705 = vpop.f32.mrf.mxu0
        %v3706 = vpop.f32.mrf.mxu0
        %v3707 = vadd.f32 0.0, %v3706
        %v3708 = vpop.f32.mrf.mxu0
        %3709 = vdwg.mxu0
        %v3710 = vadd.f32 %v3320, %v3584
        %v3711 = vadd.f32 %v3321, %v3587
        %v3712 = vadd.f32 %v3322, %v3592
        %v3713 = vadd.f32 %v3323, %v3595
        %v3714 = vadd.f32 %v3324, %v3600
        %v3715 = vadd.f32 %v3325, %v3603
        %v3716 = vadd.f32 %v3326, %v3608
        %v3717 = vadd.f32 %v3327, %v3611
        %v3718 = vadd.f32 %v3328, %v3616
        %v3719 = vadd.f32 %v3329, %v3619
        %v3720 = vadd.f32 %v3330, %v3624
        %v3721 = vadd.f32 %v3331, %v3627
        %v3722 = vadd.f32 %v3332, %v3632
        %v3723 = vadd.f32 %v3333, %v3635
        %v3724 = vadd.f32 %v3334, %v3640
        %v3725 = vadd.f32 %v3335, %v3643
        %v3726 = vadd.f32 %v3336, %v3648
        %v3727 = vadd.f32 %v3337, %v3651
        %v3728 = vadd.f32 %v3338, %v3656
        %v3729 = vadd.f32 %v3339, %v3659
        %v3730 = vadd.f32 %v3340, %v3664
        %v3731 = vadd.f32 %v3341, %v3667
        %v3732 = vadd.f32 %v3342, %v3672
        %v3733 = vadd.f32 %v3343, %v3675
        %v3734 = vadd.f32 %v3344, %v3680
        %v3735 = vadd.f32 %v3345, %v3683
        %v3736 = vadd.f32 %v3346, %v3688
        %v3737 = vadd.f32 %v3347, %v3691
        %v3738 = vadd.f32 %v3348, %v3696
        %v3739 = vadd.f32 %v3349, %v3699
        %v3740 = vadd.f32 %v3350, %v3704
        %v3741 = vadd.f32 %v3351, %v3707
        %v3742 = vld [vmem:[%s3355] sm:$0xf]
        %v3743 = vld [vmem:[%s3355 + $0x4] sm:$0xf]
        %v3744 = vld [vmem:[%s3355 + $0x8] sm:$0x1]
        %v3745 = vld [vmem:[%s3355 + $0xc] sm:$0xf]
        %v3746 = vld [vmem:[%s3355 + $0x10] sm:$0xf]
        %v3747 = vld [vmem:[%s3355 + $0x14] sm:$0x1]
        %v3748 = vld [vmem:[%s3355 + $0x18] sm:$0xf]
        %v3749 = vld [vmem:[%s3355 + $0x1c] sm:$0xf]
        %v3750 = vld [vmem:[%s3355 + $0x20] sm:$0x1]
        %v3751 = vld [vmem:[%s3355 + $0x24] sm:$0xf]
        %v3752 = vld [vmem:[%s3355 + $0x28] sm:$0xf]
        %v3753 = vld [vmem:[%s3355 + $0x2c] sm:$0x1]
        %v3754 = vld [vmem:[%s3355 + $0x30] sm:$0xf]
        %v3755 = vld [vmem:[%s3355 + $0x34] sm:$0xf]
        %v3756 = vld [vmem:[%s3355 + $0x38] sm:$0x1]
        %v3757 = vld [vmem:[%s3355 + $0x3c] sm:$0xf]
        %v3758 = vld [vmem:[%s3355 + $0x40] sm:$0xf]
        %v3759 = vld [vmem:[%s3355 + $0x44] sm:$0x1]
        %v3760 = vld [vmem:[%s3355 + $0x48] sm:$0xf]
        %v3761 = vld [vmem:[%s3355 + $0x4c] sm:$0xf]
        %v3762 = vld [vmem:[%s3355 + $0x50] sm:$0x1]
        %v3763 = vld [vmem:[%s3355 + $0x54] sm:$0xf]
        %v3764 = vld [vmem:[%s3355 + $0x58] sm:$0xf]
        %v3765 = vld [vmem:[%s3355 + $0x5c] sm:$0x1]
        %v3766 = vld [vmem:[%s3355 + $0xd8] sm:$0xf]
        %v3767 = vld [vmem:[%s3355 + $0xdc] sm:$0xf]
        %v3768 = vld [vmem:[%s3355 + $0xe0] sm:$0x1]
        %v3769 = vld [vmem:[%s3355 + $0xe4] sm:$0xf]
        %v3770 = vld [vmem:[%s3355 + $0xe8] sm:$0xf]
        %v3771 = vld [vmem:[%s3355 + $0xec] sm:$0x1]
        %v3772 = vld [vmem:[%s3355 + $0xf0] sm:$0xf]
        %v3773 = vld [vmem:[%s3355 + $0xf4] sm:$0xf]
        %v3774 = vld [vmem:[%s3355 + $0xf8] sm:$0x1]
        %v3775 = vld [vmem:[%s3355 + $0xfc] sm:$0xf]
        %v3776 = vld [vmem:[%s3355 + $0x100] sm:$0xf]
        %v3777 = vld [vmem:[%s3355 + $0x104] sm:$0x1]
        %v3778 = vld [vmem:[%s3355 + $0x108] sm:$0xf]
        %v3779 = vld [vmem:[%s3355 + $0x10c] sm:$0xf]
        %v3780 = vld [vmem:[%s3355 + $0x110] sm:$0x1]
        %v3781 = vld [vmem:[%s3355 + $0x114] sm:$0xf]
        %v3782 = vld [vmem:[%s3355 + $0x118] sm:$0xf]
        %v3783 = vld [vmem:[%s3355 + $0x11c] sm:$0x1]
        %v3784 = vld [vmem:[%s3355 + $0x120] sm:$0xf]
        %v3785 = vld [vmem:[%s3355 + $0x124] sm:$0xf]
        %v3786 = vld [vmem:[%s3355 + $0x128] sm:$0x1]
        %v3787 = vld [vmem:[%s3355 + $0x12c] sm:$0xf]
        %v3788 = vld [vmem:[%s3355 + $0x130] sm:$0xf]
        %v3789 = vld [vmem:[%s3355 + $0x134] sm:$0x1]
        %v3791 = vshrl.u32 %v3742, 16
        %v3793 = vrot.slane %v3791, 4
        %v3794 = vshll.u32 %v3742, 16
        %v3796 = vrot.slane %v3794, 5
        %v3797 = vor.u32 %v3793, %v3796
        %v3798 = vrot.slane %v3797, 4
        %v3800 = vshll.u32 %v3743, 16
        %v3802 = vrot.slane %v3800, 5
        %v3803 = vsel %vm236, %v3798, %v3802
        %v3804 = vshrl.u32 %v3743, 16
        %v3806 = vrot.slane %v3804, 4
        %v3807 = vor.u32 %v3806, %v3802
        %v3808 = vrot.slane %v3807, 4
        %v3810 = vshll.u32 %v3744, 16
        %v3812 = vrot.slane %v3810, 5
        %v3813 = vsel %vm236, %v3808, %v3812
        %v3815 = vshrl.u32 %v3745, 16
        %v3817 = vrot.slane %v3815, 4
        %v3818 = vshll.u32 %v3745, 16
        %v3820 = vrot.slane %v3818, 5
        %v3821 = vor.u32 %v3817, %v3820
        %v3822 = vrot.slane %v3821, 4
        %v3824 = vshll.u32 %v3746, 16
        %v3826 = vrot.slane %v3824, 5
        %v3827 = vsel %vm236, %v3822, %v3826
        %v3828 = vshrl.u32 %v3746, 16
        %v3830 = vrot.slane %v3828, 4
        %v3831 = vor.u32 %v3830, %v3826
        %v3832 = vrot.slane %v3831, 4
        %v3834 = vshll.u32 %v3747, 16
        %v3836 = vrot.slane %v3834, 5
        %v3837 = vsel %vm236, %v3832, %v3836
        %v3839 = vshrl.u32 %v3748, 16
        %v3841 = vrot.slane %v3839, 4
        %v3842 = vshll.u32 %v3748, 16
        %v3844 = vrot.slane %v3842, 5
        %v3845 = vor.u32 %v3841, %v3844
        %v3846 = vrot.slane %v3845, 4
        %v3848 = vshll.u32 %v3749, 16
        %v3850 = vrot.slane %v3848, 5
        %v3851 = vsel %vm236, %v3846, %v3850
        %v3852 = vshrl.u32 %v3749, 16
        %v3854 = vrot.slane %v3852, 4
        %v3855 = vor.u32 %v3854, %v3850
        %v3856 = vrot.slane %v3855, 4
        %v3858 = vshll.u32 %v3750, 16
        %v3860 = vrot.slane %v3858, 5
        %v3861 = vsel %vm236, %v3856, %v3860
        %v3863 = vshrl.u32 %v3751, 16
        %v3865 = vrot.slane %v3863, 4
        %v3866 = vshll.u32 %v3751, 16
        %v3868 = vrot.slane %v3866, 5
        %v3869 = vor.u32 %v3865, %v3868
        %v3870 = vrot.slane %v3869, 4
        %v3872 = vshll.u32 %v3752, 16
        %v3874 = vrot.slane %v3872, 5
        %v3875 = vsel %vm236, %v3870, %v3874
        %v3876 = vshrl.u32 %v3752, 16
        %v3878 = vrot.slane %v3876, 4
        %v3879 = vor.u32 %v3878, %v3874
        %v3880 = vrot.slane %v3879, 4
        %v3882 = vshll.u32 %v3753, 16
        %v3884 = vrot.slane %v3882, 5
        %v3885 = vsel %vm236, %v3880, %v3884
        %v3887 = vshrl.u32 %v3754, 16
        %v3889 = vrot.slane %v3887, 4
        %v3890 = vshll.u32 %v3754, 16
        %v3892 = vrot.slane %v3890, 5
        %v3893 = vor.u32 %v3889, %v3892
        %v3894 = vrot.slane %v3893, 4
        %v3896 = vshll.u32 %v3755, 16
        %v3898 = vrot.slane %v3896, 5
        %v3899 = vsel %vm236, %v3894, %v3898
        %v3900 = vshrl.u32 %v3755, 16
        %v3902 = vrot.slane %v3900, 4
        %v3903 = vor.u32 %v3902, %v3898
        %v3904 = vrot.slane %v3903, 4
        %v3906 = vshll.u32 %v3756, 16
        %v3908 = vrot.slane %v3906, 5
        %v3909 = vsel %vm236, %v3904, %v3908
        %v3911 = vshrl.u32 %v3757, 16
        %v3913 = vrot.slane %v3911, 4
        %v3914 = vshll.u32 %v3757, 16
        %v3916 = vrot.slane %v3914, 5
        %v3917 = vor.u32 %v3913, %v3916
        %v3918 = vrot.slane %v3917, 4
        %v3920 = vshll.u32 %v3758, 16
        %v3922 = vrot.slane %v3920, 5
        %v3923 = vsel %vm236, %v3918, %v3922
        %v3924 = vshrl.u32 %v3758, 16
        %v3926 = vrot.slane %v3924, 4
        %v3927 = vor.u32 %v3926, %v3922
        %v3928 = vrot.slane %v3927, 4
        %v3930 = vshll.u32 %v3759, 16
        %v3932 = vrot.slane %v3930, 5
        %v3933 = vsel %vm236, %v3928, %v3932
        %v3935 = vshrl.u32 %v3760, 16
        %v3937 = vrot.slane %v3935, 4
        %v3938 = vshll.u32 %v3760, 16
        %v3940 = vrot.slane %v3938, 5
        %v3941 = vor.u32 %v3937, %v3940
        %v3942 = vrot.slane %v3941, 4
        %v3944 = vshll.u32 %v3761, 16
        %v3946 = vrot.slane %v3944, 5
        %v3947 = vsel %vm236, %v3942, %v3946
        %v3948 = vshrl.u32 %v3761, 16
        %v3950 = vrot.slane %v3948, 4
        %v3951 = vor.u32 %v3950, %v3946
        %v3952 = vrot.slane %v3951, 4
        %v3954 = vshll.u32 %v3762, 16
        %v3956 = vrot.slane %v3954, 5
        %v3957 = vsel %vm236, %v3952, %v3956
        %v3959 = vshrl.u32 %v3763, 16
        %v3961 = vrot.slane %v3959, 4
        %v3962 = vshll.u32 %v3763, 16
        %v3964 = vrot.slane %v3962, 5
        %v3965 = vor.u32 %v3961, %v3964
        %v3966 = vrot.slane %v3965, 4
        %v3968 = vshll.u32 %v3764, 16
        %v3970 = vrot.slane %v3968, 5
        %v3971 = vsel %vm236, %v3966, %v3970
        %v3972 = vshrl.u32 %v3764, 16
        %v3974 = vrot.slane %v3972, 4
        %v3975 = vor.u32 %v3974, %v3970
        %v3976 = vrot.slane %v3975, 4
        %v3978 = vshll.u32 %v3765, 16
        %v3980 = vrot.slane %v3978, 5
        %v3981 = vsel %vm236, %v3976, %v3980
        %v3983 = vshrl.u32 %v3766, 16
        %v3985 = vrot.slane %v3983, 4
        %v3986 = vshll.u32 %v3766, 16
        %v3988 = vrot.slane %v3986, 5
        %v3989 = vor.u32 %v3985, %v3988
        %v3990 = vrot.slane %v3989, 4
        %v3992 = vshll.u32 %v3767, 16
        %v3994 = vrot.slane %v3992, 5
        %v3995 = vsel %vm236, %v3990, %v3994
        %v3996 = vshrl.u32 %v3767, 16
        %v3998 = vrot.slane %v3996, 4
        %v3999 = vor.u32 %v3998, %v3994
        %v4000 = vrot.slane %v3999, 4
        %v4002 = vshll.u32 %v3768, 16
        %v4004 = vrot.slane %v4002, 5
        %v4005 = vsel %vm236, %v4000, %v4004
        %v4007 = vshrl.u32 %v3769, 16
        %v4009 = vrot.slane %v4007, 4
        %v4010 = vshll.u32 %v3769, 16
        %v4012 = vrot.slane %v4010, 5
        %v4013 = vor.u32 %v4009, %v4012
        %v4014 = vrot.slane %v4013, 4
        %v4016 = vshll.u32 %v3770, 16
        %v4018 = vrot.slane %v4016, 5
        %v4019 = vsel %vm236, %v4014, %v4018
        %v4020 = vshrl.u32 %v3770, 16
        %v4022 = vrot.slane %v4020, 4
        %v4023 = vor.u32 %v4022, %v4018
        %v4024 = vrot.slane %v4023, 4
        %v4026 = vshll.u32 %v3771, 16
        %v4028 = vrot.slane %v4026, 5
        %v4029 = vsel %vm236, %v4024, %v4028
        %v4031 = vshrl.u32 %v3772, 16
        %v4033 = vrot.slane %v4031, 4
        %v4034 = vshll.u32 %v3772, 16
        %v4036 = vrot.slane %v4034, 5
        %v4037 = vor.u32 %v4033, %v4036
        %v4038 = vrot.slane %v4037, 4
        %v4040 = vshll.u32 %v3773, 16
        %v4042 = vrot.slane %v4040, 5
        %v4043 = vsel %vm236, %v4038, %v4042
        %v4044 = vshrl.u32 %v3773, 16
        %v4046 = vrot.slane %v4044, 4
        %v4047 = vor.u32 %v4046, %v4042
        %v4048 = vrot.slane %v4047, 4
        %v4050 = vshll.u32 %v3774, 16
        %v4052 = vrot.slane %v4050, 5
        %v4053 = vsel %vm236, %v4048, %v4052
        %v4055 = vshrl.u32 %v3775, 16
        %v4057 = vrot.slane %v4055, 4
        %v4058 = vshll.u32 %v3775, 16
        %v4060 = vrot.slane %v4058, 5
        %v4061 = vor.u32 %v4057, %v4060
        %v4062 = vrot.slane %v4061, 4
        %v4064 = vshll.u32 %v3776, 16
        %v4066 = vrot.slane %v4064, 5
        %v4067 = vsel %vm236, %v4062, %v4066
        %v4068 = vshrl.u32 %v3776, 16
        %v4070 = vrot.slane %v4068, 4
        %v4071 = vor.u32 %v4070, %v4066
        %v4072 = vrot.slane %v4071, 4
        %v4074 = vshll.u32 %v3777, 16
        %v4076 = vrot.slane %v4074, 5
        %v4077 = vsel %vm236, %v4072, %v4076
        %v4079 = vshrl.u32 %v3778, 16
        %v4081 = vrot.slane %v4079, 4
        %v4082 = vshll.u32 %v3778, 16
        %v4084 = vrot.slane %v4082, 5
        %v4085 = vor.u32 %v4081, %v4084
        %v4086 = vrot.slane %v4085, 4
        %v4088 = vshll.u32 %v3779, 16
        %v4090 = vrot.slane %v4088, 5
        %v4091 = vsel %vm236, %v4086, %v4090
        %v4092 = vshrl.u32 %v3779, 16
        %v4094 = vrot.slane %v4092, 4
        %v4095 = vor.u32 %v4094, %v4090
        %v4096 = vrot.slane %v4095, 4
        %v4098 = vshll.u32 %v3780, 16
        %v4100 = vrot.slane %v4098, 5
        %v4101 = vsel %vm236, %v4096, %v4100
        %v4103 = vshrl.u32 %v3781, 16
        %v4105 = vrot.slane %v4103, 4
        %v4106 = vshll.u32 %v3781, 16
        %v4108 = vrot.slane %v4106, 5
        %v4109 = vor.u32 %v4105, %v4108
        %v4110 = vrot.slane %v4109, 4
        %v4112 = vshll.u32 %v3782, 16
        %v4114 = vrot.slane %v4112, 5
        %v4115 = vsel %vm236, %v4110, %v4114
        %v4116 = vshrl.u32 %v3782, 16
        %v4118 = vrot.slane %v4116, 4
        %v4119 = vor.u32 %v4118, %v4114
        %v4120 = vrot.slane %v4119, 4
        %v4122 = vshll.u32 %v3783, 16
        %v4124 = vrot.slane %v4122, 5
        %v4125 = vsel %vm236, %v4120, %v4124
        %v4127 = vshrl.u32 %v3784, 16
        %v4129 = vrot.slane %v4127, 4
        %v4130 = vshll.u32 %v3784, 16
        %v4132 = vrot.slane %v4130, 5
        %v4133 = vor.u32 %v4129, %v4132
        %v4134 = vrot.slane %v4133, 4
        %v4136 = vshll.u32 %v3785, 16
        %v4138 = vrot.slane %v4136, 5
        %v4139 = vsel %vm236, %v4134, %v4138
        %v4140 = vshrl.u32 %v3785, 16
        %v4142 = vrot.slane %v4140, 4
        %v4143 = vor.u32 %v4142, %v4138
        %v4144 = vrot.slane %v4143, 4
        %v4146 = vshll.u32 %v3786, 16
        %v4148 = vrot.slane %v4146, 5
        %v4149 = vsel %vm236, %v4144, %v4148
        %v4151 = vshrl.u32 %v3787, 16
        %v4153 = vrot.slane %v4151, 4
        %v4154 = vshll.u32 %v3787, 16
        %v4156 = vrot.slane %v4154, 5
        %v4157 = vor.u32 %v4153, %v4156
        %v4158 = vrot.slane %v4157, 4
        %v4160 = vshll.u32 %v3788, 16
        %v4162 = vrot.slane %v4160, 5
        %v4163 = vsel %vm236, %v4158, %v4162
        %v4164 = vshrl.u32 %v3788, 16
        %v4166 = vrot.slane %v4164, 4
        %v4167 = vor.u32 %v4166, %v4162
        %v4168 = vrot.slane %v4167, 4
        %v4170 = vshll.u32 %v3789, 16
        %v4172 = vrot.slane %v4170, 5
        %v4173 = vsel %vm236, %v4168, %v4172
        %s4174 = scalar_lea.vmem %s1, 224
        %v4175 = vld [vmem:[%s4174] sm:$0xf]
        %v4176 = vld [vmem:[%s4174 + $0x4] sm:$0xf]
        %v4177 = vld [vmem:[%s4174 + $0x8] sm:$0xf]
        %v4178 = vld [vmem:[%s4174 + $0xc] sm:$0xf]
        %v4179 = vld [vmem:[%s4174 + $0x10] sm:$0xf]
        %v4180 = vld [vmem:[%s4174 + $0x14] sm:$0xf]
        %v4181 = vld [vmem:[%s4174 + $0x18] sm:$0xf]
        %v4182 = vld [vmem:[%s4174 + $0x1c] sm:$0xf]
        %v4183 = vunpack.c.l.b16 %v3803
        %v4184 = vunpack.c.l.b16 %v3813
        %v4185 = vunpack.c.l.b16 %v3827
        %v4186 = vunpack.c.l.b16 %v3837
        %v4187 = vunpack.c.l.b16 %v3851
        %v4188 = vunpack.c.l.b16 %v3861
        %v4189 = vunpack.c.l.b16 %v3875
        %v4190 = vunpack.c.l.b16 %v3885
        %v4191 = vunpack.c.l.b16 %v3899
        %v4192 = vunpack.c.l.b16 %v3909
        %v4193 = vunpack.c.l.b16 %v3923
        %v4194 = vunpack.c.l.b16 %v3933
        %v4195 = vunpack.c.l.b16 %v3947
        %v4196 = vunpack.c.l.b16 %v3957
        %v4197 = vunpack.c.l.b16 %v3971
        %v4198 = vunpack.c.l.b16 %v3981
        %v4199 = vunpack.c.l.b16 %v3995
        %v4200 = vunpack.c.l.b16 %v4005
        %v4201 = vunpack.c.l.b16 %v4019
        %v4202 = vunpack.c.l.b16 %v4029
        %v4203 = vunpack.c.l.b16 %v4043
        %v4204 = vunpack.c.l.b16 %v4053
        %v4205 = vunpack.c.l.b16 %v4067
        %v4206 = vunpack.c.l.b16 %v4077
        %v4207 = vunpack.c.l.b16 %v4091
        %v4208 = vunpack.c.l.b16 %v4101
        %v4209 = vunpack.c.l.b16 %v4115
        %v4210 = vunpack.c.l.b16 %v4125
        %v4211 = vunpack.c.l.b16 %v4139
        %v4212 = vunpack.c.l.b16 %v4149
        %v4213 = vunpack.c.l.b16 %v4163
        %v4214 = vunpack.c.l.b16 %v4173
        %v4215 = vpack.c.b16 %v4184, %v4183
        %v4216 = vpack.c.b16 %v4186, %v4185
        %v4217 = vpack.c.b16 %v4188, %v4187
        %v4218 = vpack.c.b16 %v4190, %v4189
        %v4219 = vpack.c.b16 %v4192, %v4191
        %v4220 = vpack.c.b16 %v4194, %v4193
        %v4221 = vpack.c.b16 %v4196, %v4195
        %v4222 = vpack.c.b16 %v4198, %v4197
        %v4223 = vpack.c.b16 %v4200, %v4199
        %v4224 = vpack.c.b16 %v4202, %v4201
        %v4225 = vpack.c.b16 %v4204, %v4203
        %v4226 = vpack.c.b16 %v4206, %v4205
        %v4227 = vpack.c.b16 %v4208, %v4207
        %v4228 = vpack.c.b16 %v4210, %v4209
        %v4229 = vpack.c.b16 %v4212, %v4211
        %v4230 = vpack.c.b16 %v4214, %v4213
        %v4239 = vunpack.c.l.b16 %v4175
        %v4240 = vunpack.c.l.b16 %v4176
        %v4241 = vunpack.c.l.b16 %v4177
        %v4242 = vunpack.c.l.b16 %v4178
        %v4243 = vunpack.c.l.b16 %v4179
        %v4244 = vunpack.c.l.b16 %v4180
        %v4245 = vunpack.c.l.b16 %v4181
        %v4246 = vunpack.c.l.b16 %v4182
        %v4247 = vpack.c.b16 %v4240, %v4239
        %v4248 = vpack.c.b16 %v4242, %v4241
        %v4249 = vpack.c.b16 %v4244, %v4243
        %v4250 = vpack.c.b16 %v4246, %v4245
        %v4256 = vsel %vm702, %v4215, 0
        %v4259 = vsel %vm702, %v4216, 0
        %v4262 = vsel %vm702, %v4217, 0
        %v4265 = vsel %vm702, %v4218, 0
        %v4268 = vsel %vm702, %v4219, 0
        %v4271 = vsel %vm702, %v4220, 0
        %v4274 = vsel %vm702, %v4221, 0
        %v4277 = vsel %vm702, %v4222, 0
        %v4280 = vsel %vm702, %v4223, 0
        %v4283 = vsel %vm702, %v4224, 0
        %v4286 = vsel %vm702, %v4225, 0
        %v4289 = vsel %vm702, %v4226, 0
        %v4292 = vsel %vm702, %v4227, 0
        %v4295 = vsel %vm702, %v4228, 0
        %v4298 = vsel %vm702, %v4229, 0
        %v4301 = vsel %vm702, %v4230, 0
        %4303 = vmatprep.subr.bf16.mxu0 0
        %4304 = vmatpush1.bf16.msra.mxu0 0
        %4305 = vmatprep.subr.bf16.mxu0 0
        %4306 = vmatpush1.bf16.msra.mxu0 0
        %4307 = vmatprep.subr.bf16.mxu0 0
        %4308 = vmatpush1.bf16.msra.mxu0 0
        %4309 = vmatprep.subr.bf16.mxu0 0
        %4310 = vmatpush1.bf16.msra.mxu0 0
        %4311 = vmatprep.subr.bf16.mxu0 0
        %4312 = vmatpush1.bf16.msra.mxu0 %v4250
        %4313 = vmatprep.subr.bf16.mxu0 0
        %4314 = vmatpush1.bf16.msra.mxu0 %v4249
        %4315 = vmatprep.subr.bf16.mxu0 0
        %4316 = vmatpush1.bf16.msra.mxu0 %v4248
        %4317 = vmatprep.subr.bf16.mxu0 0
        %4318 = vmatpush1.bf16.msra.mxu0 %v4247
        %4319 = vmatprep.subr.bf16.mxu0 0
        %4320 = vmatpush2.bf16.msra.mxu0 0
        %4321 = vmatprep.subr.bf16.mxu0 0
        %4322 = vmatpush2.bf16.msra.mxu0 0
        %4323 = vmatprep.subr.bf16.mxu0 0
        %4324 = vmatpush2.bf16.msra.mxu0 0
        %4325 = vmatprep.subr.bf16.mxu0 0
        %4326 = vmatpush2.bf16.msra.mxu0 0
        %4327 = vmatprep.subr.bf16.mxu0 0
        %4328 = vmatpush2.bf16.msra.mxu0 0
        %4329 = vmatprep.subr.bf16.mxu0 0
        %4330 = vmatpush2.bf16.msra.mxu0 0
        %4331 = vmatprep.subr.bf16.mxu0 0
        %4332 = vmatpush2.bf16.msra.mxu0 0
        %4333 = vmatprep.subr.bf16.mxu0 0
        %4334 = vmatpush2.bf16.msra.mxu0 0
        %4335 = vmatprep.mubr.bf16.mxu0 0
        %4336 = vmatmul.mubr.bf16.gmra.mxu0 %v4256
        %v4337 = vpop.f32.mrf.mxu0
        %v4338 = vadd.f32 0.0, %v4337
        %v4339 = vpop.f32.mrf.mxu0
        %v4340 = vpop.f32.mrf.mxu0
        %v4341 = vadd.f32 0.0, %v4340
        %v4342 = vpop.f32.mrf.mxu0
        %4343 = vmatprep.mubr.bf16.mxu0 0
        %4344 = vmatmul.mubr.bf16.gmra.mxu0 %v4259
        %v4345 = vpop.f32.mrf.mxu0
        %v4346 = vadd.f32 0.0, %v4345
        %v4347 = vpop.f32.mrf.mxu0
        %v4348 = vpop.f32.mrf.mxu0
        %v4349 = vadd.f32 0.0, %v4348
        %v4350 = vpop.f32.mrf.mxu0
        %4351 = vmatprep.mubr.bf16.mxu0 0
        %4352 = vmatmul.mubr.bf16.gmra.mxu0 %v4262
        %v4353 = vpop.f32.mrf.mxu0
        %v4354 = vadd.f32 0.0, %v4353
        %v4355 = vpop.f32.mrf.mxu0
        %v4356 = vpop.f32.mrf.mxu0
        %v4357 = vadd.f32 0.0, %v4356
        %v4358 = vpop.f32.mrf.mxu0
        %4359 = vmatprep.mubr.bf16.mxu0 0
        %4360 = vmatmul.mubr.bf16.gmra.mxu0 %v4265
        %v4361 = vpop.f32.mrf.mxu0
        %v4362 = vadd.f32 0.0, %v4361
        %v4363 = vpop.f32.mrf.mxu0
        %v4364 = vpop.f32.mrf.mxu0
        %v4365 = vadd.f32 0.0, %v4364
        %v4366 = vpop.f32.mrf.mxu0
        %4367 = vmatprep.mubr.bf16.mxu0 0
        %4368 = vmatmul.mubr.bf16.gmra.mxu0 %v4268
        %v4369 = vpop.f32.mrf.mxu0
        %v4370 = vadd.f32 0.0, %v4369
        %v4371 = vpop.f32.mrf.mxu0
        %v4372 = vpop.f32.mrf.mxu0
        %v4373 = vadd.f32 0.0, %v4372
        %v4374 = vpop.f32.mrf.mxu0
        %4375 = vmatprep.mubr.bf16.mxu0 0
        %4376 = vmatmul.mubr.bf16.gmra.mxu0 %v4271
        %v4377 = vpop.f32.mrf.mxu0
        %v4378 = vadd.f32 0.0, %v4377
        %v4379 = vpop.f32.mrf.mxu0
        %v4380 = vpop.f32.mrf.mxu0
        %v4381 = vadd.f32 0.0, %v4380
        %v4382 = vpop.f32.mrf.mxu0
        %4383 = vmatprep.mubr.bf16.mxu0 0
        %4384 = vmatmul.mubr.bf16.gmra.mxu0 %v4274
        %v4385 = vpop.f32.mrf.mxu0
        %v4386 = vadd.f32 0.0, %v4385
        %v4387 = vpop.f32.mrf.mxu0
        %v4388 = vpop.f32.mrf.mxu0
        %v4389 = vadd.f32 0.0, %v4388
        %v4390 = vpop.f32.mrf.mxu0
        %4391 = vmatprep.mubr.bf16.mxu0 0
        %4392 = vmatmul.mubr.bf16.gmra.mxu0 %v4277
        %v4393 = vpop.f32.mrf.mxu0
        %v4394 = vadd.f32 0.0, %v4393
        %v4395 = vpop.f32.mrf.mxu0
        %v4396 = vpop.f32.mrf.mxu0
        %v4397 = vadd.f32 0.0, %v4396
        %v4398 = vpop.f32.mrf.mxu0
        %4399 = vmatprep.mubr.bf16.mxu0 0
        %4400 = vmatmul.mubr.bf16.gmra.mxu0 %v4280
        %v4401 = vpop.f32.mrf.mxu0
        %v4402 = vadd.f32 0.0, %v4401
        %v4403 = vpop.f32.mrf.mxu0
        %v4404 = vpop.f32.mrf.mxu0
        %v4405 = vadd.f32 0.0, %v4404
        %v4406 = vpop.f32.mrf.mxu0
        %4407 = vmatprep.mubr.bf16.mxu0 0
        %4408 = vmatmul.mubr.bf16.gmra.mxu0 %v4283
        %v4409 = vpop.f32.mrf.mxu0
        %v4410 = vadd.f32 0.0, %v4409
        %v4411 = vpop.f32.mrf.mxu0
        %v4412 = vpop.f32.mrf.mxu0
        %v4413 = vadd.f32 0.0, %v4412
        %v4414 = vpop.f32.mrf.mxu0
        %4415 = vmatprep.mubr.bf16.mxu0 0
        %4416 = vmatmul.mubr.bf16.gmra.mxu0 %v4286
        %v4417 = vpop.f32.mrf.mxu0
        %v4418 = vadd.f32 0.0, %v4417
        %v4419 = vpop.f32.mrf.mxu0
        %v4420 = vpop.f32.mrf.mxu0
        %v4421 = vadd.f32 0.0, %v4420
        %v4422 = vpop.f32.mrf.mxu0
        %4423 = vmatprep.mubr.bf16.mxu0 0
        %4424 = vmatmul.mubr.bf16.gmra.mxu0 %v4289
        %v4425 = vpop.f32.mrf.mxu0
        %v4426 = vadd.f32 0.0, %v4425
        %v4427 = vpop.f32.mrf.mxu0
        %v4428 = vpop.f32.mrf.mxu0
        %v4429 = vadd.f32 0.0, %v4428
        %v4430 = vpop.f32.mrf.mxu0
        %4431 = vmatprep.mubr.bf16.mxu0 0
        %4432 = vmatmul.mubr.bf16.gmra.mxu0 %v4292
        %v4433 = vpop.f32.mrf.mxu0
        %v4434 = vadd.f32 0.0, %v4433
        %v4435 = vpop.f32.mrf.mxu0
        %v4436 = vpop.f32.mrf.mxu0
        %v4437 = vadd.f32 0.0, %v4436
        %v4438 = vpop.f32.mrf.mxu0
        %4439 = vmatprep.mubr.bf16.mxu0 0
        %4440 = vmatmul.mubr.bf16.gmra.mxu0 %v4295
        %v4441 = vpop.f32.mrf.mxu0
        %v4442 = vadd.f32 0.0, %v4441
        %v4443 = vpop.f32.mrf.mxu0
        %v4444 = vpop.f32.mrf.mxu0
        %v4445 = vadd.f32 0.0, %v4444
        %v4446 = vpop.f32.mrf.mxu0
        %4447 = vmatprep.mubr.bf16.mxu0 0
        %4448 = vmatmul.mubr.bf16.gmra.mxu0 %v4298
        %v4449 = vpop.f32.mrf.mxu0
        %v4450 = vadd.f32 0.0, %v4449
        %v4451 = vpop.f32.mrf.mxu0
        %v4452 = vpop.f32.mrf.mxu0
        %v4453 = vadd.f32 0.0, %v4452
        %v4454 = vpop.f32.mrf.mxu0
        %4455 = vmatprep.mubr.bf16.mxu0 0
        %4456 = vmatmul.mubr.bf16.gmra.mxu0 %v4301
        %v4457 = vpop.f32.mrf.mxu0
        %v4458 = vadd.f32 0.0, %v4457
        %v4459 = vpop.f32.mrf.mxu0
        %v4460 = vpop.f32.mrf.mxu0
        %v4461 = vadd.f32 0.0, %v4460
        %v4462 = vpop.f32.mrf.mxu0
        %4463 = vdwg.mxu0
        %v4464 = vadd.f32 %v3710, %v4338
        %v4465 = vadd.f32 %v3711, %v4341
        %v4466 = vadd.f32 %v3712, %v4346
        %v4467 = vadd.f32 %v3713, %v4349
        %v4468 = vadd.f32 %v3714, %v4354
        %v4469 = vadd.f32 %v3715, %v4357
        %v4470 = vadd.f32 %v3716, %v4362
        %v4471 = vadd.f32 %v3717, %v4365
        %v4472 = vadd.f32 %v3718, %v4370
        %v4473 = vadd.f32 %v3719, %v4373
        %v4474 = vadd.f32 %v3720, %v4378
        %v4475 = vadd.f32 %v3721, %v4381
        %v4476 = vadd.f32 %v3722, %v4386
        %v4477 = vadd.f32 %v3723, %v4389
        %v4478 = vadd.f32 %v3724, %v4394
        %v4479 = vadd.f32 %v3725, %v4397
        %v4480 = vadd.f32 %v3726, %v4402
        %v4481 = vadd.f32 %v3727, %v4405
        %v4482 = vadd.f32 %v3728, %v4410
        %v4483 = vadd.f32 %v3729, %v4413
        %v4484 = vadd.f32 %v3730, %v4418
        %v4485 = vadd.f32 %v3731, %v4421
        %v4486 = vadd.f32 %v3732, %v4426
        %v4487 = vadd.f32 %v3733, %v4429
        %v4488 = vadd.f32 %v3734, %v4434
        %v4489 = vadd.f32 %v3735, %v4437
        %v4490 = vadd.f32 %v3736, %v4442
        %v4491 = vadd.f32 %v3737, %v4445
        %v4492 = vadd.f32 %v3738, %v4450
        %v4493 = vadd.f32 %v3739, %v4453
        %v4494 = vadd.f32 %v3740, %v4458
        %v4495 = vadd.f32 %v3741, %v4461
        %v4496 = vld [vmem:[%s3355] sm:$0xe]
        %v4497 = vld [vmem:[%s3355 + $0xc] sm:$0xe]
        %v4498 = vld [vmem:[%s3355 + $0x18] sm:$0xe]
        %v4499 = vld [vmem:[%s3355 + $0x24] sm:$0xe]
        %v4500 = vld [vmem:[%s3355 + $0x30] sm:$0xe]
        %v4501 = vld [vmem:[%s3355 + $0x3c] sm:$0xe]
        %v4502 = vld [vmem:[%s3355 + $0x48] sm:$0xe]
        %v4503 = vld [vmem:[%s3355 + $0x54] sm:$0xe]
        %v4504 = vld [vmem:[%s3355 + $0xd8] sm:$0xe]
        %v4505 = vld [vmem:[%s3355 + $0xe4] sm:$0xe]
        %v4506 = vld [vmem:[%s3355 + $0xf0] sm:$0xe]
        %v4507 = vld [vmem:[%s3355 + $0xfc] sm:$0xe]
        %v4508 = vld [vmem:[%s3355 + $0x108] sm:$0xe]
        %v4509 = vld [vmem:[%s3355 + $0x114] sm:$0xe]
        %v4510 = vld [vmem:[%s3355 + $0x120] sm:$0xe]
        %v4511 = vld [vmem:[%s3355 + $0x12c] sm:$0xe]
        %v4560 = vrot.slane %v4496, 5
        %v4561 = vrot.slane %v4560, 4
        %v4562 = vrot.slane %v3743, 5
        %v4563 = vsel %vm1275, %v4561, %v4562
        %v4564 = vrot.slane %v4562, 4
        %v4565 = vrot.slane %v3744, 5
        %v4566 = vsel %vm1275, %v4564, %v4565
        %v4567 = vrot.slane %v4497, 5
        %v4568 = vrot.slane %v4567, 4
        %v4569 = vrot.slane %v3746, 5
        %v4570 = vsel %vm1275, %v4568, %v4569
        %v4571 = vrot.slane %v4569, 4
        %v4572 = vrot.slane %v3747, 5
        %v4573 = vsel %vm1275, %v4571, %v4572
        %v4574 = vrot.slane %v4498, 5
        %v4575 = vrot.slane %v4574, 4
        %v4576 = vrot.slane %v3749, 5
        %v4577 = vsel %vm1275, %v4575, %v4576
        %v4578 = vrot.slane %v4576, 4
        %v4579 = vrot.slane %v3750, 5
        %v4580 = vsel %vm1275, %v4578, %v4579
        %v4581 = vrot.slane %v4499, 5
        %v4582 = vrot.slane %v4581, 4
        %v4583 = vrot.slane %v3752, 5
        %v4584 = vsel %vm1275, %v4582, %v4583
        %v4585 = vrot.slane %v4583, 4
        %v4586 = vrot.slane %v3753, 5
        %v4587 = vsel %vm1275, %v4585, %v4586
        %v4588 = vrot.slane %v4500, 5
        %v4589 = vrot.slane %v4588, 4
        %v4590 = vrot.slane %v3755, 5
        %v4591 = vsel %vm1275, %v4589, %v4590
        %v4592 = vrot.slane %v4590, 4
        %v4593 = vrot.slane %v3756, 5
        %v4594 = vsel %vm1275, %v4592, %v4593
        %v4595 = vrot.slane %v4501, 5
        %v4596 = vrot.slane %v4595, 4
        %v4597 = vrot.slane %v3758, 5
        %v4598 = vsel %vm1275, %v4596, %v4597
        %v4599 = vrot.slane %v4597, 4
        %v4600 = vrot.slane %v3759, 5
        %v4601 = vsel %vm1275, %v4599, %v4600
        %v4602 = vrot.slane %v4502, 5
        %v4603 = vrot.slane %v4602, 4
        %v4604 = vrot.slane %v3761, 5
        %v4605 = vsel %vm1275, %v4603, %v4604
        %v4606 = vrot.slane %v4604, 4
        %v4607 = vrot.slane %v3762, 5
        %v4608 = vsel %vm1275, %v4606, %v4607
        %v4609 = vrot.slane %v4503, 5
        %v4610 = vrot.slane %v4609, 4
        %v4611 = vrot.slane %v3764, 5
        %v4612 = vsel %vm1275, %v4610, %v4611
        %v4613 = vrot.slane %v4611, 4
        %v4614 = vrot.slane %v3765, 5
        %v4615 = vsel %vm1275, %v4613, %v4614
        %v4616 = vrot.slane %v4504, 5
        %v4617 = vrot.slane %v4616, 4
        %v4618 = vrot.slane %v3767, 5
        %v4619 = vsel %vm1275, %v4617, %v4618
        %v4620 = vrot.slane %v4618, 4
        %v4621 = vrot.slane %v3768, 5
        %v4622 = vsel %vm1275, %v4620, %v4621
        %v4623 = vrot.slane %v4505, 5
        %v4624 = vrot.slane %v4623, 4
        %v4625 = vrot.slane %v3770, 5
        %v4626 = vsel %vm1275, %v4624, %v4625
        %v4627 = vrot.slane %v4625, 4
        %v4628 = vrot.slane %v3771, 5
        %v4629 = vsel %vm1275, %v4627, %v4628
        %v4630 = vrot.slane %v4506, 5
        %v4631 = vrot.slane %v4630, 4
        %v4632 = vrot.slane %v3773, 5
        %v4633 = vsel %vm1275, %v4631, %v4632
        %v4634 = vrot.slane %v4632, 4
        %v4635 = vrot.slane %v3774, 5
        %v4636 = vsel %vm1275, %v4634, %v4635
        %v4637 = vrot.slane %v4507, 5
        %v4638 = vrot.slane %v4637, 4
        %v4639 = vrot.slane %v3776, 5
        %v4640 = vsel %vm1275, %v4638, %v4639
        %v4641 = vrot.slane %v4639, 4
        %v4642 = vrot.slane %v3777, 5
        %v4643 = vsel %vm1275, %v4641, %v4642
        %v4644 = vrot.slane %v4508, 5
        %v4645 = vrot.slane %v4644, 4
        %v4646 = vrot.slane %v3779, 5
        %v4647 = vsel %vm1275, %v4645, %v4646
        %v4648 = vrot.slane %v4646, 4
        %v4649 = vrot.slane %v3780, 5
        %v4650 = vsel %vm1275, %v4648, %v4649
        %v4651 = vrot.slane %v4509, 5
        %v4652 = vrot.slane %v4651, 4
        %v4653 = vrot.slane %v3782, 5
        %v4654 = vsel %vm1275, %v4652, %v4653
        %v4655 = vrot.slane %v4653, 4
        %v4656 = vrot.slane %v3783, 5
        %v4657 = vsel %vm1275, %v4655, %v4656
        %v4658 = vrot.slane %v4510, 5
        %v4659 = vrot.slane %v4658, 4
        %v4660 = vrot.slane %v3785, 5
        %v4661 = vsel %vm1275, %v4659, %v4660
        %v4662 = vrot.slane %v4660, 4
        %v4663 = vrot.slane %v3786, 5
        %v4664 = vsel %vm1275, %v4662, %v4663
        %v4665 = vrot.slane %v4511, 5
        %v4666 = vrot.slane %v4665, 4
        %v4667 = vrot.slane %v3788, 5
        %v4668 = vsel %vm1275, %v4666, %v4667
        %v4669 = vrot.slane %v4667, 4
        %v4670 = vrot.slane %v3789, 5
        %v4671 = vsel %vm1275, %v4669, %v4670
        %s4672 = scalar_lea.vmem %s1, 256
        %v4673 = vld [vmem:[%s4672] sm:$0xf]
        %v4674 = vld [vmem:[%s4672 + $0x4] sm:$0xf]
        %v4675 = vld [vmem:[%s4672 + $0x8] sm:$0xf]
        %v4676 = vld [vmem:[%s4672 + $0xc] sm:$0xf]
        %v4677 = vld [vmem:[%s4672 + $0x10] sm:$0xf]
        %v4678 = vld [vmem:[%s4672 + $0x14] sm:$0xf]
        %v4679 = vld [vmem:[%s4672 + $0x18] sm:$0xf]
        %v4680 = vld [vmem:[%s4672 + $0x1c] sm:$0xf]
        %v4681 = vunpack.c.l.b16 %v4563
        %v4682 = vunpack.c.l.b16 %v4566
        %v4683 = vunpack.c.l.b16 %v4570
        %v4684 = vunpack.c.l.b16 %v4573
        %v4685 = vunpack.c.l.b16 %v4577
        %v4686 = vunpack.c.l.b16 %v4580
        %v4687 = vunpack.c.l.b16 %v4584
        %v4688 = vunpack.c.l.b16 %v4587
        %v4689 = vunpack.c.l.b16 %v4591
        %v4690 = vunpack.c.l.b16 %v4594
        %v4691 = vunpack.c.l.b16 %v4598
        %v4692 = vunpack.c.l.b16 %v4601
        %v4693 = vunpack.c.l.b16 %v4605
        %v4694 = vunpack.c.l.b16 %v4608
        %v4695 = vunpack.c.l.b16 %v4612
        %v4696 = vunpack.c.l.b16 %v4615
        %v4697 = vunpack.c.l.b16 %v4619
        %v4698 = vunpack.c.l.b16 %v4622
        %v4699 = vunpack.c.l.b16 %v4626
        %v4700 = vunpack.c.l.b16 %v4629
        %v4701 = vunpack.c.l.b16 %v4633
        %v4702 = vunpack.c.l.b16 %v4636
        %v4703 = vunpack.c.l.b16 %v4640
        %v4704 = vunpack.c.l.b16 %v4643
        %v4705 = vunpack.c.l.b16 %v4647
        %v4706 = vunpack.c.l.b16 %v4650
        %v4707 = vunpack.c.l.b16 %v4654
        %v4708 = vunpack.c.l.b16 %v4657
        %v4709 = vunpack.c.l.b16 %v4661
        %v4710 = vunpack.c.l.b16 %v4664
        %v4711 = vunpack.c.l.b16 %v4668
        %v4712 = vunpack.c.l.b16 %v4671
        %v4713 = vpack.c.b16 %v4682, %v4681
        %v4714 = vpack.c.b16 %v4684, %v4683
        %v4715 = vpack.c.b16 %v4686, %v4685
        %v4716 = vpack.c.b16 %v4688, %v4687
        %v4717 = vpack.c.b16 %v4690, %v4689
        %v4718 = vpack.c.b16 %v4692, %v4691
        %v4719 = vpack.c.b16 %v4694, %v4693
        %v4720 = vpack.c.b16 %v4696, %v4695
        %v4721 = vpack.c.b16 %v4698, %v4697
        %v4722 = vpack.c.b16 %v4700, %v4699
        %v4723 = vpack.c.b16 %v4702, %v4701
        %v4724 = vpack.c.b16 %v4704, %v4703
        %v4725 = vpack.c.b16 %v4706, %v4705
        %v4726 = vpack.c.b16 %v4708, %v4707
        %v4727 = vpack.c.b16 %v4710, %v4709
        %v4728 = vpack.c.b16 %v4712, %v4711
        %v4737 = vunpack.c.l.b16 %v4673
        %v4738 = vunpack.c.l.b16 %v4674
        %v4739 = vunpack.c.l.b16 %v4675
        %v4740 = vunpack.c.l.b16 %v4676
        %v4741 = vunpack.c.l.b16 %v4677
        %v4742 = vunpack.c.l.b16 %v4678
        %v4743 = vunpack.c.l.b16 %v4679
        %v4744 = vunpack.c.l.b16 %v4680
        %v4745 = vpack.c.b16 %v4738, %v4737
        %v4746 = vpack.c.b16 %v4740, %v4739
        %v4747 = vpack.c.b16 %v4742, %v4741
        %v4748 = vpack.c.b16 %v4744, %v4743
        %v4754 = vsel %vm702, %v4713, 0
        %v4757 = vsel %vm702, %v4714, 0
        %v4760 = vsel %vm702, %v4715, 0
        %v4763 = vsel %vm702, %v4716, 0
        %v4766 = vsel %vm702, %v4717, 0
        %v4769 = vsel %vm702, %v4718, 0
        %v4772 = vsel %vm702, %v4719, 0
        %v4775 = vsel %vm702, %v4720, 0
        %v4778 = vsel %vm702, %v4721, 0
        %v4781 = vsel %vm702, %v4722, 0
        %v4784 = vsel %vm702, %v4723, 0
        %v4787 = vsel %vm702, %v4724, 0
        %v4790 = vsel %vm702, %v4725, 0
        %v4793 = vsel %vm702, %v4726, 0
        %v4796 = vsel %vm702, %v4727, 0
        %v4799 = vsel %vm702, %v4728, 0
        %4801 = vmatprep.subr.bf16.mxu0 0
        %4802 = vmatpush1.bf16.msra.mxu0 0
        %4803 = vmatprep.subr.bf16.mxu0 0
        %4804 = vmatpush1.bf16.msra.mxu0 0
        %4805 = vmatprep.subr.bf16.mxu0 0
        %4806 = vmatpush1.bf16.msra.mxu0 0
        %4807 = vmatprep.subr.bf16.mxu0 0
        %4808 = vmatpush1.bf16.msra.mxu0 0
        %4809 = vmatprep.subr.bf16.mxu0 0
        %4810 = vmatpush1.bf16.msra.mxu0 %v4748
        %4811 = vmatprep.subr.bf16.mxu0 0
        %4812 = vmatpush1.bf16.msra.mxu0 %v4747
        %4813 = vmatprep.subr.bf16.mxu0 0
        %4814 = vmatpush1.bf16.msra.mxu0 %v4746
        %4815 = vmatprep.subr.bf16.mxu0 0
        %4816 = vmatpush1.bf16.msra.mxu0 %v4745
        %4817 = vmatprep.subr.bf16.mxu0 0
        %4818 = vmatpush2.bf16.msra.mxu0 0
        %4819 = vmatprep.subr.bf16.mxu0 0
        %4820 = vmatpush2.bf16.msra.mxu0 0
        %4821 = vmatprep.subr.bf16.mxu0 0
        %4822 = vmatpush2.bf16.msra.mxu0 0
        %4823 = vmatprep.subr.bf16.mxu0 0
        %4824 = vmatpush2.bf16.msra.mxu0 0
        %4825 = vmatprep.subr.bf16.mxu0 0
        %4826 = vmatpush2.bf16.msra.mxu0 0
        %4827 = vmatprep.subr.bf16.mxu0 0
        %4828 = vmatpush2.bf16.msra.mxu0 0
        %4829 = vmatprep.subr.bf16.mxu0 0
        %4830 = vmatpush2.bf16.msra.mxu0 0
        %4831 = vmatprep.subr.bf16.mxu0 0
        %4832 = vmatpush2.bf16.msra.mxu0 0
        %4833 = vmatprep.mubr.bf16.mxu0 0
        %4834 = vmatmul.mubr.bf16.gmra.mxu0 %v4754
        %v4835 = vpop.f32.mrf.mxu0
        %v4836 = vadd.f32 0.0, %v4835
        %v4837 = vpop.f32.mrf.mxu0
        %v4838 = vpop.f32.mrf.mxu0
        %v4839 = vadd.f32 0.0, %v4838
        %v4840 = vpop.f32.mrf.mxu0
        %4841 = vmatprep.mubr.bf16.mxu0 0
        %4842 = vmatmul.mubr.bf16.gmra.mxu0 %v4757
        %v4843 = vpop.f32.mrf.mxu0
        %v4844 = vadd.f32 0.0, %v4843
        %v4845 = vpop.f32.mrf.mxu0
        %v4846 = vpop.f32.mrf.mxu0
        %v4847 = vadd.f32 0.0, %v4846
        %v4848 = vpop.f32.mrf.mxu0
        %4849 = vmatprep.mubr.bf16.mxu0 0
        %4850 = vmatmul.mubr.bf16.gmra.mxu0 %v4760
        %v4851 = vpop.f32.mrf.mxu0
        %v4852 = vadd.f32 0.0, %v4851
        %v4853 = vpop.f32.mrf.mxu0
        %v4854 = vpop.f32.mrf.mxu0
        %v4855 = vadd.f32 0.0, %v4854
        %v4856 = vpop.f32.mrf.mxu0
        %4857 = vmatprep.mubr.bf16.mxu0 0
        %4858 = vmatmul.mubr.bf16.gmra.mxu0 %v4763
        %v4859 = vpop.f32.mrf.mxu0
        %v4860 = vadd.f32 0.0, %v4859
        %v4861 = vpop.f32.mrf.mxu0
        %v4862 = vpop.f32.mrf.mxu0
        %v4863 = vadd.f32 0.0, %v4862
        %v4864 = vpop.f32.mrf.mxu0
        %4865 = vmatprep.mubr.bf16.mxu0 0
        %4866 = vmatmul.mubr.bf16.gmra.mxu0 %v4766
        %v4867 = vpop.f32.mrf.mxu0
        %v4868 = vadd.f32 0.0, %v4867
        %v4869 = vpop.f32.mrf.mxu0
        %v4870 = vpop.f32.mrf.mxu0
        %v4871 = vadd.f32 0.0, %v4870
        %v4872 = vpop.f32.mrf.mxu0
        %4873 = vmatprep.mubr.bf16.mxu0 0
        %4874 = vmatmul.mubr.bf16.gmra.mxu0 %v4769
        %v4875 = vpop.f32.mrf.mxu0
        %v4876 = vadd.f32 0.0, %v4875
        %v4877 = vpop.f32.mrf.mxu0
        %v4878 = vpop.f32.mrf.mxu0
        %v4879 = vadd.f32 0.0, %v4878
        %v4880 = vpop.f32.mrf.mxu0
        %4881 = vmatprep.mubr.bf16.mxu0 0
        %4882 = vmatmul.mubr.bf16.gmra.mxu0 %v4772
        %v4883 = vpop.f32.mrf.mxu0
        %v4884 = vadd.f32 0.0, %v4883
        %v4885 = vpop.f32.mrf.mxu0
        %v4886 = vpop.f32.mrf.mxu0
        %v4887 = vadd.f32 0.0, %v4886
        %v4888 = vpop.f32.mrf.mxu0
        %4889 = vmatprep.mubr.bf16.mxu0 0
        %4890 = vmatmul.mubr.bf16.gmra.mxu0 %v4775
        %v4891 = vpop.f32.mrf.mxu0
        %v4892 = vadd.f32 0.0, %v4891
        %v4893 = vpop.f32.mrf.mxu0
        %v4894 = vpop.f32.mrf.mxu0
        %v4895 = vadd.f32 0.0, %v4894
        %v4896 = vpop.f32.mrf.mxu0
        %4897 = vmatprep.mubr.bf16.mxu0 0
        %4898 = vmatmul.mubr.bf16.gmra.mxu0 %v4778
        %v4899 = vpop.f32.mrf.mxu0
        %v4900 = vadd.f32 0.0, %v4899
        %v4901 = vpop.f32.mrf.mxu0
        %v4902 = vpop.f32.mrf.mxu0
        %v4903 = vadd.f32 0.0, %v4902
        %v4904 = vpop.f32.mrf.mxu0
        %4905 = vmatprep.mubr.bf16.mxu0 0
        %4906 = vmatmul.mubr.bf16.gmra.mxu0 %v4781
        %v4907 = vpop.f32.mrf.mxu0
        %v4908 = vadd.f32 0.0, %v4907
        %v4909 = vpop.f32.mrf.mxu0
        %v4910 = vpop.f32.mrf.mxu0
        %v4911 = vadd.f32 0.0, %v4910
        %v4912 = vpop.f32.mrf.mxu0
        %4913 = vmatprep.mubr.bf16.mxu0 0
        %4914 = vmatmul.mubr.bf16.gmra.mxu0 %v4784
        %v4915 = vpop.f32.mrf.mxu0
        %v4916 = vadd.f32 0.0, %v4915
        %v4917 = vpop.f32.mrf.mxu0
        %v4918 = vpop.f32.mrf.mxu0
        %v4919 = vadd.f32 0.0, %v4918
        %v4920 = vpop.f32.mrf.mxu0
        %4921 = vmatprep.mubr.bf16.mxu0 0
        %4922 = vmatmul.mubr.bf16.gmra.mxu0 %v4787
        %v4923 = vpop.f32.mrf.mxu0
        %v4924 = vadd.f32 0.0, %v4923
        %v4925 = vpop.f32.mrf.mxu0
        %v4926 = vpop.f32.mrf.mxu0
        %v4927 = vadd.f32 0.0, %v4926
        %v4928 = vpop.f32.mrf.mxu0
        %4929 = vmatprep.mubr.bf16.mxu0 0
        %4930 = vmatmul.mubr.bf16.gmra.mxu0 %v4790
        %v4931 = vpop.f32.mrf.mxu0
        %v4932 = vadd.f32 0.0, %v4931
        %v4933 = vpop.f32.mrf.mxu0
        %v4934 = vpop.f32.mrf.mxu0
        %v4935 = vadd.f32 0.0, %v4934
        %v4936 = vpop.f32.mrf.mxu0
        %4937 = vmatprep.mubr.bf16.mxu0 0
        %4938 = vmatmul.mubr.bf16.gmra.mxu0 %v4793
        %v4939 = vpop.f32.mrf.mxu0
        %v4940 = vadd.f32 0.0, %v4939
        %v4941 = vpop.f32.mrf.mxu0
        %v4942 = vpop.f32.mrf.mxu0
        %v4943 = vadd.f32 0.0, %v4942
        %v4944 = vpop.f32.mrf.mxu0
        %4945 = vmatprep.mubr.bf16.mxu0 0
        %4946 = vmatmul.mubr.bf16.gmra.mxu0 %v4796
        %v4947 = vpop.f32.mrf.mxu0
        %v4948 = vadd.f32 0.0, %v4947
        %v4949 = vpop.f32.mrf.mxu0
        %v4950 = vpop.f32.mrf.mxu0
        %v4951 = vadd.f32 0.0, %v4950
        %v4952 = vpop.f32.mrf.mxu0
        %4953 = vmatprep.mubr.bf16.mxu0 0
        %4954 = vmatmul.mubr.bf16.gmra.mxu0 %v4799
        %v4955 = vpop.f32.mrf.mxu0
        %v4956 = vadd.f32 0.0, %v4955
        %v4957 = vpop.f32.mrf.mxu0
        %v4958 = vpop.f32.mrf.mxu0
        %v4959 = vadd.f32 0.0, %v4958
        %v4960 = vpop.f32.mrf.mxu0
        %4961 = vdwg.mxu0
        %v4962 = vadd.f32 %v4464, %v4836
        %v4963 = vadd.f32 %v4465, %v4839
        %v4964 = vadd.f32 %v4466, %v4844
        %v4965 = vadd.f32 %v4467, %v4847
        %v4966 = vadd.f32 %v4468, %v4852
        %v4967 = vadd.f32 %v4469, %v4855
        %v4968 = vadd.f32 %v4470, %v4860
        %v4969 = vadd.f32 %v4471, %v4863
        %v4970 = vadd.f32 %v4472, %v4868
        %v4971 = vadd.f32 %v4473, %v4871
        %v4972 = vadd.f32 %v4474, %v4876
        %v4973 = vadd.f32 %v4475, %v4879
        %v4974 = vadd.f32 %v4476, %v4884
        %v4975 = vadd.f32 %v4477, %v4887
        %v4976 = vadd.f32 %v4478, %v4892
        %v4977 = vadd.f32 %v4479, %v4895
        %v4978 = vadd.f32 %v4480, %v4900
        %v4979 = vadd.f32 %v4481, %v4903
        %v4980 = vadd.f32 %v4482, %v4908
        %v4981 = vadd.f32 %v4483, %v4911
        %v4982 = vadd.f32 %v4484, %v4916
        %v4983 = vadd.f32 %v4485, %v4919
        %v4984 = vadd.f32 %v4486, %v4924
        %v4985 = vadd.f32 %v4487, %v4927
        %v4986 = vadd.f32 %v4488, %v4932
        %v4987 = vadd.f32 %v4489, %v4935
        %v4988 = vadd.f32 %v4490, %v4940
        %v4989 = vadd.f32 %v4491, %v4943
        %v4990 = vadd.f32 %v4492, %v4948
        %v4991 = vadd.f32 %v4493, %v4951
        %v4992 = vadd.f32 %v4494, %v4956
        %v4993 = vadd.f32 %v4495, %v4959
        %v4994 = vld [vmem:[%s2] sm:$0x1]
        %v4996 = vlaneseq
        %v4997 = vshrl.u32 %v4996, 7
        %v4998 = vsub.s32 0, %v4997
        %v4999 = vrot.slane %v4994, %v4998
        %v5001 = vmul.f32 %v4962, %v4999
        %v5002 = vmul.f32 %v4963, %v4999
        %v5003 = vmul.f32 %v4964, %v4999
        %v5004 = vmul.f32 %v4965, %v4999
        %v5005 = vmul.f32 %v4966, %v4999
        %v5006 = vmul.f32 %v4967, %v4999
        %v5007 = vmul.f32 %v4968, %v4999
        %v5008 = vmul.f32 %v4969, %v4999
        %v5009 = vmul.f32 %v4970, %v4999
        %v5010 = vmul.f32 %v4971, %v4999
        %v5011 = vmul.f32 %v4972, %v4999
        %v5012 = vmul.f32 %v4973, %v4999
        %v5013 = vmul.f32 %v4974, %v4999
        %v5014 = vmul.f32 %v4975, %v4999
        %v5015 = vmul.f32 %v4976, %v4999
        %v5016 = vmul.f32 %v4977, %v4999
        %v5017 = vmul.f32 %v4978, %v4999
        %v5018 = vmul.f32 %v4979, %v4999
        %v5019 = vmul.f32 %v4980, %v4999
        %v5020 = vmul.f32 %v4981, %v4999
        %v5021 = vmul.f32 %v4982, %v4999
        %v5022 = vmul.f32 %v4983, %v4999
        %v5023 = vmul.f32 %v4984, %v4999
        %v5024 = vmul.f32 %v4985, %v4999
        %v5025 = vmul.f32 %v4986, %v4999
        %v5026 = vmul.f32 %v4987, %v4999
        %v5027 = vmul.f32 %v4988, %v4999
        %v5028 = vmul.f32 %v4989, %v4999
        %v5029 = vmul.f32 %v4990, %v4999
        %v5030 = vmul.f32 %v4991, %v4999
        %v5031 = vmul.f32 %v4992, %v4999
        %v5032 = vmul.f32 %v4993, %v4999
        %v5033 = vld [vmem:[%s3] sm:$0x1]
        %v5035 = vlaneseq
        %v5036 = vshrl.u32 %v5035, 7
        %v5037 = vsub.s32 0, %v5036
        %v5038 = vrot.slane %v5033, %v5037
        %v5040 = vadd.f32 %v5001, %v5038
        %v5041 = vadd.f32 %v5002, %v5038
        %v5042 = vadd.f32 %v5003, %v5038
        %v5043 = vadd.f32 %v5004, %v5038
        %v5044 = vadd.f32 %v5005, %v5038
        %v5045 = vadd.f32 %v5006, %v5038
        %v5046 = vadd.f32 %v5007, %v5038
        %v5047 = vadd.f32 %v5008, %v5038
        %v5048 = vadd.f32 %v5009, %v5038
        %v5049 = vadd.f32 %v5010, %v5038
        %v5050 = vadd.f32 %v5011, %v5038
        %v5051 = vadd.f32 %v5012, %v5038
        %v5052 = vadd.f32 %v5013, %v5038
        %v5053 = vadd.f32 %v5014, %v5038
        %v5054 = vadd.f32 %v5015, %v5038
        %v5055 = vadd.f32 %v5016, %v5038
        %v5056 = vadd.f32 %v5017, %v5038
        %v5057 = vadd.f32 %v5018, %v5038
        %v5058 = vadd.f32 %v5019, %v5038
        %v5059 = vadd.f32 %v5020, %v5038
        %v5060 = vadd.f32 %v5021, %v5038
        %v5061 = vadd.f32 %v5022, %v5038
        %v5062 = vadd.f32 %v5023, %v5038
        %v5063 = vadd.f32 %v5024, %v5038
        %v5064 = vadd.f32 %v5025, %v5038
        %v5065 = vadd.f32 %v5026, %v5038
        %v5066 = vadd.f32 %v5027, %v5038
        %v5067 = vadd.f32 %v5028, %v5038
        %v5068 = vadd.f32 %v5029, %v5038
        %v5069 = vadd.f32 %v5030, %v5038
        %v5070 = vadd.f32 %v5031, %v5038
        %v5071 = vadd.f32 %v5032, %v5038
        %v5072 = vmax.f32 %v5040, 0.0
        %v5073 = vmax.f32 %v5041, 0.0
        %v5074 = vmax.f32 %v5042, 0.0
        %v5075 = vmax.f32 %v5043, 0.0
        %v5076 = vmax.f32 %v5044, 0.0
        %v5077 = vmax.f32 %v5045, 0.0
        %v5078 = vmax.f32 %v5046, 0.0
        %v5079 = vmax.f32 %v5047, 0.0
        %v5080 = vmax.f32 %v5048, 0.0
        %v5081 = vmax.f32 %v5049, 0.0
        %v5082 = vmax.f32 %v5050, 0.0
        %v5083 = vmax.f32 %v5051, 0.0
        %v5084 = vmax.f32 %v5052, 0.0
        %v5085 = vmax.f32 %v5053, 0.0
        %v5086 = vmax.f32 %v5054, 0.0
        %v5087 = vmax.f32 %v5055, 0.0
        %v5088 = vmax.f32 %v5056, 0.0
        %v5089 = vmax.f32 %v5057, 0.0
        %v5090 = vmax.f32 %v5058, 0.0
        %v5091 = vmax.f32 %v5059, 0.0
        %v5092 = vmax.f32 %v5060, 0.0
        %v5093 = vmax.f32 %v5061, 0.0
        %v5094 = vmax.f32 %v5062, 0.0
        %v5095 = vmax.f32 %v5063, 0.0
        %v5096 = vmax.f32 %v5064, 0.0
        %v5097 = vmax.f32 %v5065, 0.0
        %v5098 = vmax.f32 %v5066, 0.0
        %v5099 = vmax.f32 %v5067, 0.0
        %v5100 = vmax.f32 %v5068, 0.0
        %v5101 = vmax.f32 %v5069, 0.0
        %v5102 = vmax.f32 %v5070, 0.0
        %v5103 = vmax.f32 %v5071, 0.0
        %v5104 = vpack.c.bf16 %v5073, %v5072
        %v5105 = vpack.c.bf16 %v5075, %v5074
        %v5106 = vpack.c.bf16 %v5077, %v5076
        %v5107 = vpack.c.bf16 %v5079, %v5078
        %v5108 = vpack.c.bf16 %v5081, %v5080
        %v5109 = vpack.c.bf16 %v5083, %v5082
        %v5110 = vpack.c.bf16 %v5085, %v5084
        %v5111 = vpack.c.bf16 %v5087, %v5086
        %v5112 = vpack.c.bf16 %v5089, %v5088
        %v5113 = vpack.c.bf16 %v5091, %v5090
        %v5114 = vpack.c.bf16 %v5093, %v5092
        %v5115 = vpack.c.bf16 %v5095, %v5094
        %v5116 = vpack.c.bf16 %v5097, %v5096
        %v5117 = vpack.c.bf16 %v5099, %v5098
        %v5118 = vpack.c.bf16 %v5101, %v5100
        %v5119 = vpack.c.bf16 %v5103, %v5102
        %v5136 = vunpack.c.l.b16 %v5104
        %v5137 = vunpack.c.h.b16 %v5104
        %v5138 = vunpack.c.l.b16 %v5105
        %v5139 = vunpack.c.h.b16 %v5105
        %v5140 = vunpack.c.l.b16 %v5106
        %v5141 = vunpack.c.h.b16 %v5106
        %v5142 = vunpack.c.l.b16 %v5107
        %v5143 = vunpack.c.h.b16 %v5107
        %v5144 = vunpack.c.l.b16 %v5108
        %v5145 = vunpack.c.h.b16 %v5108
        %v5146 = vunpack.c.l.b16 %v5109
        %v5147 = vunpack.c.h.b16 %v5109
        %v5148 = vunpack.c.l.b16 %v5110
        %v5149 = vunpack.c.h.b16 %v5110
        %v5150 = vunpack.c.l.b16 %v5111
        %v5151 = vunpack.c.h.b16 %v5111
        %v5152 = vunpack.c.l.b16 %v5112
        %v5153 = vunpack.c.h.b16 %v5112
        %v5154 = vunpack.c.l.b16 %v5113
        %v5155 = vunpack.c.h.b16 %v5113
        %v5156 = vunpack.c.l.b16 %v5114
        %v5157 = vunpack.c.h.b16 %v5114
        %v5158 = vunpack.c.l.b16 %v5115
        %v5159 = vunpack.c.h.b16 %v5115
        %v5160 = vunpack.c.l.b16 %v5116
        %v5161 = vunpack.c.h.b16 %v5116
        %v5162 = vunpack.c.l.b16 %v5117
        %v5163 = vunpack.c.h.b16 %v5117
        %v5164 = vunpack.c.l.b16 %v5118
        %v5165 = vunpack.c.h.b16 %v5118
        %v5166 = vunpack.c.l.b16 %v5119
        %v5167 = vunpack.c.h.b16 %v5119
        %v5168 = vpack.c.b16 %v5136, %v5136
        %v5169 = vpack.c.b16 %v5137, %v5137
        %v5170 = vpack.c.b16 %v5138, %v5138
        %v5171 = vpack.c.b16 %v5139, %v5139
        %v5172 = vpack.c.b16 %v5140, %v5140
        %v5173 = vpack.c.b16 %v5141, %v5141
        %v5174 = vpack.c.b16 %v5142, %v5142
        %v5175 = vpack.c.b16 %v5143, %v5143
        %v5176 = vpack.c.b16 %v5144, %v5144
        %v5177 = vpack.c.b16 %v5145, %v5145
        %v5178 = vpack.c.b16 %v5146, %v5146
        %v5179 = vpack.c.b16 %v5147, %v5147
        %v5180 = vpack.c.b16 %v5148, %v5148
        %v5181 = vpack.c.b16 %v5149, %v5149
        %v5182 = vpack.c.b16 %v5150, %v5150
        %v5183 = vpack.c.b16 %v5151, %v5151
        %v5184 = vpack.c.b16 %v5152, %v5152
        %v5185 = vpack.c.b16 %v5153, %v5153
        %v5186 = vpack.c.b16 %v5154, %v5154
        %v5187 = vpack.c.b16 %v5155, %v5155
        %v5188 = vpack.c.b16 %v5156, %v5156
        %v5189 = vpack.c.b16 %v5157, %v5157
        %v5190 = vpack.c.b16 %v5158, %v5158
        %v5191 = vpack.c.b16 %v5159, %v5159
        %v5192 = vpack.c.b16 %v5160, %v5160
        %v5193 = vpack.c.b16 %v5161, %v5161
        %v5194 = vpack.c.b16 %v5162, %v5162
        %v5195 = vpack.c.b16 %v5163, %v5163
        %v5196 = vpack.c.b16 %v5164, %v5164
        %v5197 = vpack.c.b16 %v5165, %v5165
        %v5198 = vpack.c.b16 %v5166, %v5166
        %v5199 = vpack.c.b16 %v5167, %v5167
        %vm5232 = vcmask 519168
        %5233 = vst.msk [vmem:[%s171] sm:$0xf] %vm5232, %v5168
        %5234 = vst.msk [vmem:[%s171 + $0x4] sm:$0xf] %vm5232, %v5169
        %5235 = vst.msk [vmem:[%s171 + $0x8] sm:$0xf] %vm5232, %v5170
        %5236 = vst.msk [vmem:[%s171 + $0xc] sm:$0xf] %vm5232, %v5171
        %5237 = vst.msk [vmem:[%s171 + $0x10] sm:$0xf] %vm5232, %v5172
        %5238 = vst.msk [vmem:[%s171 + $0x14] sm:$0xf] %vm5232, %v5173
        %5239 = vst.msk [vmem:[%s171 + $0x18] sm:$0xf] %vm5232, %v5174
        %5240 = vst.msk [vmem:[%s171 + $0x1c] sm:$0xf] %vm5232, %v5175
        %5241 = vst.msk [vmem:[%s171 + $0x20] sm:$0xf] %vm5232, %v5176
        %5242 = vst.msk [vmem:[%s171 + $0x24] sm:$0xf] %vm5232, %v5177
        %5243 = vst.msk [vmem:[%s171 + $0x28] sm:$0xf] %vm5232, %v5178
        %5244 = vst.msk [vmem:[%s171 + $0x2c] sm:$0xf] %vm5232, %v5179
        %5245 = vst.msk [vmem:[%s171 + $0x30] sm:$0xf] %vm5232, %v5180
        %5246 = vst.msk [vmem:[%s171 + $0x34] sm:$0xf] %vm5232, %v5181
        %5247 = vst.msk [vmem:[%s171 + $0x38] sm:$0xf] %vm5232, %v5182
        %5248 = vst.msk [vmem:[%s171 + $0x3c] sm:$0xf] %vm5232, %v5183
        %5249 = vst.msk [vmem:[%s171 + $0x40] sm:$0xf] %vm5232, %v5184
        %5250 = vst.msk [vmem:[%s171 + $0x44] sm:$0xf] %vm5232, %v5185
        %5251 = vst.msk [vmem:[%s171 + $0x48] sm:$0xf] %vm5232, %v5186
        %5252 = vst.msk [vmem:[%s171 + $0x4c] sm:$0xf] %vm5232, %v5187
        %5253 = vst.msk [vmem:[%s171 + $0x50] sm:$0xf] %vm5232, %v5188
        %5254 = vst.msk [vmem:[%s171 + $0x54] sm:$0xf] %vm5232, %v5189
        %5255 = vst.msk [vmem:[%s171 + $0x58] sm:$0xf] %vm5232, %v5190
        %5256 = vst.msk [vmem:[%s171 + $0x5c] sm:$0xf] %vm5232, %v5191
        %5257 = vst.msk [vmem:[%s171 + $0x60] sm:$0xf] %vm5232, %v5192
        %5258 = vst.msk [vmem:[%s171 + $0x64] sm:$0xf] %vm5232, %v5193
        %5259 = vst.msk [vmem:[%s171 + $0x68] sm:$0xf] %vm5232, %v5194
        %5260 = vst.msk [vmem:[%s171 + $0x6c] sm:$0xf] %vm5232, %v5195
        %5261 = vst.msk [vmem:[%s171 + $0x70] sm:$0xf] %vm5232, %v5196
        %5262 = vst.msk [vmem:[%s171 + $0x74] sm:$0xf] %vm5232, %v5197
        %5263 = vst.msk [vmem:[%s171 + $0x78] sm:$0xf] %vm5232, %v5198
        %5264 = vst.msk [vmem:[%s171 + $0x7c] sm:$0xf] %vm5232, %v5199
        %s5265 = sand.u32 %s107, 1
        %s5266 = sand.u32 %s107, 1
        %s5267 = smul.addr %s5266, 128
        %s5268 = scalar_lea.vmem [#allocation2], %s5267
        // Predicated region
        $region37: #{residual_block_bn_forward.2} parent=35 // pred_check
          %p5269 = pneg %p117
        $region38: #{residual_block_bn_forward.2} parent=35 // pred_check_branch
          %5271 = sbr.rel (%p5269) target = $region40
        $region39: #{residual_block_bn_forward.2} parent=35 // pred_region
          %s5272 = smul.u32 8, %s15
          %s5273 = smul.addr %s5272, 2
          %s5274 = smul.addr %s5273, 4
          %s5275 = scalar_lea.vmem %s4, %s5274
          // Predicated region
          $region41: #{residual_block_bn_forward.2} parent=39 // pred_check
            _
          $region42: #{residual_block_bn_forward.2} parent=39 // pred_check_branch
            %5277 = sbr.rel (0) target = $region44
          $region43: #{residual_block_bn_forward.2} parent=39 // pred_region
            // Predicated region
            $region45: #{residual_block_bn_forward.2} parent=43 // pred_check
              _
            $region46: #{residual_block_bn_forward.2} parent=43 // pred_check_branch
              %5279 = sbr.rel target = $region48
            $region47: #{residual_block_bn_forward.2} parent=43 // pred_region
              // Predicated region
              $region60: #{residual_block_bn_forward.2} parent=47 // pred_check
                _
              $region61: #{residual_block_bn_forward.2} parent=47 // pred_check_branch
                %5357 = sbr.rel (0) target = $region63
              $region62: #{residual_block_bn_forward.2} parent=47 // pred_region
                loop: start=0, step=1, limit=1
                $region64: #{residual_block_bn_forward.2} parent=62 // loop_pre_header
                  _
                $region65: #{residual_block_bn_forward.2} parent=62 // loop_header
                  %s5359 = sphi 0, %s5363
                  %p5360 = scmp.ge.s32.totalorder %s5359, 1
                  %s5364 = sphi %s5268, %s5268
                  %s5365 = sphi %s5275, %s5275
                $region66: #{residual_block_bn_forward.2} parent=62 // loop_header_branch
                  %5362 = sbr.rel (%p5360) target = $region70
                $region67: #{residual_block_bn_forward.2} parent=62 // loop_body
                  _
                $region68: #{residual_block_bn_forward.2} parent=62 // loop_footer
                  %s5363 = sadd.s32 1, %s5359
                $region69: #{residual_block_bn_forward.2} parent=62 // loop_footer_branch
                  %5358 = sbr.rel target = $region65
                $region70: #{residual_block_bn_forward.2} parent=62 // loop_exit
                  _
                %s5367 = ssub.s32 16, 1
                loop: start=0, step=1, limit=1
                $region71: #{residual_block_bn_forward.2} parent=62 // loop_pre_header
                  _
                $region72: #{residual_block_bn_forward.2} parent=62 // loop_header
                  %s5369 = sphi 0, %s5373
                  %p5370 = scmp.ge.s32.totalorder %s5369, 1
                  %s5374 = sphi %s5268, %s5268
                  %s5375 = sphi %s5275, %s5275
                $region73: #{residual_block_bn_forward.2} parent=62 // loop_header_branch
                  %5372 = sbr.rel (%p5370) target = $region77
                $region74: #{residual_block_bn_forward.2} parent=62 // loop_body
                  %v5376 = vld [vmem:[%s5374] sm:%s5367]
                  %5377 = vst [vmem:[%s5375] sm:%s5367] %v5376
                  %v5378 = vld [vmem:[%s5374 + $0x4] sm:%s5367]
                  %5379 = vst [vmem:[%s5375 + $0x4] sm:%s5367] %v5378
                  %v5380 = vld [vmem:[%s5374 + $0x8] sm:%s5367]
                  %5381 = vst [vmem:[%s5375 + $0x8] sm:%s5367] %v5380
                  %v5382 = vld [vmem:[%s5374 + $0xc] sm:%s5367]
                  %5383 = vst [vmem:[%s5375 + $0xc] sm:%s5367] %v5382
                  %v5384 = vld [vmem:[%s5374 + $0x10] sm:%s5367]
                  %5385 = vst [vmem:[%s5375 + $0x10] sm:%s5367] %v5384
                  %v5386 = vld [vmem:[%s5374 + $0x14] sm:%s5367]
                  %5387 = vst [vmem:[%s5375 + $0x14] sm:%s5367] %v5386
                  %v5388 = vld [vmem:[%s5374 + $0x18] sm:%s5367]
                  %5389 = vst [vmem:[%s5375 + $0x18] sm:%s5367] %v5388
                  %v5390 = vld [vmem:[%s5374 + $0x1c] sm:%s5367]
                  %5391 = vst [vmem:[%s5375 + $0x1c] sm:%s5367] %v5390
                  %v5392 = vld [vmem:[%s5374 + $0x20] sm:%s5367]
                  %5393 = vst [vmem:[%s5375 + $0x20] sm:%s5367] %v5392
                  %v5394 = vld [vmem:[%s5374 + $0x24] sm:%s5367]
                  %5395 = vst [vmem:[%s5375 + $0x24] sm:%s5367] %v5394
                  %v5396 = vld [vmem:[%s5374 + $0x28] sm:%s5367]
                  %5397 = vst [vmem:[%s5375 + $0x28] sm:%s5367] %v5396
                  %v5398 = vld [vmem:[%s5374 + $0x2c] sm:%s5367]
                  %5399 = vst [vmem:[%s5375 + $0x2c] sm:%s5367] %v5398
                  %v5400 = vld [vmem:[%s5374 + $0x30] sm:%s5367]
                  %5401 = vst [vmem:[%s5375 + $0x30] sm:%s5367] %v5400
                  %v5402 = vld [vmem:[%s5374 + $0x34] sm:%s5367]
                  %5403 = vst [vmem:[%s5375 + $0x34] sm:%s5367] %v5402
                  %v5404 = vld [vmem:[%s5374 + $0x38] sm:%s5367]
                  %5405 = vst [vmem:[%s5375 + $0x38] sm:%s5367] %v5404
                  %v5406 = vld [vmem:[%s5374 + $0x3c] sm:%s5367]
                  %5407 = vst [vmem:[%s5375 + $0x3c] sm:%s5367] %v5406
                  %v5408 = vld [vmem:[%s5374 + $0x40] sm:%s5367]
                  %5409 = vst [vmem:[%s5375 + $0x80] sm:%s5367] %v5408
                  %v5410 = vld [vmem:[%s5374 + $0x44] sm:%s5367]
                  %5411 = vst [vmem:[%s5375 + $0x84] sm:%s5367] %v5410
                  %v5412 = vld [vmem:[%s5374 + $0x48] sm:%s5367]
                  %5413 = vst [vmem:[%s5375 + $0x88] sm:%s5367] %v5412
                  %v5414 = vld [vmem:[%s5374 + $0x4c] sm:%s5367]
                  %5415 = vst [vmem:[%s5375 + $0x8c] sm:%s5367] %v5414
                  %v5416 = vld [vmem:[%s5374 + $0x50] sm:%s5367]
                  %5417 = vst [vmem:[%s5375 + $0x90] sm:%s5367] %v5416
                  %v5418 = vld [vmem:[%s5374 + $0x54] sm:%s5367]
                  %5419 = vst [vmem:[%s5375 + $0x94] sm:%s5367] %v5418
                  %v5420 = vld [vmem:[%s5374 + $0x58] sm:%s5367]
                  %5421 = vst [vmem:[%s5375 + $0x98] sm:%s5367] %v5420
                  %v5422 = vld [vmem:[%s5374 + $0x5c] sm:%s5367]
                  %5423 = vst [vmem:[%s5375 + $0x9c] sm:%s5367] %v5422
                  %v5424 = vld [vmem:[%s5374 + $0x60] sm:%s5367]
                  %5425 = vst [vmem:[%s5375 + $0xa0] sm:%s5367] %v5424
                  %v5426 = vld [vmem:[%s5374 + $0x64] sm:%s5367]
                  %5427 = vst [vmem:[%s5375 + $0xa4] sm:%s5367] %v5426
                  %v5428 = vld [vmem:[%s5374 + $0x68] sm:%s5367]
                  %5429 = vst [vmem:[%s5375 + $0xa8] sm:%s5367] %v5428
                  %v5430 = vld [vmem:[%s5374 + $0x6c] sm:%s5367]
                  %5431 = vst [vmem:[%s5375 + $0xac] sm:%s5367] %v5430
                  %v5432 = vld [vmem:[%s5374 + $0x70] sm:%s5367]
                  %5433 = vst [vmem:[%s5375 + $0xb0] sm:%s5367] %v5432
                  %v5434 = vld [vmem:[%s5374 + $0x74] sm:%s5367]
                  %5435 = vst [vmem:[%s5375 + $0xb4] sm:%s5367] %v5434
                  %v5436 = vld [vmem:[%s5374 + $0x78] sm:%s5367]
                  %5437 = vst [vmem:[%s5375 + $0xb8] sm:%s5367] %v5436
                  %v5438 = vld [vmem:[%s5374 + $0x7c] sm:%s5367]
                  %5439 = vst [vmem:[%s5375 + $0xbc] sm:%s5367] %v5438
                $region75: #{residual_block_bn_forward.2} parent=62 // loop_footer
                  %s5373 = sadd.s32 1, %s5369
                $region76: #{residual_block_bn_forward.2} parent=62 // loop_footer_branch
                  %5368 = sbr.rel target = $region72
                $region77: #{residual_block_bn_forward.2} parent=62 // loop_exit
                  _
              $region63: #{residual_block_bn_forward.2} parent=47 // pred_fallthru
                _
            $region48: #{residual_block_bn_forward.2} parent=43 // pred_fallthru
              _
            // Predicated region
            $region49: #{residual_block_bn_forward.2} parent=43 // pred_check
              _
            $region50: #{residual_block_bn_forward.2} parent=43 // pred_check_branch
              %5281 = sbr.rel (0) target = $region52
            $region51: #{residual_block_bn_forward.2} parent=43 // pred_region
              %s5283 = ssub.s32 16, 1
              loop: start=0, step=1, limit=1
              $region53: #{residual_block_bn_forward.2} parent=51 // loop_pre_header
                _
              $region54: #{residual_block_bn_forward.2} parent=51 // loop_header
                %s5285 = sphi 0, %s5289
                %p5286 = scmp.ge.s32.totalorder %s5285, 1
                %s5290 = sphi %s5268, %s5268
                %s5291 = sphi %s5275, %s5275
              $region55: #{residual_block_bn_forward.2} parent=51 // loop_header_branch
                %5288 = sbr.rel (%p5286) target = $region59
              $region56: #{residual_block_bn_forward.2} parent=51 // loop_body
                %v5292 = vld [vmem:[%s5290] sm:%s5283]
                %5293 = vst [vmem:[%s5291] sm:%s5283] %v5292
                %v5294 = vld [vmem:[%s5290 + $0x4] sm:%s5283]
                %5295 = vst [vmem:[%s5291 + $0x4] sm:%s5283] %v5294
                %v5296 = vld [vmem:[%s5290 + $0x8] sm:%s5283]
                %5297 = vst [vmem:[%s5291 + $0x8] sm:%s5283] %v5296
                %v5298 = vld [vmem:[%s5290 + $0xc] sm:%s5283]
                %5299 = vst [vmem:[%s5291 + $0xc] sm:%s5283] %v5298
                %v5300 = vld [vmem:[%s5290 + $0x10] sm:%s5283]
                %5301 = vst [vmem:[%s5291 + $0x10] sm:%s5283] %v5300
                %v5302 = vld [vmem:[%s5290 + $0x14] sm:%s5283]
                %5303 = vst [vmem:[%s5291 + $0x14] sm:%s5283] %v5302
                %v5304 = vld [vmem:[%s5290 + $0x18] sm:%s5283]
                %5305 = vst [vmem:[%s5291 + $0x18] sm:%s5283] %v5304
                %v5306 = vld [vmem:[%s5290 + $0x1c] sm:%s5283]
                %5307 = vst [vmem:[%s5291 + $0x1c] sm:%s5283] %v5306
                %v5308 = vld [vmem:[%s5290 + $0x20] sm:%s5283]
                %5309 = vst [vmem:[%s5291 + $0x20] sm:%s5283] %v5308
                %v5310 = vld [vmem:[%s5290 + $0x24] sm:%s5283]
                %5311 = vst [vmem:[%s5291 + $0x24] sm:%s5283] %v5310
                %v5312 = vld [vmem:[%s5290 + $0x28] sm:%s5283]
                %5313 = vst [vmem:[%s5291 + $0x28] sm:%s5283] %v5312
                %v5314 = vld [vmem:[%s5290 + $0x2c] sm:%s5283]
                %5315 = vst [vmem:[%s5291 + $0x2c] sm:%s5283] %v5314
                %v5316 = vld [vmem:[%s5290 + $0x30] sm:%s5283]
                %5317 = vst [vmem:[%s5291 + $0x30] sm:%s5283] %v5316
                %v5318 = vld [vmem:[%s5290 + $0x34] sm:%s5283]
                %5319 = vst [vmem:[%s5291 + $0x34] sm:%s5283] %v5318
                %v5320 = vld [vmem:[%s5290 + $0x38] sm:%s5283]
                %5321 = vst [vmem:[%s5291 + $0x38] sm:%s5283] %v5320
                %v5322 = vld [vmem:[%s5290 + $0x3c] sm:%s5283]
                %5323 = vst [vmem:[%s5291 + $0x3c] sm:%s5283] %v5322
                %v5324 = vld [vmem:[%s5290 + $0x40] sm:%s5283]
                %5325 = vst [vmem:[%s5291 + $0x80] sm:%s5283] %v5324
                %v5326 = vld [vmem:[%s5290 + $0x44] sm:%s5283]
                %5327 = vst [vmem:[%s5291 + $0x84] sm:%s5283] %v5326
                %v5328 = vld [vmem:[%s5290 + $0x48] sm:%s5283]
                %5329 = vst [vmem:[%s5291 + $0x88] sm:%s5283] %v5328
                %v5330 = vld [vmem:[%s5290 + $0x4c] sm:%s5283]
                %5331 = vst [vmem:[%s5291 + $0x8c] sm:%s5283] %v5330
                %v5332 = vld [vmem:[%s5290 + $0x50] sm:%s5283]
                %5333 = vst [vmem:[%s5291 + $0x90] sm:%s5283] %v5332
                %v5334 = vld [vmem:[%s5290 + $0x54] sm:%s5283]
                %5335 = vst [vmem:[%s5291 + $0x94] sm:%s5283] %v5334
                %v5336 = vld [vmem:[%s5290 + $0x58] sm:%s5283]
                %5337 = vst [vmem:[%s5291 + $0x98] sm:%s5283] %v5336
                %v5338 = vld [vmem:[%s5290 + $0x5c] sm:%s5283]
                %5339 = vst [vmem:[%s5291 + $0x9c] sm:%s5283] %v5338
                %v5340 = vld [vmem:[%s5290 + $0x60] sm:%s5283]
                %5341 = vst [vmem:[%s5291 + $0xa0] sm:%s5283] %v5340
                %v5342 = vld [vmem:[%s5290 + $0x64] sm:%s5283]
                %5343 = vst [vmem:[%s5291 + $0xa4] sm:%s5283] %v5342
                %v5344 = vld [vmem:[%s5290 + $0x68] sm:%s5283]
                %5345 = vst [vmem:[%s5291 + $0xa8] sm:%s5283] %v5344
                %v5346 = vld [vmem:[%s5290 + $0x6c] sm:%s5283]
                %5347 = vst [vmem:[%s5291 + $0xac] sm:%s5283] %v5346
                %v5348 = vld [vmem:[%s5290 + $0x70] sm:%s5283]
                %5349 = vst [vmem:[%s5291 + $0xb0] sm:%s5283] %v5348
                %v5350 = vld [vmem:[%s5290 + $0x74] sm:%s5283]
                %5351 = vst [vmem:[%s5291 + $0xb4] sm:%s5283] %v5350
                %v5352 = vld [vmem:[%s5290 + $0x78] sm:%s5283]
                %5353 = vst [vmem:[%s5291 + $0xb8] sm:%s5283] %v5352
                %v5354 = vld [vmem:[%s5290 + $0x7c] sm:%s5283]
                %5355 = vst [vmem:[%s5291 + $0xbc] sm:%s5283] %v5354
              $region57: #{residual_block_bn_forward.2} parent=51 // loop_footer
                %s5289 = sadd.s32 1, %s5285
              $region58: #{residual_block_bn_forward.2} parent=51 // loop_footer_branch
                %5284 = sbr.rel target = $region54
              $region59: #{residual_block_bn_forward.2} parent=51 // loop_exit
                _
            $region52: #{residual_block_bn_forward.2} parent=43 // pred_fallthru
              _
          $region44: #{residual_block_bn_forward.2} parent=39 // pred_fallthru
            _
          %5440 = vnop
        $region40: #{residual_block_bn_forward.2} parent=35 // pred_fallthru
          _
      $region36: #{residual_block_bn_forward.2} parent=5 // pred_fallthru
        _
      %p5441 = scmp.le.s32.totalorder 2, %s10
      // Predicated region
      $region78: #{residual_block_bn_forward.2} parent=5 // pred_check
        %p5442 = pneg %p5441
      $region79: #{residual_block_bn_forward.2} parent=5 // pred_check_branch
        %5444 = sbr.rel (%p5442) target = $region81
      $region80: #{residual_block_bn_forward.2} parent=5 // pred_region
        %s5445 = ssub.s32 %s10, 2
        // Predicated region
        $region82: #{residual_block_bn_forward.2} parent=80 // pred_check
          %p5446 = pneg %p123
        $region83: #{residual_block_bn_forward.2} parent=80 // pred_check_branch
          %5448 = sbr.rel (%p5446) target = $region85
        $region84: #{residual_block_bn_forward.2} parent=80 // pred_region
          %s5449 = sand.u32 %s108, 1
          %s5450 = sand.u32 %s108, 1
          %s5451 = smul.addr %s5450, 128
          %s5452 = scalar_lea.vmem [#allocation2], %s5451
        $region85: #{residual_block_bn_forward.2} parent=80 // pred_fallthru
          _
      $region81: #{residual_block_bn_forward.2} parent=5 // pred_fallthru
        _
    $region6: #{residual_block_bn_forward.2} parent=1 // loop_footer
      %s14 = sadd.s32 1, %s10
    $region7: #{residual_block_bn_forward.2} parent=1 // loop_footer_branch
      %9 = sbr.rel target = $region3
    $region8: #{residual_block_bn_forward.2} parent=1 // loop_exit
      _

</llo_original>
